<compile_context>
chip_gen: v7x
topology: tpu7x:2x2x1
jax: 0.10.0
libtpu: 0.0.40
codegen_flags: <defaults>
</compile_context>

<pallas_src>
import numpy as np
import jax
import jax.numpy as jnp
from jax import lax
from jax.experimental import pallas as pl
from jax.experimental.pallas import tpu as pltpu


def _round_up(x, m):
    return (x + m - 1) // m * m


# ----------------------------------------------------------------------------
# Pallas kernel
# ----------------------------------------------------------------------------
def _make_kernel(k_max, with_proj):
    """Fused multi-ngram conv + bias + ReLU + masked spatial max (+ Linear)."""

    def kernel(*refs):
        if with_proj:
            (x_ref, w_ref, b_ref, m_ref, pw_ref, pb_ref,
             o_ref, x32_ref, slab_ref) = refs
        else:
            x_ref, w_ref, b_ref, m_ref, o_ref, x32_ref, slab_ref = refs

        TB, S, T, C = x_ref.shape
        K = slab_ref.shape[-1]            # k_max^2 * C  (wide contraction dim)
        P = S * T
        F_pad = w_ref.shape[-1]
        halo = k_max - 1

        # Full-tile bf16 load of the streamed block, staged once as f32 so the
        # k^2 shifted reads below are plain 32-bit ref slices.
        x32_ref[...] = x_ref[...].astype(jnp.float32)

        # --- build the im2col slab ------------------------------------------
        # Zero only the halo band: every tap's "source falls outside the
        # input" region is contained in {s >= S-halo} U {t >= T-halo}, and the
        # interior is fully overwritten below.  Done every step (cheap: the
        # band is a (k_max-1)-wide edge), NOT once-only -- see header comment.
        if halo:
            slab_ref[:, S - halo:, :, :] = jnp.zeros(
                (TB, halo, T, K), jnp.float32)
            slab_ref[:, :S - halo, T - halo:, :] = jnp.zeros(
                (TB, S - halo, halo, K), jnp.float32)

        # Scatter the k_max^2 shifted views of the input into the slab
        # (layout plumbing only; all accumulation happens inside the MXU).
        for di in range(k_max):
            for dj in range(k_max):
                tap = di * k_max + dj
                slab_ref[:, :S - di, :T - dj, tap * C:(tap + 1) * C] = (
                    x32_ref[:, di:, dj:, :])

        # --- one wide-K MXU matmul + bias + ReLU + masked spatial max --------
        lhs = slab_ref[...].reshape(TB * P, K).astype(jnp.bfloat16)
        y = jnp.dot(lhs, w_ref[...], preferred_element_type=jnp.float32)
        y = jnp.maximum(y + b_ref[...], 0.0)          # bias + ReLU     (f32)
        y = y.reshape(TB, P, F_pad) * m_ref[...]      # kill invalid positions
        pooled = jnp.max(y, axis=1)                   # (TB, F_pad)     (f32)
        # TODO(synk): for very large S*T, tile P here with an online running
        # max instead of materialising the full (TB*P, F_pad) activation.

        if with_proj:
            o_ref[...] = (jnp.dot(pooled.astype(jnp.bfloat16), pw_ref[...],
                                  preferred_element_type=jnp.float32)
                          + pb_ref[...])
        else:
            o_ref[...] = pooled

    return kernel


# ----------------------------------------------------------------------------
# Host-side, done-once parameter packing (layout plumbing, not compute)
# ----------------------------------------------------------------------------
def pack_cnn_params(conv_weights, conv_biases, ngram_filter_sizes,
                    num_sentences, num_tokens, proj_w=None, proj_b=None):
    """Packs all ngram filter banks into one im2col weight/bias/mask set.

    conv_weights[i]: (F, C, k_i, k_i) PyTorch Conv2d layout.
    Weight layout: row index = (di * k_max + dj) * C + c, lane-dense F_pad cols.
    """
    sizes = tuple(int(k) for k in ngram_filter_sizes)
    k_max = max(sizes)
    S, T = num_sentences, num_tokens
    if any(k > min(S, T) for k in sizes):
        raise ValueError("ngram size exceeds the (num_sentences, num_tokens) "
                         "grid; the reference conv would be empty.")
    F, C = np.asarray(conv_weights[0]).shape[:2]
    n_sizes = len(sizes)
    F_total = F * n_sizes
    F_pad = _round_up(max(F_total, 128), 128)
    K = k_max * k_max * C                      # wide contraction dim (>= C)

    w_packed = np.zeros((K, F_pad), np.float32)
    b_packed = np.zeros((1, F_pad), np.float32)
    mask = np.zeros((S * T, F_pad), np.float32)
    for g, (k, w, b) in enumerate(zip(sizes, conv_weights, conv_biases)):
        w_np = np.asarray(w, np.float32)       # (F, C, k, k)
        lo, hi = g * F, (g + 1) * F
        for di in range(k):
            for dj in range(k):
                row0 = (di * k_max + dj) * C
                w_packed[row0:row0 + C, lo:hi] = w_np[:, :, di, dj].T
        b_packed[0, lo:hi] = np.asarray(b, np.float32)
        valid = np.zeros((S, T), np.float32)
        valid[: S - k + 1, : T - k + 1] = 1.0  # VALID conv positions for k
        mask[:, lo:hi] = valid.reshape(-1, 1)
    # TODO(synk): when ngram sizes span a wide range (e.g. 1..5), give each
    # 128-wide filter column block its own K extent instead of matmul-ing
    # guaranteed-zero taps (only worth it once the kernel is MXU-bound).

    packed = dict(
        w=jnp.asarray(w_packed, jnp.bfloat16),   # MXU-native, halves VMEM
        b=jnp.asarray(b_packed),                 # f32
        mask=jnp.asarray(mask),                  # f32
        k_max=k_max, K=K, C=C, f_total=F_total, f_pad=F_pad,
        S=S, T=T, pw=None, pb=None, d_out=None, d_pad=None,
    )
    if proj_w is not None:
        proj_w = np.asarray(proj_w, np.float32)
        proj_b = np.asarray(proj_b, np.float32)
        D_out = proj_w.shape[1]
        D_pad = _round_up(max(D_out, 128), 128)
        pw = np.zeros((F_pad, D_pad), np.float32)
        pw[:F_total, :D_out] = proj_w
        pb = np.zeros((1, D_pad), np.float32)
        pb[0, :D_out] = proj_b
        packed.update(pw=jnp.asarray(pw, jnp.bfloat16), pb=jnp.asarray(pb),
                      d_out=D_out, d_pad=D_pad)
    return packed


# ----------------------------------------------------------------------------
# Tiling / VMEM budgeting
# ----------------------------------------------------------------------------
def _vmem_bytes_per_step(TB, S, T, C, K, F_pad, D_pad):
    """Rough per-grid-step VMEM footprint (lane padding included)."""
    lane = lambda n: _round_up(n, 128)
    P = S * T
    by = 2 * TB * S * T * lane(C) * 2            # streamed bf16 input (2 bufs)
    by += TB * S * T * lane(C) * 4               # f32 staging copy of the input
    by += TB * S * T * lane(K) * 4               # f32 im2col slab
    by += K * F_pad * 2 + 8 * F_pad * 4          # conv weights (bf16) + bias
    by += P * F_pad * 4                          # validity mask (f32)
    by += TB * P * F_pad * 4                     # post-matmul f32 activations
    if D_pad:
        by += F_pad * D_pad * 2 + 8 * D_pad * 4  # projection weights + bias
        by += 2 * TB * D_pad * 4                 # output block (2 bufs)
    else:
        by += 2 * TB * F_pad * 4
    return by


def _choose_tiling(B, S, T, C, K, F_pad, D_pad,
                   target_rows=1024, vmem_budget=40 * 1024 * 1024):
    """TB: multiple of 8, ~target_rows MXU rows per step, clamped by a VMEM
    budget (headroom under v7x's 64 MiB physical VMEM); grid kept even when
    >1 step so both v7x TensorCores get equal work."""
    P = S * T
    tb = _round_up(max(1, target_rows // max(P, 1)), 8)
    tb = min(tb, _round_up(B, 8))
    while tb > 8 and _vmem_bytes_per_step(tb, S, T, C, K, F_pad, D_pad) > vmem_budget:
        tb -= 8
    # TODO(synk): if even TB=8 blows the budget (huge S*T), tile P inside the
    # kernel with an online running max instead of shrinking TB further.
    b_pad = _round_up(B, tb)
    steps = b_pad // tb
    if steps > 1 and steps % 2 == 1:             # even grid for v7x megacore
        steps += 1
        b_pad = steps * tb
    return tb, b_pad, steps


# ----------------------------------------------------------------------------
# Forward pass
# ----------------------------------------------------------------------------
def cnn_dialogue_encoder(sentences, packed):
    """sentences: (B, num_sentences, num_tokens, embedding_dim) float32."""
    B, S, T, C = sentences.shape
    assert (S, T, C) == (packed["S"], packed["T"], packed["C"])
    K, F_pad = packed["K"], packed["f_pad"]
    P = S * T
    with_proj = packed["pw"] is not None
    D_pad = packed["d_pad"] if with_proj else None
    out_cols = D_pad if with_proj else F_pad

    TB, B_pad, steps = _choose_tiling(B, S, T, C, K, F_pad, D_pad)

    x = sentences.astype(jnp.bfloat16)           # halve streamed HBM traffic
    if B_pad != B:
        x = jnp.pad(x, ((0, B_pad - B), (0, 0), (0, 0), (0, 0)))

    resident = dict(pipeline_mode=pl.Buffered(1))   # constant index_map -> 1 buf
    in_specs = [
        pl.BlockSpec((TB, S, T, C), lambda i: (i, 0, 0, 0)),   # streamed input
        pl.BlockSpec((K, F_pad), lambda i: (0, 0), **resident),
        pl.BlockSpec((1, F_pad), lambda i: (0, 0), **resident),
        pl.BlockSpec((P, F_pad), lambda i: (0, 0), **resident),
    ]
    operands = [x, packed["w"], packed["b"], packed["mask"]]
    if with_proj:
        in_specs += [
            pl.BlockSpec((F_pad, D_pad), lambda i: (0, 0), **resident),
            pl.BlockSpec((1, D_pad), lambda i: (0, 0), **resident),
        ]
        operands += [packed["pw"], packed["pb"]]

    out = pl.pallas_call(
        _make_kernel(packed["k_max"], with_proj),
        out_shape=jax.ShapeDtypeStruct((B_pad, out_cols), jnp.float32),
        grid=(steps,),
        in_specs=in_specs,
        out_specs=pl.BlockSpec((TB, out_cols), lambda i: (i, 0)),
        scratch_shapes=[pltpu.VMEM((TB, S, T, C), jnp.float32),   # f32 input stage
                        pltpu.VMEM((TB, S, T, K), jnp.float32)],  # im2col slab
        compiler_params=pltpu.CompilerParams(
            dimension_semantics=("parallel",),
            vmem_limit_bytes=64 * 1024 * 1024),
    )(*operands)

    n_cols = packed["d_out"] if with_proj else packed["f_total"]
    return out[:B, :n_cols]


# ----------------------------------------------------------------------------
# Pure-JAX reference (independent conv path) for a correctness check
# ----------------------------------------------------------------------------
def _reference(sentences, conv_weights, conv_biases, proj_w, proj_b, sizes):
    outs = []
    for k, w, b in zip(sizes, conv_weights, conv_biases):
        w_hwio = jnp.transpose(w, (2, 3, 1, 0))  # (k, k, C, F)
        y = lax.conv_general_dilated(
            sentences, w_hwio, window_strides=(1, 1), padding="VALID",
            dimension_numbers=("NHWC", "HWIO", "NHWC"),
        ) + b[None, None, None, :]
        y = jnp.maximum(y, 0.0)
        outs.append(jnp.max(y, axis=(1, 2)))     # (B, F)
    pooled = jnp.concatenate(outs, axis=1)
    if proj_w is not None:
        return pooled @ proj_w + proj_b[None, :]
    return pooled


# ----------------------------------------------------------------------------
if __name__ == "__main__":
    batch = 2
    num_sentences = 8
    num_tokens = 16
    embedding_dim = 16
    num_filters = 8
    ngram_filter_sizes = (2, 3)
    output_dim = 10

    key = jax.random.PRNGKey(0)
    k_x, k_w, k_b, k_pw, k_pb = jax.random.split(key, 5)

    def bf16_repr(v):
        # Demo values are made exactly bf16-representable so the f32 reference
        # isolates kernel-math differences from operand quantisation noise.
        return v.astype(jnp.bfloat16).astype(jnp.float32)

    sentences = bf16_repr(jax.random.normal(
        k_x, (batch, num_sentences, num_tokens, embedding_dim), jnp.float32))

    conv_weights, conv_biases = [], []
    wkeys = jax.random.split(k_w, len(ngram_filter_sizes))
    bkeys = jax.random.split(k_b, len(ngram_filter_sizes))
    for i, k in enumerate(ngram_filter_sizes):
        conv_weights.append(bf16_repr(0.1 * jax.random.normal(
            wkeys[i], (num_filters, embedding_dim, k, k), jnp.float32)))
        conv_biases.append(0.1 * jax.random.normal(
            bkeys[i], (num_filters,), jnp.float32))

    maxpool_dim = num_filters * len(ngram_filter_sizes)
    proj_w = bf16_repr(0.1 * jax.random.normal(
        k_pw, (maxpool_dim, output_dim), jnp.float32))
    proj_b = 0.1 * jax.random.normal(k_pb, (output_dim,), jnp.float32)

    # --- projection path -----------------------------------------------------
    packed = pack_cnn_params(conv_weights, conv_biases, ngram_filter_sizes,
                             num_sentences, num_tokens, proj_w, proj_b)
    out = jax.block_until_ready(cnn_dialogue_encoder(sentences, packed))
    assert out.shape == (batch, output_dim), out.shape
    ref = _reference(sentences, conv_weights, conv_biases, proj_w, proj_b,
                     ngram_filter_sizes)
    # bf16 MXU operands -> slightly widened tolerance vs. the f32 reference.
    assert jnp.allclose(out, ref, atol=2e-2, rtol=2e-2), "proj path mismatch"

    # --- no-projection path --------------------------------------------------
    packed_np = pack_cnn_params(conv_weights, conv_biases, ngram_filter_sizes,
                                num_sentences, num_tokens)
    out_np = jax.block_until_ready(cnn_dialogue_encoder(sentences, packed_np))
    assert out_np.shape == (batch, maxpool_dim), out_np.shape
    ref_np = _reference(sentences, conv_weights, conv_biases, None, None,
                        ngram_filter_sizes)
    assert jnp.allclose(out_np, ref_np, atol=2e-2, rtol=2e-2), "pool mismatch"

    print("KERNEL_OK")
</pallas_src>

<mosaic_0001>
module attributes {stable_mosaic.version = 11 : i64} {
  func.func @kernel(%arg0: i32, %arg1: memref<8x8x16x16xbf16, #tpu.memory_space<vmem>>, %arg2: memref<144x128xbf16, #tpu.memory_space<vmem>>, %arg3: memref<1x128xf32, #tpu.memory_space<vmem>>, %arg4: memref<128x128xf32, #tpu.memory_space<vmem>>, %arg5: memref<128x128xbf16, #tpu.memory_space<vmem>>, %arg6: memref<1x128xf32, #tpu.memory_space<vmem>>, %arg7: memref<8x128xf32, #tpu.memory_space<vmem>>, %arg8: memref<8x8x16x16xf32, #tpu.memory_space<vmem>>, %arg9: memref<8x8x16x144xf32, #tpu.memory_space<vmem>>) attributes {dimension_semantics = [#tpu.dimension_semantics<parallel>], iteration_bounds = array<i64: 1>, scalar_prefetch = 0 : i64, scratch_operands = 2 : i64, tpu.core_type = #tpu.core_type<tc>, window_params = [{transform_indices = @transform_0, window_bounds = array<i64: 8, 8, 16, 16>}, {pipeline_mode = #tpu.pipeline_mode<synchronous>, transform_indices = @transform_1, window_bounds = array<i64: 144, 128>}, {pipeline_mode = #tpu.pipeline_mode<synchronous>, transform_indices = @transform_2, window_bounds = array<i64: 1, 128>}, {pipeline_mode = #tpu.pipeline_mode<synchronous>, transform_indices = @transform_3, window_bounds = array<i64: 128, 128>}, {pipeline_mode = #tpu.pipeline_mode<synchronous>, transform_indices = @transform_4, window_bounds = array<i64: 128, 128>}, {pipeline_mode = #tpu.pipeline_mode<synchronous>, transform_indices = @transform_5, window_bounds = array<i64: 1, 128>}, {transform_indices = @transform_6, window_bounds = array<i64: 8, 128>}]} {
    %c0 = arith.constant 0 : index
    %c0_0 = arith.constant 0 : index
    %c0_1 = arith.constant 0 : index
    %c0_2 = arith.constant 0 : index
    %0 = vector.load %arg1[%c0, %c0_0, %c0_1, %c0_2] : memref<8x8x16x16xbf16, #tpu.memory_space<vmem>>, vector<8x8x16x16xbf16>
    %1 = arith.extf %0 : vector<8x8x16x16xbf16> to vector<8x8x16x16xf32>
    %c0_3 = arith.constant 0 : index
    %c0_4 = arith.constant 0 : index
    %c0_5 = arith.constant 0 : index
    %c0_6 = arith.constant 0 : index
    %2 = vector.load %arg8[%c0_3, %c0_4, %c0_5, %c0_6] : memref<8x8x16x16xf32, #tpu.memory_space<vmem>>, vector<8x8x16x16xf32>
    tpu.vector_store %arg8[%c0_3, %c0_4, %c0_5, %c0_6], %1 {strides = array<i32>} : memref<8x8x16x16xf32, #tpu.memory_space<vmem>>, vector<8x8x16x16xf32>,
    %cst = arith.constant 0.000000e+00 : f32
    %3 = vector.broadcast %cst : f32 to vector<8x2x16x144xf32>
    %c0_7 = arith.constant 0 : index
    %c6 = arith.constant 6 : index
    %c0_8 = arith.constant 0 : index
    %c0_9 = arith.constant 0 : index
    %4 = vector.load %arg9[%c0_7, %c6, %c0_8, %c0_9] : memref<8x8x16x144xf32, #tpu.memory_space<vmem>>, vector<8x2x16x144xf32>
    tpu.vector_store %arg9[%c0_7, %c6, %c0_8, %c0_9], %3 {strides = array<i32>} : memref<8x8x16x144xf32, #tpu.memory_space<vmem>>, vector<8x2x16x144xf32>,
    %cst_10 = arith.constant 0.000000e+00 : f32
    %5 = vector.broadcast %cst_10 : f32 to vector<8x6x2x144xf32>
    %c0_11 = arith.constant 0 : index
    %c0_12 = arith.constant 0 : index
    %c14 = arith.constant 14 : index
    %c0_13 = arith.constant 0 : index
    %6 = vector.load %arg9[%c0_11, %c0_12, %c14, %c0_13] : memref<8x8x16x144xf32, #tpu.memory_space<vmem>>, vector<8x6x2x144xf32>
    tpu.vector_store %arg9[%c0_11, %c0_12, %c14, %c0_13], %5 {strides = array<i32>} : memref<8x8x16x144xf32, #tpu.memory_space<vmem>>, vector<8x6x2x144xf32>,
    %c0_14 = arith.constant 0 : index
    %c0_15 = arith.constant 0 : index
    %c0_16 = arith.constant 0 : index
    %c0_17 = arith.constant 0 : index
    %7 = vector.load %arg8[%c0_14, %c0_15, %c0_16, %c0_17] : memref<8x8x16x16xf32, #tpu.memory_space<vmem>>, vector<8x8x16x16xf32>
    %c0_18 = arith.constant 0 : index
    %c0_19 = arith.constant 0 : index
    %c0_20 = arith.constant 0 : index
    %c0_21 = arith.constant 0 : index
    %8 = vector.load %arg9[%c0_18, %c0_19, %c0_20, %c0_21] : memref<8x8x16x144xf32, #tpu.memory_space<vmem>>, vector<8x8x16x16xf32>
    tpu.vector_store %arg9[%c0_18, %c0_19, %c0_20, %c0_21], %7 {strides = array<i32>} : memref<8x8x16x144xf32, #tpu.memory_space<vmem>>, vector<8x8x16x16xf32>,
    %c0_22 = arith.constant 0 : index
    %c0_23 = arith.constant 0 : index
    %c1 = arith.constant 1 : index
    %c0_24 = arith.constant 0 : index
    %9 = vector.load %arg8[%c0_22, %c0_23, %c1, %c0_24] : memref<8x8x16x16xf32, #tpu.memory_space<vmem>>, vector<8x8x15x16xf32>
    %c0_25 = arith.constant 0 : index
    %c0_26 = arith.constant 0 : index
    %c0_27 = arith.constant 0 : index
    %c16 = arith.constant 16 : index
    %10 = vector.load %arg9[%c0_25, %c0_26, %c0_27, %c16] : memref<8x8x16x144xf32, #tpu.memory_space<vmem>>, vector<8x8x15x16xf32>
    tpu.vector_store %arg9[%c0_25, %c0_26, %c0_27, %c16], %9 {strides = array<i32>} : memref<8x8x16x144xf32, #tpu.memory_space<vmem>>, vector<8x8x15x16xf32>,
    %c0_28 = arith.constant 0 : index
    %c0_29 = arith.constant 0 : index
    %c2 = arith.constant 2 : index
    %c0_30 = arith.constant 0 : index
    %11 = vector.load %arg8[%c0_28, %c0_29, %c2, %c0_30] : memref<8x8x16x16xf32, #tpu.memory_space<vmem>>, vector<8x8x14x16xf32>
    %c0_31 = arith.constant 0 : index
    %c0_32 = arith.constant 0 : index
    %c0_33 = arith.constant 0 : index
    %c32 = arith.constant 32 : index
    %12 = vector.load %arg9[%c0_31, %c0_32, %c0_33, %c32] : memref<8x8x16x144xf32, #tpu.memory_space<vmem>>, vector<8x8x14x16xf32>
    tpu.vector_store %arg9[%c0_31, %c0_32, %c0_33, %c32], %11 {strides = array<i32>} : memref<8x8x16x144xf32, #tpu.memory_space<vmem>>, vector<8x8x14x16xf32>,
    %c0_34 = arith.constant 0 : index
    %c1_35 = arith.constant 1 : index
    %c0_36 = arith.constant 0 : index
    %c0_37 = arith.constant 0 : index
    %13 = vector.load %arg8[%c0_34, %c1_35, %c0_36, %c0_37] : memref<8x8x16x16xf32, #tpu.memory_space<vmem>>, vector<8x7x16x16xf32>
    %c0_38 = arith.constant 0 : index
    %c0_39 = arith.constant 0 : index
    %c0_40 = arith.constant 0 : index
    %c48 = arith.constant 48 : index
    %14 = vector.load %arg9[%c0_38, %c0_39, %c0_40, %c48] : memref<8x8x16x144xf32, #tpu.memory_space<vmem>>, vector<8x7x16x16xf32>
    tpu.vector_store %arg9[%c0_38, %c0_39, %c0_40, %c48], %13 {strides = array<i32>} : memref<8x8x16x144xf32, #tpu.memory_space<vmem>>, vector<8x7x16x16xf32>,
    %c0_41 = arith.constant 0 : index
    %c1_42 = arith.constant 1 : index
    %c1_43 = arith.constant 1 : index
    %c0_44 = arith.constant 0 : index
    %15 = vector.load %arg8[%c0_41, %c1_42, %c1_43, %c0_44] : memref<8x8x16x16xf32, #tpu.memory_space<vmem>>, vector<8x7x15x16xf32>
    %c0_45 = arith.constant 0 : index
    %c0_46 = arith.constant 0 : index
    %c0_47 = arith.constant 0 : index
    %c64 = arith.constant 64 : index
    %16 = vector.load %arg9[%c0_45, %c0_46, %c0_47, %c64] : memref<8x8x16x144xf32, #tpu.memory_space<vmem>>, vector<8x7x15x16xf32>
    tpu.vector_store %arg9[%c0_45, %c0_46, %c0_47, %c64], %15 {strides = array<i32>} : memref<8x8x16x144xf32, #tpu.memory_space<vmem>>, vector<8x7x15x16xf32>,
    %c0_48 = arith.constant 0 : index
    %c1_49 = arith.constant 1 : index
    %c2_50 = arith.constant 2 : index
    %c0_51 = arith.constant 0 : index
    %17 = vector.load %arg8[%c0_48, %c1_49, %c2_50, %c0_51] : memref<8x8x16x16xf32, #tpu.memory_space<vmem>>, vector<8x7x14x16xf32>
    %c0_52 = arith.constant 0 : index
    %c0_53 = arith.constant 0 : index
    %c0_54 = arith.constant 0 : index
    %c80 = arith.constant 80 : index
    %18 = vector.load %arg9[%c0_52, %c0_53, %c0_54, %c80] : memref<8x8x16x144xf32, #tpu.memory_space<vmem>>, vector<8x7x14x16xf32>
    tpu.vector_store %arg9[%c0_52, %c0_53, %c0_54, %c80], %17 {strides = array<i32>} : memref<8x8x16x144xf32, #tpu.memory_space<vmem>>, vector<8x7x14x16xf32>,
    %c0_55 = arith.constant 0 : index
    %c2_56 = arith.constant 2 : index
    %c0_57 = arith.constant 0 : index
    %c0_58 = arith.constant 0 : index
    %19 = vector.load %arg8[%c0_55, %c2_56, %c0_57, %c0_58] : memref<8x8x16x16xf32, #tpu.memory_space<vmem>>, vector<8x6x16x16xf32>
    %c0_59 = arith.constant 0 : index
    %c0_60 = arith.constant 0 : index
    %c0_61 = arith.constant 0 : index
    %c96 = arith.constant 96 : index
    %20 = vector.load %arg9[%c0_59, %c0_60, %c0_61, %c96] : memref<8x8x16x144xf32, #tpu.memory_space<vmem>>, vector<8x6x16x16xf32>
    tpu.vector_store %arg9[%c0_59, %c0_60, %c0_61, %c96], %19 {strides = array<i32>} : memref<8x8x16x144xf32, #tpu.memory_space<vmem>>, vector<8x6x16x16xf32>,
    %c0_62 = arith.constant 0 : index
    %c2_63 = arith.constant 2 : index
    %c1_64 = arith.constant 1 : index
    %c0_65 = arith.constant 0 : index
    %21 = vector.load %arg8[%c0_62, %c2_63, %c1_64, %c0_65] : memref<8x8x16x16xf32, #tpu.memory_space<vmem>>, vector<8x6x15x16xf32>
    %c0_66 = arith.constant 0 : index
    %c0_67 = arith.constant 0 : index
    %c0_68 = arith.constant 0 : index
    %c112 = arith.constant 112 : index
    %22 = vector.load %arg9[%c0_66, %c0_67, %c0_68, %c112] : memref<8x8x16x144xf32, #tpu.memory_space<vmem>>, vector<8x6x15x16xf32>
    tpu.vector_store %arg9[%c0_66, %c0_67, %c0_68, %c112], %21 {strides = array<i32>} : memref<8x8x16x144xf32, #tpu.memory_space<vmem>>, vector<8x6x15x16xf32>,
    %c0_69 = arith.constant 0 : index
    %c2_70 = arith.constant 2 : index
    %c2_71 = arith.constant 2 : index
    %c0_72 = arith.constant 0 : index
    %23 = vector.load %arg8[%c0_69, %c2_70, %c2_71, %c0_72] : memref<8x8x16x16xf32, #tpu.memory_space<vmem>>, vector<8x6x14x16xf32>
    %c0_73 = arith.constant 0 : index
    %c0_74 = arith.constant 0 : index
    %c0_75 = arith.constant 0 : index
    %c128 = arith.constant 128 : index
    %24 = vector.load %arg9[%c0_73, %c0_74, %c0_75, %c128] : memref<8x8x16x144xf32, #tpu.memory_space<vmem>>, vector<8x6x14x16xf32>
    tpu.vector_store %arg9[%c0_73, %c0_74, %c0_75, %c128], %23 {strides = array<i32>} : memref<8x8x16x144xf32, #tpu.memory_space<vmem>>, vector<8x6x14x16xf32>,
    %c0_76 = arith.constant 0 : index
    %c0_77 = arith.constant 0 : index
    %c0_78 = arith.constant 0 : index
    %c0_79 = arith.constant 0 : index
    %25 = vector.load %arg9[%c0_76, %c0_77, %c0_78, %c0_79] : memref<8x8x16x144xf32, #tpu.memory_space<vmem>>, vector<8x8x16x144xf32>
    %26 = vector.shape_cast %25 : vector<8x8x16x144xf32> to vector<1024x144xf32>
    %27 = arith.truncf %26 : vector<1024x144xf32> to vector<1024x144xbf16>
    %c0_80 = arith.constant 0 : index
    %c0_81 = arith.constant 0 : index
    %28 = vector.load %arg2[%c0_80, %c0_81] : memref<144x128xbf16, #tpu.memory_space<vmem>>, vector<144x128xbf16>
    %cst_82 = arith.constant dense<0.000000e+00> : vector<1024x128xf32>
    %29 = tpu.matmul %27, %28, %cst_82 {dimension_numbers = #tpu.dot_dimension_numbers<[1], [0], [0], [1], [0, 0, 1, 1], [], []>} : vector<1024x144xbf16>, vector<144x128xbf16>, vector<1024x128xf32> -> vector<1024x128xf32>
    %c0_83 = arith.constant 0 : index
    %c0_84 = arith.constant 0 : index
    %30 = vector.load %arg3[%c0_83, %c0_84] : memref<1x128xf32, #tpu.memory_space<vmem>>, vector<1x128xf32>
    %31 = vector.broadcast %30 : vector<1x128xf32> to vector<1024x128xf32>
    %32 = arith.addf %29, %31 : vector<1024x128xf32>
    %cst_85 = arith.constant 0.000000e+00 : f32
    %33 = vector.broadcast %cst_85 : f32 to vector<1024x128xf32>
    %34 = arith.maximumf %32, %33 : vector<1024x128xf32>
    %35 = vector.shape_cast %34 : vector<1024x128xf32> to vector<8x128x128xf32>
    %c0_86 = arith.constant 0 : index
    %c0_87 = arith.constant 0 : index
    %36 = vector.load %arg4[%c0_86, %c0_87] : memref<128x128xf32, #tpu.memory_space<vmem>>, vector<128x128xf32>
    %37 = vector.shape_cast %36 : vector<128x128xf32> to vector<1x128x128xf32>
    %38 = vector.broadcast %37 : vector<1x128x128xf32> to vector<8x128x128xf32>
    %39 = arith.mulf %35, %38 : vector<8x128x128xf32>
    %cst_88 = arith.constant dense<0xFF800000> : vector<8x128xf32>
    %40 = vector.multi_reduction <maximumf>, %39, %cst_88 [1] : vector<8x128x128xf32> to vector<8x128xf32>
    %41 = arith.truncf %40 : vector<8x128xf32> to vector<8x128xbf16>
    %c0_89 = arith.constant 0 : index
    %c0_90 = arith.constant 0 : index
    %42 = vector.load %arg5[%c0_89, %c0_90] : memref<128x128xbf16, #tpu.memory_space<vmem>>, vector<128x128xbf16>
    %cst_91 = arith.constant dense<0.000000e+00> : vector<8x128xf32>
    %43 = tpu.matmul %41, %42, %cst_91 {dimension_numbers = #tpu.dot_dimension_numbers<[1], [0], [0], [1], [0, 0, 1, 1], [], []>} : vector<8x128xbf16>, vector<128x128xbf16>, vector<8x128xf32> -> vector<8x128xf32>
    %c0_92 = arith.constant 0 : index
    %c0_93 = arith.constant 0 : index
    %44 = vector.load %arg6[%c0_92, %c0_93] : memref<1x128xf32, #tpu.memory_space<vmem>>, vector<1x128xf32>
    %45 = vector.broadcast %44 : vector<1x128xf32> to vector<8x128xf32>
    %46 = arith.addf %43, %45 : vector<8x128xf32>
    %c0_94 = arith.constant 0 : index
    %c0_95 = arith.constant 0 : index
    %47 = vector.load %arg7[%c0_94, %c0_95] : memref<8x128xf32, #tpu.memory_space<vmem>>, vector<8x128xf32>
    tpu.vector_store %arg7[%c0_94, %c0_95], %46 {strides = array<i32>} : memref<8x128xf32, #tpu.memory_space<vmem>>, vector<8x128xf32>,
    return
  }
  func.func @transform_0(%arg0: i32) -> (i32, i32, i32, i32) {
    %c0_i32 = arith.constant 0 : i32
    %c0_i32_0 = arith.constant 0 : i32
    %c0_i32_1 = arith.constant 0 : i32
    %c0_i32_2 = arith.constant 0 : i32
    return %arg0, %c0_i32, %c0_i32_0, %c0_i32_1 : i32, i32, i32, i32
  }
  func.func @transform_1(%arg0: i32) -> (i32, i32) {
    %c0_i32 = arith.constant 0 : i32
    %c0_i32_0 = arith.constant 0 : i32
    %c0_i32_1 = arith.constant 0 : i32
    return %c0_i32, %c0_i32_0 : i32, i32
  }
  func.func @transform_2(%arg0: i32) -> (i32, i32) {
    %c0_i32 = arith.constant 0 : i32
    %c0_i32_0 = arith.constant 0 : i32
    %c0_i32_1 = arith.constant 0 : i32
    return %c0_i32, %c0_i32_0 : i32, i32
  }
  func.func @transform_3(%arg0: i32) -> (i32, i32) {
    %c0_i32 = arith.constant 0 : i32
    %c0_i32_0 = arith.constant 0 : i32
    %c0_i32_1 = arith.constant 0 : i32
    return %c0_i32, %c0_i32_0 : i32, i32
  }
  func.func @transform_4(%arg0: i32) -> (i32, i32) {
    %c0_i32 = arith.constant 0 : i32
    %c0_i32_0 = arith.constant 0 : i32
    %c0_i32_1 = arith.constant 0 : i32
    return %c0_i32, %c0_i32_0 : i32, i32
  }
  func.func @transform_5(%arg0: i32) -> (i32, i32) {
    %c0_i32 = arith.constant 0 : i32
    %c0_i32_0 = arith.constant 0 : i32
    %c0_i32_1 = arith.constant 0 : i32
    return %c0_i32, %c0_i32_0 : i32, i32
  }
  func.func @transform_6(%arg0: i32) -> (i32, i32) {
    %c0_i32 = arith.constant 0 : i32
    %c0_i32_0 = arith.constant 0 : i32
    return %arg0, %c0_i32 : i32, i32
  }
}

</mosaic_0001>

<llo_original>
// kernel: tpu_custom_call.1
$region0: #{tpu_custom_call.1}
  #allocation0 [shape = 'u32[]', space=smem, size = 0x4, offset = 0x4, fixed_abs, tag = 'smem constant byte address 0x4 - core index']
  #allocation1 [shape = 'u32[144,128]{1,0:T(1,128)}', space=vmem, size = 0x12000, scoped, tag = 'internal scratch']
  #allocation2 [shape = 'f32[8,8,16,16]{3,2,1,0:T(8,128)}', space=vmem, size = 0x80000, scoped, tag = 'scratch operand']
  #allocation3 [shape = 'f32[8,8,16,144]{3,2,1,0:T(8,128)}', space=vmem, size = 0x100000, scoped, tag = 'scratch operand']
  %s0 = inlined_call_operand.hbm [shape: bf16[8,8,16,16], index: 0, kind: input, shape index: {}]
  %s1 = inlined_call_operand.hbm [shape: bf16[144,128], index: 1, kind: input, shape index: {}]
  %s2 = inlined_call_operand.hbm [shape: f32[1,128], index: 2, kind: input, shape index: {}]
  %s3 = inlined_call_operand.hbm [shape: f32[128,128], index: 3, kind: input, shape index: {}]
  %s4 = inlined_call_operand.hbm [shape: bf16[128,128], index: 4, kind: input, shape index: {}]
  %s5 = inlined_call_operand.hbm [shape: f32[1,128], index: 5, kind: input, shape index: {}]
  %s6 = inlined_call_operand.hbm [shape: f32[8,128], index: 6, kind: output, shape index: {}]
  %s7 = sld [smem:[#allocation0]]
  $region58: #{tpu_custom_call.1} parent=0
    _
  %s9 = ssub.s32 1, %s7
  %s10 = scalar_select 0, %s9, %s7
  $region1: #{tpu_custom_call.1} parent=0
    #allocation4 [shape = 'u8[262144]{0}', space=vmem, size = 0x40000, scoped, tag = 'input window, operand 0, single buffered']
    #allocation5 [shape = 's32[1]{0}', space=sflag, size = 0x4, scoped, tag = 'scoped memory for tpu_custom_call.1']
    #allocation6 [shape = 's32[1]{0}', space=sflag, size = 0x4, scoped, tag = 'scoped memory for tpu_custom_call.1']
    #allocation7 [shape = 'u8[36864]{0}', space=vmem, size = 0x9000, scoped, tag = 'input window, operand 1, single buffered']
    #allocation8 [shape = 's32[1]{0}', space=sflag, size = 0x4, scoped, tag = 'scoped memory for tpu_custom_call.1']
    #allocation9 [shape = 'u8[512]{0}', space=vmem, size = 0x400, scoped, tag = 'input window, operand 2, single buffered']
    #allocation10 [shape = 'u8[65536]{0}', space=vmem, size = 0x10000, scoped, tag = 'input window, operand 3, single buffered']
    #allocation11 [shape = 's32[1]{0}', space=sflag, size = 0x4, scoped, tag = 'scoped memory for tpu_custom_call.1']
    #allocation12 [shape = 'u8[32768]{0}', space=vmem, size = 0x8000, scoped, tag = 'input window, operand 4, single buffered']
    #allocation13 [shape = 'u8[512]{0}', space=vmem, size = 0x400, scoped, tag = 'input window, operand 5, single buffered']
    #allocation14 [shape = 's32[1]{0}', space=sflag, size = 0x4, scoped, tag = 'scoped memory for tpu_custom_call.1']
    #allocation15 [shape = 'u8[4096]{0}', space=vmem, size = 0x1000, scoped, tag = 'output window, operand 0, single buffered']
    %11 = vsyncpa [#allocation5], 0
    %12 = vsyncpa [#allocation8], 0
    %13 = vsyncpa [#allocation11], 0
    %14 = vsyncpa [#allocation14], 0
    %15 = vsyncpa [#allocation6], 0
    // Predicated region
    $region2: #{tpu_custom_call.1} parent=1 // pred_check
      _
    $region3: #{tpu_custom_call.1} parent=1 // pred_check_branch
      %17 = sbr.rel (0) target = $region5
    $region4: #{tpu_custom_call.1} parent=1 // pred_region
      %s19 = ssub.s32 8192, 8192
      %20 = vsyncadd [#allocation5], %s19
      %s21 = sshll.u32 [#allocation4], 4
      %s22 = int_to_ptr.vmem [resolvable:$true] %s21
      %27 = dma.hbm_to_vmem [thread:$0]  %s0, 8192, %s22, [#allocation5], 64, 64, 4
    $region5: #{tpu_custom_call.1} parent=1 // pred_fallthru
      _
    // Predicated region
    $region6: #{tpu_custom_call.1} parent=1 // pred_check
      _
    $region7: #{tpu_custom_call.1} parent=1 // pred_check_branch
      %29 = sbr.rel (0) target = $region9
    $region8: #{tpu_custom_call.1} parent=1 // pred_region
      %s31 = ssub.s32 1152, 1152
      %32 = vsyncadd [#allocation8], %s31
      %s33 = sshll.u32 [#allocation7], 4
      %s34 = int_to_ptr.vmem [resolvable:$true] %s33
      %39 = dma.hbm_to_vmem [thread:$0]  %s1, 1152, %s34, [#allocation8], 64, 64, 4
    $region9: #{tpu_custom_call.1} parent=1 // pred_fallthru
      _
    // Predicated region
    $region10: #{tpu_custom_call.1} parent=1 // pred_check
      _
    $region11: #{tpu_custom_call.1} parent=1 // pred_check_branch
      %41 = sbr.rel (0) target = $region13
    $region12: #{tpu_custom_call.1} parent=1 // pred_region
      %s43 = ssub.s32 16, 16
      %44 = vsyncadd [#allocation8], %s43
      %s46 = sshll.u32 [#allocation9], 4
      %s47 = int_to_ptr.vmem [resolvable:$true] %s46
      %49 = dma.hbm_to_vmem [thread:$0]  %s2, 16, %s47, [#allocation8]
    $region13: #{tpu_custom_call.1} parent=1 // pred_fallthru
      _
    // Predicated region
    $region14: #{tpu_custom_call.1} parent=1 // pred_check
      _
    $region15: #{tpu_custom_call.1} parent=1 // pred_check_branch
      %51 = sbr.rel (0) target = $region17
    $region16: #{tpu_custom_call.1} parent=1 // pred_region
      %s53 = ssub.s32 2048, 2048
      %54 = vsyncadd [#allocation11], %s53
      %s55 = sshll.u32 [#allocation10], 4
      %s56 = int_to_ptr.vmem [resolvable:$true] %s55
      %61 = dma.hbm_to_vmem [thread:$0]  %s3, 2048, %s56, [#allocation11], 128, 128, 8
    $region17: #{tpu_custom_call.1} parent=1 // pred_fallthru
      _
    // Predicated region
    $region18: #{tpu_custom_call.1} parent=1 // pred_check
      _
    $region19: #{tpu_custom_call.1} parent=1 // pred_check_branch
      %63 = sbr.rel (0) target = $region21
    $region20: #{tpu_custom_call.1} parent=1 // pred_region
      %s65 = ssub.s32 1024, 1024
      %66 = vsyncadd [#allocation11], %s65
      %s67 = sshll.u32 [#allocation12], 4
      %s68 = int_to_ptr.vmem [resolvable:$true] %s67
      %73 = dma.hbm_to_vmem [thread:$0]  %s4, 1024, %s68, [#allocation11], 64, 64, 4
    $region21: #{tpu_custom_call.1} parent=1 // pred_fallthru
      _
    // Predicated region
    $region22: #{tpu_custom_call.1} parent=1 // pred_check
      _
    $region23: #{tpu_custom_call.1} parent=1 // pred_check_branch
      %75 = sbr.rel (0) target = $region25
    $region24: #{tpu_custom_call.1} parent=1 // pred_region
      %s77 = ssub.s32 16, 16
      %78 = vsyncadd [#allocation14], %s77
      %s80 = sshll.u32 [#allocation13], 4
      %s81 = int_to_ptr.vmem [resolvable:$true] %s80
      %83 = dma.hbm_to_vmem [thread:$0]  %s5, 16, %s81, [#allocation14]
    $region25: #{tpu_custom_call.1} parent=1 // pred_fallthru
      _
    // Predicated region
    $region26: #{tpu_custom_call.1} parent=1 // pred_check
      _
    $region27: #{tpu_custom_call.1} parent=1 // pred_check_branch
      %85 = sbr.rel (0) target = $region29
    $region28: #{tpu_custom_call.1} parent=1 // pred_region
      %86 = dma.done [#allocation5], 8192
    $region29: #{tpu_custom_call.1} parent=1 // pred_fallthru
      _
    // Predicated region
    $region30: #{tpu_custom_call.1} parent=1 // pred_check
      _
    $region31: #{tpu_custom_call.1} parent=1 // pred_check_branch
      %88 = sbr.rel (0) target = $region33
    $region32: #{tpu_custom_call.1} parent=1 // pred_region
      %89 = dma.done [#allocation8], 1152
    $region33: #{tpu_custom_call.1} parent=1 // pred_fallthru
      _
    // Predicated region
    $region34: #{tpu_custom_call.1} parent=1 // pred_check
      _
    $region35: #{tpu_custom_call.1} parent=1 // pred_check_branch
      %91 = sbr.rel (0) target = $region37
    $region36: #{tpu_custom_call.1} parent=1 // pred_region
      %92 = dma.done [#allocation8], 16
    $region37: #{tpu_custom_call.1} parent=1 // pred_fallthru
      _
    // Predicated region
    $region38: #{tpu_custom_call.1} parent=1 // pred_check
      _
    $region39: #{tpu_custom_call.1} parent=1 // pred_check_branch
      %94 = sbr.rel (0) target = $region41
    $region40: #{tpu_custom_call.1} parent=1 // pred_region
      %95 = dma.done [#allocation11], 2048
    $region41: #{tpu_custom_call.1} parent=1 // pred_fallthru
      _
    // Predicated region
    $region42: #{tpu_custom_call.1} parent=1 // pred_check
      _
    $region43: #{tpu_custom_call.1} parent=1 // pred_check_branch
      %97 = sbr.rel (0) target = $region45
    $region44: #{tpu_custom_call.1} parent=1 // pred_region
      %98 = dma.done [#allocation11], 1024
    $region45: #{tpu_custom_call.1} parent=1 // pred_fallthru
      _
    // Predicated region
    $region46: #{tpu_custom_call.1} parent=1 // pred_check
      _
    $region47: #{tpu_custom_call.1} parent=1 // pred_check_branch
      %100 = sbr.rel (0) target = $region49
    $region48: #{tpu_custom_call.1} parent=1 // pred_region
      %101 = dma.done [#allocation14], 16
    $region49: #{tpu_custom_call.1} parent=1 // pred_fallthru
      _
    %v103 = vld [vmem:[#allocation4] sm:$0xf]
    %v104 = vld [vmem:[#allocation4 + $0x4] sm:$0xf]
    %v105 = vld [vmem:[#allocation4 + $0x8] sm:$0xf]
    %v106 = vld [vmem:[#allocation4 + $0xc] sm:$0xf]
    %v107 = vld [vmem:[#allocation4 + $0x10] sm:$0xf]
    %v108 = vld [vmem:[#allocation4 + $0x14] sm:$0xf]
    %v109 = vld [vmem:[#allocation4 + $0x18] sm:$0xf]
    %v110 = vld [vmem:[#allocation4 + $0x1c] sm:$0xf]
    %v111 = vld [vmem:[#allocation4 + $0x20] sm:$0xf]
    %v112 = vld [vmem:[#allocation4 + $0x24] sm:$0xf]
    %v113 = vld [vmem:[#allocation4 + $0x28] sm:$0xf]
    %v114 = vld [vmem:[#allocation4 + $0x2c] sm:$0xf]
    %v115 = vld [vmem:[#allocation4 + $0x30] sm:$0xf]
    %v116 = vld [vmem:[#allocation4 + $0x34] sm:$0xf]
    %v117 = vld [vmem:[#allocation4 + $0x38] sm:$0xf]
    %v118 = vld [vmem:[#allocation4 + $0x3c] sm:$0xf]
    %v119 = vld [vmem:[#allocation4 + $0x40] sm:$0xf]
    %v120 = vld [vmem:[#allocation4 + $0x44] sm:$0xf]
    %v121 = vld [vmem:[#allocation4 + $0x48] sm:$0xf]
    %v122 = vld [vmem:[#allocation4 + $0x4c] sm:$0xf]
    %v123 = vld [vmem:[#allocation4 + $0x50] sm:$0xf]
    %v124 = vld [vmem:[#allocation4 + $0x54] sm:$0xf]
    %v125 = vld [vmem:[#allocation4 + $0x58] sm:$0xf]
    %v126 = vld [vmem:[#allocation4 + $0x5c] sm:$0xf]
    %v127 = vld [vmem:[#allocation4 + $0x60] sm:$0xf]
    %v128 = vld [vmem:[#allocation4 + $0x64] sm:$0xf]
    %v129 = vld [vmem:[#allocation4 + $0x68] sm:$0xf]
    %v130 = vld [vmem:[#allocation4 + $0x6c] sm:$0xf]
    %v131 = vld [vmem:[#allocation4 + $0x70] sm:$0xf]
    %v132 = vld [vmem:[#allocation4 + $0x74] sm:$0xf]
    %v133 = vld [vmem:[#allocation4 + $0x78] sm:$0xf]
    %v134 = vld [vmem:[#allocation4 + $0x7c] sm:$0xf]
    %v135 = vld [vmem:[#allocation4 + $0x80] sm:$0xf]
    %v136 = vld [vmem:[#allocation4 + $0x84] sm:$0xf]
    %v137 = vld [vmem:[#allocation4 + $0x88] sm:$0xf]
    %v138 = vld [vmem:[#allocation4 + $0x8c] sm:$0xf]
    %v139 = vld [vmem:[#allocation4 + $0x90] sm:$0xf]
    %v140 = vld [vmem:[#allocation4 + $0x94] sm:$0xf]
    %v141 = vld [vmem:[#allocation4 + $0x98] sm:$0xf]
    %v142 = vld [vmem:[#allocation4 + $0x9c] sm:$0xf]
    %v143 = vld [vmem:[#allocation4 + $0xa0] sm:$0xf]
    %v144 = vld [vmem:[#allocation4 + $0xa4] sm:$0xf]
    %v145 = vld [vmem:[#allocation4 + $0xa8] sm:$0xf]
    %v146 = vld [vmem:[#allocation4 + $0xac] sm:$0xf]
    %v147 = vld [vmem:[#allocation4 + $0xb0] sm:$0xf]
    %v148 = vld [vmem:[#allocation4 + $0xb4] sm:$0xf]
    %v149 = vld [vmem:[#allocation4 + $0xb8] sm:$0xf]
    %v150 = vld [vmem:[#allocation4 + $0xbc] sm:$0xf]
    %v151 = vld [vmem:[#allocation4 + $0xc0] sm:$0xf]
    %v152 = vld [vmem:[#allocation4 + $0xc4] sm:$0xf]
    %v153 = vld [vmem:[#allocation4 + $0xc8] sm:$0xf]
    %v154 = vld [vmem:[#allocation4 + $0xcc] sm:$0xf]
    %v155 = vld [vmem:[#allocation4 + $0xd0] sm:$0xf]
    %v156 = vld [vmem:[#allocation4 + $0xd4] sm:$0xf]
    %v157 = vld [vmem:[#allocation4 + $0xd8] sm:$0xf]
    %v158 = vld [vmem:[#allocation4 + $0xdc] sm:$0xf]
    %v159 = vld [vmem:[#allocation4 + $0xe0] sm:$0xf]
    %v160 = vld [vmem:[#allocation4 + $0xe4] sm:$0xf]
    %v161 = vld [vmem:[#allocation4 + $0xe8] sm:$0xf]
    %v162 = vld [vmem:[#allocation4 + $0xec] sm:$0xf]
    %v163 = vld [vmem:[#allocation4 + $0xf0] sm:$0xf]
    %v164 = vld [vmem:[#allocation4 + $0xf4] sm:$0xf]
    %v165 = vld [vmem:[#allocation4 + $0xf8] sm:$0xf]
    %v166 = vld [vmem:[#allocation4 + $0xfc] sm:$0xf]
    %v167 = vld [vmem:[#allocation4 + $0x100] sm:$0xf]
    %v168 = vld [vmem:[#allocation4 + $0x104] sm:$0xf]
    %v169 = vld [vmem:[#allocation4 + $0x108] sm:$0xf]
    %v170 = vld [vmem:[#allocation4 + $0x10c] sm:$0xf]
    %v171 = vld [vmem:[#allocation4 + $0x110] sm:$0xf]
    %v172 = vld [vmem:[#allocation4 + $0x114] sm:$0xf]
    %v173 = vld [vmem:[#allocation4 + $0x118] sm:$0xf]
    %v174 = vld [vmem:[#allocation4 + $0x11c] sm:$0xf]
    %v175 = vld [vmem:[#allocation4 + $0x120] sm:$0xf]
    %v176 = vld [vmem:[#allocation4 + $0x124] sm:$0xf]
    %v177 = vld [vmem:[#allocation4 + $0x128] sm:$0xf]
    %v178 = vld [vmem:[#allocation4 + $0x12c] sm:$0xf]
    %v179 = vld [vmem:[#allocation4 + $0x130] sm:$0xf]
    %v180 = vld [vmem:[#allocation4 + $0x134] sm:$0xf]
    %v181 = vld [vmem:[#allocation4 + $0x138] sm:$0xf]
    %v182 = vld [vmem:[#allocation4 + $0x13c] sm:$0xf]
    %v183 = vld [vmem:[#allocation4 + $0x140] sm:$0xf]
    %v184 = vld [vmem:[#allocation4 + $0x144] sm:$0xf]
    %v185 = vld [vmem:[#allocation4 + $0x148] sm:$0xf]
    %v186 = vld [vmem:[#allocation4 + $0x14c] sm:$0xf]
    %v187 = vld [vmem:[#allocation4 + $0x150] sm:$0xf]
    %v188 = vld [vmem:[#allocation4 + $0x154] sm:$0xf]
    %v189 = vld [vmem:[#allocation4 + $0x158] sm:$0xf]
    %v190 = vld [vmem:[#allocation4 + $0x15c] sm:$0xf]
    %v191 = vld [vmem:[#allocation4 + $0x160] sm:$0xf]
    %v192 = vld [vmem:[#allocation4 + $0x164] sm:$0xf]
    %v193 = vld [vmem:[#allocation4 + $0x168] sm:$0xf]
    %v194 = vld [vmem:[#allocation4 + $0x16c] sm:$0xf]
    %v195 = vld [vmem:[#allocation4 + $0x170] sm:$0xf]
    %v196 = vld [vmem:[#allocation4 + $0x174] sm:$0xf]
    %v197 = vld [vmem:[#allocation4 + $0x178] sm:$0xf]
    %v198 = vld [vmem:[#allocation4 + $0x17c] sm:$0xf]
    %v199 = vld [vmem:[#allocation4 + $0x180] sm:$0xf]
    %v200 = vld [vmem:[#allocation4 + $0x184] sm:$0xf]
    %v201 = vld [vmem:[#allocation4 + $0x188] sm:$0xf]
    %v202 = vld [vmem:[#allocation4 + $0x18c] sm:$0xf]
    %v203 = vld [vmem:[#allocation4 + $0x190] sm:$0xf]
    %v204 = vld [vmem:[#allocation4 + $0x194] sm:$0xf]
    %v205 = vld [vmem:[#allocation4 + $0x198] sm:$0xf]
    %v206 = vld [vmem:[#allocation4 + $0x19c] sm:$0xf]
    %v207 = vld [vmem:[#allocation4 + $0x1a0] sm:$0xf]
    %v208 = vld [vmem:[#allocation4 + $0x1a4] sm:$0xf]
    %v209 = vld [vmem:[#allocation4 + $0x1a8] sm:$0xf]
    %v210 = vld [vmem:[#allocation4 + $0x1ac] sm:$0xf]
    %v211 = vld [vmem:[#allocation4 + $0x1b0] sm:$0xf]
    %v212 = vld [vmem:[#allocation4 + $0x1b4] sm:$0xf]
    %v213 = vld [vmem:[#allocation4 + $0x1b8] sm:$0xf]
    %v214 = vld [vmem:[#allocation4 + $0x1bc] sm:$0xf]
    %v215 = vld [vmem:[#allocation4 + $0x1c0] sm:$0xf]
    %v216 = vld [vmem:[#allocation4 + $0x1c4] sm:$0xf]
    %v217 = vld [vmem:[#allocation4 + $0x1c8] sm:$0xf]
    %v218 = vld [vmem:[#allocation4 + $0x1cc] sm:$0xf]
    %v219 = vld [vmem:[#allocation4 + $0x1d0] sm:$0xf]
    %v220 = vld [vmem:[#allocation4 + $0x1d4] sm:$0xf]
    %v221 = vld [vmem:[#allocation4 + $0x1d8] sm:$0xf]
    %v222 = vld [vmem:[#allocation4 + $0x1dc] sm:$0xf]
    %v223 = vld [vmem:[#allocation4 + $0x1e0] sm:$0xf]
    %v224 = vld [vmem:[#allocation4 + $0x1e4] sm:$0xf]
    %v225 = vld [vmem:[#allocation4 + $0x1e8] sm:$0xf]
    %v226 = vld [vmem:[#allocation4 + $0x1ec] sm:$0xf]
    %v227 = vld [vmem:[#allocation4 + $0x1f0] sm:$0xf]
    %v228 = vld [vmem:[#allocation4 + $0x1f4] sm:$0xf]
    %v229 = vld [vmem:[#allocation4 + $0x1f8] sm:$0xf]
    %v230 = vld [vmem:[#allocation4 + $0x1fc] sm:$0xf]
    %v231 = vunpack.c.l.bf16 %v103
    %v232 = vunpack.c.l.bf16 %v104
    %v233 = vunpack.c.l.bf16 %v105
    %v234 = vunpack.c.l.bf16 %v106
    %v235 = vunpack.c.l.bf16 %v107
    %v236 = vunpack.c.l.bf16 %v108
    %v237 = vunpack.c.l.bf16 %v109
    %v238 = vunpack.c.l.bf16 %v110
    %v239 = vunpack.c.l.bf16 %v111
    %v240 = vunpack.c.l.bf16 %v112
    %v241 = vunpack.c.l.bf16 %v113
    %v242 = vunpack.c.l.bf16 %v114
    %v243 = vunpack.c.l.bf16 %v115
    %v244 = vunpack.c.l.bf16 %v116
    %v245 = vunpack.c.l.bf16 %v117
    %v246 = vunpack.c.l.bf16 %v118
    %v247 = vunpack.c.l.bf16 %v119
    %v248 = vunpack.c.l.bf16 %v120
    %v249 = vunpack.c.l.bf16 %v121
    %v250 = vunpack.c.l.bf16 %v122
    %v251 = vunpack.c.l.bf16 %v123
    %v252 = vunpack.c.l.bf16 %v124
    %v253 = vunpack.c.l.bf16 %v125
    %v254 = vunpack.c.l.bf16 %v126
    %v255 = vunpack.c.l.bf16 %v127
    %v256 = vunpack.c.l.bf16 %v128
    %v257 = vunpack.c.l.bf16 %v129
    %v258 = vunpack.c.l.bf16 %v130
    %v259 = vunpack.c.l.bf16 %v131
    %v260 = vunpack.c.l.bf16 %v132
    %v261 = vunpack.c.l.bf16 %v133
    %v262 = vunpack.c.l.bf16 %v134
    %v263 = vunpack.c.l.bf16 %v135
    %v264 = vunpack.c.l.bf16 %v136
    %v265 = vunpack.c.l.bf16 %v137
    %v266 = vunpack.c.l.bf16 %v138
    %v267 = vunpack.c.l.bf16 %v139
    %v268 = vunpack.c.l.bf16 %v140
    %v269 = vunpack.c.l.bf16 %v141
    %v270 = vunpack.c.l.bf16 %v142
    %v271 = vunpack.c.l.bf16 %v143
    %v272 = vunpack.c.l.bf16 %v144
    %v273 = vunpack.c.l.bf16 %v145
    %v274 = vunpack.c.l.bf16 %v146
    %v275 = vunpack.c.l.bf16 %v147
    %v276 = vunpack.c.l.bf16 %v148
    %v277 = vunpack.c.l.bf16 %v149
    %v278 = vunpack.c.l.bf16 %v150
    %v279 = vunpack.c.l.bf16 %v151
    %v280 = vunpack.c.l.bf16 %v152
    %v281 = vunpack.c.l.bf16 %v153
    %v282 = vunpack.c.l.bf16 %v154
    %v283 = vunpack.c.l.bf16 %v155
    %v284 = vunpack.c.l.bf16 %v156
    %v285 = vunpack.c.l.bf16 %v157
    %v286 = vunpack.c.l.bf16 %v158
    %v287 = vunpack.c.l.bf16 %v159
    %v288 = vunpack.c.l.bf16 %v160
    %v289 = vunpack.c.l.bf16 %v161
    %v290 = vunpack.c.l.bf16 %v162
    %v291 = vunpack.c.l.bf16 %v163
    %v292 = vunpack.c.l.bf16 %v164
    %v293 = vunpack.c.l.bf16 %v165
    %v294 = vunpack.c.l.bf16 %v166
    %v295 = vunpack.c.l.bf16 %v167
    %v296 = vunpack.c.l.bf16 %v168
    %v297 = vunpack.c.l.bf16 %v169
    %v298 = vunpack.c.l.bf16 %v170
    %v299 = vunpack.c.l.bf16 %v171
    %v300 = vunpack.c.l.bf16 %v172
    %v301 = vunpack.c.l.bf16 %v173
    %v302 = vunpack.c.l.bf16 %v174
    %v303 = vunpack.c.l.bf16 %v175
    %v304 = vunpack.c.l.bf16 %v176
    %v305 = vunpack.c.l.bf16 %v177
    %v306 = vunpack.c.l.bf16 %v178
    %v307 = vunpack.c.l.bf16 %v179
    %v308 = vunpack.c.l.bf16 %v180
    %v309 = vunpack.c.l.bf16 %v181
    %v310 = vunpack.c.l.bf16 %v182
    %v311 = vunpack.c.l.bf16 %v183
    %v312 = vunpack.c.l.bf16 %v184
    %v313 = vunpack.c.l.bf16 %v185
    %v314 = vunpack.c.l.bf16 %v186
    %v315 = vunpack.c.l.bf16 %v187
    %v316 = vunpack.c.l.bf16 %v188
    %v317 = vunpack.c.l.bf16 %v189
    %v318 = vunpack.c.l.bf16 %v190
    %v319 = vunpack.c.l.bf16 %v191
    %v320 = vunpack.c.l.bf16 %v192
    %v321 = vunpack.c.l.bf16 %v193
    %v322 = vunpack.c.l.bf16 %v194
    %v323 = vunpack.c.l.bf16 %v195
    %v324 = vunpack.c.l.bf16 %v196
    %v325 = vunpack.c.l.bf16 %v197
    %v326 = vunpack.c.l.bf16 %v198
    %v327 = vunpack.c.l.bf16 %v199
    %v328 = vunpack.c.l.bf16 %v200
    %v329 = vunpack.c.l.bf16 %v201
    %v330 = vunpack.c.l.bf16 %v202
    %v331 = vunpack.c.l.bf16 %v203
    %v332 = vunpack.c.l.bf16 %v204
    %v333 = vunpack.c.l.bf16 %v205
    %v334 = vunpack.c.l.bf16 %v206
    %v335 = vunpack.c.l.bf16 %v207
    %v336 = vunpack.c.l.bf16 %v208
    %v337 = vunpack.c.l.bf16 %v209
    %v338 = vunpack.c.l.bf16 %v210
    %v339 = vunpack.c.l.bf16 %v211
    %v340 = vunpack.c.l.bf16 %v212
    %v341 = vunpack.c.l.bf16 %v213
    %v342 = vunpack.c.l.bf16 %v214
    %v343 = vunpack.c.l.bf16 %v215
    %v344 = vunpack.c.l.bf16 %v216
    %v345 = vunpack.c.l.bf16 %v217
    %v346 = vunpack.c.l.bf16 %v218
    %v347 = vunpack.c.l.bf16 %v219
    %v348 = vunpack.c.l.bf16 %v220
    %v349 = vunpack.c.l.bf16 %v221
    %v350 = vunpack.c.l.bf16 %v222
    %v351 = vunpack.c.l.bf16 %v223
    %v352 = vunpack.c.l.bf16 %v224
    %v353 = vunpack.c.l.bf16 %v225
    %v354 = vunpack.c.l.bf16 %v226
    %v355 = vunpack.c.l.bf16 %v227
    %v356 = vunpack.c.l.bf16 %v228
    %v357 = vunpack.c.l.bf16 %v229
    %v358 = vunpack.c.l.bf16 %v230
    %vm359 = vcmask 130048
    %360 = vst.msk [vmem:[#allocation2] sm:$0xff] %vm359, %v231
    %361 = vst.msk [vmem:[#allocation2 + $0x8] sm:$0xff] %vm359, %v232
    %362 = vst.msk [vmem:[#allocation2 + $0x10] sm:$0xff] %vm359, %v233
    %363 = vst.msk [vmem:[#allocation2 + $0x18] sm:$0xff] %vm359, %v234
    %364 = vst.msk [vmem:[#allocation2 + $0x20] sm:$0xff] %vm359, %v235
    %365 = vst.msk [vmem:[#allocation2 + $0x28] sm:$0xff] %vm359, %v236
    %366 = vst.msk [vmem:[#allocation2 + $0x30] sm:$0xff] %vm359, %v237
    %367 = vst.msk [vmem:[#allocation2 + $0x38] sm:$0xff] %vm359, %v238
    %368 = vst.msk [vmem:[#allocation2 + $0x40] sm:$0xff] %vm359, %v239
    %369 = vst.msk [vmem:[#allocation2 + $0x48] sm:$0xff] %vm359, %v240
    %370 = vst.msk [vmem:[#allocation2 + $0x50] sm:$0xff] %vm359, %v241
    %371 = vst.msk [vmem:[#allocation2 + $0x58] sm:$0xff] %vm359, %v242
    %372 = vst.msk [vmem:[#allocation2 + $0x60] sm:$0xff] %vm359, %v243
    %373 = vst.msk [vmem:[#allocation2 + $0x68] sm:$0xff] %vm359, %v244
    %374 = vst.msk [vmem:[#allocation2 + $0x70] sm:$0xff] %vm359, %v245
    %375 = vst.msk [vmem:[#allocation2 + $0x78] sm:$0xff] %vm359, %v246
    %376 = vst.msk [vmem:[#allocation2 + $0x80] sm:$0xff] %vm359, %v247
    %377 = vst.msk [vmem:[#allocation2 + $0x88] sm:$0xff] %vm359, %v248
    %378 = vst.msk [vmem:[#allocation2 + $0x90] sm:$0xff] %vm359, %v249
    %379 = vst.msk [vmem:[#allocation2 + $0x98] sm:$0xff] %vm359, %v250
    %380 = vst.msk [vmem:[#allocation2 + $0xa0] sm:$0xff] %vm359, %v251
    %381 = vst.msk [vmem:[#allocation2 + $0xa8] sm:$0xff] %vm359, %v252
    %382 = vst.msk [vmem:[#allocation2 + $0xb0] sm:$0xff] %vm359, %v253
    %383 = vst.msk [vmem:[#allocation2 + $0xb8] sm:$0xff] %vm359, %v254
    %384 = vst.msk [vmem:[#allocation2 + $0xc0] sm:$0xff] %vm359, %v255
    %385 = vst.msk [vmem:[#allocation2 + $0xc8] sm:$0xff] %vm359, %v256
    %386 = vst.msk [vmem:[#allocation2 + $0xd0] sm:$0xff] %vm359, %v257
    %387 = vst.msk [vmem:[#allocation2 + $0xd8] sm:$0xff] %vm359, %v258
    %388 = vst.msk [vmem:[#allocation2 + $0xe0] sm:$0xff] %vm359, %v259
    %389 = vst.msk [vmem:[#allocation2 + $0xe8] sm:$0xff] %vm359, %v260
    %390 = vst.msk [vmem:[#allocation2 + $0xf0] sm:$0xff] %vm359, %v261
    %391 = vst.msk [vmem:[#allocation2 + $0xf8] sm:$0xff] %vm359, %v262
    %392 = vst.msk [vmem:[#allocation2 + $0x100] sm:$0xff] %vm359, %v263
    %393 = vst.msk [vmem:[#allocation2 + $0x108] sm:$0xff] %vm359, %v264
    %394 = vst.msk [vmem:[#allocation2 + $0x110] sm:$0xff] %vm359, %v265
    %395 = vst.msk [vmem:[#allocation2 + $0x118] sm:$0xff] %vm359, %v266
    %396 = vst.msk [vmem:[#allocation2 + $0x120] sm:$0xff] %vm359, %v267
    %397 = vst.msk [vmem:[#allocation2 + $0x128] sm:$0xff] %vm359, %v268
    %398 = vst.msk [vmem:[#allocation2 + $0x130] sm:$0xff] %vm359, %v269
    %399 = vst.msk [vmem:[#allocation2 + $0x138] sm:$0xff] %vm359, %v270
    %400 = vst.msk [vmem:[#allocation2 + $0x140] sm:$0xff] %vm359, %v271
    %401 = vst.msk [vmem:[#allocation2 + $0x148] sm:$0xff] %vm359, %v272
    %402 = vst.msk [vmem:[#allocation2 + $0x150] sm:$0xff] %vm359, %v273
    %403 = vst.msk [vmem:[#allocation2 + $0x158] sm:$0xff] %vm359, %v274
    %404 = vst.msk [vmem:[#allocation2 + $0x160] sm:$0xff] %vm359, %v275
    %405 = vst.msk [vmem:[#allocation2 + $0x168] sm:$0xff] %vm359, %v276
    %406 = vst.msk [vmem:[#allocation2 + $0x170] sm:$0xff] %vm359, %v277
    %407 = vst.msk [vmem:[#allocation2 + $0x178] sm:$0xff] %vm359, %v278
    %408 = vst.msk [vmem:[#allocation2 + $0x180] sm:$0xff] %vm359, %v279
    %409 = vst.msk [vmem:[#allocation2 + $0x188] sm:$0xff] %vm359, %v280
    %410 = vst.msk [vmem:[#allocation2 + $0x190] sm:$0xff] %vm359, %v281
    %411 = vst.msk [vmem:[#allocation2 + $0x198] sm:$0xff] %vm359, %v282
    %412 = vst.msk [vmem:[#allocation2 + $0x1a0] sm:$0xff] %vm359, %v283
    %413 = vst.msk [vmem:[#allocation2 + $0x1a8] sm:$0xff] %vm359, %v284
    %414 = vst.msk [vmem:[#allocation2 + $0x1b0] sm:$0xff] %vm359, %v285
    %415 = vst.msk [vmem:[#allocation2 + $0x1b8] sm:$0xff] %vm359, %v286
    %416 = vst.msk [vmem:[#allocation2 + $0x1c0] sm:$0xff] %vm359, %v287
    %417 = vst.msk [vmem:[#allocation2 + $0x1c8] sm:$0xff] %vm359, %v288
    %418 = vst.msk [vmem:[#allocation2 + $0x1d0] sm:$0xff] %vm359, %v289
    %419 = vst.msk [vmem:[#allocation2 + $0x1d8] sm:$0xff] %vm359, %v290
    %420 = vst.msk [vmem:[#allocation2 + $0x1e0] sm:$0xff] %vm359, %v291
    %421 = vst.msk [vmem:[#allocation2 + $0x1e8] sm:$0xff] %vm359, %v292
    %422 = vst.msk [vmem:[#allocation2 + $0x1f0] sm:$0xff] %vm359, %v293
    %423 = vst.msk [vmem:[#allocation2 + $0x1f8] sm:$0xff] %vm359, %v294
    %424 = vst.msk [vmem:[#allocation2 + $0x200] sm:$0xff] %vm359, %v295
    %425 = vst.msk [vmem:[#allocation2 + $0x208] sm:$0xff] %vm359, %v296
    %426 = vst.msk [vmem:[#allocation2 + $0x210] sm:$0xff] %vm359, %v297
    %427 = vst.msk [vmem:[#allocation2 + $0x218] sm:$0xff] %vm359, %v298
    %428 = vst.msk [vmem:[#allocation2 + $0x220] sm:$0xff] %vm359, %v299
    %429 = vst.msk [vmem:[#allocation2 + $0x228] sm:$0xff] %vm359, %v300
    %430 = vst.msk [vmem:[#allocation2 + $0x230] sm:$0xff] %vm359, %v301
    %431 = vst.msk [vmem:[#allocation2 + $0x238] sm:$0xff] %vm359, %v302
    %432 = vst.msk [vmem:[#allocation2 + $0x240] sm:$0xff] %vm359, %v303
    %433 = vst.msk [vmem:[#allocation2 + $0x248] sm:$0xff] %vm359, %v304
    %434 = vst.msk [vmem:[#allocation2 + $0x250] sm:$0xff] %vm359, %v305
    %435 = vst.msk [vmem:[#allocation2 + $0x258] sm:$0xff] %vm359, %v306
    %436 = vst.msk [vmem:[#allocation2 + $0x260] sm:$0xff] %vm359, %v307
    %437 = vst.msk [vmem:[#allocation2 + $0x268] sm:$0xff] %vm359, %v308
    %438 = vst.msk [vmem:[#allocation2 + $0x270] sm:$0xff] %vm359, %v309
    %439 = vst.msk [vmem:[#allocation2 + $0x278] sm:$0xff] %vm359, %v310
    %440 = vst.msk [vmem:[#allocation2 + $0x280] sm:$0xff] %vm359, %v311
    %441 = vst.msk [vmem:[#allocation2 + $0x288] sm:$0xff] %vm359, %v312
    %442 = vst.msk [vmem:[#allocation2 + $0x290] sm:$0xff] %vm359, %v313
    %443 = vst.msk [vmem:[#allocation2 + $0x298] sm:$0xff] %vm359, %v314
    %444 = vst.msk [vmem:[#allocation2 + $0x2a0] sm:$0xff] %vm359, %v315
    %445 = vst.msk [vmem:[#allocation2 + $0x2a8] sm:$0xff] %vm359, %v316
    %446 = vst.msk [vmem:[#allocation2 + $0x2b0] sm:$0xff] %vm359, %v317
    %447 = vst.msk [vmem:[#allocation2 + $0x2b8] sm:$0xff] %vm359, %v318
    %448 = vst.msk [vmem:[#allocation2 + $0x2c0] sm:$0xff] %vm359, %v319
    %449 = vst.msk [vmem:[#allocation2 + $0x2c8] sm:$0xff] %vm359, %v320
    %450 = vst.msk [vmem:[#allocation2 + $0x2d0] sm:$0xff] %vm359, %v321
    %451 = vst.msk [vmem:[#allocation2 + $0x2d8] sm:$0xff] %vm359, %v322
    %452 = vst.msk [vmem:[#allocation2 + $0x2e0] sm:$0xff] %vm359, %v323
    %453 = vst.msk [vmem:[#allocation2 + $0x2e8] sm:$0xff] %vm359, %v324
    %454 = vst.msk [vmem:[#allocation2 + $0x2f0] sm:$0xff] %vm359, %v325
    %455 = vst.msk [vmem:[#allocation2 + $0x2f8] sm:$0xff] %vm359, %v326
    %456 = vst.msk [vmem:[#allocation2 + $0x300] sm:$0xff] %vm359, %v327
    %457 = vst.msk [vmem:[#allocation2 + $0x308] sm:$0xff] %vm359, %v328
    %458 = vst.msk [vmem:[#allocation2 + $0x310] sm:$0xff] %vm359, %v329
    %459 = vst.msk [vmem:[#allocation2 + $0x318] sm:$0xff] %vm359, %v330
    %460 = vst.msk [vmem:[#allocation2 + $0x320] sm:$0xff] %vm359, %v331
    %461 = vst.msk [vmem:[#allocation2 + $0x328] sm:$0xff] %vm359, %v332
    %462 = vst.msk [vmem:[#allocation2 + $0x330] sm:$0xff] %vm359, %v333
    %463 = vst.msk [vmem:[#allocation2 + $0x338] sm:$0xff] %vm359, %v334
    %464 = vst.msk [vmem:[#allocation2 + $0x340] sm:$0xff] %vm359, %v335
    %465 = vst.msk [vmem:[#allocation2 + $0x348] sm:$0xff] %vm359, %v336
    %466 = vst.msk [vmem:[#allocation2 + $0x350] sm:$0xff] %vm359, %v337
    %467 = vst.msk [vmem:[#allocation2 + $0x358] sm:$0xff] %vm359, %v338
    %468 = vst.msk [vmem:[#allocation2 + $0x360] sm:$0xff] %vm359, %v339
    %469 = vst.msk [vmem:[#allocation2 + $0x368] sm:$0xff] %vm359, %v340
    %470 = vst.msk [vmem:[#allocation2 + $0x370] sm:$0xff] %vm359, %v341
    %471 = vst.msk [vmem:[#allocation2 + $0x378] sm:$0xff] %vm359, %v342
    %472 = vst.msk [vmem:[#allocation2 + $0x380] sm:$0xff] %vm359, %v343
    %473 = vst.msk [vmem:[#allocation2 + $0x388] sm:$0xff] %vm359, %v344
    %474 = vst.msk [vmem:[#allocation2 + $0x390] sm:$0xff] %vm359, %v345
    %475 = vst.msk [vmem:[#allocation2 + $0x398] sm:$0xff] %vm359, %v346
    %476 = vst.msk [vmem:[#allocation2 + $0x3a0] sm:$0xff] %vm359, %v347
    %477 = vst.msk [vmem:[#allocation2 + $0x3a8] sm:$0xff] %vm359, %v348
    %478 = vst.msk [vmem:[#allocation2 + $0x3b0] sm:$0xff] %vm359, %v349
    %479 = vst.msk [vmem:[#allocation2 + $0x3b8] sm:$0xff] %vm359, %v350
    %480 = vst.msk [vmem:[#allocation2 + $0x3c0] sm:$0xff] %vm359, %v351
    %481 = vst.msk [vmem:[#allocation2 + $0x3c8] sm:$0xff] %vm359, %v352
    %482 = vst.msk [vmem:[#allocation2 + $0x3d0] sm:$0xff] %vm359, %v353
    %483 = vst.msk [vmem:[#allocation2 + $0x3d8] sm:$0xff] %vm359, %v354
    %484 = vst.msk [vmem:[#allocation2 + $0x3e0] sm:$0xff] %vm359, %v355
    %485 = vst.msk [vmem:[#allocation2 + $0x3e8] sm:$0xff] %vm359, %v356
    %486 = vst.msk [vmem:[#allocation2 + $0x3f0] sm:$0xff] %vm359, %v357
    %487 = vst.msk [vmem:[#allocation2 + $0x3f8] sm:$0xff] %vm359, %v358
    %s488 = scalar_lea.vmem [#allocation3], 192
    %489 = vst [vmem:[%s488] sm:$0xff] 0.0
    %490 = vst.msk [vmem:[%s488 + $0x8] sm:$0xff] %vm359, 0.0
    %491 = vst [vmem:[%s488 + $0x10] sm:$0xff] 0.0
    %492 = vst.msk [vmem:[%s488 + $0x18] sm:$0xff] %vm359, 0.0
    %493 = vst [vmem:[%s488 + $0x20] sm:$0xff] 0.0
    %494 = vst.msk [vmem:[%s488 + $0x28] sm:$0xff] %vm359, 0.0
    %495 = vst [vmem:[%s488 + $0x30] sm:$0xff] 0.0
    %496 = vst.msk [vmem:[%s488 + $0x38] sm:$0xff] %vm359, 0.0
    %497 = vst [vmem:[%s488 + $0x100] sm:$0xff] 0.0
    %498 = vst.msk [vmem:[%s488 + $0x108] sm:$0xff] %vm359, 0.0
    %499 = vst [vmem:[%s488 + $0x110] sm:$0xff] 0.0
    %500 = vst.msk [vmem:[%s488 + $0x118] sm:$0xff] %vm359, 0.0
    %501 = vst [vmem:[%s488 + $0x120] sm:$0xff] 0.0
    %502 = vst.msk [vmem:[%s488 + $0x128] sm:$0xff] %vm359, 0.0
    %503 = vst [vmem:[%s488 + $0x130] sm:$0xff] 0.0
    %504 = vst.msk [vmem:[%s488 + $0x138] sm:$0xff] %vm359, 0.0
    %505 = vst [vmem:[%s488 + $0x200] sm:$0xff] 0.0
    %506 = vst.msk [vmem:[%s488 + $0x208] sm:$0xff] %vm359, 0.0
    %507 = vst [vmem:[%s488 + $0x210] sm:$0xff] 0.0
    %508 = vst.msk [vmem:[%s488 + $0x218] sm:$0xff] %vm359, 0.0
    %509 = vst [vmem:[%s488 + $0x220] sm:$0xff] 0.0
    %510 = vst.msk [vmem:[%s488 + $0x228] sm:$0xff] %vm359, 0.0
    %511 = vst [vmem:[%s488 + $0x230] sm:$0xff] 0.0
    %512 = vst.msk [vmem:[%s488 + $0x238] sm:$0xff] %vm359, 0.0
    %513 = vst [vmem:[%s488 + $0x300] sm:$0xff] 0.0
    %514 = vst.msk [vmem:[%s488 + $0x308] sm:$0xff] %vm359, 0.0
    %515 = vst [vmem:[%s488 + $0x310] sm:$0xff] 0.0
    %516 = vst.msk [vmem:[%s488 + $0x318] sm:$0xff] %vm359, 0.0
    %517 = vst [vmem:[%s488 + $0x320] sm:$0xff] 0.0
    %518 = vst.msk [vmem:[%s488 + $0x328] sm:$0xff] %vm359, 0.0
    %519 = vst [vmem:[%s488 + $0x330] sm:$0xff] 0.0
    %520 = vst.msk [vmem:[%s488 + $0x338] sm:$0xff] %vm359, 0.0
    %521 = vst [vmem:[%s488 + $0x400] sm:$0xff] 0.0
    %522 = vst.msk [vmem:[%s488 + $0x408] sm:$0xff] %vm359, 0.0
    %523 = vst [vmem:[%s488 + $0x410] sm:$0xff] 0.0
    %524 = vst.msk [vmem:[%s488 + $0x418] sm:$0xff] %vm359, 0.0
    %525 = vst [vmem:[%s488 + $0x420] sm:$0xff] 0.0
    %526 = vst.msk [vmem:[%s488 + $0x428] sm:$0xff] %vm359, 0.0
    %527 = vst [vmem:[%s488 + $0x430] sm:$0xff] 0.0
    %528 = vst.msk [vmem:[%s488 + $0x438] sm:$0xff] %vm359, 0.0
    %529 = vst [vmem:[%s488 + $0x500] sm:$0xff] 0.0
    %530 = vst.msk [vmem:[%s488 + $0x508] sm:$0xff] %vm359, 0.0
    %531 = vst [vmem:[%s488 + $0x510] sm:$0xff] 0.0
    %532 = vst.msk [vmem:[%s488 + $0x518] sm:$0xff] %vm359, 0.0
    %533 = vst [vmem:[%s488 + $0x520] sm:$0xff] 0.0
    %534 = vst.msk [vmem:[%s488 + $0x528] sm:$0xff] %vm359, 0.0
    %535 = vst [vmem:[%s488 + $0x530] sm:$0xff] 0.0
    %536 = vst.msk [vmem:[%s488 + $0x538] sm:$0xff] %vm359, 0.0
    %537 = vst [vmem:[%s488 + $0x600] sm:$0xff] 0.0
    %538 = vst.msk [vmem:[%s488 + $0x608] sm:$0xff] %vm359, 0.0
    %539 = vst [vmem:[%s488 + $0x610] sm:$0xff] 0.0
    %540 = vst.msk [vmem:[%s488 + $0x618] sm:$0xff] %vm359, 0.0
    %541 = vst [vmem:[%s488 + $0x620] sm:$0xff] 0.0
    %542 = vst.msk [vmem:[%s488 + $0x628] sm:$0xff] %vm359, 0.0
    %543 = vst [vmem:[%s488 + $0x630] sm:$0xff] 0.0
    %544 = vst.msk [vmem:[%s488 + $0x638] sm:$0xff] %vm359, 0.0
    %545 = vst [vmem:[%s488 + $0x700] sm:$0xff] 0.0
    %546 = vst.msk [vmem:[%s488 + $0x708] sm:$0xff] %vm359, 0.0
    %547 = vst [vmem:[%s488 + $0x710] sm:$0xff] 0.0
    %548 = vst.msk [vmem:[%s488 + $0x718] sm:$0xff] %vm359, 0.0
    %549 = vst [vmem:[%s488 + $0x720] sm:$0xff] 0.0
    %550 = vst.msk [vmem:[%s488 + $0x728] sm:$0xff] %vm359, 0.0
    %551 = vst [vmem:[%s488 + $0x730] sm:$0xff] 0.0
    %552 = vst.msk [vmem:[%s488 + $0x738] sm:$0xff] %vm359, 0.0
    %553 = vst [vmem:[#allocation3 + $0x10] sm:$0xc0] 0.0
    %vm554 = vcmask 130054
    %555 = vst.msk [vmem:[#allocation3 + $0x18] sm:$0xc0] %vm554, 0.0
    %556 = vst [vmem:[#allocation3 + $0x30] sm:$0xc0] 0.0
    %557 = vst.msk [vmem:[#allocation3 + $0x38] sm:$0xc0] %vm554, 0.0
    %558 = vst [vmem:[#allocation3 + $0x50] sm:$0xc0] 0.0
    %559 = vst.msk [vmem:[#allocation3 + $0x58] sm:$0xc0] %vm554, 0.0
    %560 = vst [vmem:[#allocation3 + $0x70] sm:$0xc0] 0.0
    %561 = vst.msk [vmem:[#allocation3 + $0x78] sm:$0xc0] %vm554, 0.0
    %562 = vst [vmem:[#allocation3 + $0x90] sm:$0xc0] 0.0
    %563 = vst.msk [vmem:[#allocation3 + $0x98] sm:$0xc0] %vm554, 0.0
    %564 = vst [vmem:[#allocation3 + $0xb0] sm:$0xc0] 0.0
    %565 = vst.msk [vmem:[#allocation3 + $0xb8] sm:$0xc0] %vm554, 0.0
    %566 = vst [vmem:[#allocation3 + $0x110] sm:$0xc0] 0.0
    %567 = vst.msk [vmem:[#allocation3 + $0x118] sm:$0xc0] %vm554, 0.0
    %568 = vst [vmem:[#allocation3 + $0x130] sm:$0xc0] 0.0
    %569 = vst.msk [vmem:[#allocation3 + $0x138] sm:$0xc0] %vm554, 0.0
    %570 = vst [vmem:[#allocation3 + $0x150] sm:$0xc0] 0.0
    %571 = vst.msk [vmem:[#allocation3 + $0x158] sm:$0xc0] %vm554, 0.0
    %572 = vst [vmem:[#allocation3 + $0x170] sm:$0xc0] 0.0
    %573 = vst.msk [vmem:[#allocation3 + $0x178] sm:$0xc0] %vm554, 0.0
    %574 = vst [vmem:[#allocation3 + $0x190] sm:$0xc0] 0.0
    %575 = vst.msk [vmem:[#allocation3 + $0x198] sm:$0xc0] %vm554, 0.0
    %576 = vst [vmem:[#allocation3 + $0x1b0] sm:$0xc0] 0.0
    %577 = vst.msk [vmem:[#allocation3 + $0x1b8] sm:$0xc0] %vm554, 0.0
    %578 = vst [vmem:[#allocation3 + $0x210] sm:$0xc0] 0.0
    %579 = vst.msk [vmem:[#allocation3 + $0x218] sm:$0xc0] %vm554, 0.0
    %580 = vst [vmem:[#allocation3 + $0x230] sm:$0xc0] 0.0
    %581 = vst.msk [vmem:[#allocation3 + $0x238] sm:$0xc0] %vm554, 0.0
    %582 = vst [vmem:[#allocation3 + $0x250] sm:$0xc0] 0.0
    %583 = vst.msk [vmem:[#allocation3 + $0x258] sm:$0xc0] %vm554, 0.0
    %584 = vst [vmem:[#allocation3 + $0x270] sm:$0xc0] 0.0
    %585 = vst.msk [vmem:[#allocation3 + $0x278] sm:$0xc0] %vm554, 0.0
    %586 = vst [vmem:[#allocation3 + $0x290] sm:$0xc0] 0.0
    %587 = vst.msk [vmem:[#allocation3 + $0x298] sm:$0xc0] %vm554, 0.0
    %588 = vst [vmem:[#allocation3 + $0x2b0] sm:$0xc0] 0.0
    %589 = vst.msk [vmem:[#allocation3 + $0x2b8] sm:$0xc0] %vm554, 0.0
    %590 = vst [vmem:[#allocation3 + $0x310] sm:$0xc0] 0.0
    %591 = vst.msk [vmem:[#allocation3 + $0x318] sm:$0xc0] %vm554, 0.0
    %592 = vst [vmem:[#allocation3 + $0x330] sm:$0xc0] 0.0
    %593 = vst.msk [vmem:[#allocation3 + $0x338] sm:$0xc0] %vm554, 0.0
    %594 = vst [vmem:[#allocation3 + $0x350] sm:$0xc0] 0.0
    %595 = vst.msk [vmem:[#allocation3 + $0x358] sm:$0xc0] %vm554, 0.0
    %596 = vst [vmem:[#allocation3 + $0x370] sm:$0xc0] 0.0
    %597 = vst.msk [vmem:[#allocation3 + $0x378] sm:$0xc0] %vm554, 0.0
    %598 = vst [vmem:[#allocation3 + $0x390] sm:$0xc0] 0.0
    %599 = vst.msk [vmem:[#allocation3 + $0x398] sm:$0xc0] %vm554, 0.0
    %600 = vst [vmem:[#allocation3 + $0x3b0] sm:$0xc0] 0.0
    %601 = vst.msk [vmem:[#allocation3 + $0x3b8] sm:$0xc0] %vm554, 0.0
    %602 = vst [vmem:[#allocation3 + $0x410] sm:$0xc0] 0.0
    %603 = vst.msk [vmem:[#allocation3 + $0x418] sm:$0xc0] %vm554, 0.0
    %604 = vst [vmem:[#allocation3 + $0x430] sm:$0xc0] 0.0
    %605 = vst.msk [vmem:[#allocation3 + $0x438] sm:$0xc0] %vm554, 0.0
    %606 = vst [vmem:[#allocation3 + $0x450] sm:$0xc0] 0.0
    %607 = vst.msk [vmem:[#allocation3 + $0x458] sm:$0xc0] %vm554, 0.0
    %608 = vst [vmem:[#allocation3 + $0x470] sm:$0xc0] 0.0
    %609 = vst.msk [vmem:[#allocation3 + $0x478] sm:$0xc0] %vm554, 0.0
    %610 = vst [vmem:[#allocation3 + $0x490] sm:$0xc0] 0.0
    %611 = vst.msk [vmem:[#allocation3 + $0x498] sm:$0xc0] %vm554, 0.0
    %612 = vst [vmem:[#allocation3 + $0x4b0] sm:$0xc0] 0.0
    %613 = vst.msk [vmem:[#allocation3 + $0x4b8] sm:$0xc0] %vm554, 0.0
    %614 = vst [vmem:[#allocation3 + $0x510] sm:$0xc0] 0.0
    %615 = vst.msk [vmem:[#allocation3 + $0x518] sm:$0xc0] %vm554, 0.0
    %616 = vst [vmem:[#allocation3 + $0x530] sm:$0xc0] 0.0
    %617 = vst.msk [vmem:[#allocation3 + $0x538] sm:$0xc0] %vm554, 0.0
    %618 = vst [vmem:[#allocation3 + $0x550] sm:$0xc0] 0.0
    %619 = vst.msk [vmem:[#allocation3 + $0x558] sm:$0xc0] %vm554, 0.0
    %620 = vst [vmem:[#allocation3 + $0x570] sm:$0xc0] 0.0
    %621 = vst.msk [vmem:[#allocation3 + $0x578] sm:$0xc0] %vm554, 0.0
    %622 = vst [vmem:[#allocation3 + $0x590] sm:$0xc0] 0.0
    %623 = vst.msk [vmem:[#allocation3 + $0x598] sm:$0xc0] %vm554, 0.0
    %624 = vst [vmem:[#allocation3 + $0x5b0] sm:$0xc0] 0.0
    %625 = vst.msk [vmem:[#allocation3 + $0x5b8] sm:$0xc0] %vm554, 0.0
    %626 = vst [vmem:[#allocation3 + $0x610] sm:$0xc0] 0.0
    %627 = vst.msk [vmem:[#allocation3 + $0x618] sm:$0xc0] %vm554, 0.0
    %628 = vst [vmem:[#allocation3 + $0x630] sm:$0xc0] 0.0
    %629 = vst.msk [vmem:[#allocation3 + $0x638] sm:$0xc0] %vm554, 0.0
    %630 = vst [vmem:[#allocation3 + $0x650] sm:$0xc0] 0.0
    %631 = vst.msk [vmem:[#allocation3 + $0x658] sm:$0xc0] %vm554, 0.0
    %632 = vst [vmem:[#allocation3 + $0x670] sm:$0xc0] 0.0
    %633 = vst.msk [vmem:[#allocation3 + $0x678] sm:$0xc0] %vm554, 0.0
    %634 = vst [vmem:[#allocation3 + $0x690] sm:$0xc0] 0.0
    %635 = vst.msk [vmem:[#allocation3 + $0x698] sm:$0xc0] %vm554, 0.0
    %636 = vst [vmem:[#allocation3 + $0x6b0] sm:$0xc0] 0.0
    %637 = vst.msk [vmem:[#allocation3 + $0x6b8] sm:$0xc0] %vm554, 0.0
    %638 = vst [vmem:[#allocation3 + $0x710] sm:$0xc0] 0.0
    %639 = vst.msk [vmem:[#allocation3 + $0x718] sm:$0xc0] %vm554, 0.0
    %640 = vst [vmem:[#allocation3 + $0x730] sm:$0xc0] 0.0
    %641 = vst.msk [vmem:[#allocation3 + $0x738] sm:$0xc0] %vm554, 0.0
    %642 = vst [vmem:[#allocation3 + $0x750] sm:$0xc0] 0.0
    %643 = vst.msk [vmem:[#allocation3 + $0x758] sm:$0xc0] %vm554, 0.0
    %644 = vst [vmem:[#allocation3 + $0x770] sm:$0xc0] 0.0
    %645 = vst.msk [vmem:[#allocation3 + $0x778] sm:$0xc0] %vm554, 0.0
    %646 = vst [vmem:[#allocation3 + $0x790] sm:$0xc0] 0.0
    %647 = vst.msk [vmem:[#allocation3 + $0x798] sm:$0xc0] %vm554, 0.0
    %648 = vst [vmem:[#allocation3 + $0x7b0] sm:$0xc0] 0.0
    %649 = vst.msk [vmem:[#allocation3 + $0x7b8] sm:$0xc0] %vm554, 0.0
    %v650 = vld [vmem:[#allocation2] sm:$0xff]
    %v651 = vld [vmem:[#allocation2 + $0x8] sm:$0xff]
    %v652 = vld [vmem:[#allocation2 + $0x10] sm:$0xff]
    %v653 = vld [vmem:[#allocation2 + $0x18] sm:$0xff]
    %v654 = vld [vmem:[#allocation2 + $0x20] sm:$0xff]
    %v655 = vld [vmem:[#allocation2 + $0x28] sm:$0xff]
    %v656 = vld [vmem:[#allocation2 + $0x30] sm:$0xff]
    %v657 = vld [vmem:[#allocation2 + $0x38] sm:$0xff]
    %v658 = vld [vmem:[#allocation2 + $0x40] sm:$0xff]
    %v659 = vld [vmem:[#allocation2 + $0x48] sm:$0xff]
    %v660 = vld [vmem:[#allocation2 + $0x50] sm:$0xff]
    %v661 = vld [vmem:[#allocation2 + $0x58] sm:$0xff]
    %v662 = vld [vmem:[#allocation2 + $0x60] sm:$0xff]
    %v663 = vld [vmem:[#allocation2 + $0x68] sm:$0xff]
    %v664 = vld [vmem:[#allocation2 + $0x70] sm:$0xff]
    %v665 = vld [vmem:[#allocation2 + $0x78] sm:$0xff]
    %v666 = vld [vmem:[#allocation2 + $0x80] sm:$0xff]
    %v667 = vld [vmem:[#allocation2 + $0x88] sm:$0xff]
    %v668 = vld [vmem:[#allocation2 + $0x90] sm:$0xff]
    %v669 = vld [vmem:[#allocation2 + $0x98] sm:$0xff]
    %v670 = vld [vmem:[#allocation2 + $0xa0] sm:$0xff]
    %v671 = vld [vmem:[#allocation2 + $0xa8] sm:$0xff]
    %v672 = vld [vmem:[#allocation2 + $0xb0] sm:$0xff]
    %v673 = vld [vmem:[#allocation2 + $0xb8] sm:$0xff]
    %v674 = vld [vmem:[#allocation2 + $0xc0] sm:$0xff]
    %v675 = vld [vmem:[#allocation2 + $0xc8] sm:$0xff]
    %v676 = vld [vmem:[#allocation2 + $0xd0] sm:$0xff]
    %v677 = vld [vmem:[#allocation2 + $0xd8] sm:$0xff]
    %v678 = vld [vmem:[#allocation2 + $0xe0] sm:$0xff]
    %v679 = vld [vmem:[#allocation2 + $0xe8] sm:$0xff]
    %v680 = vld [vmem:[#allocation2 + $0xf0] sm:$0xff]
    %v681 = vld [vmem:[#allocation2 + $0xf8] sm:$0xff]
    %v682 = vld [vmem:[#allocation2 + $0x100] sm:$0xff]
    %v683 = vld [vmem:[#allocation2 + $0x108] sm:$0xff]
    %v684 = vld [vmem:[#allocation2 + $0x110] sm:$0xff]
    %v685 = vld [vmem:[#allocation2 + $0x118] sm:$0xff]
    %v686 = vld [vmem:[#allocation2 + $0x120] sm:$0xff]
    %v687 = vld [vmem:[#allocation2 + $0x128] sm:$0xff]
    %v688 = vld [vmem:[#allocation2 + $0x130] sm:$0xff]
    %v689 = vld [vmem:[#allocation2 + $0x138] sm:$0xff]
    %v690 = vld [vmem:[#allocation2 + $0x140] sm:$0xff]
    %v691 = vld [vmem:[#allocation2 + $0x148] sm:$0xff]
    %v692 = vld [vmem:[#allocation2 + $0x150] sm:$0xff]
    %v693 = vld [vmem:[#allocation2 + $0x158] sm:$0xff]
    %v694 = vld [vmem:[#allocation2 + $0x160] sm:$0xff]
    %v695 = vld [vmem:[#allocation2 + $0x168] sm:$0xff]
    %v696 = vld [vmem:[#allocation2 + $0x170] sm:$0xff]
    %v697 = vld [vmem:[#allocation2 + $0x178] sm:$0xff]
    %v698 = vld [vmem:[#allocation2 + $0x180] sm:$0xff]
    %v699 = vld [vmem:[#allocation2 + $0x188] sm:$0xff]
    %v700 = vld [vmem:[#allocation2 + $0x190] sm:$0xff]
    %v701 = vld [vmem:[#allocation2 + $0x198] sm:$0xff]
    %v702 = vld [vmem:[#allocation2 + $0x1a0] sm:$0xff]
    %v703 = vld [vmem:[#allocation2 + $0x1a8] sm:$0xff]
    %v704 = vld [vmem:[#allocation2 + $0x1b0] sm:$0xff]
    %v705 = vld [vmem:[#allocation2 + $0x1b8] sm:$0xff]
    %v706 = vld [vmem:[#allocation2 + $0x1c0] sm:$0xff]
    %v707 = vld [vmem:[#allocation2 + $0x1c8] sm:$0xff]
    %v708 = vld [vmem:[#allocation2 + $0x1d0] sm:$0xff]
    %v709 = vld [vmem:[#allocation2 + $0x1d8] sm:$0xff]
    %v710 = vld [vmem:[#allocation2 + $0x1e0] sm:$0xff]
    %v711 = vld [vmem:[#allocation2 + $0x1e8] sm:$0xff]
    %v712 = vld [vmem:[#allocation2 + $0x1f0] sm:$0xff]
    %v713 = vld [vmem:[#allocation2 + $0x1f8] sm:$0xff]
    %v714 = vld [vmem:[#allocation2 + $0x200] sm:$0xff]
    %v715 = vld [vmem:[#allocation2 + $0x208] sm:$0xff]
    %v716 = vld [vmem:[#allocation2 + $0x210] sm:$0xff]
    %v717 = vld [vmem:[#allocation2 + $0x218] sm:$0xff]
    %v718 = vld [vmem:[#allocation2 + $0x220] sm:$0xff]
    %v719 = vld [vmem:[#allocation2 + $0x228] sm:$0xff]
    %v720 = vld [vmem:[#allocation2 + $0x230] sm:$0xff]
    %v721 = vld [vmem:[#allocation2 + $0x238] sm:$0xff]
    %v722 = vld [vmem:[#allocation2 + $0x240] sm:$0xff]
    %v723 = vld [vmem:[#allocation2 + $0x248] sm:$0xff]
    %v724 = vld [vmem:[#allocation2 + $0x250] sm:$0xff]
    %v725 = vld [vmem:[#allocation2 + $0x258] sm:$0xff]
    %v726 = vld [vmem:[#allocation2 + $0x260] sm:$0xff]
    %v727 = vld [vmem:[#allocation2 + $0x268] sm:$0xff]
    %v728 = vld [vmem:[#allocation2 + $0x270] sm:$0xff]
    %v729 = vld [vmem:[#allocation2 + $0x278] sm:$0xff]
    %v730 = vld [vmem:[#allocation2 + $0x280] sm:$0xff]
    %v731 = vld [vmem:[#allocation2 + $0x288] sm:$0xff]
    %v732 = vld [vmem:[#allocation2 + $0x290] sm:$0xff]
    %v733 = vld [vmem:[#allocation2 + $0x298] sm:$0xff]
    %v734 = vld [vmem:[#allocation2 + $0x2a0] sm:$0xff]
    %v735 = vld [vmem:[#allocation2 + $0x2a8] sm:$0xff]
    %v736 = vld [vmem:[#allocation2 + $0x2b0] sm:$0xff]
    %v737 = vld [vmem:[#allocation2 + $0x2b8] sm:$0xff]
    %v738 = vld [vmem:[#allocation2 + $0x2c0] sm:$0xff]
    %v739 = vld [vmem:[#allocation2 + $0x2c8] sm:$0xff]
    %v740 = vld [vmem:[#allocation2 + $0x2d0] sm:$0xff]
    %v741 = vld [vmem:[#allocation2 + $0x2d8] sm:$0xff]
    %v742 = vld [vmem:[#allocation2 + $0x2e0] sm:$0xff]
    %v743 = vld [vmem:[#allocation2 + $0x2e8] sm:$0xff]
    %v744 = vld [vmem:[#allocation2 + $0x2f0] sm:$0xff]
    %v745 = vld [vmem:[#allocation2 + $0x2f8] sm:$0xff]
    %v746 = vld [vmem:[#allocation2 + $0x300] sm:$0xff]
    %v747 = vld [vmem:[#allocation2 + $0x308] sm:$0xff]
    %v748 = vld [vmem:[#allocation2 + $0x310] sm:$0xff]
    %v749 = vld [vmem:[#allocation2 + $0x318] sm:$0xff]
    %v750 = vld [vmem:[#allocation2 + $0x320] sm:$0xff]
    %v751 = vld [vmem:[#allocation2 + $0x328] sm:$0xff]
    %v752 = vld [vmem:[#allocation2 + $0x330] sm:$0xff]
    %v753 = vld [vmem:[#allocation2 + $0x338] sm:$0xff]
    %v754 = vld [vmem:[#allocation2 + $0x340] sm:$0xff]
    %v755 = vld [vmem:[#allocation2 + $0x348] sm:$0xff]
    %v756 = vld [vmem:[#allocation2 + $0x350] sm:$0xff]
    %v757 = vld [vmem:[#allocation2 + $0x358] sm:$0xff]
    %v758 = vld [vmem:[#allocation2 + $0x360] sm:$0xff]
    %v759 = vld [vmem:[#allocation2 + $0x368] sm:$0xff]
    %v760 = vld [vmem:[#allocation2 + $0x370] sm:$0xff]
    %v761 = vld [vmem:[#allocation2 + $0x378] sm:$0xff]
    %v762 = vld [vmem:[#allocation2 + $0x380] sm:$0xff]
    %v763 = vld [vmem:[#allocation2 + $0x388] sm:$0xff]
    %v764 = vld [vmem:[#allocation2 + $0x390] sm:$0xff]
    %v765 = vld [vmem:[#allocation2 + $0x398] sm:$0xff]
    %v766 = vld [vmem:[#allocation2 + $0x3a0] sm:$0xff]
    %v767 = vld [vmem:[#allocation2 + $0x3a8] sm:$0xff]
    %v768 = vld [vmem:[#allocation2 + $0x3b0] sm:$0xff]
    %v769 = vld [vmem:[#allocation2 + $0x3b8] sm:$0xff]
    %v770 = vld [vmem:[#allocation2 + $0x3c0] sm:$0xff]
    %v771 = vld [vmem:[#allocation2 + $0x3c8] sm:$0xff]
    %v772 = vld [vmem:[#allocation2 + $0x3d0] sm:$0xff]
    %v773 = vld [vmem:[#allocation2 + $0x3d8] sm:$0xff]
    %v774 = vld [vmem:[#allocation2 + $0x3e0] sm:$0xff]
    %v775 = vld [vmem:[#allocation2 + $0x3e8] sm:$0xff]
    %v776 = vld [vmem:[#allocation2 + $0x3f0] sm:$0xff]
    %v777 = vld [vmem:[#allocation2 + $0x3f8] sm:$0xff]
    %778 = vst.msk [vmem:[#allocation3] sm:$0xff] %vm359, %v650
    %779 = vst.msk [vmem:[#allocation3 + $0x10] sm:$0xff] %vm359, %v651
    %780 = vst.msk [vmem:[#allocation3 + $0x20] sm:$0xff] %vm359, %v652
    %781 = vst.msk [vmem:[#allocation3 + $0x30] sm:$0xff] %vm359, %v653
    %782 = vst.msk [vmem:[#allocation3 + $0x40] sm:$0xff] %vm359, %v654
    %783 = vst.msk [vmem:[#allocation3 + $0x50] sm:$0xff] %vm359, %v655
    %784 = vst.msk [vmem:[#allocation3 + $0x60] sm:$0xff] %vm359, %v656
    %785 = vst.msk [vmem:[#allocation3 + $0x70] sm:$0xff] %vm359, %v657
    %786 = vst.msk [vmem:[#allocation3 + $0x80] sm:$0xff] %vm359, %v658
    %787 = vst.msk [vmem:[#allocation3 + $0x90] sm:$0xff] %vm359, %v659
    %788 = vst.msk [vmem:[#allocation3 + $0xa0] sm:$0xff] %vm359, %v660
    %789 = vst.msk [vmem:[#allocation3 + $0xb0] sm:$0xff] %vm359, %v661
    %790 = vst.msk [vmem:[#allocation3 + $0xc0] sm:$0xff] %vm359, %v662
    %791 = vst.msk [vmem:[#allocation3 + $0xd0] sm:$0xff] %vm359, %v663
    %792 = vst.msk [vmem:[#allocation3 + $0xe0] sm:$0xff] %vm359, %v664
    %793 = vst.msk [vmem:[#allocation3 + $0xf0] sm:$0xff] %vm359, %v665
    %794 = vst.msk [vmem:[#allocation3 + $0x100] sm:$0xff] %vm359, %v666
    %795 = vst.msk [vmem:[#allocation3 + $0x110] sm:$0xff] %vm359, %v667
    %796 = vst.msk [vmem:[#allocation3 + $0x120] sm:$0xff] %vm359, %v668
    %797 = vst.msk [vmem:[#allocation3 + $0x130] sm:$0xff] %vm359, %v669
    %798 = vst.msk [vmem:[#allocation3 + $0x140] sm:$0xff] %vm359, %v670
    %799 = vst.msk [vmem:[#allocation3 + $0x150] sm:$0xff] %vm359, %v671
    %800 = vst.msk [vmem:[#allocation3 + $0x160] sm:$0xff] %vm359, %v672
    %801 = vst.msk [vmem:[#allocation3 + $0x170] sm:$0xff] %vm359, %v673
    %802 = vst.msk [vmem:[#allocation3 + $0x180] sm:$0xff] %vm359, %v674
    %803 = vst.msk [vmem:[#allocation3 + $0x190] sm:$0xff] %vm359, %v675
    %804 = vst.msk [vmem:[#allocation3 + $0x1a0] sm:$0xff] %vm359, %v676
    %805 = vst.msk [vmem:[#allocation3 + $0x1b0] sm:$0xff] %vm359, %v677
    %806 = vst.msk [vmem:[#allocation3 + $0x1c0] sm:$0xff] %vm359, %v678
    %807 = vst.msk [vmem:[#allocation3 + $0x1d0] sm:$0xff] %vm359, %v679
    %808 = vst.msk [vmem:[#allocation3 + $0x1e0] sm:$0xff] %vm359, %v680
    %809 = vst.msk [vmem:[#allocation3 + $0x1f0] sm:$0xff] %vm359, %v681
    %810 = vst.msk [vmem:[#allocation3 + $0x200] sm:$0xff] %vm359, %v682
    %811 = vst.msk [vmem:[#allocation3 + $0x210] sm:$0xff] %vm359, %v683
    %812 = vst.msk [vmem:[#allocation3 + $0x220] sm:$0xff] %vm359, %v684
    %813 = vst.msk [vmem:[#allocation3 + $0x230] sm:$0xff] %vm359, %v685
    %814 = vst.msk [vmem:[#allocation3 + $0x240] sm:$0xff] %vm359, %v686
    %815 = vst.msk [vmem:[#allocation3 + $0x250] sm:$0xff] %vm359, %v687
    %816 = vst.msk [vmem:[#allocation3 + $0x260] sm:$0xff] %vm359, %v688
    %817 = vst.msk [vmem:[#allocation3 + $0x270] sm:$0xff] %vm359, %v689
    %818 = vst.msk [vmem:[#allocation3 + $0x280] sm:$0xff] %vm359, %v690
    %819 = vst.msk [vmem:[#allocation3 + $0x290] sm:$0xff] %vm359, %v691
    %820 = vst.msk [vmem:[#allocation3 + $0x2a0] sm:$0xff] %vm359, %v692
    %821 = vst.msk [vmem:[#allocation3 + $0x2b0] sm:$0xff] %vm359, %v693
    %822 = vst.msk [vmem:[#allocation3 + $0x2c0] sm:$0xff] %vm359, %v694
    %823 = vst.msk [vmem:[#allocation3 + $0x2d0] sm:$0xff] %vm359, %v695
    %824 = vst.msk [vmem:[#allocation3 + $0x2e0] sm:$0xff] %vm359, %v696
    %825 = vst.msk [vmem:[#allocation3 + $0x2f0] sm:$0xff] %vm359, %v697
    %826 = vst.msk [vmem:[#allocation3 + $0x300] sm:$0xff] %vm359, %v698
    %827 = vst.msk [vmem:[#allocation3 + $0x310] sm:$0xff] %vm359, %v699
    %828 = vst.msk [vmem:[#allocation3 + $0x320] sm:$0xff] %vm359, %v700
    %829 = vst.msk [vmem:[#allocation3 + $0x330] sm:$0xff] %vm359, %v701
    %830 = vst.msk [vmem:[#allocation3 + $0x340] sm:$0xff] %vm359, %v702
    %831 = vst.msk [vmem:[#allocation3 + $0x350] sm:$0xff] %vm359, %v703
    %832 = vst.msk [vmem:[#allocation3 + $0x360] sm:$0xff] %vm359, %v704
    %833 = vst.msk [vmem:[#allocation3 + $0x370] sm:$0xff] %vm359, %v705
    %834 = vst.msk [vmem:[#allocation3 + $0x380] sm:$0xff] %vm359, %v706
    %835 = vst.msk [vmem:[#allocation3 + $0x390] sm:$0xff] %vm359, %v707
    %836 = vst.msk [vmem:[#allocation3 + $0x3a0] sm:$0xff] %vm359, %v708
    %837 = vst.msk [vmem:[#allocation3 + $0x3b0] sm:$0xff] %vm359, %v709
    %838 = vst.msk [vmem:[#allocation3 + $0x3c0] sm:$0xff] %vm359, %v710
    %839 = vst.msk [vmem:[#allocation3 + $0x3d0] sm:$0xff] %vm359, %v711
    %840 = vst.msk [vmem:[#allocation3 + $0x3e0] sm:$0xff] %vm359, %v712
    %841 = vst.msk [vmem:[#allocation3 + $0x3f0] sm:$0xff] %vm359, %v713
    %842 = vst.msk [vmem:[#allocation3 + $0x400] sm:$0xff] %vm359, %v714
    %843 = vst.msk [vmem:[#allocation3 + $0x410] sm:$0xff] %vm359, %v715
    %844 = vst.msk [vmem:[#allocation3 + $0x420] sm:$0xff] %vm359, %v716
    %845 = vst.msk [vmem:[#allocation3 + $0x430] sm:$0xff] %vm359, %v717
    %846 = vst.msk [vmem:[#allocation3 + $0x440] sm:$0xff] %vm359, %v718
    %847 = vst.msk [vmem:[#allocation3 + $0x450] sm:$0xff] %vm359, %v719
    %848 = vst.msk [vmem:[#allocation3 + $0x460] sm:$0xff] %vm359, %v720
    %849 = vst.msk [vmem:[#allocation3 + $0x470] sm:$0xff] %vm359, %v721
    %850 = vst.msk [vmem:[#allocation3 + $0x480] sm:$0xff] %vm359, %v722
    %851 = vst.msk [vmem:[#allocation3 + $0x490] sm:$0xff] %vm359, %v723
    %852 = vst.msk [vmem:[#allocation3 + $0x4a0] sm:$0xff] %vm359, %v724
    %853 = vst.msk [vmem:[#allocation3 + $0x4b0] sm:$0xff] %vm359, %v725
    %854 = vst.msk [vmem:[#allocation3 + $0x4c0] sm:$0xff] %vm359, %v726
    %855 = vst.msk [vmem:[#allocation3 + $0x4d0] sm:$0xff] %vm359, %v727
    %856 = vst.msk [vmem:[#allocation3 + $0x4e0] sm:$0xff] %vm359, %v728
    %857 = vst.msk [vmem:[#allocation3 + $0x4f0] sm:$0xff] %vm359, %v729
    %858 = vst.msk [vmem:[#allocation3 + $0x500] sm:$0xff] %vm359, %v730
    %859 = vst.msk [vmem:[#allocation3 + $0x510] sm:$0xff] %vm359, %v731
    %860 = vst.msk [vmem:[#allocation3 + $0x520] sm:$0xff] %vm359, %v732
    %861 = vst.msk [vmem:[#allocation3 + $0x530] sm:$0xff] %vm359, %v733
    %862 = vst.msk [vmem:[#allocation3 + $0x540] sm:$0xff] %vm359, %v734
    %863 = vst.msk [vmem:[#allocation3 + $0x550] sm:$0xff] %vm359, %v735
    %864 = vst.msk [vmem:[#allocation3 + $0x560] sm:$0xff] %vm359, %v736
    %865 = vst.msk [vmem:[#allocation3 + $0x570] sm:$0xff] %vm359, %v737
    %866 = vst.msk [vmem:[#allocation3 + $0x580] sm:$0xff] %vm359, %v738
    %867 = vst.msk [vmem:[#allocation3 + $0x590] sm:$0xff] %vm359, %v739
    %868 = vst.msk [vmem:[#allocation3 + $0x5a0] sm:$0xff] %vm359, %v740
    %869 = vst.msk [vmem:[#allocation3 + $0x5b0] sm:$0xff] %vm359, %v741
    %870 = vst.msk [vmem:[#allocation3 + $0x5c0] sm:$0xff] %vm359, %v742
    %871 = vst.msk [vmem:[#allocation3 + $0x5d0] sm:$0xff] %vm359, %v743
    %872 = vst.msk [vmem:[#allocation3 + $0x5e0] sm:$0xff] %vm359, %v744
    %873 = vst.msk [vmem:[#allocation3 + $0x5f0] sm:$0xff] %vm359, %v745
    %874 = vst.msk [vmem:[#allocation3 + $0x600] sm:$0xff] %vm359, %v746
    %875 = vst.msk [vmem:[#allocation3 + $0x610] sm:$0xff] %vm359, %v747
    %876 = vst.msk [vmem:[#allocation3 + $0x620] sm:$0xff] %vm359, %v748
    %877 = vst.msk [vmem:[#allocation3 + $0x630] sm:$0xff] %vm359, %v749
    %878 = vst.msk [vmem:[#allocation3 + $0x640] sm:$0xff] %vm359, %v750
    %879 = vst.msk [vmem:[#allocation3 + $0x650] sm:$0xff] %vm359, %v751
    %880 = vst.msk [vmem:[#allocation3 + $0x660] sm:$0xff] %vm359, %v752
    %881 = vst.msk [vmem:[#allocation3 + $0x670] sm:$0xff] %vm359, %v753
    %882 = vst.msk [vmem:[#allocation3 + $0x680] sm:$0xff] %vm359, %v754
    %883 = vst.msk [vmem:[#allocation3 + $0x690] sm:$0xff] %vm359, %v755
    %884 = vst.msk [vmem:[#allocation3 + $0x6a0] sm:$0xff] %vm359, %v756
    %885 = vst.msk [vmem:[#allocation3 + $0x6b0] sm:$0xff] %vm359, %v757
    %886 = vst.msk [vmem:[#allocation3 + $0x6c0] sm:$0xff] %vm359, %v758
    %887 = vst.msk [vmem:[#allocation3 + $0x6d0] sm:$0xff] %vm359, %v759
    %888 = vst.msk [vmem:[#allocation3 + $0x6e0] sm:$0xff] %vm359, %v760
    %889 = vst.msk [vmem:[#allocation3 + $0x6f0] sm:$0xff] %vm359, %v761
    %890 = vst.msk [vmem:[#allocation3 + $0x700] sm:$0xff] %vm359, %v762
    %891 = vst.msk [vmem:[#allocation3 + $0x710] sm:$0xff] %vm359, %v763
    %892 = vst.msk [vmem:[#allocation3 + $0x720] sm:$0xff] %vm359, %v764
    %893 = vst.msk [vmem:[#allocation3 + $0x730] sm:$0xff] %vm359, %v765
    %894 = vst.msk [vmem:[#allocation3 + $0x740] sm:$0xff] %vm359, %v766
    %895 = vst.msk [vmem:[#allocation3 + $0x750] sm:$0xff] %vm359, %v767
    %896 = vst.msk [vmem:[#allocation3 + $0x760] sm:$0xff] %vm359, %v768
    %897 = vst.msk [vmem:[#allocation3 + $0x770] sm:$0xff] %vm359, %v769
    %898 = vst.msk [vmem:[#allocation3 + $0x780] sm:$0xff] %vm359, %v770
    %899 = vst.msk [vmem:[#allocation3 + $0x790] sm:$0xff] %vm359, %v771
    %900 = vst.msk [vmem:[#allocation3 + $0x7a0] sm:$0xff] %vm359, %v772
    %901 = vst.msk [vmem:[#allocation3 + $0x7b0] sm:$0xff] %vm359, %v773
    %902 = vst.msk [vmem:[#allocation3 + $0x7c0] sm:$0xff] %vm359, %v774
    %903 = vst.msk [vmem:[#allocation3 + $0x7d0] sm:$0xff] %vm359, %v775
    %904 = vst.msk [vmem:[#allocation3 + $0x7e0] sm:$0xff] %vm359, %v776
    %905 = vst.msk [vmem:[#allocation3 + $0x7f0] sm:$0xff] %vm359, %v777
    %v906 = vld [vmem:[#allocation2 + $0x1] sm:$0xff]
    %v907 = vld [vmem:[#allocation2 + $0x9] sm:$0x7f]
    %v908 = vld [vmem:[#allocation2 + $0x11] sm:$0xff]
    %v909 = vld [vmem:[#allocation2 + $0x19] sm:$0x7f]
    %v910 = vld [vmem:[#allocation2 + $0x21] sm:$0xff]
    %v911 = vld [vmem:[#allocation2 + $0x29] sm:$0x7f]
    %v912 = vld [vmem:[#allocation2 + $0x31] sm:$0xff]
    %v913 = vld [vmem:[#allocation2 + $0x39] sm:$0x7f]
    %v914 = vld [vmem:[#allocation2 + $0x41] sm:$0xff]
    %v915 = vld [vmem:[#allocation2 + $0x49] sm:$0x7f]
    %v916 = vld [vmem:[#allocation2 + $0x51] sm:$0xff]
    %v917 = vld [vmem:[#allocation2 + $0x59] sm:$0x7f]
    %v918 = vld [vmem:[#allocation2 + $0x61] sm:$0xff]
    %v919 = vld [vmem:[#allocation2 + $0x69] sm:$0x7f]
    %v920 = vld [vmem:[#allocation2 + $0x71] sm:$0xff]
    %v921 = vld [vmem:[#allocation2 + $0x79] sm:$0x7f]
    %v922 = vld [vmem:[#allocation2 + $0x81] sm:$0xff]
    %v923 = vld [vmem:[#allocation2 + $0x89] sm:$0x7f]
    %v924 = vld [vmem:[#allocation2 + $0x91] sm:$0xff]
    %v925 = vld [vmem:[#allocation2 + $0x99] sm:$0x7f]
    %v926 = vld [vmem:[#allocation2 + $0xa1] sm:$0xff]
    %v927 = vld [vmem:[#allocation2 + $0xa9] sm:$0x7f]
    %v928 = vld [vmem:[#allocation2 + $0xb1] sm:$0xff]
    %v929 = vld [vmem:[#allocation2 + $0xb9] sm:$0x7f]
    %v930 = vld [vmem:[#allocation2 + $0xc1] sm:$0xff]
    %v931 = vld [vmem:[#allocation2 + $0xc9] sm:$0x7f]
    %v932 = vld [vmem:[#allocation2 + $0xd1] sm:$0xff]
    %v933 = vld [vmem:[#allocation2 + $0xd9] sm:$0x7f]
    %v934 = vld [vmem:[#allocation2 + $0xe1] sm:$0xff]
    %v935 = vld [vmem:[#allocation2 + $0xe9] sm:$0x7f]
    %v936 = vld [vmem:[#allocation2 + $0xf1] sm:$0xff]
    %v937 = vld [vmem:[#allocation2 + $0xf9] sm:$0x7f]
    %v938 = vld [vmem:[#allocation2 + $0x101] sm:$0xff]
    %v939 = vld [vmem:[#allocation2 + $0x109] sm:$0x7f]
    %v940 = vld [vmem:[#allocation2 + $0x111] sm:$0xff]
    %v941 = vld [vmem:[#allocation2 + $0x119] sm:$0x7f]
    %v942 = vld [vmem:[#allocation2 + $0x121] sm:$0xff]
    %v943 = vld [vmem:[#allocation2 + $0x129] sm:$0x7f]
    %v944 = vld [vmem:[#allocation2 + $0x131] sm:$0xff]
    %v945 = vld [vmem:[#allocation2 + $0x139] sm:$0x7f]
    %v946 = vld [vmem:[#allocation2 + $0x141] sm:$0xff]
    %v947 = vld [vmem:[#allocation2 + $0x149] sm:$0x7f]
    %v948 = vld [vmem:[#allocation2 + $0x151] sm:$0xff]
    %v949 = vld [vmem:[#allocation2 + $0x159] sm:$0x7f]
    %v950 = vld [vmem:[#allocation2 + $0x161] sm:$0xff]
    %v951 = vld [vmem:[#allocation2 + $0x169] sm:$0x7f]
    %v952 = vld [vmem:[#allocation2 + $0x171] sm:$0xff]
    %v953 = vld [vmem:[#allocation2 + $0x179] sm:$0x7f]
    %v954 = vld [vmem:[#allocation2 + $0x181] sm:$0xff]
    %v955 = vld [vmem:[#allocation2 + $0x189] sm:$0x7f]
    %v956 = vld [vmem:[#allocation2 + $0x191] sm:$0xff]
    %v957 = vld [vmem:[#allocation2 + $0x199] sm:$0x7f]
    %v958 = vld [vmem:[#allocation2 + $0x1a1] sm:$0xff]
    %v959 = vld [vmem:[#allocation2 + $0x1a9] sm:$0x7f]
    %v960 = vld [vmem:[#allocation2 + $0x1b1] sm:$0xff]
    %v961 = vld [vmem:[#allocation2 + $0x1b9] sm:$0x7f]
    %v962 = vld [vmem:[#allocation2 + $0x1c1] sm:$0xff]
    %v963 = vld [vmem:[#allocation2 + $0x1c9] sm:$0x7f]
    %v964 = vld [vmem:[#allocation2 + $0x1d1] sm:$0xff]
    %v965 = vld [vmem:[#allocation2 + $0x1d9] sm:$0x7f]
    %v966 = vld [vmem:[#allocation2 + $0x1e1] sm:$0xff]
    %v967 = vld [vmem:[#allocation2 + $0x1e9] sm:$0x7f]
    %v968 = vld [vmem:[#allocation2 + $0x1f1] sm:$0xff]
    %v969 = vld [vmem:[#allocation2 + $0x1f9] sm:$0x7f]
    %v970 = vld [vmem:[#allocation2 + $0x201] sm:$0xff]
    %v971 = vld [vmem:[#allocation2 + $0x209] sm:$0x7f]
    %v972 = vld [vmem:[#allocation2 + $0x211] sm:$0xff]
    %v973 = vld [vmem:[#allocation2 + $0x219] sm:$0x7f]
    %v974 = vld [vmem:[#allocation2 + $0x221] sm:$0xff]
    %v975 = vld [vmem:[#allocation2 + $0x229] sm:$0x7f]
    %v976 = vld [vmem:[#allocation2 + $0x231] sm:$0xff]
    %v977 = vld [vmem:[#allocation2 + $0x239] sm:$0x7f]
    %v978 = vld [vmem:[#allocation2 + $0x241] sm:$0xff]
    %v979 = vld [vmem:[#allocation2 + $0x249] sm:$0x7f]
    %v980 = vld [vmem:[#allocation2 + $0x251] sm:$0xff]
    %v981 = vld [vmem:[#allocation2 + $0x259] sm:$0x7f]
    %v982 = vld [vmem:[#allocation2 + $0x261] sm:$0xff]
    %v983 = vld [vmem:[#allocation2 + $0x269] sm:$0x7f]
    %v984 = vld [vmem:[#allocation2 + $0x271] sm:$0xff]
    %v985 = vld [vmem:[#allocation2 + $0x279] sm:$0x7f]
    %v986 = vld [vmem:[#allocation2 + $0x281] sm:$0xff]
    %v987 = vld [vmem:[#allocation2 + $0x289] sm:$0x7f]
    %v988 = vld [vmem:[#allocation2 + $0x291] sm:$0xff]
    %v989 = vld [vmem:[#allocation2 + $0x299] sm:$0x7f]
    %v990 = vld [vmem:[#allocation2 + $0x2a1] sm:$0xff]
    %v991 = vld [vmem:[#allocation2 + $0x2a9] sm:$0x7f]
    %v992 = vld [vmem:[#allocation2 + $0x2b1] sm:$0xff]
    %v993 = vld [vmem:[#allocation2 + $0x2b9] sm:$0x7f]
    %v994 = vld [vmem:[#allocation2 + $0x2c1] sm:$0xff]
    %v995 = vld [vmem:[#allocation2 + $0x2c9] sm:$0x7f]
    %v996 = vld [vmem:[#allocation2 + $0x2d1] sm:$0xff]
    %v997 = vld [vmem:[#allocation2 + $0x2d9] sm:$0x7f]
    %v998 = vld [vmem:[#allocation2 + $0x2e1] sm:$0xff]
    %v999 = vld [vmem:[#allocation2 + $0x2e9] sm:$0x7f]
    %v1000 = vld [vmem:[#allocation2 + $0x2f1] sm:$0xff]
    %v1001 = vld [vmem:[#allocation2 + $0x2f9] sm:$0x7f]
    %v1002 = vld [vmem:[#allocation2 + $0x301] sm:$0xff]
    %v1003 = vld [vmem:[#allocation2 + $0x309] sm:$0x7f]
    %v1004 = vld [vmem:[#allocation2 + $0x311] sm:$0xff]
    %v1005 = vld [vmem:[#allocation2 + $0x319] sm:$0x7f]
    %v1006 = vld [vmem:[#allocation2 + $0x321] sm:$0xff]
    %v1007 = vld [vmem:[#allocation2 + $0x329] sm:$0x7f]
    %v1008 = vld [vmem:[#allocation2 + $0x331] sm:$0xff]
    %v1009 = vld [vmem:[#allocation2 + $0x339] sm:$0x7f]
    %v1010 = vld [vmem:[#allocation2 + $0x341] sm:$0xff]
    %v1011 = vld [vmem:[#allocation2 + $0x349] sm:$0x7f]
    %v1012 = vld [vmem:[#allocation2 + $0x351] sm:$0xff]
    %v1013 = vld [vmem:[#allocation2 + $0x359] sm:$0x7f]
    %v1014 = vld [vmem:[#allocation2 + $0x361] sm:$0xff]
    %v1015 = vld [vmem:[#allocation2 + $0x369] sm:$0x7f]
    %v1016 = vld [vmem:[#allocation2 + $0x371] sm:$0xff]
    %v1017 = vld [vmem:[#allocation2 + $0x379] sm:$0x7f]
    %v1018 = vld [vmem:[#allocation2 + $0x381] sm:$0xff]
    %v1019 = vld [vmem:[#allocation2 + $0x389] sm:$0x7f]
    %v1020 = vld [vmem:[#allocation2 + $0x391] sm:$0xff]
    %v1021 = vld [vmem:[#allocation2 + $0x399] sm:$0x7f]
    %v1022 = vld [vmem:[#allocation2 + $0x3a1] sm:$0xff]
    %v1023 = vld [vmem:[#allocation2 + $0x3a9] sm:$0x7f]
    %v1024 = vld [vmem:[#allocation2 + $0x3b1] sm:$0xff]
    %v1025 = vld [vmem:[#allocation2 + $0x3b9] sm:$0x7f]
    %v1026 = vld [vmem:[#allocation2 + $0x3c1] sm:$0xff]
    %v1027 = vld [vmem:[#allocation2 + $0x3c9] sm:$0x7f]
    %v1028 = vld [vmem:[#allocation2 + $0x3d1] sm:$0xff]
    %v1029 = vld [vmem:[#allocation2 + $0x3d9] sm:$0x7f]
    %v1030 = vld [vmem:[#allocation2 + $0x3e1] sm:$0xff]
    %v1031 = vld [vmem:[#allocation2 + $0x3e9] sm:$0x7f]
    %v1032 = vld [vmem:[#allocation2 + $0x3f1] sm:$0xff]
    %v1033 = vld [vmem:[#allocation2 + $0x3f9] sm:$0x7f]
    %1162 = vrot.lane.b32.xlu0 %v906, 16
    %v1163 = vpop.permute.xlu0 %1162
    %1164 = vrot.lane.b32.xlu0 %v907, 16
    %v1165 = vpop.permute.xlu0 %1164
    %1166 = vrot.lane.b32.xlu0 %v908, 16
    %v1167 = vpop.permute.xlu0 %1166
    %1168 = vrot.lane.b32.xlu0 %v909, 16
    %v1169 = vpop.permute.xlu0 %1168
    %1170 = vrot.lane.b32.xlu0 %v910, 16
    %v1171 = vpop.permute.xlu0 %1170
    %1172 = vrot.lane.b32.xlu0 %v911, 16
    %v1173 = vpop.permute.xlu0 %1172
    %1174 = vrot.lane.b32.xlu0 %v912, 16
    %v1175 = vpop.permute.xlu0 %1174
    %1176 = vrot.lane.b32.xlu0 %v913, 16
    %v1177 = vpop.permute.xlu0 %1176
    %1178 = vrot.lane.b32.xlu0 %v914, 16
    %v1179 = vpop.permute.xlu0 %1178
    %1180 = vrot.lane.b32.xlu0 %v915, 16
    %v1181 = vpop.permute.xlu0 %1180
    %1182 = vrot.lane.b32.xlu0 %v916, 16
    %v1183 = vpop.permute.xlu0 %1182
    %1184 = vrot.lane.b32.xlu0 %v917, 16
    %v1185 = vpop.permute.xlu0 %1184
    %1186 = vrot.lane.b32.xlu0 %v918, 16
    %v1187 = vpop.permute.xlu0 %1186
    %1188 = vrot.lane.b32.xlu0 %v919, 16
    %v1189 = vpop.permute.xlu0 %1188
    %1190 = vrot.lane.b32.xlu0 %v920, 16
    %v1191 = vpop.permute.xlu0 %1190
    %1192 = vrot.lane.b32.xlu0 %v921, 16
    %v1193 = vpop.permute.xlu0 %1192
    %1194 = vrot.lane.b32.xlu0 %v922, 16
    %v1195 = vpop.permute.xlu0 %1194
    %1196 = vrot.lane.b32.xlu0 %v923, 16
    %v1197 = vpop.permute.xlu0 %1196
    %1198 = vrot.lane.b32.xlu0 %v924, 16
    %v1199 = vpop.permute.xlu0 %1198
    %1200 = vrot.lane.b32.xlu0 %v925, 16
    %v1201 = vpop.permute.xlu0 %1200
    %1202 = vrot.lane.b32.xlu0 %v926, 16
    %v1203 = vpop.permute.xlu0 %1202
    %1204 = vrot.lane.b32.xlu0 %v927, 16
    %v1205 = vpop.permute.xlu0 %1204
    %1206 = vrot.lane.b32.xlu0 %v928, 16
    %v1207 = vpop.permute.xlu0 %1206
    %1208 = vrot.lane.b32.xlu0 %v929, 16
    %v1209 = vpop.permute.xlu0 %1208
    %1210 = vrot.lane.b32.xlu0 %v930, 16
    %v1211 = vpop.permute.xlu0 %1210
    %1212 = vrot.lane.b32.xlu0 %v931, 16
    %v1213 = vpop.permute.xlu0 %1212
    %1214 = vrot.lane.b32.xlu0 %v932, 16
    %v1215 = vpop.permute.xlu0 %1214
    %1216 = vrot.lane.b32.xlu0 %v933, 16
    %v1217 = vpop.permute.xlu0 %1216
    %1218 = vrot.lane.b32.xlu0 %v934, 16
    %v1219 = vpop.permute.xlu0 %1218
    %1220 = vrot.lane.b32.xlu0 %v935, 16
    %v1221 = vpop.permute.xlu0 %1220
    %1222 = vrot.lane.b32.xlu0 %v936, 16
    %v1223 = vpop.permute.xlu0 %1222
    %1224 = vrot.lane.b32.xlu0 %v937, 16
    %v1225 = vpop.permute.xlu0 %1224
    %1226 = vrot.lane.b32.xlu0 %v938, 16
    %v1227 = vpop.permute.xlu0 %1226
    %1228 = vrot.lane.b32.xlu0 %v939, 16
    %v1229 = vpop.permute.xlu0 %1228
    %1230 = vrot.lane.b32.xlu0 %v940, 16
    %v1231 = vpop.permute.xlu0 %1230
    %1232 = vrot.lane.b32.xlu0 %v941, 16
    %v1233 = vpop.permute.xlu0 %1232
    %1234 = vrot.lane.b32.xlu0 %v942, 16
    %v1235 = vpop.permute.xlu0 %1234
    %1236 = vrot.lane.b32.xlu0 %v943, 16
    %v1237 = vpop.permute.xlu0 %1236
    %1238 = vrot.lane.b32.xlu0 %v944, 16
    %v1239 = vpop.permute.xlu0 %1238
    %1240 = vrot.lane.b32.xlu0 %v945, 16
    %v1241 = vpop.permute.xlu0 %1240
    %1242 = vrot.lane.b32.xlu0 %v946, 16
    %v1243 = vpop.permute.xlu0 %1242
    %1244 = vrot.lane.b32.xlu0 %v947, 16
    %v1245 = vpop.permute.xlu0 %1244
    %1246 = vrot.lane.b32.xlu0 %v948, 16
    %v1247 = vpop.permute.xlu0 %1246
    %1248 = vrot.lane.b32.xlu0 %v949, 16
    %v1249 = vpop.permute.xlu0 %1248
    %1250 = vrot.lane.b32.xlu0 %v950, 16
    %v1251 = vpop.permute.xlu0 %1250
    %1252 = vrot.lane.b32.xlu0 %v951, 16
    %v1253 = vpop.permute.xlu0 %1252
    %1254 = vrot.lane.b32.xlu0 %v952, 16
    %v1255 = vpop.permute.xlu0 %1254
    %1256 = vrot.lane.b32.xlu0 %v953, 16
    %v1257 = vpop.permute.xlu0 %1256
    %1258 = vrot.lane.b32.xlu0 %v954, 16
    %v1259 = vpop.permute.xlu0 %1258
    %1260 = vrot.lane.b32.xlu0 %v955, 16
    %v1261 = vpop.permute.xlu0 %1260
    %1262 = vrot.lane.b32.xlu0 %v956, 16
    %v1263 = vpop.permute.xlu0 %1262
    %1264 = vrot.lane.b32.xlu0 %v957, 16
    %v1265 = vpop.permute.xlu0 %1264
    %1266 = vrot.lane.b32.xlu0 %v958, 16
    %v1267 = vpop.permute.xlu0 %1266
    %1268 = vrot.lane.b32.xlu0 %v959, 16
    %v1269 = vpop.permute.xlu0 %1268
    %1270 = vrot.lane.b32.xlu0 %v960, 16
    %v1271 = vpop.permute.xlu0 %1270
    %1272 = vrot.lane.b32.xlu0 %v961, 16
    %v1273 = vpop.permute.xlu0 %1272
    %1274 = vrot.lane.b32.xlu0 %v962, 16
    %v1275 = vpop.permute.xlu0 %1274
    %1276 = vrot.lane.b32.xlu0 %v963, 16
    %v1277 = vpop.permute.xlu0 %1276
    %1278 = vrot.lane.b32.xlu0 %v964, 16
    %v1279 = vpop.permute.xlu0 %1278
    %1280 = vrot.lane.b32.xlu0 %v965, 16
    %v1281 = vpop.permute.xlu0 %1280
    %1282 = vrot.lane.b32.xlu0 %v966, 16
    %v1283 = vpop.permute.xlu0 %1282
    %1284 = vrot.lane.b32.xlu0 %v967, 16
    %v1285 = vpop.permute.xlu0 %1284
    %1286 = vrot.lane.b32.xlu0 %v968, 16
    %v1287 = vpop.permute.xlu0 %1286
    %1288 = vrot.lane.b32.xlu0 %v969, 16
    %v1289 = vpop.permute.xlu0 %1288
    %1290 = vrot.lane.b32.xlu0 %v970, 16
    %v1291 = vpop.permute.xlu0 %1290
    %1292 = vrot.lane.b32.xlu0 %v971, 16
    %v1293 = vpop.permute.xlu0 %1292
    %1294 = vrot.lane.b32.xlu0 %v972, 16
    %v1295 = vpop.permute.xlu0 %1294
    %1296 = vrot.lane.b32.xlu0 %v973, 16
    %v1297 = vpop.permute.xlu0 %1296
    %1298 = vrot.lane.b32.xlu0 %v974, 16
    %v1299 = vpop.permute.xlu0 %1298
    %1300 = vrot.lane.b32.xlu0 %v975, 16
    %v1301 = vpop.permute.xlu0 %1300
    %1302 = vrot.lane.b32.xlu0 %v976, 16
    %v1303 = vpop.permute.xlu0 %1302
    %1304 = vrot.lane.b32.xlu0 %v977, 16
    %v1305 = vpop.permute.xlu0 %1304
    %1306 = vrot.lane.b32.xlu0 %v978, 16
    %v1307 = vpop.permute.xlu0 %1306
    %1308 = vrot.lane.b32.xlu0 %v979, 16
    %v1309 = vpop.permute.xlu0 %1308
    %1310 = vrot.lane.b32.xlu0 %v980, 16
    %v1311 = vpop.permute.xlu0 %1310
    %1312 = vrot.lane.b32.xlu0 %v981, 16
    %v1313 = vpop.permute.xlu0 %1312
    %1314 = vrot.lane.b32.xlu0 %v982, 16
    %v1315 = vpop.permute.xlu0 %1314
    %1316 = vrot.lane.b32.xlu0 %v983, 16
    %v1317 = vpop.permute.xlu0 %1316
    %1318 = vrot.lane.b32.xlu0 %v984, 16
    %v1319 = vpop.permute.xlu0 %1318
    %1320 = vrot.lane.b32.xlu0 %v985, 16
    %v1321 = vpop.permute.xlu0 %1320
    %1322 = vrot.lane.b32.xlu0 %v986, 16
    %v1323 = vpop.permute.xlu0 %1322
    %1324 = vrot.lane.b32.xlu0 %v987, 16
    %v1325 = vpop.permute.xlu0 %1324
    %1326 = vrot.lane.b32.xlu0 %v988, 16
    %v1327 = vpop.permute.xlu0 %1326
    %1328 = vrot.lane.b32.xlu0 %v989, 16
    %v1329 = vpop.permute.xlu0 %1328
    %1330 = vrot.lane.b32.xlu0 %v990, 16
    %v1331 = vpop.permute.xlu0 %1330
    %1332 = vrot.lane.b32.xlu0 %v991, 16
    %v1333 = vpop.permute.xlu0 %1332
    %1334 = vrot.lane.b32.xlu0 %v992, 16
    %v1335 = vpop.permute.xlu0 %1334
    %1336 = vrot.lane.b32.xlu0 %v993, 16
    %v1337 = vpop.permute.xlu0 %1336
    %1338 = vrot.lane.b32.xlu0 %v994, 16
    %v1339 = vpop.permute.xlu0 %1338
    %1340 = vrot.lane.b32.xlu0 %v995, 16
    %v1341 = vpop.permute.xlu0 %1340
    %1342 = vrot.lane.b32.xlu0 %v996, 16
    %v1343 = vpop.permute.xlu0 %1342
    %1344 = vrot.lane.b32.xlu0 %v997, 16
    %v1345 = vpop.permute.xlu0 %1344
    %1346 = vrot.lane.b32.xlu0 %v998, 16
    %v1347 = vpop.permute.xlu0 %1346
    %1348 = vrot.lane.b32.xlu0 %v999, 16
    %v1349 = vpop.permute.xlu0 %1348
    %1350 = vrot.lane.b32.xlu0 %v1000, 16
    %v1351 = vpop.permute.xlu0 %1350
    %1352 = vrot.lane.b32.xlu0 %v1001, 16
    %v1353 = vpop.permute.xlu0 %1352
    %1354 = vrot.lane.b32.xlu0 %v1002, 16
    %v1355 = vpop.permute.xlu0 %1354
    %1356 = vrot.lane.b32.xlu0 %v1003, 16
    %v1357 = vpop.permute.xlu0 %1356
    %1358 = vrot.lane.b32.xlu0 %v1004, 16
    %v1359 = vpop.permute.xlu0 %1358
    %1360 = vrot.lane.b32.xlu0 %v1005, 16
    %v1361 = vpop.permute.xlu0 %1360
    %1362 = vrot.lane.b32.xlu0 %v1006, 16
    %v1363 = vpop.permute.xlu0 %1362
    %1364 = vrot.lane.b32.xlu0 %v1007, 16
    %v1365 = vpop.permute.xlu0 %1364
    %1366 = vrot.lane.b32.xlu0 %v1008, 16
    %v1367 = vpop.permute.xlu0 %1366
    %1368 = vrot.lane.b32.xlu0 %v1009, 16
    %v1369 = vpop.permute.xlu0 %1368
    %1370 = vrot.lane.b32.xlu0 %v1010, 16
    %v1371 = vpop.permute.xlu0 %1370
    %1372 = vrot.lane.b32.xlu0 %v1011, 16
    %v1373 = vpop.permute.xlu0 %1372
    %1374 = vrot.lane.b32.xlu0 %v1012, 16
    %v1375 = vpop.permute.xlu0 %1374
    %1376 = vrot.lane.b32.xlu0 %v1013, 16
    %v1377 = vpop.permute.xlu0 %1376
    %1378 = vrot.lane.b32.xlu0 %v1014, 16
    %v1379 = vpop.permute.xlu0 %1378
    %1380 = vrot.lane.b32.xlu0 %v1015, 16
    %v1381 = vpop.permute.xlu0 %1380
    %1382 = vrot.lane.b32.xlu0 %v1016, 16
    %v1383 = vpop.permute.xlu0 %1382
    %1384 = vrot.lane.b32.xlu0 %v1017, 16
    %v1385 = vpop.permute.xlu0 %1384
    %1386 = vrot.lane.b32.xlu0 %v1018, 16
    %v1387 = vpop.permute.xlu0 %1386
    %1388 = vrot.lane.b32.xlu0 %v1019, 16
    %v1389 = vpop.permute.xlu0 %1388
    %1390 = vrot.lane.b32.xlu0 %v1020, 16
    %v1391 = vpop.permute.xlu0 %1390
    %1392 = vrot.lane.b32.xlu0 %v1021, 16
    %v1393 = vpop.permute.xlu0 %1392
    %1394 = vrot.lane.b32.xlu0 %v1022, 16
    %v1395 = vpop.permute.xlu0 %1394
    %1396 = vrot.lane.b32.xlu0 %v1023, 16
    %v1397 = vpop.permute.xlu0 %1396
    %1398 = vrot.lane.b32.xlu0 %v1024, 16
    %v1399 = vpop.permute.xlu0 %1398
    %1400 = vrot.lane.b32.xlu0 %v1025, 16
    %v1401 = vpop.permute.xlu0 %1400
    %1402 = vrot.lane.b32.xlu0 %v1026, 16
    %v1403 = vpop.permute.xlu0 %1402
    %1404 = vrot.lane.b32.xlu0 %v1027, 16
    %v1405 = vpop.permute.xlu0 %1404
    %1406 = vrot.lane.b32.xlu0 %v1028, 16
    %v1407 = vpop.permute.xlu0 %1406
    %1408 = vrot.lane.b32.xlu0 %v1029, 16
    %v1409 = vpop.permute.xlu0 %1408
    %1410 = vrot.lane.b32.xlu0 %v1030, 16
    %v1411 = vpop.permute.xlu0 %1410
    %1412 = vrot.lane.b32.xlu0 %v1031, 16
    %v1413 = vpop.permute.xlu0 %1412
    %1414 = vrot.lane.b32.xlu0 %v1032, 16
    %v1415 = vpop.permute.xlu0 %1414
    %1416 = vrot.lane.b32.xlu0 %v1033, 16
    %v1417 = vpop.permute.xlu0 %1416
    %vm1546 = vcmask 261248
    %1547 = vst.msk [vmem:[#allocation3] sm:$0xff] %vm1546, %v1163
    %vm1548 = vcmask 260224
    %1549 = vst.msk [vmem:[#allocation3 + $0x10] sm:$0x7f] %vm1548, %v1165
    %1550 = vst.msk [vmem:[#allocation3 + $0x20] sm:$0xff] %vm1546, %v1167
    %1551 = vst.msk [vmem:[#allocation3 + $0x30] sm:$0x7f] %vm1548, %v1169
    %1552 = vst.msk [vmem:[#allocation3 + $0x40] sm:$0xff] %vm1546, %v1171
    %1553 = vst.msk [vmem:[#allocation3 + $0x50] sm:$0x7f] %vm1548, %v1173
    %1554 = vst.msk [vmem:[#allocation3 + $0x60] sm:$0xff] %vm1546, %v1175
    %1555 = vst.msk [vmem:[#allocation3 + $0x70] sm:$0x7f] %vm1548, %v1177
    %1556 = vst.msk [vmem:[#allocation3 + $0x80] sm:$0xff] %vm1546, %v1179
    %1557 = vst.msk [vmem:[#allocation3 + $0x90] sm:$0x7f] %vm1548, %v1181
    %1558 = vst.msk [vmem:[#allocation3 + $0xa0] sm:$0xff] %vm1546, %v1183
    %1559 = vst.msk [vmem:[#allocation3 + $0xb0] sm:$0x7f] %vm1548, %v1185
    %1560 = vst.msk [vmem:[#allocation3 + $0xc0] sm:$0xff] %vm1546, %v1187
    %1561 = vst.msk [vmem:[#allocation3 + $0xd0] sm:$0x7f] %vm1548, %v1189
    %1562 = vst.msk [vmem:[#allocation3 + $0xe0] sm:$0xff] %vm1546, %v1191
    %1563 = vst.msk [vmem:[#allocation3 + $0xf0] sm:$0x7f] %vm1548, %v1193
    %1564 = vst.msk [vmem:[#allocation3 + $0x100] sm:$0xff] %vm1546, %v1195
    %1565 = vst.msk [vmem:[#allocation3 + $0x110] sm:$0x7f] %vm1548, %v1197
    %1566 = vst.msk [vmem:[#allocation3 + $0x120] sm:$0xff] %vm1546, %v1199
    %1567 = vst.msk [vmem:[#allocation3 + $0x130] sm:$0x7f] %vm1548, %v1201
    %1568 = vst.msk [vmem:[#allocation3 + $0x140] sm:$0xff] %vm1546, %v1203
    %1569 = vst.msk [vmem:[#allocation3 + $0x150] sm:$0x7f] %vm1548, %v1205
    %1570 = vst.msk [vmem:[#allocation3 + $0x160] sm:$0xff] %vm1546, %v1207
    %1571 = vst.msk [vmem:[#allocation3 + $0x170] sm:$0x7f] %vm1548, %v1209
    %1572 = vst.msk [vmem:[#allocation3 + $0x180] sm:$0xff] %vm1546, %v1211
    %1573 = vst.msk [vmem:[#allocation3 + $0x190] sm:$0x7f] %vm1548, %v1213
    %1574 = vst.msk [vmem:[#allocation3 + $0x1a0] sm:$0xff] %vm1546, %v1215
    %1575 = vst.msk [vmem:[#allocation3 + $0x1b0] sm:$0x7f] %vm1548, %v1217
    %1576 = vst.msk [vmem:[#allocation3 + $0x1c0] sm:$0xff] %vm1546, %v1219
    %1577 = vst.msk [vmem:[#allocation3 + $0x1d0] sm:$0x7f] %vm1548, %v1221
    %1578 = vst.msk [vmem:[#allocation3 + $0x1e0] sm:$0xff] %vm1546, %v1223
    %1579 = vst.msk [vmem:[#allocation3 + $0x1f0] sm:$0x7f] %vm1548, %v1225
    %1580 = vst.msk [vmem:[#allocation3 + $0x200] sm:$0xff] %vm1546, %v1227
    %1581 = vst.msk [vmem:[#allocation3 + $0x210] sm:$0x7f] %vm1548, %v1229
    %1582 = vst.msk [vmem:[#allocation3 + $0x220] sm:$0xff] %vm1546, %v1231
    %1583 = vst.msk [vmem:[#allocation3 + $0x230] sm:$0x7f] %vm1548, %v1233
    %1584 = vst.msk [vmem:[#allocation3 + $0x240] sm:$0xff] %vm1546, %v1235
    %1585 = vst.msk [vmem:[#allocation3 + $0x250] sm:$0x7f] %vm1548, %v1237
    %1586 = vst.msk [vmem:[#allocation3 + $0x260] sm:$0xff] %vm1546, %v1239
    %1587 = vst.msk [vmem:[#allocation3 + $0x270] sm:$0x7f] %vm1548, %v1241
    %1588 = vst.msk [vmem:[#allocation3 + $0x280] sm:$0xff] %vm1546, %v1243
    %1589 = vst.msk [vmem:[#allocation3 + $0x290] sm:$0x7f] %vm1548, %v1245
    %1590 = vst.msk [vmem:[#allocation3 + $0x2a0] sm:$0xff] %vm1546, %v1247
    %1591 = vst.msk [vmem:[#allocation3 + $0x2b0] sm:$0x7f] %vm1548, %v1249
    %1592 = vst.msk [vmem:[#allocation3 + $0x2c0] sm:$0xff] %vm1546, %v1251
    %1593 = vst.msk [vmem:[#allocation3 + $0x2d0] sm:$0x7f] %vm1548, %v1253
    %1594 = vst.msk [vmem:[#allocation3 + $0x2e0] sm:$0xff] %vm1546, %v1255
    %1595 = vst.msk [vmem:[#allocation3 + $0x2f0] sm:$0x7f] %vm1548, %v1257
    %1596 = vst.msk [vmem:[#allocation3 + $0x300] sm:$0xff] %vm1546, %v1259
    %1597 = vst.msk [vmem:[#allocation3 + $0x310] sm:$0x7f] %vm1548, %v1261
    %1598 = vst.msk [vmem:[#allocation3 + $0x320] sm:$0xff] %vm1546, %v1263
    %1599 = vst.msk [vmem:[#allocation3 + $0x330] sm:$0x7f] %vm1548, %v1265
    %1600 = vst.msk [vmem:[#allocation3 + $0x340] sm:$0xff] %vm1546, %v1267
    %1601 = vst.msk [vmem:[#allocation3 + $0x350] sm:$0x7f] %vm1548, %v1269
    %1602 = vst.msk [vmem:[#allocation3 + $0x360] sm:$0xff] %vm1546, %v1271
    %1603 = vst.msk [vmem:[#allocation3 + $0x370] sm:$0x7f] %vm1548, %v1273
    %1604 = vst.msk [vmem:[#allocation3 + $0x380] sm:$0xff] %vm1546, %v1275
    %1605 = vst.msk [vmem:[#allocation3 + $0x390] sm:$0x7f] %vm1548, %v1277
    %1606 = vst.msk [vmem:[#allocation3 + $0x3a0] sm:$0xff] %vm1546, %v1279
    %1607 = vst.msk [vmem:[#allocation3 + $0x3b0] sm:$0x7f] %vm1548, %v1281
    %1608 = vst.msk [vmem:[#allocation3 + $0x3c0] sm:$0xff] %vm1546, %v1283
    %1609 = vst.msk [vmem:[#allocation3 + $0x3d0] sm:$0x7f] %vm1548, %v1285
    %1610 = vst.msk [vmem:[#allocation3 + $0x3e0] sm:$0xff] %vm1546, %v1287
    %1611 = vst.msk [vmem:[#allocation3 + $0x3f0] sm:$0x7f] %vm1548, %v1289
    %1612 = vst.msk [vmem:[#allocation3 + $0x400] sm:$0xff] %vm1546, %v1291
    %1613 = vst.msk [vmem:[#allocation3 + $0x410] sm:$0x7f] %vm1548, %v1293
    %1614 = vst.msk [vmem:[#allocation3 + $0x420] sm:$0xff] %vm1546, %v1295
    %1615 = vst.msk [vmem:[#allocation3 + $0x430] sm:$0x7f] %vm1548, %v1297
    %1616 = vst.msk [vmem:[#allocation3 + $0x440] sm:$0xff] %vm1546, %v1299
    %1617 = vst.msk [vmem:[#allocation3 + $0x450] sm:$0x7f] %vm1548, %v1301
    %1618 = vst.msk [vmem:[#allocation3 + $0x460] sm:$0xff] %vm1546, %v1303
    %1619 = vst.msk [vmem:[#allocation3 + $0x470] sm:$0x7f] %vm1548, %v1305
    %1620 = vst.msk [vmem:[#allocation3 + $0x480] sm:$0xff] %vm1546, %v1307
    %1621 = vst.msk [vmem:[#allocation3 + $0x490] sm:$0x7f] %vm1548, %v1309
    %1622 = vst.msk [vmem:[#allocation3 + $0x4a0] sm:$0xff] %vm1546, %v1311
    %1623 = vst.msk [vmem:[#allocation3 + $0x4b0] sm:$0x7f] %vm1548, %v1313
    %1624 = vst.msk [vmem:[#allocation3 + $0x4c0] sm:$0xff] %vm1546, %v1315
    %1625 = vst.msk [vmem:[#allocation3 + $0x4d0] sm:$0x7f] %vm1548, %v1317
    %1626 = vst.msk [vmem:[#allocation3 + $0x4e0] sm:$0xff] %vm1546, %v1319
    %1627 = vst.msk [vmem:[#allocation3 + $0x4f0] sm:$0x7f] %vm1548, %v1321
    %1628 = vst.msk [vmem:[#allocation3 + $0x500] sm:$0xff] %vm1546, %v1323
    %1629 = vst.msk [vmem:[#allocation3 + $0x510] sm:$0x7f] %vm1548, %v1325
    %1630 = vst.msk [vmem:[#allocation3 + $0x520] sm:$0xff] %vm1546, %v1327
    %1631 = vst.msk [vmem:[#allocation3 + $0x530] sm:$0x7f] %vm1548, %v1329
    %1632 = vst.msk [vmem:[#allocation3 + $0x540] sm:$0xff] %vm1546, %v1331
    %1633 = vst.msk [vmem:[#allocation3 + $0x550] sm:$0x7f] %vm1548, %v1333
    %1634 = vst.msk [vmem:[#allocation3 + $0x560] sm:$0xff] %vm1546, %v1335
    %1635 = vst.msk [vmem:[#allocation3 + $0x570] sm:$0x7f] %vm1548, %v1337
    %1636 = vst.msk [vmem:[#allocation3 + $0x580] sm:$0xff] %vm1546, %v1339
    %1637 = vst.msk [vmem:[#allocation3 + $0x590] sm:$0x7f] %vm1548, %v1341
    %1638 = vst.msk [vmem:[#allocation3 + $0x5a0] sm:$0xff] %vm1546, %v1343
    %1639 = vst.msk [vmem:[#allocation3 + $0x5b0] sm:$0x7f] %vm1548, %v1345
    %1640 = vst.msk [vmem:[#allocation3 + $0x5c0] sm:$0xff] %vm1546, %v1347
    %1641 = vst.msk [vmem:[#allocation3 + $0x5d0] sm:$0x7f] %vm1548, %v1349
    %1642 = vst.msk [vmem:[#allocation3 + $0x5e0] sm:$0xff] %vm1546, %v1351
    %1643 = vst.msk [vmem:[#allocation3 + $0x5f0] sm:$0x7f] %vm1548, %v1353
    %1644 = vst.msk [vmem:[#allocation3 + $0x600] sm:$0xff] %vm1546, %v1355
    %1645 = vst.msk [vmem:[#allocation3 + $0x610] sm:$0x7f] %vm1548, %v1357
    %1646 = vst.msk [vmem:[#allocation3 + $0x620] sm:$0xff] %vm1546, %v1359
    %1647 = vst.msk [vmem:[#allocation3 + $0x630] sm:$0x7f] %vm1548, %v1361
    %1648 = vst.msk [vmem:[#allocation3 + $0x640] sm:$0xff] %vm1546, %v1363
    %1649 = vst.msk [vmem:[#allocation3 + $0x650] sm:$0x7f] %vm1548, %v1365
    %1650 = vst.msk [vmem:[#allocation3 + $0x660] sm:$0xff] %vm1546, %v1367
    %1651 = vst.msk [vmem:[#allocation3 + $0x670] sm:$0x7f] %vm1548, %v1369
    %1652 = vst.msk [vmem:[#allocation3 + $0x680] sm:$0xff] %vm1546, %v1371
    %1653 = vst.msk [vmem:[#allocation3 + $0x690] sm:$0x7f] %vm1548, %v1373
    %1654 = vst.msk [vmem:[#allocation3 + $0x6a0] sm:$0xff] %vm1546, %v1375
    %1655 = vst.msk [vmem:[#allocation3 + $0x6b0] sm:$0x7f] %vm1548, %v1377
    %1656 = vst.msk [vmem:[#allocation3 + $0x6c0] sm:$0xff] %vm1546, %v1379
    %1657 = vst.msk [vmem:[#allocation3 + $0x6d0] sm:$0x7f] %vm1548, %v1381
    %1658 = vst.msk [vmem:[#allocation3 + $0x6e0] sm:$0xff] %vm1546, %v1383
    %1659 = vst.msk [vmem:[#allocation3 + $0x6f0] sm:$0x7f] %vm1548, %v1385
    %1660 = vst.msk [vmem:[#allocation3 + $0x700] sm:$0xff] %vm1546, %v1387
    %1661 = vst.msk [vmem:[#allocation3 + $0x710] sm:$0x7f] %vm1548, %v1389
    %1662 = vst.msk [vmem:[#allocation3 + $0x720] sm:$0xff] %vm1546, %v1391
    %1663 = vst.msk [vmem:[#allocation3 + $0x730] sm:$0x7f] %vm1548, %v1393
    %1664 = vst.msk [vmem:[#allocation3 + $0x740] sm:$0xff] %vm1546, %v1395
    %1665 = vst.msk [vmem:[#allocation3 + $0x750] sm:$0x7f] %vm1548, %v1397
    %1666 = vst.msk [vmem:[#allocation3 + $0x760] sm:$0xff] %vm1546, %v1399
    %1667 = vst.msk [vmem:[#allocation3 + $0x770] sm:$0x7f] %vm1548, %v1401
    %1668 = vst.msk [vmem:[#allocation3 + $0x780] sm:$0xff] %vm1546, %v1403
    %1669 = vst.msk [vmem:[#allocation3 + $0x790] sm:$0x7f] %vm1548, %v1405
    %1670 = vst.msk [vmem:[#allocation3 + $0x7a0] sm:$0xff] %vm1546, %v1407
    %1671 = vst.msk [vmem:[#allocation3 + $0x7b0] sm:$0x7f] %vm1548, %v1409
    %1672 = vst.msk [vmem:[#allocation3 + $0x7c0] sm:$0xff] %vm1546, %v1411
    %1673 = vst.msk [vmem:[#allocation3 + $0x7d0] sm:$0x7f] %vm1548, %v1413
    %1674 = vst.msk [vmem:[#allocation3 + $0x7e0] sm:$0xff] %vm1546, %v1415
    %1675 = vst.msk [vmem:[#allocation3 + $0x7f0] sm:$0x7f] %vm1548, %v1417
    %v1676 = vld [vmem:[#allocation2 + $0x2] sm:$0xff]
    %v1677 = vld [vmem:[#allocation2 + $0xa] sm:$0x3f]
    %v1678 = vld [vmem:[#allocation2 + $0x12] sm:$0xff]
    %v1679 = vld [vmem:[#allocation2 + $0x1a] sm:$0x3f]
    %v1680 = vld [vmem:[#allocation2 + $0x22] sm:$0xff]
    %v1681 = vld [vmem:[#allocation2 + $0x2a] sm:$0x3f]
    %v1682 = vld [vmem:[#allocation2 + $0x32] sm:$0xff]
    %v1683 = vld [vmem:[#allocation2 + $0x3a] sm:$0x3f]
    %v1684 = vld [vmem:[#allocation2 + $0x42] sm:$0xff]
    %v1685 = vld [vmem:[#allocation2 + $0x4a] sm:$0x3f]
    %v1686 = vld [vmem:[#allocation2 + $0x52] sm:$0xff]
    %v1687 = vld [vmem:[#allocation2 + $0x5a] sm:$0x3f]
    %v1688 = vld [vmem:[#allocation2 + $0x62] sm:$0xff]
    %v1689 = vld [vmem:[#allocation2 + $0x6a] sm:$0x3f]
    %v1690 = vld [vmem:[#allocation2 + $0x72] sm:$0xff]
    %v1691 = vld [vmem:[#allocation2 + $0x7a] sm:$0x3f]
    %v1692 = vld [vmem:[#allocation2 + $0x82] sm:$0xff]
    %v1693 = vld [vmem:[#allocation2 + $0x8a] sm:$0x3f]
    %v1694 = vld [vmem:[#allocation2 + $0x92] sm:$0xff]
    %v1695 = vld [vmem:[#allocation2 + $0x9a] sm:$0x3f]
    %v1696 = vld [vmem:[#allocation2 + $0xa2] sm:$0xff]
    %v1697 = vld [vmem:[#allocation2 + $0xaa] sm:$0x3f]
    %v1698 = vld [vmem:[#allocation2 + $0xb2] sm:$0xff]
    %v1699 = vld [vmem:[#allocation2 + $0xba] sm:$0x3f]
    %v1700 = vld [vmem:[#allocation2 + $0xc2] sm:$0xff]
    %v1701 = vld [vmem:[#allocation2 + $0xca] sm:$0x3f]
    %v1702 = vld [vmem:[#allocation2 + $0xd2] sm:$0xff]
    %v1703 = vld [vmem:[#allocation2 + $0xda] sm:$0x3f]
    %v1704 = vld [vmem:[#allocation2 + $0xe2] sm:$0xff]
    %v1705 = vld [vmem:[#allocation2 + $0xea] sm:$0x3f]
    %v1706 = vld [vmem:[#allocation2 + $0xf2] sm:$0xff]
    %v1707 = vld [vmem:[#allocation2 + $0xfa] sm:$0x3f]
    %v1708 = vld [vmem:[#allocation2 + $0x102] sm:$0xff]
    %v1709 = vld [vmem:[#allocation2 + $0x10a] sm:$0x3f]
    %v1710 = vld [vmem:[#allocation2 + $0x112] sm:$0xff]
    %v1711 = vld [vmem:[#allocation2 + $0x11a] sm:$0x3f]
    %v1712 = vld [vmem:[#allocation2 + $0x122] sm:$0xff]
    %v1713 = vld [vmem:[#allocation2 + $0x12a] sm:$0x3f]
    %v1714 = vld [vmem:[#allocation2 + $0x132] sm:$0xff]
    %v1715 = vld [vmem:[#allocation2 + $0x13a] sm:$0x3f]
    %v1716 = vld [vmem:[#allocation2 + $0x142] sm:$0xff]
    %v1717 = vld [vmem:[#allocation2 + $0x14a] sm:$0x3f]
    %v1718 = vld [vmem:[#allocation2 + $0x152] sm:$0xff]
    %v1719 = vld [vmem:[#allocation2 + $0x15a] sm:$0x3f]
    %v1720 = vld [vmem:[#allocation2 + $0x162] sm:$0xff]
    %v1721 = vld [vmem:[#allocation2 + $0x16a] sm:$0x3f]
    %v1722 = vld [vmem:[#allocation2 + $0x172] sm:$0xff]
    %v1723 = vld [vmem:[#allocation2 + $0x17a] sm:$0x3f]
    %v1724 = vld [vmem:[#allocation2 + $0x182] sm:$0xff]
    %v1725 = vld [vmem:[#allocation2 + $0x18a] sm:$0x3f]
    %v1726 = vld [vmem:[#allocation2 + $0x192] sm:$0xff]
    %v1727 = vld [vmem:[#allocation2 + $0x19a] sm:$0x3f]
    %v1728 = vld [vmem:[#allocation2 + $0x1a2] sm:$0xff]
    %v1729 = vld [vmem:[#allocation2 + $0x1aa] sm:$0x3f]
    %v1730 = vld [vmem:[#allocation2 + $0x1b2] sm:$0xff]
    %v1731 = vld [vmem:[#allocation2 + $0x1ba] sm:$0x3f]
    %v1732 = vld [vmem:[#allocation2 + $0x1c2] sm:$0xff]
    %v1733 = vld [vmem:[#allocation2 + $0x1ca] sm:$0x3f]
    %v1734 = vld [vmem:[#allocation2 + $0x1d2] sm:$0xff]
    %v1735 = vld [vmem:[#allocation2 + $0x1da] sm:$0x3f]
    %v1736 = vld [vmem:[#allocation2 + $0x1e2] sm:$0xff]
    %v1737 = vld [vmem:[#allocation2 + $0x1ea] sm:$0x3f]
    %v1738 = vld [vmem:[#allocation2 + $0x1f2] sm:$0xff]
    %v1739 = vld [vmem:[#allocation2 + $0x1fa] sm:$0x3f]
    %v1740 = vld [vmem:[#allocation2 + $0x202] sm:$0xff]
    %v1741 = vld [vmem:[#allocation2 + $0x20a] sm:$0x3f]
    %v1742 = vld [vmem:[#allocation2 + $0x212] sm:$0xff]
    %v1743 = vld [vmem:[#allocation2 + $0x21a] sm:$0x3f]
    %v1744 = vld [vmem:[#allocation2 + $0x222] sm:$0xff]
    %v1745 = vld [vmem:[#allocation2 + $0x22a] sm:$0x3f]
    %v1746 = vld [vmem:[#allocation2 + $0x232] sm:$0xff]
    %v1747 = vld [vmem:[#allocation2 + $0x23a] sm:$0x3f]
    %v1748 = vld [vmem:[#allocation2 + $0x242] sm:$0xff]
    %v1749 = vld [vmem:[#allocation2 + $0x24a] sm:$0x3f]
    %v1750 = vld [vmem:[#allocation2 + $0x252] sm:$0xff]
    %v1751 = vld [vmem:[#allocation2 + $0x25a] sm:$0x3f]
    %v1752 = vld [vmem:[#allocation2 + $0x262] sm:$0xff]
    %v1753 = vld [vmem:[#allocation2 + $0x26a] sm:$0x3f]
    %v1754 = vld [vmem:[#allocation2 + $0x272] sm:$0xff]
    %v1755 = vld [vmem:[#allocation2 + $0x27a] sm:$0x3f]
    %v1756 = vld [vmem:[#allocation2 + $0x282] sm:$0xff]
    %v1757 = vld [vmem:[#allocation2 + $0x28a] sm:$0x3f]
    %v1758 = vld [vmem:[#allocation2 + $0x292] sm:$0xff]
    %v1759 = vld [vmem:[#allocation2 + $0x29a] sm:$0x3f]
    %v1760 = vld [vmem:[#allocation2 + $0x2a2] sm:$0xff]
    %v1761 = vld [vmem:[#allocation2 + $0x2aa] sm:$0x3f]
    %v1762 = vld [vmem:[#allocation2 + $0x2b2] sm:$0xff]
    %v1763 = vld [vmem:[#allocation2 + $0x2ba] sm:$0x3f]
    %v1764 = vld [vmem:[#allocation2 + $0x2c2] sm:$0xff]
    %v1765 = vld [vmem:[#allocation2 + $0x2ca] sm:$0x3f]
    %v1766 = vld [vmem:[#allocation2 + $0x2d2] sm:$0xff]
    %v1767 = vld [vmem:[#allocation2 + $0x2da] sm:$0x3f]
    %v1768 = vld [vmem:[#allocation2 + $0x2e2] sm:$0xff]
    %v1769 = vld [vmem:[#allocation2 + $0x2ea] sm:$0x3f]
    %v1770 = vld [vmem:[#allocation2 + $0x2f2] sm:$0xff]
    %v1771 = vld [vmem:[#allocation2 + $0x2fa] sm:$0x3f]
    %v1772 = vld [vmem:[#allocation2 + $0x302] sm:$0xff]
    %v1773 = vld [vmem:[#allocation2 + $0x30a] sm:$0x3f]
    %v1774 = vld [vmem:[#allocation2 + $0x312] sm:$0xff]
    %v1775 = vld [vmem:[#allocation2 + $0x31a] sm:$0x3f]
    %v1776 = vld [vmem:[#allocation2 + $0x322] sm:$0xff]
    %v1777 = vld [vmem:[#allocation2 + $0x32a] sm:$0x3f]
    %v1778 = vld [vmem:[#allocation2 + $0x332] sm:$0xff]
    %v1779 = vld [vmem:[#allocation2 + $0x33a] sm:$0x3f]
    %v1780 = vld [vmem:[#allocation2 + $0x342] sm:$0xff]
    %v1781 = vld [vmem:[#allocation2 + $0x34a] sm:$0x3f]
    %v1782 = vld [vmem:[#allocation2 + $0x352] sm:$0xff]
    %v1783 = vld [vmem:[#allocation2 + $0x35a] sm:$0x3f]
    %v1784 = vld [vmem:[#allocation2 + $0x362] sm:$0xff]
    %v1785 = vld [vmem:[#allocation2 + $0x36a] sm:$0x3f]
    %v1786 = vld [vmem:[#allocation2 + $0x372] sm:$0xff]
    %v1787 = vld [vmem:[#allocation2 + $0x37a] sm:$0x3f]
    %v1788 = vld [vmem:[#allocation2 + $0x382] sm:$0xff]
    %v1789 = vld [vmem:[#allocation2 + $0x38a] sm:$0x3f]
    %v1790 = vld [vmem:[#allocation2 + $0x392] sm:$0xff]
    %v1791 = vld [vmem:[#allocation2 + $0x39a] sm:$0x3f]
    %v1792 = vld [vmem:[#allocation2 + $0x3a2] sm:$0xff]
    %v1793 = vld [vmem:[#allocation2 + $0x3aa] sm:$0x3f]
    %v1794 = vld [vmem:[#allocation2 + $0x3b2] sm:$0xff]
    %v1795 = vld [vmem:[#allocation2 + $0x3ba] sm:$0x3f]
    %v1796 = vld [vmem:[#allocation2 + $0x3c2] sm:$0xff]
    %v1797 = vld [vmem:[#allocation2 + $0x3ca] sm:$0x3f]
    %v1798 = vld [vmem:[#allocation2 + $0x3d2] sm:$0xff]
    %v1799 = vld [vmem:[#allocation2 + $0x3da] sm:$0x3f]
    %v1800 = vld [vmem:[#allocation2 + $0x3e2] sm:$0xff]
    %v1801 = vld [vmem:[#allocation2 + $0x3ea] sm:$0x3f]
    %v1802 = vld [vmem:[#allocation2 + $0x3f2] sm:$0xff]
    %v1803 = vld [vmem:[#allocation2 + $0x3fa] sm:$0x3f]
    %1932 = vrot.lane.b32.xlu0 %v1676, 32
    %v1933 = vpop.permute.xlu0 %1932
    %1934 = vrot.lane.b32.xlu0 %v1677, 32
    %v1935 = vpop.permute.xlu0 %1934
    %1936 = vrot.lane.b32.xlu0 %v1678, 32
    %v1937 = vpop.permute.xlu0 %1936
    %1938 = vrot.lane.b32.xlu0 %v1679, 32
    %v1939 = vpop.permute.xlu0 %1938
    %1940 = vrot.lane.b32.xlu0 %v1680, 32
    %v1941 = vpop.permute.xlu0 %1940
    %1942 = vrot.lane.b32.xlu0 %v1681, 32
    %v1943 = vpop.permute.xlu0 %1942
    %1944 = vrot.lane.b32.xlu0 %v1682, 32
    %v1945 = vpop.permute.xlu0 %1944
    %1946 = vrot.lane.b32.xlu0 %v1683, 32
    %v1947 = vpop.permute.xlu0 %1946
    %1948 = vrot.lane.b32.xlu0 %v1684, 32
    %v1949 = vpop.permute.xlu0 %1948
    %1950 = vrot.lane.b32.xlu0 %v1685, 32
    %v1951 = vpop.permute.xlu0 %1950
    %1952 = vrot.lane.b32.xlu0 %v1686, 32
    %v1953 = vpop.permute.xlu0 %1952
    %1954 = vrot.lane.b32.xlu0 %v1687, 32
    %v1955 = vpop.permute.xlu0 %1954
    %1956 = vrot.lane.b32.xlu0 %v1688, 32
    %v1957 = vpop.permute.xlu0 %1956
    %1958 = vrot.lane.b32.xlu0 %v1689, 32
    %v1959 = vpop.permute.xlu0 %1958
    %1960 = vrot.lane.b32.xlu0 %v1690, 32
    %v1961 = vpop.permute.xlu0 %1960
    %1962 = vrot.lane.b32.xlu0 %v1691, 32
    %v1963 = vpop.permute.xlu0 %1962
    %1964 = vrot.lane.b32.xlu0 %v1692, 32
    %v1965 = vpop.permute.xlu0 %1964
    %1966 = vrot.lane.b32.xlu0 %v1693, 32
    %v1967 = vpop.permute.xlu0 %1966
    %1968 = vrot.lane.b32.xlu0 %v1694, 32
    %v1969 = vpop.permute.xlu0 %1968
    %1970 = vrot.lane.b32.xlu0 %v1695, 32
    %v1971 = vpop.permute.xlu0 %1970
    %1972 = vrot.lane.b32.xlu0 %v1696, 32
    %v1973 = vpop.permute.xlu0 %1972
    %1974 = vrot.lane.b32.xlu0 %v1697, 32
    %v1975 = vpop.permute.xlu0 %1974
    %1976 = vrot.lane.b32.xlu0 %v1698, 32
    %v1977 = vpop.permute.xlu0 %1976
    %1978 = vrot.lane.b32.xlu0 %v1699, 32
    %v1979 = vpop.permute.xlu0 %1978
    %1980 = vrot.lane.b32.xlu0 %v1700, 32
    %v1981 = vpop.permute.xlu0 %1980
    %1982 = vrot.lane.b32.xlu0 %v1701, 32
    %v1983 = vpop.permute.xlu0 %1982
    %1984 = vrot.lane.b32.xlu0 %v1702, 32
    %v1985 = vpop.permute.xlu0 %1984
    %1986 = vrot.lane.b32.xlu0 %v1703, 32
    %v1987 = vpop.permute.xlu0 %1986
    %1988 = vrot.lane.b32.xlu0 %v1704, 32
    %v1989 = vpop.permute.xlu0 %1988
    %1990 = vrot.lane.b32.xlu0 %v1705, 32
    %v1991 = vpop.permute.xlu0 %1990
    %1992 = vrot.lane.b32.xlu0 %v1706, 32
    %v1993 = vpop.permute.xlu0 %1992
    %1994 = vrot.lane.b32.xlu0 %v1707, 32
    %v1995 = vpop.permute.xlu0 %1994
    %1996 = vrot.lane.b32.xlu0 %v1708, 32
    %v1997 = vpop.permute.xlu0 %1996
    %1998 = vrot.lane.b32.xlu0 %v1709, 32
    %v1999 = vpop.permute.xlu0 %1998
    %2000 = vrot.lane.b32.xlu0 %v1710, 32
    %v2001 = vpop.permute.xlu0 %2000
    %2002 = vrot.lane.b32.xlu0 %v1711, 32
    %v2003 = vpop.permute.xlu0 %2002
    %2004 = vrot.lane.b32.xlu0 %v1712, 32
    %v2005 = vpop.permute.xlu0 %2004
    %2006 = vrot.lane.b32.xlu0 %v1713, 32
    %v2007 = vpop.permute.xlu0 %2006
    %2008 = vrot.lane.b32.xlu0 %v1714, 32
    %v2009 = vpop.permute.xlu0 %2008
    %2010 = vrot.lane.b32.xlu0 %v1715, 32
    %v2011 = vpop.permute.xlu0 %2010
    %2012 = vrot.lane.b32.xlu0 %v1716, 32
    %v2013 = vpop.permute.xlu0 %2012
    %2014 = vrot.lane.b32.xlu0 %v1717, 32
    %v2015 = vpop.permute.xlu0 %2014
    %2016 = vrot.lane.b32.xlu0 %v1718, 32
    %v2017 = vpop.permute.xlu0 %2016
    %2018 = vrot.lane.b32.xlu0 %v1719, 32
    %v2019 = vpop.permute.xlu0 %2018
    %2020 = vrot.lane.b32.xlu0 %v1720, 32
    %v2021 = vpop.permute.xlu0 %2020
    %2022 = vrot.lane.b32.xlu0 %v1721, 32
    %v2023 = vpop.permute.xlu0 %2022
    %2024 = vrot.lane.b32.xlu0 %v1722, 32
    %v2025 = vpop.permute.xlu0 %2024
    %2026 = vrot.lane.b32.xlu0 %v1723, 32
    %v2027 = vpop.permute.xlu0 %2026
    %2028 = vrot.lane.b32.xlu0 %v1724, 32
    %v2029 = vpop.permute.xlu0 %2028
    %2030 = vrot.lane.b32.xlu0 %v1725, 32
    %v2031 = vpop.permute.xlu0 %2030
    %2032 = vrot.lane.b32.xlu0 %v1726, 32
    %v2033 = vpop.permute.xlu0 %2032
    %2034 = vrot.lane.b32.xlu0 %v1727, 32
    %v2035 = vpop.permute.xlu0 %2034
    %2036 = vrot.lane.b32.xlu0 %v1728, 32
    %v2037 = vpop.permute.xlu0 %2036
    %2038 = vrot.lane.b32.xlu0 %v1729, 32
    %v2039 = vpop.permute.xlu0 %2038
    %2040 = vrot.lane.b32.xlu0 %v1730, 32
    %v2041 = vpop.permute.xlu0 %2040
    %2042 = vrot.lane.b32.xlu0 %v1731, 32
    %v2043 = vpop.permute.xlu0 %2042
    %2044 = vrot.lane.b32.xlu0 %v1732, 32
    %v2045 = vpop.permute.xlu0 %2044
    %2046 = vrot.lane.b32.xlu0 %v1733, 32
    %v2047 = vpop.permute.xlu0 %2046
    %2048 = vrot.lane.b32.xlu0 %v1734, 32
    %v2049 = vpop.permute.xlu0 %2048
    %2050 = vrot.lane.b32.xlu0 %v1735, 32
    %v2051 = vpop.permute.xlu0 %2050
    %2052 = vrot.lane.b32.xlu0 %v1736, 32
    %v2053 = vpop.permute.xlu0 %2052
    %2054 = vrot.lane.b32.xlu0 %v1737, 32
    %v2055 = vpop.permute.xlu0 %2054
    %2056 = vrot.lane.b32.xlu0 %v1738, 32
    %v2057 = vpop.permute.xlu0 %2056
    %2058 = vrot.lane.b32.xlu0 %v1739, 32
    %v2059 = vpop.permute.xlu0 %2058
    %2060 = vrot.lane.b32.xlu0 %v1740, 32
    %v2061 = vpop.permute.xlu0 %2060
    %2062 = vrot.lane.b32.xlu0 %v1741, 32
    %v2063 = vpop.permute.xlu0 %2062
    %2064 = vrot.lane.b32.xlu0 %v1742, 32
    %v2065 = vpop.permute.xlu0 %2064
    %2066 = vrot.lane.b32.xlu0 %v1743, 32
    %v2067 = vpop.permute.xlu0 %2066
    %2068 = vrot.lane.b32.xlu0 %v1744, 32
    %v2069 = vpop.permute.xlu0 %2068
    %2070 = vrot.lane.b32.xlu0 %v1745, 32
    %v2071 = vpop.permute.xlu0 %2070
    %2072 = vrot.lane.b32.xlu0 %v1746, 32
    %v2073 = vpop.permute.xlu0 %2072
    %2074 = vrot.lane.b32.xlu0 %v1747, 32
    %v2075 = vpop.permute.xlu0 %2074
    %2076 = vrot.lane.b32.xlu0 %v1748, 32
    %v2077 = vpop.permute.xlu0 %2076
    %2078 = vrot.lane.b32.xlu0 %v1749, 32
    %v2079 = vpop.permute.xlu0 %2078
    %2080 = vrot.lane.b32.xlu0 %v1750, 32
    %v2081 = vpop.permute.xlu0 %2080
    %2082 = vrot.lane.b32.xlu0 %v1751, 32
    %v2083 = vpop.permute.xlu0 %2082
    %2084 = vrot.lane.b32.xlu0 %v1752, 32
    %v2085 = vpop.permute.xlu0 %2084
    %2086 = vrot.lane.b32.xlu0 %v1753, 32
    %v2087 = vpop.permute.xlu0 %2086
    %2088 = vrot.lane.b32.xlu0 %v1754, 32
    %v2089 = vpop.permute.xlu0 %2088
    %2090 = vrot.lane.b32.xlu0 %v1755, 32
    %v2091 = vpop.permute.xlu0 %2090
    %2092 = vrot.lane.b32.xlu0 %v1756, 32
    %v2093 = vpop.permute.xlu0 %2092
    %2094 = vrot.lane.b32.xlu0 %v1757, 32
    %v2095 = vpop.permute.xlu0 %2094
    %2096 = vrot.lane.b32.xlu0 %v1758, 32
    %v2097 = vpop.permute.xlu0 %2096
    %2098 = vrot.lane.b32.xlu0 %v1759, 32
    %v2099 = vpop.permute.xlu0 %2098
    %2100 = vrot.lane.b32.xlu0 %v1760, 32
    %v2101 = vpop.permute.xlu0 %2100
    %2102 = vrot.lane.b32.xlu0 %v1761, 32
    %v2103 = vpop.permute.xlu0 %2102
    %2104 = vrot.lane.b32.xlu0 %v1762, 32
    %v2105 = vpop.permute.xlu0 %2104
    %2106 = vrot.lane.b32.xlu0 %v1763, 32
    %v2107 = vpop.permute.xlu0 %2106
    %2108 = vrot.lane.b32.xlu0 %v1764, 32
    %v2109 = vpop.permute.xlu0 %2108
    %2110 = vrot.lane.b32.xlu0 %v1765, 32
    %v2111 = vpop.permute.xlu0 %2110
    %2112 = vrot.lane.b32.xlu0 %v1766, 32
    %v2113 = vpop.permute.xlu0 %2112
    %2114 = vrot.lane.b32.xlu0 %v1767, 32
    %v2115 = vpop.permute.xlu0 %2114
    %2116 = vrot.lane.b32.xlu0 %v1768, 32
    %v2117 = vpop.permute.xlu0 %2116
    %2118 = vrot.lane.b32.xlu0 %v1769, 32
    %v2119 = vpop.permute.xlu0 %2118
    %2120 = vrot.lane.b32.xlu0 %v1770, 32
    %v2121 = vpop.permute.xlu0 %2120
    %2122 = vrot.lane.b32.xlu0 %v1771, 32
    %v2123 = vpop.permute.xlu0 %2122
    %2124 = vrot.lane.b32.xlu0 %v1772, 32
    %v2125 = vpop.permute.xlu0 %2124
    %2126 = vrot.lane.b32.xlu0 %v1773, 32
    %v2127 = vpop.permute.xlu0 %2126
    %2128 = vrot.lane.b32.xlu0 %v1774, 32
    %v2129 = vpop.permute.xlu0 %2128
    %2130 = vrot.lane.b32.xlu0 %v1775, 32
    %v2131 = vpop.permute.xlu0 %2130
    %2132 = vrot.lane.b32.xlu0 %v1776, 32
    %v2133 = vpop.permute.xlu0 %2132
    %2134 = vrot.lane.b32.xlu0 %v1777, 32
    %v2135 = vpop.permute.xlu0 %2134
    %2136 = vrot.lane.b32.xlu0 %v1778, 32
    %v2137 = vpop.permute.xlu0 %2136
    %2138 = vrot.lane.b32.xlu0 %v1779, 32
    %v2139 = vpop.permute.xlu0 %2138
    %2140 = vrot.lane.b32.xlu0 %v1780, 32
    %v2141 = vpop.permute.xlu0 %2140
    %2142 = vrot.lane.b32.xlu0 %v1781, 32
    %v2143 = vpop.permute.xlu0 %2142
    %2144 = vrot.lane.b32.xlu0 %v1782, 32
    %v2145 = vpop.permute.xlu0 %2144
    %2146 = vrot.lane.b32.xlu0 %v1783, 32
    %v2147 = vpop.permute.xlu0 %2146
    %2148 = vrot.lane.b32.xlu0 %v1784, 32
    %v2149 = vpop.permute.xlu0 %2148
    %2150 = vrot.lane.b32.xlu0 %v1785, 32
    %v2151 = vpop.permute.xlu0 %2150
    %2152 = vrot.lane.b32.xlu0 %v1786, 32
    %v2153 = vpop.permute.xlu0 %2152
    %2154 = vrot.lane.b32.xlu0 %v1787, 32
    %v2155 = vpop.permute.xlu0 %2154
    %2156 = vrot.lane.b32.xlu0 %v1788, 32
    %v2157 = vpop.permute.xlu0 %2156
    %2158 = vrot.lane.b32.xlu0 %v1789, 32
    %v2159 = vpop.permute.xlu0 %2158
    %2160 = vrot.lane.b32.xlu0 %v1790, 32
    %v2161 = vpop.permute.xlu0 %2160
    %2162 = vrot.lane.b32.xlu0 %v1791, 32
    %v2163 = vpop.permute.xlu0 %2162
    %2164 = vrot.lane.b32.xlu0 %v1792, 32
    %v2165 = vpop.permute.xlu0 %2164
    %2166 = vrot.lane.b32.xlu0 %v1793, 32
    %v2167 = vpop.permute.xlu0 %2166
    %2168 = vrot.lane.b32.xlu0 %v1794, 32
    %v2169 = vpop.permute.xlu0 %2168
    %2170 = vrot.lane.b32.xlu0 %v1795, 32
    %v2171 = vpop.permute.xlu0 %2170
    %2172 = vrot.lane.b32.xlu0 %v1796, 32
    %v2173 = vpop.permute.xlu0 %2172
    %2174 = vrot.lane.b32.xlu0 %v1797, 32
    %v2175 = vpop.permute.xlu0 %2174
    %2176 = vrot.lane.b32.xlu0 %v1798, 32
    %v2177 = vpop.permute.xlu0 %2176
    %2178 = vrot.lane.b32.xlu0 %v1799, 32
    %v2179 = vpop.permute.xlu0 %2178
    %2180 = vrot.lane.b32.xlu0 %v1800, 32
    %v2181 = vpop.permute.xlu0 %2180
    %2182 = vrot.lane.b32.xlu0 %v1801, 32
    %v2183 = vpop.permute.xlu0 %2182
    %2184 = vrot.lane.b32.xlu0 %v1802, 32
    %v2185 = vpop.permute.xlu0 %2184
    %2186 = vrot.lane.b32.xlu0 %v1803, 32
    %v2187 = vpop.permute.xlu0 %2186
    %vm2316 = vcmask 392448
    %2317 = vst.msk [vmem:[#allocation3] sm:$0xff] %vm2316, %v1933
    %vm2318 = vcmask 390400
    %2319 = vst.msk [vmem:[#allocation3 + $0x10] sm:$0x3f] %vm2318, %v1935
    %2320 = vst.msk [vmem:[#allocation3 + $0x20] sm:$0xff] %vm2316, %v1937
    %2321 = vst.msk [vmem:[#allocation3 + $0x30] sm:$0x3f] %vm2318, %v1939
    %2322 = vst.msk [vmem:[#allocation3 + $0x40] sm:$0xff] %vm2316, %v1941
    %2323 = vst.msk [vmem:[#allocation3 + $0x50] sm:$0x3f] %vm2318, %v1943
    %2324 = vst.msk [vmem:[#allocation3 + $0x60] sm:$0xff] %vm2316, %v1945
    %2325 = vst.msk [vmem:[#allocation3 + $0x70] sm:$0x3f] %vm2318, %v1947
    %2326 = vst.msk [vmem:[#allocation3 + $0x80] sm:$0xff] %vm2316, %v1949
    %2327 = vst.msk [vmem:[#allocation3 + $0x90] sm:$0x3f] %vm2318, %v1951
    %2328 = vst.msk [vmem:[#allocation3 + $0xa0] sm:$0xff] %vm2316, %v1953
    %2329 = vst.msk [vmem:[#allocation3 + $0xb0] sm:$0x3f] %vm2318, %v1955
    %2330 = vst.msk [vmem:[#allocation3 + $0xc0] sm:$0xff] %vm2316, %v1957
    %2331 = vst.msk [vmem:[#allocation3 + $0xd0] sm:$0x3f] %vm2318, %v1959
    %2332 = vst.msk [vmem:[#allocation3 + $0xe0] sm:$0xff] %vm2316, %v1961
    %2333 = vst.msk [vmem:[#allocation3 + $0xf0] sm:$0x3f] %vm2318, %v1963
    %2334 = vst.msk [vmem:[#allocation3 + $0x100] sm:$0xff] %vm2316, %v1965
    %2335 = vst.msk [vmem:[#allocation3 + $0x110] sm:$0x3f] %vm2318, %v1967
    %2336 = vst.msk [vmem:[#allocation3 + $0x120] sm:$0xff] %vm2316, %v1969
    %2337 = vst.msk [vmem:[#allocation3 + $0x130] sm:$0x3f] %vm2318, %v1971
    %2338 = vst.msk [vmem:[#allocation3 + $0x140] sm:$0xff] %vm2316, %v1973
    %2339 = vst.msk [vmem:[#allocation3 + $0x150] sm:$0x3f] %vm2318, %v1975
    %2340 = vst.msk [vmem:[#allocation3 + $0x160] sm:$0xff] %vm2316, %v1977
    %2341 = vst.msk [vmem:[#allocation3 + $0x170] sm:$0x3f] %vm2318, %v1979
    %2342 = vst.msk [vmem:[#allocation3 + $0x180] sm:$0xff] %vm2316, %v1981
    %2343 = vst.msk [vmem:[#allocation3 + $0x190] sm:$0x3f] %vm2318, %v1983
    %2344 = vst.msk [vmem:[#allocation3 + $0x1a0] sm:$0xff] %vm2316, %v1985
    %2345 = vst.msk [vmem:[#allocation3 + $0x1b0] sm:$0x3f] %vm2318, %v1987
    %2346 = vst.msk [vmem:[#allocation3 + $0x1c0] sm:$0xff] %vm2316, %v1989
    %2347 = vst.msk [vmem:[#allocation3 + $0x1d0] sm:$0x3f] %vm2318, %v1991
    %2348 = vst.msk [vmem:[#allocation3 + $0x1e0] sm:$0xff] %vm2316, %v1993
    %2349 = vst.msk [vmem:[#allocation3 + $0x1f0] sm:$0x3f] %vm2318, %v1995
    %2350 = vst.msk [vmem:[#allocation3 + $0x200] sm:$0xff] %vm2316, %v1997
    %2351 = vst.msk [vmem:[#allocation3 + $0x210] sm:$0x3f] %vm2318, %v1999
    %2352 = vst.msk [vmem:[#allocation3 + $0x220] sm:$0xff] %vm2316, %v2001
    %2353 = vst.msk [vmem:[#allocation3 + $0x230] sm:$0x3f] %vm2318, %v2003
    %2354 = vst.msk [vmem:[#allocation3 + $0x240] sm:$0xff] %vm2316, %v2005
    %2355 = vst.msk [vmem:[#allocation3 + $0x250] sm:$0x3f] %vm2318, %v2007
    %2356 = vst.msk [vmem:[#allocation3 + $0x260] sm:$0xff] %vm2316, %v2009
    %2357 = vst.msk [vmem:[#allocation3 + $0x270] sm:$0x3f] %vm2318, %v2011
    %2358 = vst.msk [vmem:[#allocation3 + $0x280] sm:$0xff] %vm2316, %v2013
    %2359 = vst.msk [vmem:[#allocation3 + $0x290] sm:$0x3f] %vm2318, %v2015
    %2360 = vst.msk [vmem:[#allocation3 + $0x2a0] sm:$0xff] %vm2316, %v2017
    %2361 = vst.msk [vmem:[#allocation3 + $0x2b0] sm:$0x3f] %vm2318, %v2019
    %2362 = vst.msk [vmem:[#allocation3 + $0x2c0] sm:$0xff] %vm2316, %v2021
    %2363 = vst.msk [vmem:[#allocation3 + $0x2d0] sm:$0x3f] %vm2318, %v2023
    %2364 = vst.msk [vmem:[#allocation3 + $0x2e0] sm:$0xff] %vm2316, %v2025
    %2365 = vst.msk [vmem:[#allocation3 + $0x2f0] sm:$0x3f] %vm2318, %v2027
    %2366 = vst.msk [vmem:[#allocation3 + $0x300] sm:$0xff] %vm2316, %v2029
    %2367 = vst.msk [vmem:[#allocation3 + $0x310] sm:$0x3f] %vm2318, %v2031
    %2368 = vst.msk [vmem:[#allocation3 + $0x320] sm:$0xff] %vm2316, %v2033
    %2369 = vst.msk [vmem:[#allocation3 + $0x330] sm:$0x3f] %vm2318, %v2035
    %2370 = vst.msk [vmem:[#allocation3 + $0x340] sm:$0xff] %vm2316, %v2037
    %2371 = vst.msk [vmem:[#allocation3 + $0x350] sm:$0x3f] %vm2318, %v2039
    %2372 = vst.msk [vmem:[#allocation3 + $0x360] sm:$0xff] %vm2316, %v2041
    %2373 = vst.msk [vmem:[#allocation3 + $0x370] sm:$0x3f] %vm2318, %v2043
    %2374 = vst.msk [vmem:[#allocation3 + $0x380] sm:$0xff] %vm2316, %v2045
    %2375 = vst.msk [vmem:[#allocation3 + $0x390] sm:$0x3f] %vm2318, %v2047
    %2376 = vst.msk [vmem:[#allocation3 + $0x3a0] sm:$0xff] %vm2316, %v2049
    %2377 = vst.msk [vmem:[#allocation3 + $0x3b0] sm:$0x3f] %vm2318, %v2051
    %2378 = vst.msk [vmem:[#allocation3 + $0x3c0] sm:$0xff] %vm2316, %v2053
    %2379 = vst.msk [vmem:[#allocation3 + $0x3d0] sm:$0x3f] %vm2318, %v2055
    %2380 = vst.msk [vmem:[#allocation3 + $0x3e0] sm:$0xff] %vm2316, %v2057
    %2381 = vst.msk [vmem:[#allocation3 + $0x3f0] sm:$0x3f] %vm2318, %v2059
    %2382 = vst.msk [vmem:[#allocation3 + $0x400] sm:$0xff] %vm2316, %v2061
    %2383 = vst.msk [vmem:[#allocation3 + $0x410] sm:$0x3f] %vm2318, %v2063
    %2384 = vst.msk [vmem:[#allocation3 + $0x420] sm:$0xff] %vm2316, %v2065
    %2385 = vst.msk [vmem:[#allocation3 + $0x430] sm:$0x3f] %vm2318, %v2067
    %2386 = vst.msk [vmem:[#allocation3 + $0x440] sm:$0xff] %vm2316, %v2069
    %2387 = vst.msk [vmem:[#allocation3 + $0x450] sm:$0x3f] %vm2318, %v2071
    %2388 = vst.msk [vmem:[#allocation3 + $0x460] sm:$0xff] %vm2316, %v2073
    %2389 = vst.msk [vmem:[#allocation3 + $0x470] sm:$0x3f] %vm2318, %v2075
    %2390 = vst.msk [vmem:[#allocation3 + $0x480] sm:$0xff] %vm2316, %v2077
    %2391 = vst.msk [vmem:[#allocation3 + $0x490] sm:$0x3f] %vm2318, %v2079
    %2392 = vst.msk [vmem:[#allocation3 + $0x4a0] sm:$0xff] %vm2316, %v2081
    %2393 = vst.msk [vmem:[#allocation3 + $0x4b0] sm:$0x3f] %vm2318, %v2083
    %2394 = vst.msk [vmem:[#allocation3 + $0x4c0] sm:$0xff] %vm2316, %v2085
    %2395 = vst.msk [vmem:[#allocation3 + $0x4d0] sm:$0x3f] %vm2318, %v2087
    %2396 = vst.msk [vmem:[#allocation3 + $0x4e0] sm:$0xff] %vm2316, %v2089
    %2397 = vst.msk [vmem:[#allocation3 + $0x4f0] sm:$0x3f] %vm2318, %v2091
    %2398 = vst.msk [vmem:[#allocation3 + $0x500] sm:$0xff] %vm2316, %v2093
    %2399 = vst.msk [vmem:[#allocation3 + $0x510] sm:$0x3f] %vm2318, %v2095
    %2400 = vst.msk [vmem:[#allocation3 + $0x520] sm:$0xff] %vm2316, %v2097
    %2401 = vst.msk [vmem:[#allocation3 + $0x530] sm:$0x3f] %vm2318, %v2099
    %2402 = vst.msk [vmem:[#allocation3 + $0x540] sm:$0xff] %vm2316, %v2101
    %2403 = vst.msk [vmem:[#allocation3 + $0x550] sm:$0x3f] %vm2318, %v2103
    %2404 = vst.msk [vmem:[#allocation3 + $0x560] sm:$0xff] %vm2316, %v2105
    %2405 = vst.msk [vmem:[#allocation3 + $0x570] sm:$0x3f] %vm2318, %v2107
    %2406 = vst.msk [vmem:[#allocation3 + $0x580] sm:$0xff] %vm2316, %v2109
    %2407 = vst.msk [vmem:[#allocation3 + $0x590] sm:$0x3f] %vm2318, %v2111
    %2408 = vst.msk [vmem:[#allocation3 + $0x5a0] sm:$0xff] %vm2316, %v2113
    %2409 = vst.msk [vmem:[#allocation3 + $0x5b0] sm:$0x3f] %vm2318, %v2115
    %2410 = vst.msk [vmem:[#allocation3 + $0x5c0] sm:$0xff] %vm2316, %v2117
    %2411 = vst.msk [vmem:[#allocation3 + $0x5d0] sm:$0x3f] %vm2318, %v2119
    %2412 = vst.msk [vmem:[#allocation3 + $0x5e0] sm:$0xff] %vm2316, %v2121
    %2413 = vst.msk [vmem:[#allocation3 + $0x5f0] sm:$0x3f] %vm2318, %v2123
    %2414 = vst.msk [vmem:[#allocation3 + $0x600] sm:$0xff] %vm2316, %v2125
    %2415 = vst.msk [vmem:[#allocation3 + $0x610] sm:$0x3f] %vm2318, %v2127
    %2416 = vst.msk [vmem:[#allocation3 + $0x620] sm:$0xff] %vm2316, %v2129
    %2417 = vst.msk [vmem:[#allocation3 + $0x630] sm:$0x3f] %vm2318, %v2131
    %2418 = vst.msk [vmem:[#allocation3 + $0x640] sm:$0xff] %vm2316, %v2133
    %2419 = vst.msk [vmem:[#allocation3 + $0x650] sm:$0x3f] %vm2318, %v2135
    %2420 = vst.msk [vmem:[#allocation3 + $0x660] sm:$0xff] %vm2316, %v2137
    %2421 = vst.msk [vmem:[#allocation3 + $0x670] sm:$0x3f] %vm2318, %v2139
    %2422 = vst.msk [vmem:[#allocation3 + $0x680] sm:$0xff] %vm2316, %v2141
    %2423 = vst.msk [vmem:[#allocation3 + $0x690] sm:$0x3f] %vm2318, %v2143
    %2424 = vst.msk [vmem:[#allocation3 + $0x6a0] sm:$0xff] %vm2316, %v2145
    %2425 = vst.msk [vmem:[#allocation3 + $0x6b0] sm:$0x3f] %vm2318, %v2147
    %2426 = vst.msk [vmem:[#allocation3 + $0x6c0] sm:$0xff] %vm2316, %v2149
    %2427 = vst.msk [vmem:[#allocation3 + $0x6d0] sm:$0x3f] %vm2318, %v2151
    %2428 = vst.msk [vmem:[#allocation3 + $0x6e0] sm:$0xff] %vm2316, %v2153
    %2429 = vst.msk [vmem:[#allocation3 + $0x6f0] sm:$0x3f] %vm2318, %v2155
    %2430 = vst.msk [vmem:[#allocation3 + $0x700] sm:$0xff] %vm2316, %v2157
    %2431 = vst.msk [vmem:[#allocation3 + $0x710] sm:$0x3f] %vm2318, %v2159
    %2432 = vst.msk [vmem:[#allocation3 + $0x720] sm:$0xff] %vm2316, %v2161
    %2433 = vst.msk [vmem:[#allocation3 + $0x730] sm:$0x3f] %vm2318, %v2163
    %2434 = vst.msk [vmem:[#allocation3 + $0x740] sm:$0xff] %vm2316, %v2165
    %2435 = vst.msk [vmem:[#allocation3 + $0x750] sm:$0x3f] %vm2318, %v2167
    %2436 = vst.msk [vmem:[#allocation3 + $0x760] sm:$0xff] %vm2316, %v2169
    %2437 = vst.msk [vmem:[#allocation3 + $0x770] sm:$0x3f] %vm2318, %v2171
    %2438 = vst.msk [vmem:[#allocation3 + $0x780] sm:$0xff] %vm2316, %v2173
    %2439 = vst.msk [vmem:[#allocation3 + $0x790] sm:$0x3f] %vm2318, %v2175
    %2440 = vst.msk [vmem:[#allocation3 + $0x7a0] sm:$0xff] %vm2316, %v2177
    %2441 = vst.msk [vmem:[#allocation3 + $0x7b0] sm:$0x3f] %vm2318, %v2179
    %2442 = vst.msk [vmem:[#allocation3 + $0x7c0] sm:$0xff] %vm2316, %v2181
    %2443 = vst.msk [vmem:[#allocation3 + $0x7d0] sm:$0x3f] %vm2318, %v2183
    %2444 = vst.msk [vmem:[#allocation3 + $0x7e0] sm:$0xff] %vm2316, %v2185
    %2445 = vst.msk [vmem:[#allocation3 + $0x7f0] sm:$0x3f] %vm2318, %v2187
    %s2446 = scalar_lea.vmem [#allocation2], 16
    %v2447 = vld [vmem:[%s2446] sm:$0xff]
    %v2448 = vld [vmem:[%s2446 + $0x8] sm:$0xff]
    %v2449 = vld [vmem:[%s2446 + $0x10] sm:$0xff]
    %v2450 = vld [vmem:[%s2446 + $0x18] sm:$0xff]
    %v2451 = vld [vmem:[%s2446 + $0x20] sm:$0xff]
    %v2452 = vld [vmem:[%s2446 + $0x28] sm:$0xff]
    %v2453 = vld [vmem:[%s2446 + $0x30] sm:$0xff]
    %v2454 = vld [vmem:[%s2446 + $0x38] sm:$0xff]
    %v2455 = vld [vmem:[%s2446 + $0x40] sm:$0xff]
    %v2456 = vld [vmem:[%s2446 + $0x48] sm:$0xff]
    %v2457 = vld [vmem:[%s2446 + $0x50] sm:$0xff]
    %v2458 = vld [vmem:[%s2446 + $0x58] sm:$0xff]
    %v2459 = vld [vmem:[%s2446 + $0x60] sm:$0xff]
    %v2460 = vld [vmem:[%s2446 + $0x68] sm:$0xff]
    %v2461 = vld [vmem:[%s2446 + $0x80] sm:$0xff]
    %v2462 = vld [vmem:[%s2446 + $0x88] sm:$0xff]
    %v2463 = vld [vmem:[%s2446 + $0x90] sm:$0xff]
    %v2464 = vld [vmem:[%s2446 + $0x98] sm:$0xff]
    %v2465 = vld [vmem:[%s2446 + $0xa0] sm:$0xff]
    %v2466 = vld [vmem:[%s2446 + $0xa8] sm:$0xff]
    %v2467 = vld [vmem:[%s2446 + $0xb0] sm:$0xff]
    %v2468 = vld [vmem:[%s2446 + $0xb8] sm:$0xff]
    %v2469 = vld [vmem:[%s2446 + $0xc0] sm:$0xff]
    %v2470 = vld [vmem:[%s2446 + $0xc8] sm:$0xff]
    %v2471 = vld [vmem:[%s2446 + $0xd0] sm:$0xff]
    %v2472 = vld [vmem:[%s2446 + $0xd8] sm:$0xff]
    %v2473 = vld [vmem:[%s2446 + $0xe0] sm:$0xff]
    %v2474 = vld [vmem:[%s2446 + $0xe8] sm:$0xff]
    %v2475 = vld [vmem:[%s2446 + $0x100] sm:$0xff]
    %v2476 = vld [vmem:[%s2446 + $0x108] sm:$0xff]
    %v2477 = vld [vmem:[%s2446 + $0x110] sm:$0xff]
    %v2478 = vld [vmem:[%s2446 + $0x118] sm:$0xff]
    %v2479 = vld [vmem:[%s2446 + $0x120] sm:$0xff]
    %v2480 = vld [vmem:[%s2446 + $0x128] sm:$0xff]
    %v2481 = vld [vmem:[%s2446 + $0x130] sm:$0xff]
    %v2482 = vld [vmem:[%s2446 + $0x138] sm:$0xff]
    %v2483 = vld [vmem:[%s2446 + $0x140] sm:$0xff]
    %v2484 = vld [vmem:[%s2446 + $0x148] sm:$0xff]
    %v2485 = vld [vmem:[%s2446 + $0x150] sm:$0xff]
    %v2486 = vld [vmem:[%s2446 + $0x158] sm:$0xff]
    %v2487 = vld [vmem:[%s2446 + $0x160] sm:$0xff]
    %v2488 = vld [vmem:[%s2446 + $0x168] sm:$0xff]
    %v2489 = vld [vmem:[%s2446 + $0x180] sm:$0xff]
    %v2490 = vld [vmem:[%s2446 + $0x188] sm:$0xff]
    %v2491 = vld [vmem:[%s2446 + $0x190] sm:$0xff]
    %v2492 = vld [vmem:[%s2446 + $0x198] sm:$0xff]
    %v2493 = vld [vmem:[%s2446 + $0x1a0] sm:$0xff]
    %v2494 = vld [vmem:[%s2446 + $0x1a8] sm:$0xff]
    %v2495 = vld [vmem:[%s2446 + $0x1b0] sm:$0xff]
    %v2496 = vld [vmem:[%s2446 + $0x1b8] sm:$0xff]
    %v2497 = vld [vmem:[%s2446 + $0x1c0] sm:$0xff]
    %v2498 = vld [vmem:[%s2446 + $0x1c8] sm:$0xff]
    %v2499 = vld [vmem:[%s2446 + $0x1d0] sm:$0xff]
    %v2500 = vld [vmem:[%s2446 + $0x1d8] sm:$0xff]
    %v2501 = vld [vmem:[%s2446 + $0x1e0] sm:$0xff]
    %v2502 = vld [vmem:[%s2446 + $0x1e8] sm:$0xff]
    %v2503 = vld [vmem:[%s2446 + $0x200] sm:$0xff]
    %v2504 = vld [vmem:[%s2446 + $0x208] sm:$0xff]
    %v2505 = vld [vmem:[%s2446 + $0x210] sm:$0xff]
    %v2506 = vld [vmem:[%s2446 + $0x218] sm:$0xff]
    %v2507 = vld [vmem:[%s2446 + $0x220] sm:$0xff]
    %v2508 = vld [vmem:[%s2446 + $0x228] sm:$0xff]
    %v2509 = vld [vmem:[%s2446 + $0x230] sm:$0xff]
    %v2510 = vld [vmem:[%s2446 + $0x238] sm:$0xff]
    %v2511 = vld [vmem:[%s2446 + $0x240] sm:$0xff]
    %v2512 = vld [vmem:[%s2446 + $0x248] sm:$0xff]
    %v2513 = vld [vmem:[%s2446 + $0x250] sm:$0xff]
    %v2514 = vld [vmem:[%s2446 + $0x258] sm:$0xff]
    %v2515 = vld [vmem:[%s2446 + $0x260] sm:$0xff]
    %v2516 = vld [vmem:[%s2446 + $0x268] sm:$0xff]
    %v2517 = vld [vmem:[%s2446 + $0x280] sm:$0xff]
    %v2518 = vld [vmem:[%s2446 + $0x288] sm:$0xff]
    %v2519 = vld [vmem:[%s2446 + $0x290] sm:$0xff]
    %v2520 = vld [vmem:[%s2446 + $0x298] sm:$0xff]
    %v2521 = vld [vmem:[%s2446 + $0x2a0] sm:$0xff]
    %v2522 = vld [vmem:[%s2446 + $0x2a8] sm:$0xff]
    %v2523 = vld [vmem:[%s2446 + $0x2b0] sm:$0xff]
    %v2524 = vld [vmem:[%s2446 + $0x2b8] sm:$0xff]
    %v2525 = vld [vmem:[%s2446 + $0x2c0] sm:$0xff]
    %v2526 = vld [vmem:[%s2446 + $0x2c8] sm:$0xff]
    %v2527 = vld [vmem:[%s2446 + $0x2d0] sm:$0xff]
    %v2528 = vld [vmem:[%s2446 + $0x2d8] sm:$0xff]
    %v2529 = vld [vmem:[%s2446 + $0x2e0] sm:$0xff]
    %v2530 = vld [vmem:[%s2446 + $0x2e8] sm:$0xff]
    %v2531 = vld [vmem:[%s2446 + $0x300] sm:$0xff]
    %v2532 = vld [vmem:[%s2446 + $0x308] sm:$0xff]
    %v2533 = vld [vmem:[%s2446 + $0x310] sm:$0xff]
    %v2534 = vld [vmem:[%s2446 + $0x318] sm:$0xff]
    %v2535 = vld [vmem:[%s2446 + $0x320] sm:$0xff]
    %v2536 = vld [vmem:[%s2446 + $0x328] sm:$0xff]
    %v2537 = vld [vmem:[%s2446 + $0x330] sm:$0xff]
    %v2538 = vld [vmem:[%s2446 + $0x338] sm:$0xff]
    %v2539 = vld [vmem:[%s2446 + $0x340] sm:$0xff]
    %v2540 = vld [vmem:[%s2446 + $0x348] sm:$0xff]
    %v2541 = vld [vmem:[%s2446 + $0x350] sm:$0xff]
    %v2542 = vld [vmem:[%s2446 + $0x358] sm:$0xff]
    %v2543 = vld [vmem:[%s2446 + $0x360] sm:$0xff]
    %v2544 = vld [vmem:[%s2446 + $0x368] sm:$0xff]
    %v2545 = vld [vmem:[%s2446 + $0x380] sm:$0xff]
    %v2546 = vld [vmem:[%s2446 + $0x388] sm:$0xff]
    %v2547 = vld [vmem:[%s2446 + $0x390] sm:$0xff]
    %v2548 = vld [vmem:[%s2446 + $0x398] sm:$0xff]
    %v2549 = vld [vmem:[%s2446 + $0x3a0] sm:$0xff]
    %v2550 = vld [vmem:[%s2446 + $0x3a8] sm:$0xff]
    %v2551 = vld [vmem:[%s2446 + $0x3b0] sm:$0xff]
    %v2552 = vld [vmem:[%s2446 + $0x3b8] sm:$0xff]
    %v2553 = vld [vmem:[%s2446 + $0x3c0] sm:$0xff]
    %v2554 = vld [vmem:[%s2446 + $0x3c8] sm:$0xff]
    %v2555 = vld [vmem:[%s2446 + $0x3d0] sm:$0xff]
    %v2556 = vld [vmem:[%s2446 + $0x3d8] sm:$0xff]
    %v2557 = vld [vmem:[%s2446 + $0x3e0] sm:$0xff]
    %v2558 = vld [vmem:[%s2446 + $0x3e8] sm:$0xff]
    %2671 = vrot.lane.b32.xlu0 %v2447, 48
    %v2672 = vpop.permute.xlu0 %2671
    %2673 = vrot.lane.b32.xlu0 %v2448, 48
    %v2674 = vpop.permute.xlu0 %2673
    %2675 = vrot.lane.b32.xlu0 %v2449, 48
    %v2676 = vpop.permute.xlu0 %2675
    %2677 = vrot.lane.b32.xlu0 %v2450, 48
    %v2678 = vpop.permute.xlu0 %2677
    %2679 = vrot.lane.b32.xlu0 %v2451, 48
    %v2680 = vpop.permute.xlu0 %2679
    %2681 = vrot.lane.b32.xlu0 %v2452, 48
    %v2682 = vpop.permute.xlu0 %2681
    %2683 = vrot.lane.b32.xlu0 %v2453, 48
    %v2684 = vpop.permute.xlu0 %2683
    %2685 = vrot.lane.b32.xlu0 %v2454, 48
    %v2686 = vpop.permute.xlu0 %2685
    %2687 = vrot.lane.b32.xlu0 %v2455, 48
    %v2688 = vpop.permute.xlu0 %2687
    %2689 = vrot.lane.b32.xlu0 %v2456, 48
    %v2690 = vpop.permute.xlu0 %2689
    %2691 = vrot.lane.b32.xlu0 %v2457, 48
    %v2692 = vpop.permute.xlu0 %2691
    %2693 = vrot.lane.b32.xlu0 %v2458, 48
    %v2694 = vpop.permute.xlu0 %2693
    %2695 = vrot.lane.b32.xlu0 %v2459, 48
    %v2696 = vpop.permute.xlu0 %2695
    %2697 = vrot.lane.b32.xlu0 %v2460, 48
    %v2698 = vpop.permute.xlu0 %2697
    %2699 = vrot.lane.b32.xlu0 %v2461, 48
    %v2700 = vpop.permute.xlu0 %2699
    %2701 = vrot.lane.b32.xlu0 %v2462, 48
    %v2702 = vpop.permute.xlu0 %2701
    %2703 = vrot.lane.b32.xlu0 %v2463, 48
    %v2704 = vpop.permute.xlu0 %2703
    %2705 = vrot.lane.b32.xlu0 %v2464, 48
    %v2706 = vpop.permute.xlu0 %2705
    %2707 = vrot.lane.b32.xlu0 %v2465, 48
    %v2708 = vpop.permute.xlu0 %2707
    %2709 = vrot.lane.b32.xlu0 %v2466, 48
    %v2710 = vpop.permute.xlu0 %2709
    %2711 = vrot.lane.b32.xlu0 %v2467, 48
    %v2712 = vpop.permute.xlu0 %2711
    %2713 = vrot.lane.b32.xlu0 %v2468, 48
    %v2714 = vpop.permute.xlu0 %2713
    %2715 = vrot.lane.b32.xlu0 %v2469, 48
    %v2716 = vpop.permute.xlu0 %2715
    %2717 = vrot.lane.b32.xlu0 %v2470, 48
    %v2718 = vpop.permute.xlu0 %2717
    %2719 = vrot.lane.b32.xlu0 %v2471, 48
    %v2720 = vpop.permute.xlu0 %2719
    %2721 = vrot.lane.b32.xlu0 %v2472, 48
    %v2722 = vpop.permute.xlu0 %2721
    %2723 = vrot.lane.b32.xlu0 %v2473, 48
    %v2724 = vpop.permute.xlu0 %2723
    %2725 = vrot.lane.b32.xlu0 %v2474, 48
    %v2726 = vpop.permute.xlu0 %2725
    %2727 = vrot.lane.b32.xlu0 %v2475, 48
    %v2728 = vpop.permute.xlu0 %2727
    %2729 = vrot.lane.b32.xlu0 %v2476, 48
    %v2730 = vpop.permute.xlu0 %2729
    %2731 = vrot.lane.b32.xlu0 %v2477, 48
    %v2732 = vpop.permute.xlu0 %2731
    %2733 = vrot.lane.b32.xlu0 %v2478, 48
    %v2734 = vpop.permute.xlu0 %2733
    %2735 = vrot.lane.b32.xlu0 %v2479, 48
    %v2736 = vpop.permute.xlu0 %2735
    %2737 = vrot.lane.b32.xlu0 %v2480, 48
    %v2738 = vpop.permute.xlu0 %2737
    %2739 = vrot.lane.b32.xlu0 %v2481, 48
    %v2740 = vpop.permute.xlu0 %2739
    %2741 = vrot.lane.b32.xlu0 %v2482, 48
    %v2742 = vpop.permute.xlu0 %2741
    %2743 = vrot.lane.b32.xlu0 %v2483, 48
    %v2744 = vpop.permute.xlu0 %2743
    %2745 = vrot.lane.b32.xlu0 %v2484, 48
    %v2746 = vpop.permute.xlu0 %2745
    %2747 = vrot.lane.b32.xlu0 %v2485, 48
    %v2748 = vpop.permute.xlu0 %2747
    %2749 = vrot.lane.b32.xlu0 %v2486, 48
    %v2750 = vpop.permute.xlu0 %2749
    %2751 = vrot.lane.b32.xlu0 %v2487, 48
    %v2752 = vpop.permute.xlu0 %2751
    %2753 = vrot.lane.b32.xlu0 %v2488, 48
    %v2754 = vpop.permute.xlu0 %2753
    %2755 = vrot.lane.b32.xlu0 %v2489, 48
    %v2756 = vpop.permute.xlu0 %2755
    %2757 = vrot.lane.b32.xlu0 %v2490, 48
    %v2758 = vpop.permute.xlu0 %2757
    %2759 = vrot.lane.b32.xlu0 %v2491, 48
    %v2760 = vpop.permute.xlu0 %2759
    %2761 = vrot.lane.b32.xlu0 %v2492, 48
    %v2762 = vpop.permute.xlu0 %2761
    %2763 = vrot.lane.b32.xlu0 %v2493, 48
    %v2764 = vpop.permute.xlu0 %2763
    %2765 = vrot.lane.b32.xlu0 %v2494, 48
    %v2766 = vpop.permute.xlu0 %2765
    %2767 = vrot.lane.b32.xlu0 %v2495, 48
    %v2768 = vpop.permute.xlu0 %2767
    %2769 = vrot.lane.b32.xlu0 %v2496, 48
    %v2770 = vpop.permute.xlu0 %2769
    %2771 = vrot.lane.b32.xlu0 %v2497, 48
    %v2772 = vpop.permute.xlu0 %2771
    %2773 = vrot.lane.b32.xlu0 %v2498, 48
    %v2774 = vpop.permute.xlu0 %2773
    %2775 = vrot.lane.b32.xlu0 %v2499, 48
    %v2776 = vpop.permute.xlu0 %2775
    %2777 = vrot.lane.b32.xlu0 %v2500, 48
    %v2778 = vpop.permute.xlu0 %2777
    %2779 = vrot.lane.b32.xlu0 %v2501, 48
    %v2780 = vpop.permute.xlu0 %2779
    %2781 = vrot.lane.b32.xlu0 %v2502, 48
    %v2782 = vpop.permute.xlu0 %2781
    %2783 = vrot.lane.b32.xlu0 %v2503, 48
    %v2784 = vpop.permute.xlu0 %2783
    %2785 = vrot.lane.b32.xlu0 %v2504, 48
    %v2786 = vpop.permute.xlu0 %2785
    %2787 = vrot.lane.b32.xlu0 %v2505, 48
    %v2788 = vpop.permute.xlu0 %2787
    %2789 = vrot.lane.b32.xlu0 %v2506, 48
    %v2790 = vpop.permute.xlu0 %2789
    %2791 = vrot.lane.b32.xlu0 %v2507, 48
    %v2792 = vpop.permute.xlu0 %2791
    %2793 = vrot.lane.b32.xlu0 %v2508, 48
    %v2794 = vpop.permute.xlu0 %2793
    %2795 = vrot.lane.b32.xlu0 %v2509, 48
    %v2796 = vpop.permute.xlu0 %2795
    %2797 = vrot.lane.b32.xlu0 %v2510, 48
    %v2798 = vpop.permute.xlu0 %2797
    %2799 = vrot.lane.b32.xlu0 %v2511, 48
    %v2800 = vpop.permute.xlu0 %2799
    %2801 = vrot.lane.b32.xlu0 %v2512, 48
    %v2802 = vpop.permute.xlu0 %2801
    %2803 = vrot.lane.b32.xlu0 %v2513, 48
    %v2804 = vpop.permute.xlu0 %2803
    %2805 = vrot.lane.b32.xlu0 %v2514, 48
    %v2806 = vpop.permute.xlu0 %2805
    %2807 = vrot.lane.b32.xlu0 %v2515, 48
    %v2808 = vpop.permute.xlu0 %2807
    %2809 = vrot.lane.b32.xlu0 %v2516, 48
    %v2810 = vpop.permute.xlu0 %2809
    %2811 = vrot.lane.b32.xlu0 %v2517, 48
    %v2812 = vpop.permute.xlu0 %2811
    %2813 = vrot.lane.b32.xlu0 %v2518, 48
    %v2814 = vpop.permute.xlu0 %2813
    %2815 = vrot.lane.b32.xlu0 %v2519, 48
    %v2816 = vpop.permute.xlu0 %2815
    %2817 = vrot.lane.b32.xlu0 %v2520, 48
    %v2818 = vpop.permute.xlu0 %2817
    %2819 = vrot.lane.b32.xlu0 %v2521, 48
    %v2820 = vpop.permute.xlu0 %2819
    %2821 = vrot.lane.b32.xlu0 %v2522, 48
    %v2822 = vpop.permute.xlu0 %2821
    %2823 = vrot.lane.b32.xlu0 %v2523, 48
    %v2824 = vpop.permute.xlu0 %2823
    %2825 = vrot.lane.b32.xlu0 %v2524, 48
    %v2826 = vpop.permute.xlu0 %2825
    %2827 = vrot.lane.b32.xlu0 %v2525, 48
    %v2828 = vpop.permute.xlu0 %2827
    %2829 = vrot.lane.b32.xlu0 %v2526, 48
    %v2830 = vpop.permute.xlu0 %2829
    %2831 = vrot.lane.b32.xlu0 %v2527, 48
    %v2832 = vpop.permute.xlu0 %2831
    %2833 = vrot.lane.b32.xlu0 %v2528, 48
    %v2834 = vpop.permute.xlu0 %2833
    %2835 = vrot.lane.b32.xlu0 %v2529, 48
    %v2836 = vpop.permute.xlu0 %2835
    %2837 = vrot.lane.b32.xlu0 %v2530, 48
    %v2838 = vpop.permute.xlu0 %2837
    %2839 = vrot.lane.b32.xlu0 %v2531, 48
    %v2840 = vpop.permute.xlu0 %2839
    %2841 = vrot.lane.b32.xlu0 %v2532, 48
    %v2842 = vpop.permute.xlu0 %2841
    %2843 = vrot.lane.b32.xlu0 %v2533, 48
    %v2844 = vpop.permute.xlu0 %2843
    %2845 = vrot.lane.b32.xlu0 %v2534, 48
    %v2846 = vpop.permute.xlu0 %2845
    %2847 = vrot.lane.b32.xlu0 %v2535, 48
    %v2848 = vpop.permute.xlu0 %2847
    %2849 = vrot.lane.b32.xlu0 %v2536, 48
    %v2850 = vpop.permute.xlu0 %2849
    %2851 = vrot.lane.b32.xlu0 %v2537, 48
    %v2852 = vpop.permute.xlu0 %2851
    %2853 = vrot.lane.b32.xlu0 %v2538, 48
    %v2854 = vpop.permute.xlu0 %2853
    %2855 = vrot.lane.b32.xlu0 %v2539, 48
    %v2856 = vpop.permute.xlu0 %2855
    %2857 = vrot.lane.b32.xlu0 %v2540, 48
    %v2858 = vpop.permute.xlu0 %2857
    %2859 = vrot.lane.b32.xlu0 %v2541, 48
    %v2860 = vpop.permute.xlu0 %2859
    %2861 = vrot.lane.b32.xlu0 %v2542, 48
    %v2862 = vpop.permute.xlu0 %2861
    %2863 = vrot.lane.b32.xlu0 %v2543, 48
    %v2864 = vpop.permute.xlu0 %2863
    %2865 = vrot.lane.b32.xlu0 %v2544, 48
    %v2866 = vpop.permute.xlu0 %2865
    %2867 = vrot.lane.b32.xlu0 %v2545, 48
    %v2868 = vpop.permute.xlu0 %2867
    %2869 = vrot.lane.b32.xlu0 %v2546, 48
    %v2870 = vpop.permute.xlu0 %2869
    %2871 = vrot.lane.b32.xlu0 %v2547, 48
    %v2872 = vpop.permute.xlu0 %2871
    %2873 = vrot.lane.b32.xlu0 %v2548, 48
    %v2874 = vpop.permute.xlu0 %2873
    %2875 = vrot.lane.b32.xlu0 %v2549, 48
    %v2876 = vpop.permute.xlu0 %2875
    %2877 = vrot.lane.b32.xlu0 %v2550, 48
    %v2878 = vpop.permute.xlu0 %2877
    %2879 = vrot.lane.b32.xlu0 %v2551, 48
    %v2880 = vpop.permute.xlu0 %2879
    %2881 = vrot.lane.b32.xlu0 %v2552, 48
    %v2882 = vpop.permute.xlu0 %2881
    %2883 = vrot.lane.b32.xlu0 %v2553, 48
    %v2884 = vpop.permute.xlu0 %2883
    %2885 = vrot.lane.b32.xlu0 %v2554, 48
    %v2886 = vpop.permute.xlu0 %2885
    %2887 = vrot.lane.b32.xlu0 %v2555, 48
    %v2888 = vpop.permute.xlu0 %2887
    %2889 = vrot.lane.b32.xlu0 %v2556, 48
    %v2890 = vpop.permute.xlu0 %2889
    %2891 = vrot.lane.b32.xlu0 %v2557, 48
    %v2892 = vpop.permute.xlu0 %2891
    %2893 = vrot.lane.b32.xlu0 %v2558, 48
    %v2894 = vpop.permute.xlu0 %2893
    %vm3007 = vcmask 523648
    %3008 = vst.msk [vmem:[#allocation3] sm:$0xff] %vm3007, %v2672
    %3009 = vst.msk [vmem:[#allocation3 + $0x10] sm:$0xff] %vm3007, %v2674
    %3010 = vst.msk [vmem:[#allocation3 + $0x20] sm:$0xff] %vm3007, %v2676
    %3011 = vst.msk [vmem:[#allocation3 + $0x30] sm:$0xff] %vm3007, %v2678
    %3012 = vst.msk [vmem:[#allocation3 + $0x40] sm:$0xff] %vm3007, %v2680
    %3013 = vst.msk [vmem:[#allocation3 + $0x50] sm:$0xff] %vm3007, %v2682
    %3014 = vst.msk [vmem:[#allocation3 + $0x60] sm:$0xff] %vm3007, %v2684
    %3015 = vst.msk [vmem:[#allocation3 + $0x70] sm:$0xff] %vm3007, %v2686
    %3016 = vst.msk [vmem:[#allocation3 + $0x80] sm:$0xff] %vm3007, %v2688
    %3017 = vst.msk [vmem:[#allocation3 + $0x90] sm:$0xff] %vm3007, %v2690
    %3018 = vst.msk [vmem:[#allocation3 + $0xa0] sm:$0xff] %vm3007, %v2692
    %3019 = vst.msk [vmem:[#allocation3 + $0xb0] sm:$0xff] %vm3007, %v2694
    %3020 = vst.msk [vmem:[#allocation3 + $0xc0] sm:$0xff] %vm3007, %v2696
    %3021 = vst.msk [vmem:[#allocation3 + $0xd0] sm:$0xff] %vm3007, %v2698
    %3022 = vst.msk [vmem:[#allocation3 + $0x100] sm:$0xff] %vm3007, %v2700
    %3023 = vst.msk [vmem:[#allocation3 + $0x110] sm:$0xff] %vm3007, %v2702
    %3024 = vst.msk [vmem:[#allocation3 + $0x120] sm:$0xff] %vm3007, %v2704
    %3025 = vst.msk [vmem:[#allocation3 + $0x130] sm:$0xff] %vm3007, %v2706
    %3026 = vst.msk [vmem:[#allocation3 + $0x140] sm:$0xff] %vm3007, %v2708
    %3027 = vst.msk [vmem:[#allocation3 + $0x150] sm:$0xff] %vm3007, %v2710
    %3028 = vst.msk [vmem:[#allocation3 + $0x160] sm:$0xff] %vm3007, %v2712
    %3029 = vst.msk [vmem:[#allocation3 + $0x170] sm:$0xff] %vm3007, %v2714
    %3030 = vst.msk [vmem:[#allocation3 + $0x180] sm:$0xff] %vm3007, %v2716
    %3031 = vst.msk [vmem:[#allocation3 + $0x190] sm:$0xff] %vm3007, %v2718
    %3032 = vst.msk [vmem:[#allocation3 + $0x1a0] sm:$0xff] %vm3007, %v2720
    %3033 = vst.msk [vmem:[#allocation3 + $0x1b0] sm:$0xff] %vm3007, %v2722
    %3034 = vst.msk [vmem:[#allocation3 + $0x1c0] sm:$0xff] %vm3007, %v2724
    %3035 = vst.msk [vmem:[#allocation3 + $0x1d0] sm:$0xff] %vm3007, %v2726
    %3036 = vst.msk [vmem:[#allocation3 + $0x200] sm:$0xff] %vm3007, %v2728
    %3037 = vst.msk [vmem:[#allocation3 + $0x210] sm:$0xff] %vm3007, %v2730
    %3038 = vst.msk [vmem:[#allocation3 + $0x220] sm:$0xff] %vm3007, %v2732
    %3039 = vst.msk [vmem:[#allocation3 + $0x230] sm:$0xff] %vm3007, %v2734
    %3040 = vst.msk [vmem:[#allocation3 + $0x240] sm:$0xff] %vm3007, %v2736
    %3041 = vst.msk [vmem:[#allocation3 + $0x250] sm:$0xff] %vm3007, %v2738
    %3042 = vst.msk [vmem:[#allocation3 + $0x260] sm:$0xff] %vm3007, %v2740
    %3043 = vst.msk [vmem:[#allocation3 + $0x270] sm:$0xff] %vm3007, %v2742
    %3044 = vst.msk [vmem:[#allocation3 + $0x280] sm:$0xff] %vm3007, %v2744
    %3045 = vst.msk [vmem:[#allocation3 + $0x290] sm:$0xff] %vm3007, %v2746
    %3046 = vst.msk [vmem:[#allocation3 + $0x2a0] sm:$0xff] %vm3007, %v2748
    %3047 = vst.msk [vmem:[#allocation3 + $0x2b0] sm:$0xff] %vm3007, %v2750
    %3048 = vst.msk [vmem:[#allocation3 + $0x2c0] sm:$0xff] %vm3007, %v2752
    %3049 = vst.msk [vmem:[#allocation3 + $0x2d0] sm:$0xff] %vm3007, %v2754
    %3050 = vst.msk [vmem:[#allocation3 + $0x300] sm:$0xff] %vm3007, %v2756
    %3051 = vst.msk [vmem:[#allocation3 + $0x310] sm:$0xff] %vm3007, %v2758
    %3052 = vst.msk [vmem:[#allocation3 + $0x320] sm:$0xff] %vm3007, %v2760
    %3053 = vst.msk [vmem:[#allocation3 + $0x330] sm:$0xff] %vm3007, %v2762
    %3054 = vst.msk [vmem:[#allocation3 + $0x340] sm:$0xff] %vm3007, %v2764
    %3055 = vst.msk [vmem:[#allocation3 + $0x350] sm:$0xff] %vm3007, %v2766
    %3056 = vst.msk [vmem:[#allocation3 + $0x360] sm:$0xff] %vm3007, %v2768
    %3057 = vst.msk [vmem:[#allocation3 + $0x370] sm:$0xff] %vm3007, %v2770
    %3058 = vst.msk [vmem:[#allocation3 + $0x380] sm:$0xff] %vm3007, %v2772
    %3059 = vst.msk [vmem:[#allocation3 + $0x390] sm:$0xff] %vm3007, %v2774
    %3060 = vst.msk [vmem:[#allocation3 + $0x3a0] sm:$0xff] %vm3007, %v2776
    %3061 = vst.msk [vmem:[#allocation3 + $0x3b0] sm:$0xff] %vm3007, %v2778
    %3062 = vst.msk [vmem:[#allocation3 + $0x3c0] sm:$0xff] %vm3007, %v2780
    %3063 = vst.msk [vmem:[#allocation3 + $0x3d0] sm:$0xff] %vm3007, %v2782
    %3064 = vst.msk [vmem:[#allocation3 + $0x400] sm:$0xff] %vm3007, %v2784
    %3065 = vst.msk [vmem:[#allocation3 + $0x410] sm:$0xff] %vm3007, %v2786
    %3066 = vst.msk [vmem:[#allocation3 + $0x420] sm:$0xff] %vm3007, %v2788
    %3067 = vst.msk [vmem:[#allocation3 + $0x430] sm:$0xff] %vm3007, %v2790
    %3068 = vst.msk [vmem:[#allocation3 + $0x440] sm:$0xff] %vm3007, %v2792
    %3069 = vst.msk [vmem:[#allocation3 + $0x450] sm:$0xff] %vm3007, %v2794
    %3070 = vst.msk [vmem:[#allocation3 + $0x460] sm:$0xff] %vm3007, %v2796
    %3071 = vst.msk [vmem:[#allocation3 + $0x470] sm:$0xff] %vm3007, %v2798
    %3072 = vst.msk [vmem:[#allocation3 + $0x480] sm:$0xff] %vm3007, %v2800
    %3073 = vst.msk [vmem:[#allocation3 + $0x490] sm:$0xff] %vm3007, %v2802
    %3074 = vst.msk [vmem:[#allocation3 + $0x4a0] sm:$0xff] %vm3007, %v2804
    %3075 = vst.msk [vmem:[#allocation3 + $0x4b0] sm:$0xff] %vm3007, %v2806
    %3076 = vst.msk [vmem:[#allocation3 + $0x4c0] sm:$0xff] %vm3007, %v2808
    %3077 = vst.msk [vmem:[#allocation3 + $0x4d0] sm:$0xff] %vm3007, %v2810
    %3078 = vst.msk [vmem:[#allocation3 + $0x500] sm:$0xff] %vm3007, %v2812
    %3079 = vst.msk [vmem:[#allocation3 + $0x510] sm:$0xff] %vm3007, %v2814
    %3080 = vst.msk [vmem:[#allocation3 + $0x520] sm:$0xff] %vm3007, %v2816
    %3081 = vst.msk [vmem:[#allocation3 + $0x530] sm:$0xff] %vm3007, %v2818
    %3082 = vst.msk [vmem:[#allocation3 + $0x540] sm:$0xff] %vm3007, %v2820
    %3083 = vst.msk [vmem:[#allocation3 + $0x550] sm:$0xff] %vm3007, %v2822
    %3084 = vst.msk [vmem:[#allocation3 + $0x560] sm:$0xff] %vm3007, %v2824
    %3085 = vst.msk [vmem:[#allocation3 + $0x570] sm:$0xff] %vm3007, %v2826
    %3086 = vst.msk [vmem:[#allocation3 + $0x580] sm:$0xff] %vm3007, %v2828
    %3087 = vst.msk [vmem:[#allocation3 + $0x590] sm:$0xff] %vm3007, %v2830
    %3088 = vst.msk [vmem:[#allocation3 + $0x5a0] sm:$0xff] %vm3007, %v2832
    %3089 = vst.msk [vmem:[#allocation3 + $0x5b0] sm:$0xff] %vm3007, %v2834
    %3090 = vst.msk [vmem:[#allocation3 + $0x5c0] sm:$0xff] %vm3007, %v2836
    %3091 = vst.msk [vmem:[#allocation3 + $0x5d0] sm:$0xff] %vm3007, %v2838
    %3092 = vst.msk [vmem:[#allocation3 + $0x600] sm:$0xff] %vm3007, %v2840
    %3093 = vst.msk [vmem:[#allocation3 + $0x610] sm:$0xff] %vm3007, %v2842
    %3094 = vst.msk [vmem:[#allocation3 + $0x620] sm:$0xff] %vm3007, %v2844
    %3095 = vst.msk [vmem:[#allocation3 + $0x630] sm:$0xff] %vm3007, %v2846
    %3096 = vst.msk [vmem:[#allocation3 + $0x640] sm:$0xff] %vm3007, %v2848
    %3097 = vst.msk [vmem:[#allocation3 + $0x650] sm:$0xff] %vm3007, %v2850
    %3098 = vst.msk [vmem:[#allocation3 + $0x660] sm:$0xff] %vm3007, %v2852
    %3099 = vst.msk [vmem:[#allocation3 + $0x670] sm:$0xff] %vm3007, %v2854
    %3100 = vst.msk [vmem:[#allocation3 + $0x680] sm:$0xff] %vm3007, %v2856
    %3101 = vst.msk [vmem:[#allocation3 + $0x690] sm:$0xff] %vm3007, %v2858
    %3102 = vst.msk [vmem:[#allocation3 + $0x6a0] sm:$0xff] %vm3007, %v2860
    %3103 = vst.msk [vmem:[#allocation3 + $0x6b0] sm:$0xff] %vm3007, %v2862
    %3104 = vst.msk [vmem:[#allocation3 + $0x6c0] sm:$0xff] %vm3007, %v2864
    %3105 = vst.msk [vmem:[#allocation3 + $0x6d0] sm:$0xff] %vm3007, %v2866
    %3106 = vst.msk [vmem:[#allocation3 + $0x700] sm:$0xff] %vm3007, %v2868
    %3107 = vst.msk [vmem:[#allocation3 + $0x710] sm:$0xff] %vm3007, %v2870
    %3108 = vst.msk [vmem:[#allocation3 + $0x720] sm:$0xff] %vm3007, %v2872
    %3109 = vst.msk [vmem:[#allocation3 + $0x730] sm:$0xff] %vm3007, %v2874
    %3110 = vst.msk [vmem:[#allocation3 + $0x740] sm:$0xff] %vm3007, %v2876
    %3111 = vst.msk [vmem:[#allocation3 + $0x750] sm:$0xff] %vm3007, %v2878
    %3112 = vst.msk [vmem:[#allocation3 + $0x760] sm:$0xff] %vm3007, %v2880
    %3113 = vst.msk [vmem:[#allocation3 + $0x770] sm:$0xff] %vm3007, %v2882
    %3114 = vst.msk [vmem:[#allocation3 + $0x780] sm:$0xff] %vm3007, %v2884
    %3115 = vst.msk [vmem:[#allocation3 + $0x790] sm:$0xff] %vm3007, %v2886
    %3116 = vst.msk [vmem:[#allocation3 + $0x7a0] sm:$0xff] %vm3007, %v2888
    %3117 = vst.msk [vmem:[#allocation3 + $0x7b0] sm:$0xff] %vm3007, %v2890
    %3118 = vst.msk [vmem:[#allocation3 + $0x7c0] sm:$0xff] %vm3007, %v2892
    %3119 = vst.msk [vmem:[#allocation3 + $0x7d0] sm:$0xff] %vm3007, %v2894
    %v3120 = vld [vmem:[%s2446 + $0x1] sm:$0xff]
    %v3121 = vld [vmem:[%s2446 + $0x9] sm:$0x7f]
    %v3122 = vld [vmem:[%s2446 + $0x11] sm:$0xff]
    %v3123 = vld [vmem:[%s2446 + $0x19] sm:$0x7f]
    %v3124 = vld [vmem:[%s2446 + $0x21] sm:$0xff]
    %v3125 = vld [vmem:[%s2446 + $0x29] sm:$0x7f]
    %v3126 = vld [vmem:[%s2446 + $0x31] sm:$0xff]
    %v3127 = vld [vmem:[%s2446 + $0x39] sm:$0x7f]
    %v3128 = vld [vmem:[%s2446 + $0x41] sm:$0xff]
    %v3129 = vld [vmem:[%s2446 + $0x49] sm:$0x7f]
    %v3130 = vld [vmem:[%s2446 + $0x51] sm:$0xff]
    %v3131 = vld [vmem:[%s2446 + $0x59] sm:$0x7f]
    %v3132 = vld [vmem:[%s2446 + $0x61] sm:$0xff]
    %v3133 = vld [vmem:[%s2446 + $0x69] sm:$0x7f]
    %v3134 = vld [vmem:[%s2446 + $0x81] sm:$0xff]
    %v3135 = vld [vmem:[%s2446 + $0x89] sm:$0x7f]
    %v3136 = vld [vmem:[%s2446 + $0x91] sm:$0xff]
    %v3137 = vld [vmem:[%s2446 + $0x99] sm:$0x7f]
    %v3138 = vld [vmem:[%s2446 + $0xa1] sm:$0xff]
    %v3139 = vld [vmem:[%s2446 + $0xa9] sm:$0x7f]
    %v3140 = vld [vmem:[%s2446 + $0xb1] sm:$0xff]
    %v3141 = vld [vmem:[%s2446 + $0xb9] sm:$0x7f]
    %v3142 = vld [vmem:[%s2446 + $0xc1] sm:$0xff]
    %v3143 = vld [vmem:[%s2446 + $0xc9] sm:$0x7f]
    %v3144 = vld [vmem:[%s2446 + $0xd1] sm:$0xff]
    %v3145 = vld [vmem:[%s2446 + $0xd9] sm:$0x7f]
    %v3146 = vld [vmem:[%s2446 + $0xe1] sm:$0xff]
    %v3147 = vld [vmem:[%s2446 + $0xe9] sm:$0x7f]
    %v3148 = vld [vmem:[%s2446 + $0x101] sm:$0xff]
    %v3149 = vld [vmem:[%s2446 + $0x109] sm:$0x7f]
    %v3150 = vld [vmem:[%s2446 + $0x111] sm:$0xff]
    %v3151 = vld [vmem:[%s2446 + $0x119] sm:$0x7f]
    %v3152 = vld [vmem:[%s2446 + $0x121] sm:$0xff]
    %v3153 = vld [vmem:[%s2446 + $0x129] sm:$0x7f]
    %v3154 = vld [vmem:[%s2446 + $0x131] sm:$0xff]
    %v3155 = vld [vmem:[%s2446 + $0x139] sm:$0x7f]
    %v3156 = vld [vmem:[%s2446 + $0x141] sm:$0xff]
    %v3157 = vld [vmem:[%s2446 + $0x149] sm:$0x7f]
    %v3158 = vld [vmem:[%s2446 + $0x151] sm:$0xff]
    %v3159 = vld [vmem:[%s2446 + $0x159] sm:$0x7f]
    %v3160 = vld [vmem:[%s2446 + $0x161] sm:$0xff]
    %v3161 = vld [vmem:[%s2446 + $0x169] sm:$0x7f]
    %v3162 = vld [vmem:[%s2446 + $0x181] sm:$0xff]
    %v3163 = vld [vmem:[%s2446 + $0x189] sm:$0x7f]
    %v3164 = vld [vmem:[%s2446 + $0x191] sm:$0xff]
    %v3165 = vld [vmem:[%s2446 + $0x199] sm:$0x7f]
    %v3166 = vld [vmem:[%s2446 + $0x1a1] sm:$0xff]
    %v3167 = vld [vmem:[%s2446 + $0x1a9] sm:$0x7f]
    %v3168 = vld [vmem:[%s2446 + $0x1b1] sm:$0xff]
    %v3169 = vld [vmem:[%s2446 + $0x1b9] sm:$0x7f]
    %v3170 = vld [vmem:[%s2446 + $0x1c1] sm:$0xff]
    %v3171 = vld [vmem:[%s2446 + $0x1c9] sm:$0x7f]
    %v3172 = vld [vmem:[%s2446 + $0x1d1] sm:$0xff]
    %v3173 = vld [vmem:[%s2446 + $0x1d9] sm:$0x7f]
    %v3174 = vld [vmem:[%s2446 + $0x1e1] sm:$0xff]
    %v3175 = vld [vmem:[%s2446 + $0x1e9] sm:$0x7f]
    %v3176 = vld [vmem:[%s2446 + $0x201] sm:$0xff]
    %v3177 = vld [vmem:[%s2446 + $0x209] sm:$0x7f]
    %v3178 = vld [vmem:[%s2446 + $0x211] sm:$0xff]
    %v3179 = vld [vmem:[%s2446 + $0x219] sm:$0x7f]
    %v3180 = vld [vmem:[%s2446 + $0x221] sm:$0xff]
    %v3181 = vld [vmem:[%s2446 + $0x229] sm:$0x7f]
    %v3182 = vld [vmem:[%s2446 + $0x231] sm:$0xff]
    %v3183 = vld [vmem:[%s2446 + $0x239] sm:$0x7f]
    %v3184 = vld [vmem:[%s2446 + $0x241] sm:$0xff]
    %v3185 = vld [vmem:[%s2446 + $0x249] sm:$0x7f]
    %v3186 = vld [vmem:[%s2446 + $0x251] sm:$0xff]
    %v3187 = vld [vmem:[%s2446 + $0x259] sm:$0x7f]
    %v3188 = vld [vmem:[%s2446 + $0x261] sm:$0xff]
    %v3189 = vld [vmem:[%s2446 + $0x269] sm:$0x7f]
    %v3190 = vld [vmem:[%s2446 + $0x281] sm:$0xff]
    %v3191 = vld [vmem:[%s2446 + $0x289] sm:$0x7f]
    %v3192 = vld [vmem:[%s2446 + $0x291] sm:$0xff]
    %v3193 = vld [vmem:[%s2446 + $0x299] sm:$0x7f]
    %v3194 = vld [vmem:[%s2446 + $0x2a1] sm:$0xff]
    %v3195 = vld [vmem:[%s2446 + $0x2a9] sm:$0x7f]
    %v3196 = vld [vmem:[%s2446 + $0x2b1] sm:$0xff]
    %v3197 = vld [vmem:[%s2446 + $0x2b9] sm:$0x7f]
    %v3198 = vld [vmem:[%s2446 + $0x2c1] sm:$0xff]
    %v3199 = vld [vmem:[%s2446 + $0x2c9] sm:$0x7f]
    %v3200 = vld [vmem:[%s2446 + $0x2d1] sm:$0xff]
    %v3201 = vld [vmem:[%s2446 + $0x2d9] sm:$0x7f]
    %v3202 = vld [vmem:[%s2446 + $0x2e1] sm:$0xff]
    %v3203 = vld [vmem:[%s2446 + $0x2e9] sm:$0x7f]
    %v3204 = vld [vmem:[%s2446 + $0x301] sm:$0xff]
    %v3205 = vld [vmem:[%s2446 + $0x309] sm:$0x7f]
    %v3206 = vld [vmem:[%s2446 + $0x311] sm:$0xff]
    %v3207 = vld [vmem:[%s2446 + $0x319] sm:$0x7f]
    %v3208 = vld [vmem:[%s2446 + $0x321] sm:$0xff]
    %v3209 = vld [vmem:[%s2446 + $0x329] sm:$0x7f]
    %v3210 = vld [vmem:[%s2446 + $0x331] sm:$0xff]
    %v3211 = vld [vmem:[%s2446 + $0x339] sm:$0x7f]
    %v3212 = vld [vmem:[%s2446 + $0x341] sm:$0xff]
    %v3213 = vld [vmem:[%s2446 + $0x349] sm:$0x7f]
    %v3214 = vld [vmem:[%s2446 + $0x351] sm:$0xff]
    %v3215 = vld [vmem:[%s2446 + $0x359] sm:$0x7f]
    %v3216 = vld [vmem:[%s2446 + $0x361] sm:$0xff]
    %v3217 = vld [vmem:[%s2446 + $0x369] sm:$0x7f]
    %v3218 = vld [vmem:[%s2446 + $0x381] sm:$0xff]
    %v3219 = vld [vmem:[%s2446 + $0x389] sm:$0x7f]
    %v3220 = vld [vmem:[%s2446 + $0x391] sm:$0xff]
    %v3221 = vld [vmem:[%s2446 + $0x399] sm:$0x7f]
    %v3222 = vld [vmem:[%s2446 + $0x3a1] sm:$0xff]
    %v3223 = vld [vmem:[%s2446 + $0x3a9] sm:$0x7f]
    %v3224 = vld [vmem:[%s2446 + $0x3b1] sm:$0xff]
    %v3225 = vld [vmem:[%s2446 + $0x3b9] sm:$0x7f]
    %v3226 = vld [vmem:[%s2446 + $0x3c1] sm:$0xff]
    %v3227 = vld [vmem:[%s2446 + $0x3c9] sm:$0x7f]
    %v3228 = vld [vmem:[%s2446 + $0x3d1] sm:$0xff]
    %v3229 = vld [vmem:[%s2446 + $0x3d9] sm:$0x7f]
    %v3230 = vld [vmem:[%s2446 + $0x3e1] sm:$0xff]
    %v3231 = vld [vmem:[%s2446 + $0x3e9] sm:$0x7f]
    %3344 = vrot.lane.b32.xlu0 %v3120, 64
    %v3345 = vpop.permute.xlu0 %3344
    %3346 = vrot.lane.b32.xlu0 %v3121, 64
    %v3347 = vpop.permute.xlu0 %3346
    %3348 = vrot.lane.b32.xlu0 %v3122, 64
    %v3349 = vpop.permute.xlu0 %3348
    %3350 = vrot.lane.b32.xlu0 %v3123, 64
    %v3351 = vpop.permute.xlu0 %3350
    %3352 = vrot.lane.b32.xlu0 %v3124, 64
    %v3353 = vpop.permute.xlu0 %3352
    %3354 = vrot.lane.b32.xlu0 %v3125, 64
    %v3355 = vpop.permute.xlu0 %3354
    %3356 = vrot.lane.b32.xlu0 %v3126, 64
    %v3357 = vpop.permute.xlu0 %3356
    %3358 = vrot.lane.b32.xlu0 %v3127, 64
    %v3359 = vpop.permute.xlu0 %3358
    %3360 = vrot.lane.b32.xlu0 %v3128, 64
    %v3361 = vpop.permute.xlu0 %3360
    %3362 = vrot.lane.b32.xlu0 %v3129, 64
    %v3363 = vpop.permute.xlu0 %3362
    %3364 = vrot.lane.b32.xlu0 %v3130, 64
    %v3365 = vpop.permute.xlu0 %3364
    %3366 = vrot.lane.b32.xlu0 %v3131, 64
    %v3367 = vpop.permute.xlu0 %3366
    %3368 = vrot.lane.b32.xlu0 %v3132, 64
    %v3369 = vpop.permute.xlu0 %3368
    %3370 = vrot.lane.b32.xlu0 %v3133, 64
    %v3371 = vpop.permute.xlu0 %3370
    %3372 = vrot.lane.b32.xlu0 %v3134, 64
    %v3373 = vpop.permute.xlu0 %3372
    %3374 = vrot.lane.b32.xlu0 %v3135, 64
    %v3375 = vpop.permute.xlu0 %3374
    %3376 = vrot.lane.b32.xlu0 %v3136, 64
    %v3377 = vpop.permute.xlu0 %3376
    %3378 = vrot.lane.b32.xlu0 %v3137, 64
    %v3379 = vpop.permute.xlu0 %3378
    %3380 = vrot.lane.b32.xlu0 %v3138, 64
    %v3381 = vpop.permute.xlu0 %3380
    %3382 = vrot.lane.b32.xlu0 %v3139, 64
    %v3383 = vpop.permute.xlu0 %3382
    %3384 = vrot.lane.b32.xlu0 %v3140, 64
    %v3385 = vpop.permute.xlu0 %3384
    %3386 = vrot.lane.b32.xlu0 %v3141, 64
    %v3387 = vpop.permute.xlu0 %3386
    %3388 = vrot.lane.b32.xlu0 %v3142, 64
    %v3389 = vpop.permute.xlu0 %3388
    %3390 = vrot.lane.b32.xlu0 %v3143, 64
    %v3391 = vpop.permute.xlu0 %3390
    %3392 = vrot.lane.b32.xlu0 %v3144, 64
    %v3393 = vpop.permute.xlu0 %3392
    %3394 = vrot.lane.b32.xlu0 %v3145, 64
    %v3395 = vpop.permute.xlu0 %3394
    %3396 = vrot.lane.b32.xlu0 %v3146, 64
    %v3397 = vpop.permute.xlu0 %3396
    %3398 = vrot.lane.b32.xlu0 %v3147, 64
    %v3399 = vpop.permute.xlu0 %3398
    %3400 = vrot.lane.b32.xlu0 %v3148, 64
    %v3401 = vpop.permute.xlu0 %3400
    %3402 = vrot.lane.b32.xlu0 %v3149, 64
    %v3403 = vpop.permute.xlu0 %3402
    %3404 = vrot.lane.b32.xlu0 %v3150, 64
    %v3405 = vpop.permute.xlu0 %3404
    %3406 = vrot.lane.b32.xlu0 %v3151, 64
    %v3407 = vpop.permute.xlu0 %3406
    %3408 = vrot.lane.b32.xlu0 %v3152, 64
    %v3409 = vpop.permute.xlu0 %3408
    %3410 = vrot.lane.b32.xlu0 %v3153, 64
    %v3411 = vpop.permute.xlu0 %3410
    %3412 = vrot.lane.b32.xlu0 %v3154, 64
    %v3413 = vpop.permute.xlu0 %3412
    %3414 = vrot.lane.b32.xlu0 %v3155, 64
    %v3415 = vpop.permute.xlu0 %3414
    %3416 = vrot.lane.b32.xlu0 %v3156, 64
    %v3417 = vpop.permute.xlu0 %3416
    %3418 = vrot.lane.b32.xlu0 %v3157, 64
    %v3419 = vpop.permute.xlu0 %3418
    %3420 = vrot.lane.b32.xlu0 %v3158, 64
    %v3421 = vpop.permute.xlu0 %3420
    %3422 = vrot.lane.b32.xlu0 %v3159, 64
    %v3423 = vpop.permute.xlu0 %3422
    %3424 = vrot.lane.b32.xlu0 %v3160, 64
    %v3425 = vpop.permute.xlu0 %3424
    %3426 = vrot.lane.b32.xlu0 %v3161, 64
    %v3427 = vpop.permute.xlu0 %3426
    %3428 = vrot.lane.b32.xlu0 %v3162, 64
    %v3429 = vpop.permute.xlu0 %3428
    %3430 = vrot.lane.b32.xlu0 %v3163, 64
    %v3431 = vpop.permute.xlu0 %3430
    %3432 = vrot.lane.b32.xlu0 %v3164, 64
    %v3433 = vpop.permute.xlu0 %3432
    %3434 = vrot.lane.b32.xlu0 %v3165, 64
    %v3435 = vpop.permute.xlu0 %3434
    %3436 = vrot.lane.b32.xlu0 %v3166, 64
    %v3437 = vpop.permute.xlu0 %3436
    %3438 = vrot.lane.b32.xlu0 %v3167, 64
    %v3439 = vpop.permute.xlu0 %3438
    %3440 = vrot.lane.b32.xlu0 %v3168, 64
    %v3441 = vpop.permute.xlu0 %3440
    %3442 = vrot.lane.b32.xlu0 %v3169, 64
    %v3443 = vpop.permute.xlu0 %3442
    %3444 = vrot.lane.b32.xlu0 %v3170, 64
    %v3445 = vpop.permute.xlu0 %3444
    %3446 = vrot.lane.b32.xlu0 %v3171, 64
    %v3447 = vpop.permute.xlu0 %3446
    %3448 = vrot.lane.b32.xlu0 %v3172, 64
    %v3449 = vpop.permute.xlu0 %3448
    %3450 = vrot.lane.b32.xlu0 %v3173, 64
    %v3451 = vpop.permute.xlu0 %3450
    %3452 = vrot.lane.b32.xlu0 %v3174, 64
    %v3453 = vpop.permute.xlu0 %3452
    %3454 = vrot.lane.b32.xlu0 %v3175, 64
    %v3455 = vpop.permute.xlu0 %3454
    %3456 = vrot.lane.b32.xlu0 %v3176, 64
    %v3457 = vpop.permute.xlu0 %3456
    %3458 = vrot.lane.b32.xlu0 %v3177, 64
    %v3459 = vpop.permute.xlu0 %3458
    %3460 = vrot.lane.b32.xlu0 %v3178, 64
    %v3461 = vpop.permute.xlu0 %3460
    %3462 = vrot.lane.b32.xlu0 %v3179, 64
    %v3463 = vpop.permute.xlu0 %3462
    %3464 = vrot.lane.b32.xlu0 %v3180, 64
    %v3465 = vpop.permute.xlu0 %3464
    %3466 = vrot.lane.b32.xlu0 %v3181, 64
    %v3467 = vpop.permute.xlu0 %3466
    %3468 = vrot.lane.b32.xlu0 %v3182, 64
    %v3469 = vpop.permute.xlu0 %3468
    %3470 = vrot.lane.b32.xlu0 %v3183, 64
    %v3471 = vpop.permute.xlu0 %3470
    %3472 = vrot.lane.b32.xlu0 %v3184, 64
    %v3473 = vpop.permute.xlu0 %3472
    %3474 = vrot.lane.b32.xlu0 %v3185, 64
    %v3475 = vpop.permute.xlu0 %3474
    %3476 = vrot.lane.b32.xlu0 %v3186, 64
    %v3477 = vpop.permute.xlu0 %3476
    %3478 = vrot.lane.b32.xlu0 %v3187, 64
    %v3479 = vpop.permute.xlu0 %3478
    %3480 = vrot.lane.b32.xlu0 %v3188, 64
    %v3481 = vpop.permute.xlu0 %3480
    %3482 = vrot.lane.b32.xlu0 %v3189, 64
    %v3483 = vpop.permute.xlu0 %3482
    %3484 = vrot.lane.b32.xlu0 %v3190, 64
    %v3485 = vpop.permute.xlu0 %3484
    %3486 = vrot.lane.b32.xlu0 %v3191, 64
    %v3487 = vpop.permute.xlu0 %3486
    %3488 = vrot.lane.b32.xlu0 %v3192, 64
    %v3489 = vpop.permute.xlu0 %3488
    %3490 = vrot.lane.b32.xlu0 %v3193, 64
    %v3491 = vpop.permute.xlu0 %3490
    %3492 = vrot.lane.b32.xlu0 %v3194, 64
    %v3493 = vpop.permute.xlu0 %3492
    %3494 = vrot.lane.b32.xlu0 %v3195, 64
    %v3495 = vpop.permute.xlu0 %3494
    %3496 = vrot.lane.b32.xlu0 %v3196, 64
    %v3497 = vpop.permute.xlu0 %3496
    %3498 = vrot.lane.b32.xlu0 %v3197, 64
    %v3499 = vpop.permute.xlu0 %3498
    %3500 = vrot.lane.b32.xlu0 %v3198, 64
    %v3501 = vpop.permute.xlu0 %3500
    %3502 = vrot.lane.b32.xlu0 %v3199, 64
    %v3503 = vpop.permute.xlu0 %3502
    %3504 = vrot.lane.b32.xlu0 %v3200, 64
    %v3505 = vpop.permute.xlu0 %3504
    %3506 = vrot.lane.b32.xlu0 %v3201, 64
    %v3507 = vpop.permute.xlu0 %3506
    %3508 = vrot.lane.b32.xlu0 %v3202, 64
    %v3509 = vpop.permute.xlu0 %3508
    %3510 = vrot.lane.b32.xlu0 %v3203, 64
    %v3511 = vpop.permute.xlu0 %3510
    %3512 = vrot.lane.b32.xlu0 %v3204, 64
    %v3513 = vpop.permute.xlu0 %3512
    %3514 = vrot.lane.b32.xlu0 %v3205, 64
    %v3515 = vpop.permute.xlu0 %3514
    %3516 = vrot.lane.b32.xlu0 %v3206, 64
    %v3517 = vpop.permute.xlu0 %3516
    %3518 = vrot.lane.b32.xlu0 %v3207, 64
    %v3519 = vpop.permute.xlu0 %3518
    %3520 = vrot.lane.b32.xlu0 %v3208, 64
    %v3521 = vpop.permute.xlu0 %3520
    %3522 = vrot.lane.b32.xlu0 %v3209, 64
    %v3523 = vpop.permute.xlu0 %3522
    %3524 = vrot.lane.b32.xlu0 %v3210, 64
    %v3525 = vpop.permute.xlu0 %3524
    %3526 = vrot.lane.b32.xlu0 %v3211, 64
    %v3527 = vpop.permute.xlu0 %3526
    %3528 = vrot.lane.b32.xlu0 %v3212, 64
    %v3529 = vpop.permute.xlu0 %3528
    %3530 = vrot.lane.b32.xlu0 %v3213, 64
    %v3531 = vpop.permute.xlu0 %3530
    %3532 = vrot.lane.b32.xlu0 %v3214, 64
    %v3533 = vpop.permute.xlu0 %3532
    %3534 = vrot.lane.b32.xlu0 %v3215, 64
    %v3535 = vpop.permute.xlu0 %3534
    %3536 = vrot.lane.b32.xlu0 %v3216, 64
    %v3537 = vpop.permute.xlu0 %3536
    %3538 = vrot.lane.b32.xlu0 %v3217, 64
    %v3539 = vpop.permute.xlu0 %3538
    %3540 = vrot.lane.b32.xlu0 %v3218, 64
    %v3541 = vpop.permute.xlu0 %3540
    %3542 = vrot.lane.b32.xlu0 %v3219, 64
    %v3543 = vpop.permute.xlu0 %3542
    %3544 = vrot.lane.b32.xlu0 %v3220, 64
    %v3545 = vpop.permute.xlu0 %3544
    %3546 = vrot.lane.b32.xlu0 %v3221, 64
    %v3547 = vpop.permute.xlu0 %3546
    %3548 = vrot.lane.b32.xlu0 %v3222, 64
    %v3549 = vpop.permute.xlu0 %3548
    %3550 = vrot.lane.b32.xlu0 %v3223, 64
    %v3551 = vpop.permute.xlu0 %3550
    %3552 = vrot.lane.b32.xlu0 %v3224, 64
    %v3553 = vpop.permute.xlu0 %3552
    %3554 = vrot.lane.b32.xlu0 %v3225, 64
    %v3555 = vpop.permute.xlu0 %3554
    %3556 = vrot.lane.b32.xlu0 %v3226, 64
    %v3557 = vpop.permute.xlu0 %3556
    %3558 = vrot.lane.b32.xlu0 %v3227, 64
    %v3559 = vpop.permute.xlu0 %3558
    %3560 = vrot.lane.b32.xlu0 %v3228, 64
    %v3561 = vpop.permute.xlu0 %3560
    %3562 = vrot.lane.b32.xlu0 %v3229, 64
    %v3563 = vpop.permute.xlu0 %3562
    %3564 = vrot.lane.b32.xlu0 %v3230, 64
    %v3565 = vpop.permute.xlu0 %3564
    %3566 = vrot.lane.b32.xlu0 %v3231, 64
    %v3567 = vpop.permute.xlu0 %3566
    %vm3680 = vcmask 654848
    %3681 = vst.msk [vmem:[#allocation3] sm:$0xff] %vm3680, %v3345
    %vm3682 = vcmask 653824
    %3683 = vst.msk [vmem:[#allocation3 + $0x10] sm:$0x7f] %vm3682, %v3347
    %3684 = vst.msk [vmem:[#allocation3 + $0x20] sm:$0xff] %vm3680, %v3349
    %3685 = vst.msk [vmem:[#allocation3 + $0x30] sm:$0x7f] %vm3682, %v3351
    %3686 = vst.msk [vmem:[#allocation3 + $0x40] sm:$0xff] %vm3680, %v3353
    %3687 = vst.msk [vmem:[#allocation3 + $0x50] sm:$0x7f] %vm3682, %v3355
    %3688 = vst.msk [vmem:[#allocation3 + $0x60] sm:$0xff] %vm3680, %v3357
    %3689 = vst.msk [vmem:[#allocation3 + $0x70] sm:$0x7f] %vm3682, %v3359
    %3690 = vst.msk [vmem:[#allocation3 + $0x80] sm:$0xff] %vm3680, %v3361
    %3691 = vst.msk [vmem:[#allocation3 + $0x90] sm:$0x7f] %vm3682, %v3363
    %3692 = vst.msk [vmem:[#allocation3 + $0xa0] sm:$0xff] %vm3680, %v3365
    %3693 = vst.msk [vmem:[#allocation3 + $0xb0] sm:$0x7f] %vm3682, %v3367
    %3694 = vst.msk [vmem:[#allocation3 + $0xc0] sm:$0xff] %vm3680, %v3369
    %3695 = vst.msk [vmem:[#allocation3 + $0xd0] sm:$0x7f] %vm3682, %v3371
    %3696 = vst.msk [vmem:[#allocation3 + $0x100] sm:$0xff] %vm3680, %v3373
    %3697 = vst.msk [vmem:[#allocation3 + $0x110] sm:$0x7f] %vm3682, %v3375
    %3698 = vst.msk [vmem:[#allocation3 + $0x120] sm:$0xff] %vm3680, %v3377
    %3699 = vst.msk [vmem:[#allocation3 + $0x130] sm:$0x7f] %vm3682, %v3379
    %3700 = vst.msk [vmem:[#allocation3 + $0x140] sm:$0xff] %vm3680, %v3381
    %3701 = vst.msk [vmem:[#allocation3 + $0x150] sm:$0x7f] %vm3682, %v3383
    %3702 = vst.msk [vmem:[#allocation3 + $0x160] sm:$0xff] %vm3680, %v3385
    %3703 = vst.msk [vmem:[#allocation3 + $0x170] sm:$0x7f] %vm3682, %v3387
    %3704 = vst.msk [vmem:[#allocation3 + $0x180] sm:$0xff] %vm3680, %v3389
    %3705 = vst.msk [vmem:[#allocation3 + $0x190] sm:$0x7f] %vm3682, %v3391
    %3706 = vst.msk [vmem:[#allocation3 + $0x1a0] sm:$0xff] %vm3680, %v3393
    %3707 = vst.msk [vmem:[#allocation3 + $0x1b0] sm:$0x7f] %vm3682, %v3395
    %3708 = vst.msk [vmem:[#allocation3 + $0x1c0] sm:$0xff] %vm3680, %v3397
    %3709 = vst.msk [vmem:[#allocation3 + $0x1d0] sm:$0x7f] %vm3682, %v3399
    %3710 = vst.msk [vmem:[#allocation3 + $0x200] sm:$0xff] %vm3680, %v3401
    %3711 = vst.msk [vmem:[#allocation3 + $0x210] sm:$0x7f] %vm3682, %v3403
    %3712 = vst.msk [vmem:[#allocation3 + $0x220] sm:$0xff] %vm3680, %v3405
    %3713 = vst.msk [vmem:[#allocation3 + $0x230] sm:$0x7f] %vm3682, %v3407
    %3714 = vst.msk [vmem:[#allocation3 + $0x240] sm:$0xff] %vm3680, %v3409
    %3715 = vst.msk [vmem:[#allocation3 + $0x250] sm:$0x7f] %vm3682, %v3411
    %3716 = vst.msk [vmem:[#allocation3 + $0x260] sm:$0xff] %vm3680, %v3413
    %3717 = vst.msk [vmem:[#allocation3 + $0x270] sm:$0x7f] %vm3682, %v3415
    %3718 = vst.msk [vmem:[#allocation3 + $0x280] sm:$0xff] %vm3680, %v3417
    %3719 = vst.msk [vmem:[#allocation3 + $0x290] sm:$0x7f] %vm3682, %v3419
    %3720 = vst.msk [vmem:[#allocation3 + $0x2a0] sm:$0xff] %vm3680, %v3421
    %3721 = vst.msk [vmem:[#allocation3 + $0x2b0] sm:$0x7f] %vm3682, %v3423
    %3722 = vst.msk [vmem:[#allocation3 + $0x2c0] sm:$0xff] %vm3680, %v3425
    %3723 = vst.msk [vmem:[#allocation3 + $0x2d0] sm:$0x7f] %vm3682, %v3427
    %3724 = vst.msk [vmem:[#allocation3 + $0x300] sm:$0xff] %vm3680, %v3429
    %3725 = vst.msk [vmem:[#allocation3 + $0x310] sm:$0x7f] %vm3682, %v3431
    %3726 = vst.msk [vmem:[#allocation3 + $0x320] sm:$0xff] %vm3680, %v3433
    %3727 = vst.msk [vmem:[#allocation3 + $0x330] sm:$0x7f] %vm3682, %v3435
    %3728 = vst.msk [vmem:[#allocation3 + $0x340] sm:$0xff] %vm3680, %v3437
    %3729 = vst.msk [vmem:[#allocation3 + $0x350] sm:$0x7f] %vm3682, %v3439
    %3730 = vst.msk [vmem:[#allocation3 + $0x360] sm:$0xff] %vm3680, %v3441
    %3731 = vst.msk [vmem:[#allocation3 + $0x370] sm:$0x7f] %vm3682, %v3443
    %3732 = vst.msk [vmem:[#allocation3 + $0x380] sm:$0xff] %vm3680, %v3445
    %3733 = vst.msk [vmem:[#allocation3 + $0x390] sm:$0x7f] %vm3682, %v3447
    %3734 = vst.msk [vmem:[#allocation3 + $0x3a0] sm:$0xff] %vm3680, %v3449
    %3735 = vst.msk [vmem:[#allocation3 + $0x3b0] sm:$0x7f] %vm3682, %v3451
    %3736 = vst.msk [vmem:[#allocation3 + $0x3c0] sm:$0xff] %vm3680, %v3453
    %3737 = vst.msk [vmem:[#allocation3 + $0x3d0] sm:$0x7f] %vm3682, %v3455
    %3738 = vst.msk [vmem:[#allocation3 + $0x400] sm:$0xff] %vm3680, %v3457
    %3739 = vst.msk [vmem:[#allocation3 + $0x410] sm:$0x7f] %vm3682, %v3459
    %3740 = vst.msk [vmem:[#allocation3 + $0x420] sm:$0xff] %vm3680, %v3461
    %3741 = vst.msk [vmem:[#allocation3 + $0x430] sm:$0x7f] %vm3682, %v3463
    %3742 = vst.msk [vmem:[#allocation3 + $0x440] sm:$0xff] %vm3680, %v3465
    %3743 = vst.msk [vmem:[#allocation3 + $0x450] sm:$0x7f] %vm3682, %v3467
    %3744 = vst.msk [vmem:[#allocation3 + $0x460] sm:$0xff] %vm3680, %v3469
    %3745 = vst.msk [vmem:[#allocation3 + $0x470] sm:$0x7f] %vm3682, %v3471
    %3746 = vst.msk [vmem:[#allocation3 + $0x480] sm:$0xff] %vm3680, %v3473
    %3747 = vst.msk [vmem:[#allocation3 + $0x490] sm:$0x7f] %vm3682, %v3475
    %3748 = vst.msk [vmem:[#allocation3 + $0x4a0] sm:$0xff] %vm3680, %v3477
    %3749 = vst.msk [vmem:[#allocation3 + $0x4b0] sm:$0x7f] %vm3682, %v3479
    %3750 = vst.msk [vmem:[#allocation3 + $0x4c0] sm:$0xff] %vm3680, %v3481
    %3751 = vst.msk [vmem:[#allocation3 + $0x4d0] sm:$0x7f] %vm3682, %v3483
    %3752 = vst.msk [vmem:[#allocation3 + $0x500] sm:$0xff] %vm3680, %v3485
    %3753 = vst.msk [vmem:[#allocation3 + $0x510] sm:$0x7f] %vm3682, %v3487
    %3754 = vst.msk [vmem:[#allocation3 + $0x520] sm:$0xff] %vm3680, %v3489
    %3755 = vst.msk [vmem:[#allocation3 + $0x530] sm:$0x7f] %vm3682, %v3491
    %3756 = vst.msk [vmem:[#allocation3 + $0x540] sm:$0xff] %vm3680, %v3493
    %3757 = vst.msk [vmem:[#allocation3 + $0x550] sm:$0x7f] %vm3682, %v3495
    %3758 = vst.msk [vmem:[#allocation3 + $0x560] sm:$0xff] %vm3680, %v3497
    %3759 = vst.msk [vmem:[#allocation3 + $0x570] sm:$0x7f] %vm3682, %v3499
    %3760 = vst.msk [vmem:[#allocation3 + $0x580] sm:$0xff] %vm3680, %v3501
    %3761 = vst.msk [vmem:[#allocation3 + $0x590] sm:$0x7f] %vm3682, %v3503
    %3762 = vst.msk [vmem:[#allocation3 + $0x5a0] sm:$0xff] %vm3680, %v3505
    %3763 = vst.msk [vmem:[#allocation3 + $0x5b0] sm:$0x7f] %vm3682, %v3507
    %3764 = vst.msk [vmem:[#allocation3 + $0x5c0] sm:$0xff] %vm3680, %v3509
    %3765 = vst.msk [vmem:[#allocation3 + $0x5d0] sm:$0x7f] %vm3682, %v3511
    %3766 = vst.msk [vmem:[#allocation3 + $0x600] sm:$0xff] %vm3680, %v3513
    %3767 = vst.msk [vmem:[#allocation3 + $0x610] sm:$0x7f] %vm3682, %v3515
    %3768 = vst.msk [vmem:[#allocation3 + $0x620] sm:$0xff] %vm3680, %v3517
    %3769 = vst.msk [vmem:[#allocation3 + $0x630] sm:$0x7f] %vm3682, %v3519
    %3770 = vst.msk [vmem:[#allocation3 + $0x640] sm:$0xff] %vm3680, %v3521
    %3771 = vst.msk [vmem:[#allocation3 + $0x650] sm:$0x7f] %vm3682, %v3523
    %3772 = vst.msk [vmem:[#allocation3 + $0x660] sm:$0xff] %vm3680, %v3525
    %3773 = vst.msk [vmem:[#allocation3 + $0x670] sm:$0x7f] %vm3682, %v3527
    %3774 = vst.msk [vmem:[#allocation3 + $0x680] sm:$0xff] %vm3680, %v3529
    %3775 = vst.msk [vmem:[#allocation3 + $0x690] sm:$0x7f] %vm3682, %v3531
    %3776 = vst.msk [vmem:[#allocation3 + $0x6a0] sm:$0xff] %vm3680, %v3533
    %3777 = vst.msk [vmem:[#allocation3 + $0x6b0] sm:$0x7f] %vm3682, %v3535
    %3778 = vst.msk [vmem:[#allocation3 + $0x6c0] sm:$0xff] %vm3680, %v3537
    %3779 = vst.msk [vmem:[#allocation3 + $0x6d0] sm:$0x7f] %vm3682, %v3539
    %3780 = vst.msk [vmem:[#allocation3 + $0x700] sm:$0xff] %vm3680, %v3541
    %3781 = vst.msk [vmem:[#allocation3 + $0x710] sm:$0x7f] %vm3682, %v3543
    %3782 = vst.msk [vmem:[#allocation3 + $0x720] sm:$0xff] %vm3680, %v3545
    %3783 = vst.msk [vmem:[#allocation3 + $0x730] sm:$0x7f] %vm3682, %v3547
    %3784 = vst.msk [vmem:[#allocation3 + $0x740] sm:$0xff] %vm3680, %v3549
    %3785 = vst.msk [vmem:[#allocation3 + $0x750] sm:$0x7f] %vm3682, %v3551
    %3786 = vst.msk [vmem:[#allocation3 + $0x760] sm:$0xff] %vm3680, %v3553
    %3787 = vst.msk [vmem:[#allocation3 + $0x770] sm:$0x7f] %vm3682, %v3555
    %3788 = vst.msk [vmem:[#allocation3 + $0x780] sm:$0xff] %vm3680, %v3557
    %3789 = vst.msk [vmem:[#allocation3 + $0x790] sm:$0x7f] %vm3682, %v3559
    %3790 = vst.msk [vmem:[#allocation3 + $0x7a0] sm:$0xff] %vm3680, %v3561
    %3791 = vst.msk [vmem:[#allocation3 + $0x7b0] sm:$0x7f] %vm3682, %v3563
    %3792 = vst.msk [vmem:[#allocation3 + $0x7c0] sm:$0xff] %vm3680, %v3565
    %3793 = vst.msk [vmem:[#allocation3 + $0x7d0] sm:$0x7f] %vm3682, %v3567
    %v3794 = vld [vmem:[%s2446 + $0x2] sm:$0xff]
    %v3795 = vld [vmem:[%s2446 + $0xa] sm:$0x3f]
    %v3796 = vld [vmem:[%s2446 + $0x12] sm:$0xff]
    %v3797 = vld [vmem:[%s2446 + $0x1a] sm:$0x3f]
    %v3798 = vld [vmem:[%s2446 + $0x22] sm:$0xff]
    %v3799 = vld [vmem:[%s2446 + $0x2a] sm:$0x3f]
    %v3800 = vld [vmem:[%s2446 + $0x32] sm:$0xff]
    %v3801 = vld [vmem:[%s2446 + $0x3a] sm:$0x3f]
    %v3802 = vld [vmem:[%s2446 + $0x42] sm:$0xff]
    %v3803 = vld [vmem:[%s2446 + $0x4a] sm:$0x3f]
    %v3804 = vld [vmem:[%s2446 + $0x52] sm:$0xff]
    %v3805 = vld [vmem:[%s2446 + $0x5a] sm:$0x3f]
    %v3806 = vld [vmem:[%s2446 + $0x62] sm:$0xff]
    %v3807 = vld [vmem:[%s2446 + $0x6a] sm:$0x3f]
    %v3808 = vld [vmem:[%s2446 + $0x82] sm:$0xff]
    %v3809 = vld [vmem:[%s2446 + $0x8a] sm:$0x3f]
    %v3810 = vld [vmem:[%s2446 + $0x92] sm:$0xff]
    %v3811 = vld [vmem:[%s2446 + $0x9a] sm:$0x3f]
    %v3812 = vld [vmem:[%s2446 + $0xa2] sm:$0xff]
    %v3813 = vld [vmem:[%s2446 + $0xaa] sm:$0x3f]
    %v3814 = vld [vmem:[%s2446 + $0xb2] sm:$0xff]
    %v3815 = vld [vmem:[%s2446 + $0xba] sm:$0x3f]
    %v3816 = vld [vmem:[%s2446 + $0xc2] sm:$0xff]
    %v3817 = vld [vmem:[%s2446 + $0xca] sm:$0x3f]
    %v3818 = vld [vmem:[%s2446 + $0xd2] sm:$0xff]
    %v3819 = vld [vmem:[%s2446 + $0xda] sm:$0x3f]
    %v3820 = vld [vmem:[%s2446 + $0xe2] sm:$0xff]
    %v3821 = vld [vmem:[%s2446 + $0xea] sm:$0x3f]
    %v3822 = vld [vmem:[%s2446 + $0x102] sm:$0xff]
    %v3823 = vld [vmem:[%s2446 + $0x10a] sm:$0x3f]
    %v3824 = vld [vmem:[%s2446 + $0x112] sm:$0xff]
    %v3825 = vld [vmem:[%s2446 + $0x11a] sm:$0x3f]
    %v3826 = vld [vmem:[%s2446 + $0x122] sm:$0xff]
    %v3827 = vld [vmem:[%s2446 + $0x12a] sm:$0x3f]
    %v3828 = vld [vmem:[%s2446 + $0x132] sm:$0xff]
    %v3829 = vld [vmem:[%s2446 + $0x13a] sm:$0x3f]
    %v3830 = vld [vmem:[%s2446 + $0x142] sm:$0xff]
    %v3831 = vld [vmem:[%s2446 + $0x14a] sm:$0x3f]
    %v3832 = vld [vmem:[%s2446 + $0x152] sm:$0xff]
    %v3833 = vld [vmem:[%s2446 + $0x15a] sm:$0x3f]
    %v3834 = vld [vmem:[%s2446 + $0x162] sm:$0xff]
    %v3835 = vld [vmem:[%s2446 + $0x16a] sm:$0x3f]
    %v3836 = vld [vmem:[%s2446 + $0x182] sm:$0xff]
    %v3837 = vld [vmem:[%s2446 + $0x18a] sm:$0x3f]
    %v3838 = vld [vmem:[%s2446 + $0x192] sm:$0xff]
    %v3839 = vld [vmem:[%s2446 + $0x19a] sm:$0x3f]
    %v3840 = vld [vmem:[%s2446 + $0x1a2] sm:$0xff]
    %v3841 = vld [vmem:[%s2446 + $0x1aa] sm:$0x3f]
    %v3842 = vld [vmem:[%s2446 + $0x1b2] sm:$0xff]
    %v3843 = vld [vmem:[%s2446 + $0x1ba] sm:$0x3f]
    %v3844 = vld [vmem:[%s2446 + $0x1c2] sm:$0xff]
    %v3845 = vld [vmem:[%s2446 + $0x1ca] sm:$0x3f]
    %v3846 = vld [vmem:[%s2446 + $0x1d2] sm:$0xff]
    %v3847 = vld [vmem:[%s2446 + $0x1da] sm:$0x3f]
    %v3848 = vld [vmem:[%s2446 + $0x1e2] sm:$0xff]
    %v3849 = vld [vmem:[%s2446 + $0x1ea] sm:$0x3f]
    %v3850 = vld [vmem:[%s2446 + $0x202] sm:$0xff]
    %v3851 = vld [vmem:[%s2446 + $0x20a] sm:$0x3f]
    %v3852 = vld [vmem:[%s2446 + $0x212] sm:$0xff]
    %v3853 = vld [vmem:[%s2446 + $0x21a] sm:$0x3f]
    %v3854 = vld [vmem:[%s2446 + $0x222] sm:$0xff]
    %v3855 = vld [vmem:[%s2446 + $0x22a] sm:$0x3f]
    %v3856 = vld [vmem:[%s2446 + $0x232] sm:$0xff]
    %v3857 = vld [vmem:[%s2446 + $0x23a] sm:$0x3f]
    %v3858 = vld [vmem:[%s2446 + $0x242] sm:$0xff]
    %v3859 = vld [vmem:[%s2446 + $0x24a] sm:$0x3f]
    %v3860 = vld [vmem:[%s2446 + $0x252] sm:$0xff]
    %v3861 = vld [vmem:[%s2446 + $0x25a] sm:$0x3f]
    %v3862 = vld [vmem:[%s2446 + $0x262] sm:$0xff]
    %v3863 = vld [vmem:[%s2446 + $0x26a] sm:$0x3f]
    %v3864 = vld [vmem:[%s2446 + $0x282] sm:$0xff]
    %v3865 = vld [vmem:[%s2446 + $0x28a] sm:$0x3f]
    %v3866 = vld [vmem:[%s2446 + $0x292] sm:$0xff]
    %v3867 = vld [vmem:[%s2446 + $0x29a] sm:$0x3f]
    %v3868 = vld [vmem:[%s2446 + $0x2a2] sm:$0xff]
    %v3869 = vld [vmem:[%s2446 + $0x2aa] sm:$0x3f]
    %v3870 = vld [vmem:[%s2446 + $0x2b2] sm:$0xff]
    %v3871 = vld [vmem:[%s2446 + $0x2ba] sm:$0x3f]
    %v3872 = vld [vmem:[%s2446 + $0x2c2] sm:$0xff]
    %v3873 = vld [vmem:[%s2446 + $0x2ca] sm:$0x3f]
    %v3874 = vld [vmem:[%s2446 + $0x2d2] sm:$0xff]
    %v3875 = vld [vmem:[%s2446 + $0x2da] sm:$0x3f]
    %v3876 = vld [vmem:[%s2446 + $0x2e2] sm:$0xff]
    %v3877 = vld [vmem:[%s2446 + $0x2ea] sm:$0x3f]
    %v3878 = vld [vmem:[%s2446 + $0x302] sm:$0xff]
    %v3879 = vld [vmem:[%s2446 + $0x30a] sm:$0x3f]
    %v3880 = vld [vmem:[%s2446 + $0x312] sm:$0xff]
    %v3881 = vld [vmem:[%s2446 + $0x31a] sm:$0x3f]
    %v3882 = vld [vmem:[%s2446 + $0x322] sm:$0xff]
    %v3883 = vld [vmem:[%s2446 + $0x32a] sm:$0x3f]
    %v3884 = vld [vmem:[%s2446 + $0x332] sm:$0xff]
    %v3885 = vld [vmem:[%s2446 + $0x33a] sm:$0x3f]
    %v3886 = vld [vmem:[%s2446 + $0x342] sm:$0xff]
    %v3887 = vld [vmem:[%s2446 + $0x34a] sm:$0x3f]
    %v3888 = vld [vmem:[%s2446 + $0x352] sm:$0xff]
    %v3889 = vld [vmem:[%s2446 + $0x35a] sm:$0x3f]
    %v3890 = vld [vmem:[%s2446 + $0x362] sm:$0xff]
    %v3891 = vld [vmem:[%s2446 + $0x36a] sm:$0x3f]
    %v3892 = vld [vmem:[%s2446 + $0x382] sm:$0xff]
    %v3893 = vld [vmem:[%s2446 + $0x38a] sm:$0x3f]
    %v3894 = vld [vmem:[%s2446 + $0x392] sm:$0xff]
    %v3895 = vld [vmem:[%s2446 + $0x39a] sm:$0x3f]
    %v3896 = vld [vmem:[%s2446 + $0x3a2] sm:$0xff]
    %v3897 = vld [vmem:[%s2446 + $0x3aa] sm:$0x3f]
    %v3898 = vld [vmem:[%s2446 + $0x3b2] sm:$0xff]
    %v3899 = vld [vmem:[%s2446 + $0x3ba] sm:$0x3f]
    %v3900 = vld [vmem:[%s2446 + $0x3c2] sm:$0xff]
    %v3901 = vld [vmem:[%s2446 + $0x3ca] sm:$0x3f]
    %v3902 = vld [vmem:[%s2446 + $0x3d2] sm:$0xff]
    %v3903 = vld [vmem:[%s2446 + $0x3da] sm:$0x3f]
    %v3904 = vld [vmem:[%s2446 + $0x3e2] sm:$0xff]
    %v3905 = vld [vmem:[%s2446 + $0x3ea] sm:$0x3f]
    %4018 = vrot.lane.b32.xlu0 %v3794, 80
    %v4019 = vpop.permute.xlu0 %4018
    %4020 = vrot.lane.b32.xlu0 %v3795, 80
    %v4021 = vpop.permute.xlu0 %4020
    %4022 = vrot.lane.b32.xlu0 %v3796, 80
    %v4023 = vpop.permute.xlu0 %4022
    %4024 = vrot.lane.b32.xlu0 %v3797, 80
    %v4025 = vpop.permute.xlu0 %4024
    %4026 = vrot.lane.b32.xlu0 %v3798, 80
    %v4027 = vpop.permute.xlu0 %4026
    %4028 = vrot.lane.b32.xlu0 %v3799, 80
    %v4029 = vpop.permute.xlu0 %4028
    %4030 = vrot.lane.b32.xlu0 %v3800, 80
    %v4031 = vpop.permute.xlu0 %4030
    %4032 = vrot.lane.b32.xlu0 %v3801, 80
    %v4033 = vpop.permute.xlu0 %4032
    %4034 = vrot.lane.b32.xlu0 %v3802, 80
    %v4035 = vpop.permute.xlu0 %4034
    %4036 = vrot.lane.b32.xlu0 %v3803, 80
    %v4037 = vpop.permute.xlu0 %4036
    %4038 = vrot.lane.b32.xlu0 %v3804, 80
    %v4039 = vpop.permute.xlu0 %4038
    %4040 = vrot.lane.b32.xlu0 %v3805, 80
    %v4041 = vpop.permute.xlu0 %4040
    %4042 = vrot.lane.b32.xlu0 %v3806, 80
    %v4043 = vpop.permute.xlu0 %4042
    %4044 = vrot.lane.b32.xlu0 %v3807, 80
    %v4045 = vpop.permute.xlu0 %4044
    %4046 = vrot.lane.b32.xlu0 %v3808, 80
    %v4047 = vpop.permute.xlu0 %4046
    %4048 = vrot.lane.b32.xlu0 %v3809, 80
    %v4049 = vpop.permute.xlu0 %4048
    %4050 = vrot.lane.b32.xlu0 %v3810, 80
    %v4051 = vpop.permute.xlu0 %4050
    %4052 = vrot.lane.b32.xlu0 %v3811, 80
    %v4053 = vpop.permute.xlu0 %4052
    %4054 = vrot.lane.b32.xlu0 %v3812, 80
    %v4055 = vpop.permute.xlu0 %4054
    %4056 = vrot.lane.b32.xlu0 %v3813, 80
    %v4057 = vpop.permute.xlu0 %4056
    %4058 = vrot.lane.b32.xlu0 %v3814, 80
    %v4059 = vpop.permute.xlu0 %4058
    %4060 = vrot.lane.b32.xlu0 %v3815, 80
    %v4061 = vpop.permute.xlu0 %4060
    %4062 = vrot.lane.b32.xlu0 %v3816, 80
    %v4063 = vpop.permute.xlu0 %4062
    %4064 = vrot.lane.b32.xlu0 %v3817, 80
    %v4065 = vpop.permute.xlu0 %4064
    %4066 = vrot.lane.b32.xlu0 %v3818, 80
    %v4067 = vpop.permute.xlu0 %4066
    %4068 = vrot.lane.b32.xlu0 %v3819, 80
    %v4069 = vpop.permute.xlu0 %4068
    %4070 = vrot.lane.b32.xlu0 %v3820, 80
    %v4071 = vpop.permute.xlu0 %4070
    %4072 = vrot.lane.b32.xlu0 %v3821, 80
    %v4073 = vpop.permute.xlu0 %4072
    %4074 = vrot.lane.b32.xlu0 %v3822, 80
    %v4075 = vpop.permute.xlu0 %4074
    %4076 = vrot.lane.b32.xlu0 %v3823, 80
    %v4077 = vpop.permute.xlu0 %4076
    %4078 = vrot.lane.b32.xlu0 %v3824, 80
    %v4079 = vpop.permute.xlu0 %4078
    %4080 = vrot.lane.b32.xlu0 %v3825, 80
    %v4081 = vpop.permute.xlu0 %4080
    %4082 = vrot.lane.b32.xlu0 %v3826, 80
    %v4083 = vpop.permute.xlu0 %4082
    %4084 = vrot.lane.b32.xlu0 %v3827, 80
    %v4085 = vpop.permute.xlu0 %4084
    %4086 = vrot.lane.b32.xlu0 %v3828, 80
    %v4087 = vpop.permute.xlu0 %4086
    %4088 = vrot.lane.b32.xlu0 %v3829, 80
    %v4089 = vpop.permute.xlu0 %4088
    %4090 = vrot.lane.b32.xlu0 %v3830, 80
    %v4091 = vpop.permute.xlu0 %4090
    %4092 = vrot.lane.b32.xlu0 %v3831, 80
    %v4093 = vpop.permute.xlu0 %4092
    %4094 = vrot.lane.b32.xlu0 %v3832, 80
    %v4095 = vpop.permute.xlu0 %4094
    %4096 = vrot.lane.b32.xlu0 %v3833, 80
    %v4097 = vpop.permute.xlu0 %4096
    %4098 = vrot.lane.b32.xlu0 %v3834, 80
    %v4099 = vpop.permute.xlu0 %4098
    %4100 = vrot.lane.b32.xlu0 %v3835, 80
    %v4101 = vpop.permute.xlu0 %4100
    %4102 = vrot.lane.b32.xlu0 %v3836, 80
    %v4103 = vpop.permute.xlu0 %4102
    %4104 = vrot.lane.b32.xlu0 %v3837, 80
    %v4105 = vpop.permute.xlu0 %4104
    %4106 = vrot.lane.b32.xlu0 %v3838, 80
    %v4107 = vpop.permute.xlu0 %4106
    %4108 = vrot.lane.b32.xlu0 %v3839, 80
    %v4109 = vpop.permute.xlu0 %4108
    %4110 = vrot.lane.b32.xlu0 %v3840, 80
    %v4111 = vpop.permute.xlu0 %4110
    %4112 = vrot.lane.b32.xlu0 %v3841, 80
    %v4113 = vpop.permute.xlu0 %4112
    %4114 = vrot.lane.b32.xlu0 %v3842, 80
    %v4115 = vpop.permute.xlu0 %4114
    %4116 = vrot.lane.b32.xlu0 %v3843, 80
    %v4117 = vpop.permute.xlu0 %4116
    %4118 = vrot.lane.b32.xlu0 %v3844, 80
    %v4119 = vpop.permute.xlu0 %4118
    %4120 = vrot.lane.b32.xlu0 %v3845, 80
    %v4121 = vpop.permute.xlu0 %4120
    %4122 = vrot.lane.b32.xlu0 %v3846, 80
    %v4123 = vpop.permute.xlu0 %4122
    %4124 = vrot.lane.b32.xlu0 %v3847, 80
    %v4125 = vpop.permute.xlu0 %4124
    %4126 = vrot.lane.b32.xlu0 %v3848, 80
    %v4127 = vpop.permute.xlu0 %4126
    %4128 = vrot.lane.b32.xlu0 %v3849, 80
    %v4129 = vpop.permute.xlu0 %4128
    %4130 = vrot.lane.b32.xlu0 %v3850, 80
    %v4131 = vpop.permute.xlu0 %4130
    %4132 = vrot.lane.b32.xlu0 %v3851, 80
    %v4133 = vpop.permute.xlu0 %4132
    %4134 = vrot.lane.b32.xlu0 %v3852, 80
    %v4135 = vpop.permute.xlu0 %4134
    %4136 = vrot.lane.b32.xlu0 %v3853, 80
    %v4137 = vpop.permute.xlu0 %4136
    %4138 = vrot.lane.b32.xlu0 %v3854, 80
    %v4139 = vpop.permute.xlu0 %4138
    %4140 = vrot.lane.b32.xlu0 %v3855, 80
    %v4141 = vpop.permute.xlu0 %4140
    %4142 = vrot.lane.b32.xlu0 %v3856, 80
    %v4143 = vpop.permute.xlu0 %4142
    %4144 = vrot.lane.b32.xlu0 %v3857, 80
    %v4145 = vpop.permute.xlu0 %4144
    %4146 = vrot.lane.b32.xlu0 %v3858, 80
    %v4147 = vpop.permute.xlu0 %4146
    %4148 = vrot.lane.b32.xlu0 %v3859, 80
    %v4149 = vpop.permute.xlu0 %4148
    %4150 = vrot.lane.b32.xlu0 %v3860, 80
    %v4151 = vpop.permute.xlu0 %4150
    %4152 = vrot.lane.b32.xlu0 %v3861, 80
    %v4153 = vpop.permute.xlu0 %4152
    %4154 = vrot.lane.b32.xlu0 %v3862, 80
    %v4155 = vpop.permute.xlu0 %4154
    %4156 = vrot.lane.b32.xlu0 %v3863, 80
    %v4157 = vpop.permute.xlu0 %4156
    %4158 = vrot.lane.b32.xlu0 %v3864, 80
    %v4159 = vpop.permute.xlu0 %4158
    %4160 = vrot.lane.b32.xlu0 %v3865, 80
    %v4161 = vpop.permute.xlu0 %4160
    %4162 = vrot.lane.b32.xlu0 %v3866, 80
    %v4163 = vpop.permute.xlu0 %4162
    %4164 = vrot.lane.b32.xlu0 %v3867, 80
    %v4165 = vpop.permute.xlu0 %4164
    %4166 = vrot.lane.b32.xlu0 %v3868, 80
    %v4167 = vpop.permute.xlu0 %4166
    %4168 = vrot.lane.b32.xlu0 %v3869, 80
    %v4169 = vpop.permute.xlu0 %4168
    %4170 = vrot.lane.b32.xlu0 %v3870, 80
    %v4171 = vpop.permute.xlu0 %4170
    %4172 = vrot.lane.b32.xlu0 %v3871, 80
    %v4173 = vpop.permute.xlu0 %4172
    %4174 = vrot.lane.b32.xlu0 %v3872, 80
    %v4175 = vpop.permute.xlu0 %4174
    %4176 = vrot.lane.b32.xlu0 %v3873, 80
    %v4177 = vpop.permute.xlu0 %4176
    %4178 = vrot.lane.b32.xlu0 %v3874, 80
    %v4179 = vpop.permute.xlu0 %4178
    %4180 = vrot.lane.b32.xlu0 %v3875, 80
    %v4181 = vpop.permute.xlu0 %4180
    %4182 = vrot.lane.b32.xlu0 %v3876, 80
    %v4183 = vpop.permute.xlu0 %4182
    %4184 = vrot.lane.b32.xlu0 %v3877, 80
    %v4185 = vpop.permute.xlu0 %4184
    %4186 = vrot.lane.b32.xlu0 %v3878, 80
    %v4187 = vpop.permute.xlu0 %4186
    %4188 = vrot.lane.b32.xlu0 %v3879, 80
    %v4189 = vpop.permute.xlu0 %4188
    %4190 = vrot.lane.b32.xlu0 %v3880, 80
    %v4191 = vpop.permute.xlu0 %4190
    %4192 = vrot.lane.b32.xlu0 %v3881, 80
    %v4193 = vpop.permute.xlu0 %4192
    %4194 = vrot.lane.b32.xlu0 %v3882, 80
    %v4195 = vpop.permute.xlu0 %4194
    %4196 = vrot.lane.b32.xlu0 %v3883, 80
    %v4197 = vpop.permute.xlu0 %4196
    %4198 = vrot.lane.b32.xlu0 %v3884, 80
    %v4199 = vpop.permute.xlu0 %4198
    %4200 = vrot.lane.b32.xlu0 %v3885, 80
    %v4201 = vpop.permute.xlu0 %4200
    %4202 = vrot.lane.b32.xlu0 %v3886, 80
    %v4203 = vpop.permute.xlu0 %4202
    %4204 = vrot.lane.b32.xlu0 %v3887, 80
    %v4205 = vpop.permute.xlu0 %4204
    %4206 = vrot.lane.b32.xlu0 %v3888, 80
    %v4207 = vpop.permute.xlu0 %4206
    %4208 = vrot.lane.b32.xlu0 %v3889, 80
    %v4209 = vpop.permute.xlu0 %4208
    %4210 = vrot.lane.b32.xlu0 %v3890, 80
    %v4211 = vpop.permute.xlu0 %4210
    %4212 = vrot.lane.b32.xlu0 %v3891, 80
    %v4213 = vpop.permute.xlu0 %4212
    %4214 = vrot.lane.b32.xlu0 %v3892, 80
    %v4215 = vpop.permute.xlu0 %4214
    %4216 = vrot.lane.b32.xlu0 %v3893, 80
    %v4217 = vpop.permute.xlu0 %4216
    %4218 = vrot.lane.b32.xlu0 %v3894, 80
    %v4219 = vpop.permute.xlu0 %4218
    %4220 = vrot.lane.b32.xlu0 %v3895, 80
    %v4221 = vpop.permute.xlu0 %4220
    %4222 = vrot.lane.b32.xlu0 %v3896, 80
    %v4223 = vpop.permute.xlu0 %4222
    %4224 = vrot.lane.b32.xlu0 %v3897, 80
    %v4225 = vpop.permute.xlu0 %4224
    %4226 = vrot.lane.b32.xlu0 %v3898, 80
    %v4227 = vpop.permute.xlu0 %4226
    %4228 = vrot.lane.b32.xlu0 %v3899, 80
    %v4229 = vpop.permute.xlu0 %4228
    %4230 = vrot.lane.b32.xlu0 %v3900, 80
    %v4231 = vpop.permute.xlu0 %4230
    %4232 = vrot.lane.b32.xlu0 %v3901, 80
    %v4233 = vpop.permute.xlu0 %4232
    %4234 = vrot.lane.b32.xlu0 %v3902, 80
    %v4235 = vpop.permute.xlu0 %4234
    %4236 = vrot.lane.b32.xlu0 %v3903, 80
    %v4237 = vpop.permute.xlu0 %4236
    %4238 = vrot.lane.b32.xlu0 %v3904, 80
    %v4239 = vpop.permute.xlu0 %4238
    %4240 = vrot.lane.b32.xlu0 %v3905, 80
    %v4241 = vpop.permute.xlu0 %4240
    %vm4354 = vcmask 786048
    %4355 = vst.msk [vmem:[#allocation3] sm:$0xff] %vm4354, %v4019
    %vm4356 = vcmask 784000
    %4357 = vst.msk [vmem:[#allocation3 + $0x10] sm:$0x3f] %vm4356, %v4021
    %4358 = vst.msk [vmem:[#allocation3 + $0x20] sm:$0xff] %vm4354, %v4023
    %4359 = vst.msk [vmem:[#allocation3 + $0x30] sm:$0x3f] %vm4356, %v4025
    %4360 = vst.msk [vmem:[#allocation3 + $0x40] sm:$0xff] %vm4354, %v4027
    %4361 = vst.msk [vmem:[#allocation3 + $0x50] sm:$0x3f] %vm4356, %v4029
    %4362 = vst.msk [vmem:[#allocation3 + $0x60] sm:$0xff] %vm4354, %v4031
    %4363 = vst.msk [vmem:[#allocation3 + $0x70] sm:$0x3f] %vm4356, %v4033
    %4364 = vst.msk [vmem:[#allocation3 + $0x80] sm:$0xff] %vm4354, %v4035
    %4365 = vst.msk [vmem:[#allocation3 + $0x90] sm:$0x3f] %vm4356, %v4037
    %4366 = vst.msk [vmem:[#allocation3 + $0xa0] sm:$0xff] %vm4354, %v4039
    %4367 = vst.msk [vmem:[#allocation3 + $0xb0] sm:$0x3f] %vm4356, %v4041
    %4368 = vst.msk [vmem:[#allocation3 + $0xc0] sm:$0xff] %vm4354, %v4043
    %4369 = vst.msk [vmem:[#allocation3 + $0xd0] sm:$0x3f] %vm4356, %v4045
    %4370 = vst.msk [vmem:[#allocation3 + $0x100] sm:$0xff] %vm4354, %v4047
    %4371 = vst.msk [vmem:[#allocation3 + $0x110] sm:$0x3f] %vm4356, %v4049
    %4372 = vst.msk [vmem:[#allocation3 + $0x120] sm:$0xff] %vm4354, %v4051
    %4373 = vst.msk [vmem:[#allocation3 + $0x130] sm:$0x3f] %vm4356, %v4053
    %4374 = vst.msk [vmem:[#allocation3 + $0x140] sm:$0xff] %vm4354, %v4055
    %4375 = vst.msk [vmem:[#allocation3 + $0x150] sm:$0x3f] %vm4356, %v4057
    %4376 = vst.msk [vmem:[#allocation3 + $0x160] sm:$0xff] %vm4354, %v4059
    %4377 = vst.msk [vmem:[#allocation3 + $0x170] sm:$0x3f] %vm4356, %v4061
    %4378 = vst.msk [vmem:[#allocation3 + $0x180] sm:$0xff] %vm4354, %v4063
    %4379 = vst.msk [vmem:[#allocation3 + $0x190] sm:$0x3f] %vm4356, %v4065
    %4380 = vst.msk [vmem:[#allocation3 + $0x1a0] sm:$0xff] %vm4354, %v4067
    %4381 = vst.msk [vmem:[#allocation3 + $0x1b0] sm:$0x3f] %vm4356, %v4069
    %4382 = vst.msk [vmem:[#allocation3 + $0x1c0] sm:$0xff] %vm4354, %v4071
    %4383 = vst.msk [vmem:[#allocation3 + $0x1d0] sm:$0x3f] %vm4356, %v4073
    %4384 = vst.msk [vmem:[#allocation3 + $0x200] sm:$0xff] %vm4354, %v4075
    %4385 = vst.msk [vmem:[#allocation3 + $0x210] sm:$0x3f] %vm4356, %v4077
    %4386 = vst.msk [vmem:[#allocation3 + $0x220] sm:$0xff] %vm4354, %v4079
    %4387 = vst.msk [vmem:[#allocation3 + $0x230] sm:$0x3f] %vm4356, %v4081
    %4388 = vst.msk [vmem:[#allocation3 + $0x240] sm:$0xff] %vm4354, %v4083
    %4389 = vst.msk [vmem:[#allocation3 + $0x250] sm:$0x3f] %vm4356, %v4085
    %4390 = vst.msk [vmem:[#allocation3 + $0x260] sm:$0xff] %vm4354, %v4087
    %4391 = vst.msk [vmem:[#allocation3 + $0x270] sm:$0x3f] %vm4356, %v4089
    %4392 = vst.msk [vmem:[#allocation3 + $0x280] sm:$0xff] %vm4354, %v4091
    %4393 = vst.msk [vmem:[#allocation3 + $0x290] sm:$0x3f] %vm4356, %v4093
    %4394 = vst.msk [vmem:[#allocation3 + $0x2a0] sm:$0xff] %vm4354, %v4095
    %4395 = vst.msk [vmem:[#allocation3 + $0x2b0] sm:$0x3f] %vm4356, %v4097
    %4396 = vst.msk [vmem:[#allocation3 + $0x2c0] sm:$0xff] %vm4354, %v4099
    %4397 = vst.msk [vmem:[#allocation3 + $0x2d0] sm:$0x3f] %vm4356, %v4101
    %4398 = vst.msk [vmem:[#allocation3 + $0x300] sm:$0xff] %vm4354, %v4103
    %4399 = vst.msk [vmem:[#allocation3 + $0x310] sm:$0x3f] %vm4356, %v4105
    %4400 = vst.msk [vmem:[#allocation3 + $0x320] sm:$0xff] %vm4354, %v4107
    %4401 = vst.msk [vmem:[#allocation3 + $0x330] sm:$0x3f] %vm4356, %v4109
    %4402 = vst.msk [vmem:[#allocation3 + $0x340] sm:$0xff] %vm4354, %v4111
    %4403 = vst.msk [vmem:[#allocation3 + $0x350] sm:$0x3f] %vm4356, %v4113
    %4404 = vst.msk [vmem:[#allocation3 + $0x360] sm:$0xff] %vm4354, %v4115
    %4405 = vst.msk [vmem:[#allocation3 + $0x370] sm:$0x3f] %vm4356, %v4117
    %4406 = vst.msk [vmem:[#allocation3 + $0x380] sm:$0xff] %vm4354, %v4119
    %4407 = vst.msk [vmem:[#allocation3 + $0x390] sm:$0x3f] %vm4356, %v4121
    %4408 = vst.msk [vmem:[#allocation3 + $0x3a0] sm:$0xff] %vm4354, %v4123
    %4409 = vst.msk [vmem:[#allocation3 + $0x3b0] sm:$0x3f] %vm4356, %v4125
    %4410 = vst.msk [vmem:[#allocation3 + $0x3c0] sm:$0xff] %vm4354, %v4127
    %4411 = vst.msk [vmem:[#allocation3 + $0x3d0] sm:$0x3f] %vm4356, %v4129
    %4412 = vst.msk [vmem:[#allocation3 + $0x400] sm:$0xff] %vm4354, %v4131
    %4413 = vst.msk [vmem:[#allocation3 + $0x410] sm:$0x3f] %vm4356, %v4133
    %4414 = vst.msk [vmem:[#allocation3 + $0x420] sm:$0xff] %vm4354, %v4135
    %4415 = vst.msk [vmem:[#allocation3 + $0x430] sm:$0x3f] %vm4356, %v4137
    %4416 = vst.msk [vmem:[#allocation3 + $0x440] sm:$0xff] %vm4354, %v4139
    %4417 = vst.msk [vmem:[#allocation3 + $0x450] sm:$0x3f] %vm4356, %v4141
    %4418 = vst.msk [vmem:[#allocation3 + $0x460] sm:$0xff] %vm4354, %v4143
    %4419 = vst.msk [vmem:[#allocation3 + $0x470] sm:$0x3f] %vm4356, %v4145
    %4420 = vst.msk [vmem:[#allocation3 + $0x480] sm:$0xff] %vm4354, %v4147
    %4421 = vst.msk [vmem:[#allocation3 + $0x490] sm:$0x3f] %vm4356, %v4149
    %4422 = vst.msk [vmem:[#allocation3 + $0x4a0] sm:$0xff] %vm4354, %v4151
    %4423 = vst.msk [vmem:[#allocation3 + $0x4b0] sm:$0x3f] %vm4356, %v4153
    %4424 = vst.msk [vmem:[#allocation3 + $0x4c0] sm:$0xff] %vm4354, %v4155
    %4425 = vst.msk [vmem:[#allocation3 + $0x4d0] sm:$0x3f] %vm4356, %v4157
    %4426 = vst.msk [vmem:[#allocation3 + $0x500] sm:$0xff] %vm4354, %v4159
    %4427 = vst.msk [vmem:[#allocation3 + $0x510] sm:$0x3f] %vm4356, %v4161
    %4428 = vst.msk [vmem:[#allocation3 + $0x520] sm:$0xff] %vm4354, %v4163
    %4429 = vst.msk [vmem:[#allocation3 + $0x530] sm:$0x3f] %vm4356, %v4165
    %4430 = vst.msk [vmem:[#allocation3 + $0x540] sm:$0xff] %vm4354, %v4167
    %4431 = vst.msk [vmem:[#allocation3 + $0x550] sm:$0x3f] %vm4356, %v4169
    %4432 = vst.msk [vmem:[#allocation3 + $0x560] sm:$0xff] %vm4354, %v4171
    %4433 = vst.msk [vmem:[#allocation3 + $0x570] sm:$0x3f] %vm4356, %v4173
    %4434 = vst.msk [vmem:[#allocation3 + $0x580] sm:$0xff] %vm4354, %v4175
    %4435 = vst.msk [vmem:[#allocation3 + $0x590] sm:$0x3f] %vm4356, %v4177
    %4436 = vst.msk [vmem:[#allocation3 + $0x5a0] sm:$0xff] %vm4354, %v4179
    %4437 = vst.msk [vmem:[#allocation3 + $0x5b0] sm:$0x3f] %vm4356, %v4181
    %4438 = vst.msk [vmem:[#allocation3 + $0x5c0] sm:$0xff] %vm4354, %v4183
    %4439 = vst.msk [vmem:[#allocation3 + $0x5d0] sm:$0x3f] %vm4356, %v4185
    %4440 = vst.msk [vmem:[#allocation3 + $0x600] sm:$0xff] %vm4354, %v4187
    %4441 = vst.msk [vmem:[#allocation3 + $0x610] sm:$0x3f] %vm4356, %v4189
    %4442 = vst.msk [vmem:[#allocation3 + $0x620] sm:$0xff] %vm4354, %v4191
    %4443 = vst.msk [vmem:[#allocation3 + $0x630] sm:$0x3f] %vm4356, %v4193
    %4444 = vst.msk [vmem:[#allocation3 + $0x640] sm:$0xff] %vm4354, %v4195
    %4445 = vst.msk [vmem:[#allocation3 + $0x650] sm:$0x3f] %vm4356, %v4197
    %4446 = vst.msk [vmem:[#allocation3 + $0x660] sm:$0xff] %vm4354, %v4199
    %4447 = vst.msk [vmem:[#allocation3 + $0x670] sm:$0x3f] %vm4356, %v4201
    %4448 = vst.msk [vmem:[#allocation3 + $0x680] sm:$0xff] %vm4354, %v4203
    %4449 = vst.msk [vmem:[#allocation3 + $0x690] sm:$0x3f] %vm4356, %v4205
    %4450 = vst.msk [vmem:[#allocation3 + $0x6a0] sm:$0xff] %vm4354, %v4207
    %4451 = vst.msk [vmem:[#allocation3 + $0x6b0] sm:$0x3f] %vm4356, %v4209
    %4452 = vst.msk [vmem:[#allocation3 + $0x6c0] sm:$0xff] %vm4354, %v4211
    %4453 = vst.msk [vmem:[#allocation3 + $0x6d0] sm:$0x3f] %vm4356, %v4213
    %4454 = vst.msk [vmem:[#allocation3 + $0x700] sm:$0xff] %vm4354, %v4215
    %4455 = vst.msk [vmem:[#allocation3 + $0x710] sm:$0x3f] %vm4356, %v4217
    %4456 = vst.msk [vmem:[#allocation3 + $0x720] sm:$0xff] %vm4354, %v4219
    %4457 = vst.msk [vmem:[#allocation3 + $0x730] sm:$0x3f] %vm4356, %v4221
    %4458 = vst.msk [vmem:[#allocation3 + $0x740] sm:$0xff] %vm4354, %v4223
    %4459 = vst.msk [vmem:[#allocation3 + $0x750] sm:$0x3f] %vm4356, %v4225
    %4460 = vst.msk [vmem:[#allocation3 + $0x760] sm:$0xff] %vm4354, %v4227
    %4461 = vst.msk [vmem:[#allocation3 + $0x770] sm:$0x3f] %vm4356, %v4229
    %4462 = vst.msk [vmem:[#allocation3 + $0x780] sm:$0xff] %vm4354, %v4231
    %4463 = vst.msk [vmem:[#allocation3 + $0x790] sm:$0x3f] %vm4356, %v4233
    %4464 = vst.msk [vmem:[#allocation3 + $0x7a0] sm:$0xff] %vm4354, %v4235
    %4465 = vst.msk [vmem:[#allocation3 + $0x7b0] sm:$0x3f] %vm4356, %v4237
    %4466 = vst.msk [vmem:[#allocation3 + $0x7c0] sm:$0xff] %vm4354, %v4239
    %4467 = vst.msk [vmem:[#allocation3 + $0x7d0] sm:$0x3f] %vm4356, %v4241
    %s4468 = scalar_lea.vmem [#allocation2], 32
    %v4469 = vld [vmem:[%s4468] sm:$0xff]
    %v4470 = vld [vmem:[%s4468 + $0x8] sm:$0xff]
    %v4471 = vld [vmem:[%s4468 + $0x10] sm:$0xff]
    %v4472 = vld [vmem:[%s4468 + $0x18] sm:$0xff]
    %v4473 = vld [vmem:[%s4468 + $0x20] sm:$0xff]
    %v4474 = vld [vmem:[%s4468 + $0x28] sm:$0xff]
    %v4475 = vld [vmem:[%s4468 + $0x30] sm:$0xff]
    %v4476 = vld [vmem:[%s4468 + $0x38] sm:$0xff]
    %v4477 = vld [vmem:[%s4468 + $0x40] sm:$0xff]
    %v4478 = vld [vmem:[%s4468 + $0x48] sm:$0xff]
    %v4479 = vld [vmem:[%s4468 + $0x50] sm:$0xff]
    %v4480 = vld [vmem:[%s4468 + $0x58] sm:$0xff]
    %v4481 = vld [vmem:[%s4468 + $0x80] sm:$0xff]
    %v4482 = vld [vmem:[%s4468 + $0x88] sm:$0xff]
    %v4483 = vld [vmem:[%s4468 + $0x90] sm:$0xff]
    %v4484 = vld [vmem:[%s4468 + $0x98] sm:$0xff]
    %v4485 = vld [vmem:[%s4468 + $0xa0] sm:$0xff]
    %v4486 = vld [vmem:[%s4468 + $0xa8] sm:$0xff]
    %v4487 = vld [vmem:[%s4468 + $0xb0] sm:$0xff]
    %v4488 = vld [vmem:[%s4468 + $0xb8] sm:$0xff]
    %v4489 = vld [vmem:[%s4468 + $0xc0] sm:$0xff]
    %v4490 = vld [vmem:[%s4468 + $0xc8] sm:$0xff]
    %v4491 = vld [vmem:[%s4468 + $0xd0] sm:$0xff]
    %v4492 = vld [vmem:[%s4468 + $0xd8] sm:$0xff]
    %v4493 = vld [vmem:[%s4468 + $0x100] sm:$0xff]
    %v4494 = vld [vmem:[%s4468 + $0x108] sm:$0xff]
    %v4495 = vld [vmem:[%s4468 + $0x110] sm:$0xff]
    %v4496 = vld [vmem:[%s4468 + $0x118] sm:$0xff]
    %v4497 = vld [vmem:[%s4468 + $0x120] sm:$0xff]
    %v4498 = vld [vmem:[%s4468 + $0x128] sm:$0xff]
    %v4499 = vld [vmem:[%s4468 + $0x130] sm:$0xff]
    %v4500 = vld [vmem:[%s4468 + $0x138] sm:$0xff]
    %v4501 = vld [vmem:[%s4468 + $0x140] sm:$0xff]
    %v4502 = vld [vmem:[%s4468 + $0x148] sm:$0xff]
    %v4503 = vld [vmem:[%s4468 + $0x150] sm:$0xff]
    %v4504 = vld [vmem:[%s4468 + $0x158] sm:$0xff]
    %v4505 = vld [vmem:[%s4468 + $0x180] sm:$0xff]
    %v4506 = vld [vmem:[%s4468 + $0x188] sm:$0xff]
    %v4507 = vld [vmem:[%s4468 + $0x190] sm:$0xff]
    %v4508 = vld [vmem:[%s4468 + $0x198] sm:$0xff]
    %v4509 = vld [vmem:[%s4468 + $0x1a0] sm:$0xff]
    %v4510 = vld [vmem:[%s4468 + $0x1a8] sm:$0xff]
    %v4511 = vld [vmem:[%s4468 + $0x1b0] sm:$0xff]
    %v4512 = vld [vmem:[%s4468 + $0x1b8] sm:$0xff]
    %v4513 = vld [vmem:[%s4468 + $0x1c0] sm:$0xff]
    %v4514 = vld [vmem:[%s4468 + $0x1c8] sm:$0xff]
    %v4515 = vld [vmem:[%s4468 + $0x1d0] sm:$0xff]
    %v4516 = vld [vmem:[%s4468 + $0x1d8] sm:$0xff]
    %v4517 = vld [vmem:[%s4468 + $0x200] sm:$0xff]
    %v4518 = vld [vmem:[%s4468 + $0x208] sm:$0xff]
    %v4519 = vld [vmem:[%s4468 + $0x210] sm:$0xff]
    %v4520 = vld [vmem:[%s4468 + $0x218] sm:$0xff]
    %v4521 = vld [vmem:[%s4468 + $0x220] sm:$0xff]
    %v4522 = vld [vmem:[%s4468 + $0x228] sm:$0xff]
    %v4523 = vld [vmem:[%s4468 + $0x230] sm:$0xff]
    %v4524 = vld [vmem:[%s4468 + $0x238] sm:$0xff]
    %v4525 = vld [vmem:[%s4468 + $0x240] sm:$0xff]
    %v4526 = vld [vmem:[%s4468 + $0x248] sm:$0xff]
    %v4527 = vld [vmem:[%s4468 + $0x250] sm:$0xff]
    %v4528 = vld [vmem:[%s4468 + $0x258] sm:$0xff]
    %v4529 = vld [vmem:[%s4468 + $0x280] sm:$0xff]
    %v4530 = vld [vmem:[%s4468 + $0x288] sm:$0xff]
    %v4531 = vld [vmem:[%s4468 + $0x290] sm:$0xff]
    %v4532 = vld [vmem:[%s4468 + $0x298] sm:$0xff]
    %v4533 = vld [vmem:[%s4468 + $0x2a0] sm:$0xff]
    %v4534 = vld [vmem:[%s4468 + $0x2a8] sm:$0xff]
    %v4535 = vld [vmem:[%s4468 + $0x2b0] sm:$0xff]
    %v4536 = vld [vmem:[%s4468 + $0x2b8] sm:$0xff]
    %v4537 = vld [vmem:[%s4468 + $0x2c0] sm:$0xff]
    %v4538 = vld [vmem:[%s4468 + $0x2c8] sm:$0xff]
    %v4539 = vld [vmem:[%s4468 + $0x2d0] sm:$0xff]
    %v4540 = vld [vmem:[%s4468 + $0x2d8] sm:$0xff]
    %v4541 = vld [vmem:[%s4468 + $0x300] sm:$0xff]
    %v4542 = vld [vmem:[%s4468 + $0x308] sm:$0xff]
    %v4543 = vld [vmem:[%s4468 + $0x310] sm:$0xff]
    %v4544 = vld [vmem:[%s4468 + $0x318] sm:$0xff]
    %v4545 = vld [vmem:[%s4468 + $0x320] sm:$0xff]
    %v4546 = vld [vmem:[%s4468 + $0x328] sm:$0xff]
    %v4547 = vld [vmem:[%s4468 + $0x330] sm:$0xff]
    %v4548 = vld [vmem:[%s4468 + $0x338] sm:$0xff]
    %v4549 = vld [vmem:[%s4468 + $0x340] sm:$0xff]
    %v4550 = vld [vmem:[%s4468 + $0x348] sm:$0xff]
    %v4551 = vld [vmem:[%s4468 + $0x350] sm:$0xff]
    %v4552 = vld [vmem:[%s4468 + $0x358] sm:$0xff]
    %v4553 = vld [vmem:[%s4468 + $0x380] sm:$0xff]
    %v4554 = vld [vmem:[%s4468 + $0x388] sm:$0xff]
    %v4555 = vld [vmem:[%s4468 + $0x390] sm:$0xff]
    %v4556 = vld [vmem:[%s4468 + $0x398] sm:$0xff]
    %v4557 = vld [vmem:[%s4468 + $0x3a0] sm:$0xff]
    %v4558 = vld [vmem:[%s4468 + $0x3a8] sm:$0xff]
    %v4559 = vld [vmem:[%s4468 + $0x3b0] sm:$0xff]
    %v4560 = vld [vmem:[%s4468 + $0x3b8] sm:$0xff]
    %v4561 = vld [vmem:[%s4468 + $0x3c0] sm:$0xff]
    %v4562 = vld [vmem:[%s4468 + $0x3c8] sm:$0xff]
    %v4563 = vld [vmem:[%s4468 + $0x3d0] sm:$0xff]
    %v4564 = vld [vmem:[%s4468 + $0x3d8] sm:$0xff]
    %4661 = vrot.lane.b32.xlu0 %v4469, 96
    %v4662 = vpop.permute.xlu0 %4661
    %4663 = vrot.lane.b32.xlu0 %v4470, 96
    %v4664 = vpop.permute.xlu0 %4663
    %4665 = vrot.lane.b32.xlu0 %v4471, 96
    %v4666 = vpop.permute.xlu0 %4665
    %4667 = vrot.lane.b32.xlu0 %v4472, 96
    %v4668 = vpop.permute.xlu0 %4667
    %4669 = vrot.lane.b32.xlu0 %v4473, 96
    %v4670 = vpop.permute.xlu0 %4669
    %4671 = vrot.lane.b32.xlu0 %v4474, 96
    %v4672 = vpop.permute.xlu0 %4671
    %4673 = vrot.lane.b32.xlu0 %v4475, 96
    %v4674 = vpop.permute.xlu0 %4673
    %4675 = vrot.lane.b32.xlu0 %v4476, 96
    %v4676 = vpop.permute.xlu0 %4675
    %4677 = vrot.lane.b32.xlu0 %v4477, 96
    %v4678 = vpop.permute.xlu0 %4677
    %4679 = vrot.lane.b32.xlu0 %v4478, 96
    %v4680 = vpop.permute.xlu0 %4679
    %4681 = vrot.lane.b32.xlu0 %v4479, 96
    %v4682 = vpop.permute.xlu0 %4681
    %4683 = vrot.lane.b32.xlu0 %v4480, 96
    %v4684 = vpop.permute.xlu0 %4683
    %4685 = vrot.lane.b32.xlu0 %v4481, 96
    %v4686 = vpop.permute.xlu0 %4685
    %4687 = vrot.lane.b32.xlu0 %v4482, 96
    %v4688 = vpop.permute.xlu0 %4687
    %4689 = vrot.lane.b32.xlu0 %v4483, 96
    %v4690 = vpop.permute.xlu0 %4689
    %4691 = vrot.lane.b32.xlu0 %v4484, 96
    %v4692 = vpop.permute.xlu0 %4691
    %4693 = vrot.lane.b32.xlu0 %v4485, 96
    %v4694 = vpop.permute.xlu0 %4693
    %4695 = vrot.lane.b32.xlu0 %v4486, 96
    %v4696 = vpop.permute.xlu0 %4695
    %4697 = vrot.lane.b32.xlu0 %v4487, 96
    %v4698 = vpop.permute.xlu0 %4697
    %4699 = vrot.lane.b32.xlu0 %v4488, 96
    %v4700 = vpop.permute.xlu0 %4699
    %4701 = vrot.lane.b32.xlu0 %v4489, 96
    %v4702 = vpop.permute.xlu0 %4701
    %4703 = vrot.lane.b32.xlu0 %v4490, 96
    %v4704 = vpop.permute.xlu0 %4703
    %4705 = vrot.lane.b32.xlu0 %v4491, 96
    %v4706 = vpop.permute.xlu0 %4705
    %4707 = vrot.lane.b32.xlu0 %v4492, 96
    %v4708 = vpop.permute.xlu0 %4707
    %4709 = vrot.lane.b32.xlu0 %v4493, 96
    %v4710 = vpop.permute.xlu0 %4709
    %4711 = vrot.lane.b32.xlu0 %v4494, 96
    %v4712 = vpop.permute.xlu0 %4711
    %4713 = vrot.lane.b32.xlu0 %v4495, 96
    %v4714 = vpop.permute.xlu0 %4713
    %4715 = vrot.lane.b32.xlu0 %v4496, 96
    %v4716 = vpop.permute.xlu0 %4715
    %4717 = vrot.lane.b32.xlu0 %v4497, 96
    %v4718 = vpop.permute.xlu0 %4717
    %4719 = vrot.lane.b32.xlu0 %v4498, 96
    %v4720 = vpop.permute.xlu0 %4719
    %4721 = vrot.lane.b32.xlu0 %v4499, 96
    %v4722 = vpop.permute.xlu0 %4721
    %4723 = vrot.lane.b32.xlu0 %v4500, 96
    %v4724 = vpop.permute.xlu0 %4723
    %4725 = vrot.lane.b32.xlu0 %v4501, 96
    %v4726 = vpop.permute.xlu0 %4725
    %4727 = vrot.lane.b32.xlu0 %v4502, 96
    %v4728 = vpop.permute.xlu0 %4727
    %4729 = vrot.lane.b32.xlu0 %v4503, 96
    %v4730 = vpop.permute.xlu0 %4729
    %4731 = vrot.lane.b32.xlu0 %v4504, 96
    %v4732 = vpop.permute.xlu0 %4731
    %4733 = vrot.lane.b32.xlu0 %v4505, 96
    %v4734 = vpop.permute.xlu0 %4733
    %4735 = vrot.lane.b32.xlu0 %v4506, 96
    %v4736 = vpop.permute.xlu0 %4735
    %4737 = vrot.lane.b32.xlu0 %v4507, 96
    %v4738 = vpop.permute.xlu0 %4737
    %4739 = vrot.lane.b32.xlu0 %v4508, 96
    %v4740 = vpop.permute.xlu0 %4739
    %4741 = vrot.lane.b32.xlu0 %v4509, 96
    %v4742 = vpop.permute.xlu0 %4741
    %4743 = vrot.lane.b32.xlu0 %v4510, 96
    %v4744 = vpop.permute.xlu0 %4743
    %4745 = vrot.lane.b32.xlu0 %v4511, 96
    %v4746 = vpop.permute.xlu0 %4745
    %4747 = vrot.lane.b32.xlu0 %v4512, 96
    %v4748 = vpop.permute.xlu0 %4747
    %4749 = vrot.lane.b32.xlu0 %v4513, 96
    %v4750 = vpop.permute.xlu0 %4749
    %4751 = vrot.lane.b32.xlu0 %v4514, 96
    %v4752 = vpop.permute.xlu0 %4751
    %4753 = vrot.lane.b32.xlu0 %v4515, 96
    %v4754 = vpop.permute.xlu0 %4753
    %4755 = vrot.lane.b32.xlu0 %v4516, 96
    %v4756 = vpop.permute.xlu0 %4755
    %4757 = vrot.lane.b32.xlu0 %v4517, 96
    %v4758 = vpop.permute.xlu0 %4757
    %4759 = vrot.lane.b32.xlu0 %v4518, 96
    %v4760 = vpop.permute.xlu0 %4759
    %4761 = vrot.lane.b32.xlu0 %v4519, 96
    %v4762 = vpop.permute.xlu0 %4761
    %4763 = vrot.lane.b32.xlu0 %v4520, 96
    %v4764 = vpop.permute.xlu0 %4763
    %4765 = vrot.lane.b32.xlu0 %v4521, 96
    %v4766 = vpop.permute.xlu0 %4765
    %4767 = vrot.lane.b32.xlu0 %v4522, 96
    %v4768 = vpop.permute.xlu0 %4767
    %4769 = vrot.lane.b32.xlu0 %v4523, 96
    %v4770 = vpop.permute.xlu0 %4769
    %4771 = vrot.lane.b32.xlu0 %v4524, 96
    %v4772 = vpop.permute.xlu0 %4771
    %4773 = vrot.lane.b32.xlu0 %v4525, 96
    %v4774 = vpop.permute.xlu0 %4773
    %4775 = vrot.lane.b32.xlu0 %v4526, 96
    %v4776 = vpop.permute.xlu0 %4775
    %4777 = vrot.lane.b32.xlu0 %v4527, 96
    %v4778 = vpop.permute.xlu0 %4777
    %4779 = vrot.lane.b32.xlu0 %v4528, 96
    %v4780 = vpop.permute.xlu0 %4779
    %4781 = vrot.lane.b32.xlu0 %v4529, 96
    %v4782 = vpop.permute.xlu0 %4781
    %4783 = vrot.lane.b32.xlu0 %v4530, 96
    %v4784 = vpop.permute.xlu0 %4783
    %4785 = vrot.lane.b32.xlu0 %v4531, 96
    %v4786 = vpop.permute.xlu0 %4785
    %4787 = vrot.lane.b32.xlu0 %v4532, 96
    %v4788 = vpop.permute.xlu0 %4787
    %4789 = vrot.lane.b32.xlu0 %v4533, 96
    %v4790 = vpop.permute.xlu0 %4789
    %4791 = vrot.lane.b32.xlu0 %v4534, 96
    %v4792 = vpop.permute.xlu0 %4791
    %4793 = vrot.lane.b32.xlu0 %v4535, 96
    %v4794 = vpop.permute.xlu0 %4793
    %4795 = vrot.lane.b32.xlu0 %v4536, 96
    %v4796 = vpop.permute.xlu0 %4795
    %4797 = vrot.lane.b32.xlu0 %v4537, 96
    %v4798 = vpop.permute.xlu0 %4797
    %4799 = vrot.lane.b32.xlu0 %v4538, 96
    %v4800 = vpop.permute.xlu0 %4799
    %4801 = vrot.lane.b32.xlu0 %v4539, 96
    %v4802 = vpop.permute.xlu0 %4801
    %4803 = vrot.lane.b32.xlu0 %v4540, 96
    %v4804 = vpop.permute.xlu0 %4803
    %4805 = vrot.lane.b32.xlu0 %v4541, 96
    %v4806 = vpop.permute.xlu0 %4805
    %4807 = vrot.lane.b32.xlu0 %v4542, 96
    %v4808 = vpop.permute.xlu0 %4807
    %4809 = vrot.lane.b32.xlu0 %v4543, 96
    %v4810 = vpop.permute.xlu0 %4809
    %4811 = vrot.lane.b32.xlu0 %v4544, 96
    %v4812 = vpop.permute.xlu0 %4811
    %4813 = vrot.lane.b32.xlu0 %v4545, 96
    %v4814 = vpop.permute.xlu0 %4813
    %4815 = vrot.lane.b32.xlu0 %v4546, 96
    %v4816 = vpop.permute.xlu0 %4815
    %4817 = vrot.lane.b32.xlu0 %v4547, 96
    %v4818 = vpop.permute.xlu0 %4817
    %4819 = vrot.lane.b32.xlu0 %v4548, 96
    %v4820 = vpop.permute.xlu0 %4819
    %4821 = vrot.lane.b32.xlu0 %v4549, 96
    %v4822 = vpop.permute.xlu0 %4821
    %4823 = vrot.lane.b32.xlu0 %v4550, 96
    %v4824 = vpop.permute.xlu0 %4823
    %4825 = vrot.lane.b32.xlu0 %v4551, 96
    %v4826 = vpop.permute.xlu0 %4825
    %4827 = vrot.lane.b32.xlu0 %v4552, 96
    %v4828 = vpop.permute.xlu0 %4827
    %4829 = vrot.lane.b32.xlu0 %v4553, 96
    %v4830 = vpop.permute.xlu0 %4829
    %4831 = vrot.lane.b32.xlu0 %v4554, 96
    %v4832 = vpop.permute.xlu0 %4831
    %4833 = vrot.lane.b32.xlu0 %v4555, 96
    %v4834 = vpop.permute.xlu0 %4833
    %4835 = vrot.lane.b32.xlu0 %v4556, 96
    %v4836 = vpop.permute.xlu0 %4835
    %4837 = vrot.lane.b32.xlu0 %v4557, 96
    %v4838 = vpop.permute.xlu0 %4837
    %4839 = vrot.lane.b32.xlu0 %v4558, 96
    %v4840 = vpop.permute.xlu0 %4839
    %4841 = vrot.lane.b32.xlu0 %v4559, 96
    %v4842 = vpop.permute.xlu0 %4841
    %4843 = vrot.lane.b32.xlu0 %v4560, 96
    %v4844 = vpop.permute.xlu0 %4843
    %4845 = vrot.lane.b32.xlu0 %v4561, 96
    %v4846 = vpop.permute.xlu0 %4845
    %4847 = vrot.lane.b32.xlu0 %v4562, 96
    %v4848 = vpop.permute.xlu0 %4847
    %4849 = vrot.lane.b32.xlu0 %v4563, 96
    %v4850 = vpop.permute.xlu0 %4849
    %4851 = vrot.lane.b32.xlu0 %v4564, 96
    %v4852 = vpop.permute.xlu0 %4851
    %vm4949 = vcmask 917248
    %4950 = vst.msk [vmem:[#allocation3] sm:$0xff] %vm4949, %v4662
    %4951 = vst.msk [vmem:[#allocation3 + $0x10] sm:$0xff] %vm4949, %v4664
    %4952 = vst.msk [vmem:[#allocation3 + $0x20] sm:$0xff] %vm4949, %v4666
    %4953 = vst.msk [vmem:[#allocation3 + $0x30] sm:$0xff] %vm4949, %v4668
    %4954 = vst.msk [vmem:[#allocation3 + $0x40] sm:$0xff] %vm4949, %v4670
    %4955 = vst.msk [vmem:[#allocation3 + $0x50] sm:$0xff] %vm4949, %v4672
    %4956 = vst.msk [vmem:[#allocation3 + $0x60] sm:$0xff] %vm4949, %v4674
    %4957 = vst.msk [vmem:[#allocation3 + $0x70] sm:$0xff] %vm4949, %v4676
    %4958 = vst.msk [vmem:[#allocation3 + $0x80] sm:$0xff] %vm4949, %v4678
    %4959 = vst.msk [vmem:[#allocation3 + $0x90] sm:$0xff] %vm4949, %v4680
    %4960 = vst.msk [vmem:[#allocation3 + $0xa0] sm:$0xff] %vm4949, %v4682
    %4961 = vst.msk [vmem:[#allocation3 + $0xb0] sm:$0xff] %vm4949, %v4684
    %4962 = vst.msk [vmem:[#allocation3 + $0x100] sm:$0xff] %vm4949, %v4686
    %4963 = vst.msk [vmem:[#allocation3 + $0x110] sm:$0xff] %vm4949, %v4688
    %4964 = vst.msk [vmem:[#allocation3 + $0x120] sm:$0xff] %vm4949, %v4690
    %4965 = vst.msk [vmem:[#allocation3 + $0x130] sm:$0xff] %vm4949, %v4692
    %4966 = vst.msk [vmem:[#allocation3 + $0x140] sm:$0xff] %vm4949, %v4694
    %4967 = vst.msk [vmem:[#allocation3 + $0x150] sm:$0xff] %vm4949, %v4696
    %4968 = vst.msk [vmem:[#allocation3 + $0x160] sm:$0xff] %vm4949, %v4698
    %4969 = vst.msk [vmem:[#allocation3 + $0x170] sm:$0xff] %vm4949, %v4700
    %4970 = vst.msk [vmem:[#allocation3 + $0x180] sm:$0xff] %vm4949, %v4702
    %4971 = vst.msk [vmem:[#allocation3 + $0x190] sm:$0xff] %vm4949, %v4704
    %4972 = vst.msk [vmem:[#allocation3 + $0x1a0] sm:$0xff] %vm4949, %v4706
    %4973 = vst.msk [vmem:[#allocation3 + $0x1b0] sm:$0xff] %vm4949, %v4708
    %4974 = vst.msk [vmem:[#allocation3 + $0x200] sm:$0xff] %vm4949, %v4710
    %4975 = vst.msk [vmem:[#allocation3 + $0x210] sm:$0xff] %vm4949, %v4712
    %4976 = vst.msk [vmem:[#allocation3 + $0x220] sm:$0xff] %vm4949, %v4714
    %4977 = vst.msk [vmem:[#allocation3 + $0x230] sm:$0xff] %vm4949, %v4716
    %4978 = vst.msk [vmem:[#allocation3 + $0x240] sm:$0xff] %vm4949, %v4718
    %4979 = vst.msk [vmem:[#allocation3 + $0x250] sm:$0xff] %vm4949, %v4720
    %4980 = vst.msk [vmem:[#allocation3 + $0x260] sm:$0xff] %vm4949, %v4722
    %4981 = vst.msk [vmem:[#allocation3 + $0x270] sm:$0xff] %vm4949, %v4724
    %4982 = vst.msk [vmem:[#allocation3 + $0x280] sm:$0xff] %vm4949, %v4726
    %4983 = vst.msk [vmem:[#allocation3 + $0x290] sm:$0xff] %vm4949, %v4728
    %4984 = vst.msk [vmem:[#allocation3 + $0x2a0] sm:$0xff] %vm4949, %v4730
    %4985 = vst.msk [vmem:[#allocation3 + $0x2b0] sm:$0xff] %vm4949, %v4732
    %4986 = vst.msk [vmem:[#allocation3 + $0x300] sm:$0xff] %vm4949, %v4734
    %4987 = vst.msk [vmem:[#allocation3 + $0x310] sm:$0xff] %vm4949, %v4736
    %4988 = vst.msk [vmem:[#allocation3 + $0x320] sm:$0xff] %vm4949, %v4738
    %4989 = vst.msk [vmem:[#allocation3 + $0x330] sm:$0xff] %vm4949, %v4740
    %4990 = vst.msk [vmem:[#allocation3 + $0x340] sm:$0xff] %vm4949, %v4742
    %4991 = vst.msk [vmem:[#allocation3 + $0x350] sm:$0xff] %vm4949, %v4744
    %4992 = vst.msk [vmem:[#allocation3 + $0x360] sm:$0xff] %vm4949, %v4746
    %4993 = vst.msk [vmem:[#allocation3 + $0x370] sm:$0xff] %vm4949, %v4748
    %4994 = vst.msk [vmem:[#allocation3 + $0x380] sm:$0xff] %vm4949, %v4750
    %4995 = vst.msk [vmem:[#allocation3 + $0x390] sm:$0xff] %vm4949, %v4752
    %4996 = vst.msk [vmem:[#allocation3 + $0x3a0] sm:$0xff] %vm4949, %v4754
    %4997 = vst.msk [vmem:[#allocation3 + $0x3b0] sm:$0xff] %vm4949, %v4756
    %4998 = vst.msk [vmem:[#allocation3 + $0x400] sm:$0xff] %vm4949, %v4758
    %4999 = vst.msk [vmem:[#allocation3 + $0x410] sm:$0xff] %vm4949, %v4760
    %5000 = vst.msk [vmem:[#allocation3 + $0x420] sm:$0xff] %vm4949, %v4762
    %5001 = vst.msk [vmem:[#allocation3 + $0x430] sm:$0xff] %vm4949, %v4764
    %5002 = vst.msk [vmem:[#allocation3 + $0x440] sm:$0xff] %vm4949, %v4766
    %5003 = vst.msk [vmem:[#allocation3 + $0x450] sm:$0xff] %vm4949, %v4768
    %5004 = vst.msk [vmem:[#allocation3 + $0x460] sm:$0xff] %vm4949, %v4770
    %5005 = vst.msk [vmem:[#allocation3 + $0x470] sm:$0xff] %vm4949, %v4772
    %5006 = vst.msk [vmem:[#allocation3 + $0x480] sm:$0xff] %vm4949, %v4774
    %5007 = vst.msk [vmem:[#allocation3 + $0x490] sm:$0xff] %vm4949, %v4776
    %5008 = vst.msk [vmem:[#allocation3 + $0x4a0] sm:$0xff] %vm4949, %v4778
    %5009 = vst.msk [vmem:[#allocation3 + $0x4b0] sm:$0xff] %vm4949, %v4780
    %5010 = vst.msk [vmem:[#allocation3 + $0x500] sm:$0xff] %vm4949, %v4782
    %5011 = vst.msk [vmem:[#allocation3 + $0x510] sm:$0xff] %vm4949, %v4784
    %5012 = vst.msk [vmem:[#allocation3 + $0x520] sm:$0xff] %vm4949, %v4786
    %5013 = vst.msk [vmem:[#allocation3 + $0x530] sm:$0xff] %vm4949, %v4788
    %5014 = vst.msk [vmem:[#allocation3 + $0x540] sm:$0xff] %vm4949, %v4790
    %5015 = vst.msk [vmem:[#allocation3 + $0x550] sm:$0xff] %vm4949, %v4792
    %5016 = vst.msk [vmem:[#allocation3 + $0x560] sm:$0xff] %vm4949, %v4794
    %5017 = vst.msk [vmem:[#allocation3 + $0x570] sm:$0xff] %vm4949, %v4796
    %5018 = vst.msk [vmem:[#allocation3 + $0x580] sm:$0xff] %vm4949, %v4798
    %5019 = vst.msk [vmem:[#allocation3 + $0x590] sm:$0xff] %vm4949, %v4800
    %5020 = vst.msk [vmem:[#allocation3 + $0x5a0] sm:$0xff] %vm4949, %v4802
    %5021 = vst.msk [vmem:[#allocation3 + $0x5b0] sm:$0xff] %vm4949, %v4804
    %5022 = vst.msk [vmem:[#allocation3 + $0x600] sm:$0xff] %vm4949, %v4806
    %5023 = vst.msk [vmem:[#allocation3 + $0x610] sm:$0xff] %vm4949, %v4808
    %5024 = vst.msk [vmem:[#allocation3 + $0x620] sm:$0xff] %vm4949, %v4810
    %5025 = vst.msk [vmem:[#allocation3 + $0x630] sm:$0xff] %vm4949, %v4812
    %5026 = vst.msk [vmem:[#allocation3 + $0x640] sm:$0xff] %vm4949, %v4814
    %5027 = vst.msk [vmem:[#allocation3 + $0x650] sm:$0xff] %vm4949, %v4816
    %5028 = vst.msk [vmem:[#allocation3 + $0x660] sm:$0xff] %vm4949, %v4818
    %5029 = vst.msk [vmem:[#allocation3 + $0x670] sm:$0xff] %vm4949, %v4820
    %5030 = vst.msk [vmem:[#allocation3 + $0x680] sm:$0xff] %vm4949, %v4822
    %5031 = vst.msk [vmem:[#allocation3 + $0x690] sm:$0xff] %vm4949, %v4824
    %5032 = vst.msk [vmem:[#allocation3 + $0x6a0] sm:$0xff] %vm4949, %v4826
    %5033 = vst.msk [vmem:[#allocation3 + $0x6b0] sm:$0xff] %vm4949, %v4828
    %5034 = vst.msk [vmem:[#allocation3 + $0x700] sm:$0xff] %vm4949, %v4830
    %5035 = vst.msk [vmem:[#allocation3 + $0x710] sm:$0xff] %vm4949, %v4832
    %5036 = vst.msk [vmem:[#allocation3 + $0x720] sm:$0xff] %vm4949, %v4834
    %5037 = vst.msk [vmem:[#allocation3 + $0x730] sm:$0xff] %vm4949, %v4836
    %5038 = vst.msk [vmem:[#allocation3 + $0x740] sm:$0xff] %vm4949, %v4838
    %5039 = vst.msk [vmem:[#allocation3 + $0x750] sm:$0xff] %vm4949, %v4840
    %5040 = vst.msk [vmem:[#allocation3 + $0x760] sm:$0xff] %vm4949, %v4842
    %5041 = vst.msk [vmem:[#allocation3 + $0x770] sm:$0xff] %vm4949, %v4844
    %5042 = vst.msk [vmem:[#allocation3 + $0x780] sm:$0xff] %vm4949, %v4846
    %5043 = vst.msk [vmem:[#allocation3 + $0x790] sm:$0xff] %vm4949, %v4848
    %5044 = vst.msk [vmem:[#allocation3 + $0x7a0] sm:$0xff] %vm4949, %v4850
    %5045 = vst.msk [vmem:[#allocation3 + $0x7b0] sm:$0xff] %vm4949, %v4852
    %v5046 = vld [vmem:[%s4468 + $0x1] sm:$0xff]
    %v5047 = vld [vmem:[%s4468 + $0x9] sm:$0x7f]
    %v5048 = vld [vmem:[%s4468 + $0x11] sm:$0xff]
    %v5049 = vld [vmem:[%s4468 + $0x19] sm:$0x7f]
    %v5050 = vld [vmem:[%s4468 + $0x21] sm:$0xff]
    %v5051 = vld [vmem:[%s4468 + $0x29] sm:$0x7f]
    %v5052 = vld [vmem:[%s4468 + $0x31] sm:$0xff]
    %v5053 = vld [vmem:[%s4468 + $0x39] sm:$0x7f]
    %v5054 = vld [vmem:[%s4468 + $0x41] sm:$0xff]
    %v5055 = vld [vmem:[%s4468 + $0x49] sm:$0x7f]
    %v5056 = vld [vmem:[%s4468 + $0x51] sm:$0xff]
    %v5057 = vld [vmem:[%s4468 + $0x59] sm:$0x7f]
    %v5058 = vld [vmem:[%s4468 + $0x81] sm:$0xff]
    %v5059 = vld [vmem:[%s4468 + $0x89] sm:$0x7f]
    %v5060 = vld [vmem:[%s4468 + $0x91] sm:$0xff]
    %v5061 = vld [vmem:[%s4468 + $0x99] sm:$0x7f]
    %v5062 = vld [vmem:[%s4468 + $0xa1] sm:$0xff]
    %v5063 = vld [vmem:[%s4468 + $0xa9] sm:$0x7f]
    %v5064 = vld [vmem:[%s4468 + $0xb1] sm:$0xff]
    %v5065 = vld [vmem:[%s4468 + $0xb9] sm:$0x7f]
    %v5066 = vld [vmem:[%s4468 + $0xc1] sm:$0xff]
    %v5067 = vld [vmem:[%s4468 + $0xc9] sm:$0x7f]
    %v5068 = vld [vmem:[%s4468 + $0xd1] sm:$0xff]
    %v5069 = vld [vmem:[%s4468 + $0xd9] sm:$0x7f]
    %v5070 = vld [vmem:[%s4468 + $0x101] sm:$0xff]
    %v5071 = vld [vmem:[%s4468 + $0x109] sm:$0x7f]
    %v5072 = vld [vmem:[%s4468 + $0x111] sm:$0xff]
    %v5073 = vld [vmem:[%s4468 + $0x119] sm:$0x7f]
    %v5074 = vld [vmem:[%s4468 + $0x121] sm:$0xff]
    %v5075 = vld [vmem:[%s4468 + $0x129] sm:$0x7f]
    %v5076 = vld [vmem:[%s4468 + $0x131] sm:$0xff]
    %v5077 = vld [vmem:[%s4468 + $0x139] sm:$0x7f]
    %v5078 = vld [vmem:[%s4468 + $0x141] sm:$0xff]
    %v5079 = vld [vmem:[%s4468 + $0x149] sm:$0x7f]
    %v5080 = vld [vmem:[%s4468 + $0x151] sm:$0xff]
    %v5081 = vld [vmem:[%s4468 + $0x159] sm:$0x7f]
    %v5082 = vld [vmem:[%s4468 + $0x181] sm:$0xff]
    %v5083 = vld [vmem:[%s4468 + $0x189] sm:$0x7f]
    %v5084 = vld [vmem:[%s4468 + $0x191] sm:$0xff]
    %v5085 = vld [vmem:[%s4468 + $0x199] sm:$0x7f]
    %v5086 = vld [vmem:[%s4468 + $0x1a1] sm:$0xff]
    %v5087 = vld [vmem:[%s4468 + $0x1a9] sm:$0x7f]
    %v5088 = vld [vmem:[%s4468 + $0x1b1] sm:$0xff]
    %v5089 = vld [vmem:[%s4468 + $0x1b9] sm:$0x7f]
    %v5090 = vld [vmem:[%s4468 + $0x1c1] sm:$0xff]
    %v5091 = vld [vmem:[%s4468 + $0x1c9] sm:$0x7f]
    %v5092 = vld [vmem:[%s4468 + $0x1d1] sm:$0xff]
    %v5093 = vld [vmem:[%s4468 + $0x1d9] sm:$0x7f]
    %v5094 = vld [vmem:[%s4468 + $0x201] sm:$0xff]
    %v5095 = vld [vmem:[%s4468 + $0x209] sm:$0x7f]
    %v5096 = vld [vmem:[%s4468 + $0x211] sm:$0xff]
    %v5097 = vld [vmem:[%s4468 + $0x219] sm:$0x7f]
    %v5098 = vld [vmem:[%s4468 + $0x221] sm:$0xff]
    %v5099 = vld [vmem:[%s4468 + $0x229] sm:$0x7f]
    %v5100 = vld [vmem:[%s4468 + $0x231] sm:$0xff]
    %v5101 = vld [vmem:[%s4468 + $0x239] sm:$0x7f]
    %v5102 = vld [vmem:[%s4468 + $0x241] sm:$0xff]
    %v5103 = vld [vmem:[%s4468 + $0x249] sm:$0x7f]
    %v5104 = vld [vmem:[%s4468 + $0x251] sm:$0xff]
    %v5105 = vld [vmem:[%s4468 + $0x259] sm:$0x7f]
    %v5106 = vld [vmem:[%s4468 + $0x281] sm:$0xff]
    %v5107 = vld [vmem:[%s4468 + $0x289] sm:$0x7f]
    %v5108 = vld [vmem:[%s4468 + $0x291] sm:$0xff]
    %v5109 = vld [vmem:[%s4468 + $0x299] sm:$0x7f]
    %v5110 = vld [vmem:[%s4468 + $0x2a1] sm:$0xff]
    %v5111 = vld [vmem:[%s4468 + $0x2a9] sm:$0x7f]
    %v5112 = vld [vmem:[%s4468 + $0x2b1] sm:$0xff]
    %v5113 = vld [vmem:[%s4468 + $0x2b9] sm:$0x7f]
    %v5114 = vld [vmem:[%s4468 + $0x2c1] sm:$0xff]
    %v5115 = vld [vmem:[%s4468 + $0x2c9] sm:$0x7f]
    %v5116 = vld [vmem:[%s4468 + $0x2d1] sm:$0xff]
    %v5117 = vld [vmem:[%s4468 + $0x2d9] sm:$0x7f]
    %v5118 = vld [vmem:[%s4468 + $0x301] sm:$0xff]
    %v5119 = vld [vmem:[%s4468 + $0x309] sm:$0x7f]
    %v5120 = vld [vmem:[%s4468 + $0x311] sm:$0xff]
    %v5121 = vld [vmem:[%s4468 + $0x319] sm:$0x7f]
    %v5122 = vld [vmem:[%s4468 + $0x321] sm:$0xff]
    %v5123 = vld [vmem:[%s4468 + $0x329] sm:$0x7f]
    %v5124 = vld [vmem:[%s4468 + $0x331] sm:$0xff]
    %v5125 = vld [vmem:[%s4468 + $0x339] sm:$0x7f]
    %v5126 = vld [vmem:[%s4468 + $0x341] sm:$0xff]
    %v5127 = vld [vmem:[%s4468 + $0x349] sm:$0x7f]
    %v5128 = vld [vmem:[%s4468 + $0x351] sm:$0xff]
    %v5129 = vld [vmem:[%s4468 + $0x359] sm:$0x7f]
    %v5130 = vld [vmem:[%s4468 + $0x381] sm:$0xff]
    %v5131 = vld [vmem:[%s4468 + $0x389] sm:$0x7f]
    %v5132 = vld [vmem:[%s4468 + $0x391] sm:$0xff]
    %v5133 = vld [vmem:[%s4468 + $0x399] sm:$0x7f]
    %v5134 = vld [vmem:[%s4468 + $0x3a1] sm:$0xff]
    %v5135 = vld [vmem:[%s4468 + $0x3a9] sm:$0x7f]
    %v5136 = vld [vmem:[%s4468 + $0x3b1] sm:$0xff]
    %v5137 = vld [vmem:[%s4468 + $0x3b9] sm:$0x7f]
    %v5138 = vld [vmem:[%s4468 + $0x3c1] sm:$0xff]
    %v5139 = vld [vmem:[%s4468 + $0x3c9] sm:$0x7f]
    %v5140 = vld [vmem:[%s4468 + $0x3d1] sm:$0xff]
    %v5141 = vld [vmem:[%s4468 + $0x3d9] sm:$0x7f]
    %5238 = vrot.lane.b32.xlu0 %v5046, 112
    %v5239 = vpop.permute.xlu0 %5238
    %5240 = vrot.lane.b32.xlu0 %v5047, 112
    %v5241 = vpop.permute.xlu0 %5240
    %5242 = vrot.lane.b32.xlu0 %v5048, 112
    %v5243 = vpop.permute.xlu0 %5242
    %5244 = vrot.lane.b32.xlu0 %v5049, 112
    %v5245 = vpop.permute.xlu0 %5244
    %5246 = vrot.lane.b32.xlu0 %v5050, 112
    %v5247 = vpop.permute.xlu0 %5246
    %5248 = vrot.lane.b32.xlu0 %v5051, 112
    %v5249 = vpop.permute.xlu0 %5248
    %5250 = vrot.lane.b32.xlu0 %v5052, 112
    %v5251 = vpop.permute.xlu0 %5250
    %5252 = vrot.lane.b32.xlu0 %v5053, 112
    %v5253 = vpop.permute.xlu0 %5252
    %5254 = vrot.lane.b32.xlu0 %v5054, 112
    %v5255 = vpop.permute.xlu0 %5254
    %5256 = vrot.lane.b32.xlu0 %v5055, 112
    %v5257 = vpop.permute.xlu0 %5256
    %5258 = vrot.lane.b32.xlu0 %v5056, 112
    %v5259 = vpop.permute.xlu0 %5258
    %5260 = vrot.lane.b32.xlu0 %v5057, 112
    %v5261 = vpop.permute.xlu0 %5260
    %5262 = vrot.lane.b32.xlu0 %v5058, 112
    %v5263 = vpop.permute.xlu0 %5262
    %5264 = vrot.lane.b32.xlu0 %v5059, 112
    %v5265 = vpop.permute.xlu0 %5264
    %5266 = vrot.lane.b32.xlu0 %v5060, 112
    %v5267 = vpop.permute.xlu0 %5266
    %5268 = vrot.lane.b32.xlu0 %v5061, 112
    %v5269 = vpop.permute.xlu0 %5268
    %5270 = vrot.lane.b32.xlu0 %v5062, 112
    %v5271 = vpop.permute.xlu0 %5270
    %5272 = vrot.lane.b32.xlu0 %v5063, 112
    %v5273 = vpop.permute.xlu0 %5272
    %5274 = vrot.lane.b32.xlu0 %v5064, 112
    %v5275 = vpop.permute.xlu0 %5274
    %5276 = vrot.lane.b32.xlu0 %v5065, 112
    %v5277 = vpop.permute.xlu0 %5276
    %5278 = vrot.lane.b32.xlu0 %v5066, 112
    %v5279 = vpop.permute.xlu0 %5278
    %5280 = vrot.lane.b32.xlu0 %v5067, 112
    %v5281 = vpop.permute.xlu0 %5280
    %5282 = vrot.lane.b32.xlu0 %v5068, 112
    %v5283 = vpop.permute.xlu0 %5282
    %5284 = vrot.lane.b32.xlu0 %v5069, 112
    %v5285 = vpop.permute.xlu0 %5284
    %5286 = vrot.lane.b32.xlu0 %v5070, 112
    %v5287 = vpop.permute.xlu0 %5286
    %5288 = vrot.lane.b32.xlu0 %v5071, 112
    %v5289 = vpop.permute.xlu0 %5288
    %5290 = vrot.lane.b32.xlu0 %v5072, 112
    %v5291 = vpop.permute.xlu0 %5290
    %5292 = vrot.lane.b32.xlu0 %v5073, 112
    %v5293 = vpop.permute.xlu0 %5292
    %5294 = vrot.lane.b32.xlu0 %v5074, 112
    %v5295 = vpop.permute.xlu0 %5294
    %5296 = vrot.lane.b32.xlu0 %v5075, 112
    %v5297 = vpop.permute.xlu0 %5296
    %5298 = vrot.lane.b32.xlu0 %v5076, 112
    %v5299 = vpop.permute.xlu0 %5298
    %5300 = vrot.lane.b32.xlu0 %v5077, 112
    %v5301 = vpop.permute.xlu0 %5300
    %5302 = vrot.lane.b32.xlu0 %v5078, 112
    %v5303 = vpop.permute.xlu0 %5302
    %5304 = vrot.lane.b32.xlu0 %v5079, 112
    %v5305 = vpop.permute.xlu0 %5304
    %5306 = vrot.lane.b32.xlu0 %v5080, 112
    %v5307 = vpop.permute.xlu0 %5306
    %5308 = vrot.lane.b32.xlu0 %v5081, 112
    %v5309 = vpop.permute.xlu0 %5308
    %5310 = vrot.lane.b32.xlu0 %v5082, 112
    %v5311 = vpop.permute.xlu0 %5310
    %5312 = vrot.lane.b32.xlu0 %v5083, 112
    %v5313 = vpop.permute.xlu0 %5312
    %5314 = vrot.lane.b32.xlu0 %v5084, 112
    %v5315 = vpop.permute.xlu0 %5314
    %5316 = vrot.lane.b32.xlu0 %v5085, 112
    %v5317 = vpop.permute.xlu0 %5316
    %5318 = vrot.lane.b32.xlu0 %v5086, 112
    %v5319 = vpop.permute.xlu0 %5318
    %5320 = vrot.lane.b32.xlu0 %v5087, 112
    %v5321 = vpop.permute.xlu0 %5320
    %5322 = vrot.lane.b32.xlu0 %v5088, 112
    %v5323 = vpop.permute.xlu0 %5322
    %5324 = vrot.lane.b32.xlu0 %v5089, 112
    %v5325 = vpop.permute.xlu0 %5324
    %5326 = vrot.lane.b32.xlu0 %v5090, 112
    %v5327 = vpop.permute.xlu0 %5326
    %5328 = vrot.lane.b32.xlu0 %v5091, 112
    %v5329 = vpop.permute.xlu0 %5328
    %5330 = vrot.lane.b32.xlu0 %v5092, 112
    %v5331 = vpop.permute.xlu0 %5330
    %5332 = vrot.lane.b32.xlu0 %v5093, 112
    %v5333 = vpop.permute.xlu0 %5332
    %5334 = vrot.lane.b32.xlu0 %v5094, 112
    %v5335 = vpop.permute.xlu0 %5334
    %5336 = vrot.lane.b32.xlu0 %v5095, 112
    %v5337 = vpop.permute.xlu0 %5336
    %5338 = vrot.lane.b32.xlu0 %v5096, 112
    %v5339 = vpop.permute.xlu0 %5338
    %5340 = vrot.lane.b32.xlu0 %v5097, 112
    %v5341 = vpop.permute.xlu0 %5340
    %5342 = vrot.lane.b32.xlu0 %v5098, 112
    %v5343 = vpop.permute.xlu0 %5342
    %5344 = vrot.lane.b32.xlu0 %v5099, 112
    %v5345 = vpop.permute.xlu0 %5344
    %5346 = vrot.lane.b32.xlu0 %v5100, 112
    %v5347 = vpop.permute.xlu0 %5346
    %5348 = vrot.lane.b32.xlu0 %v5101, 112
    %v5349 = vpop.permute.xlu0 %5348
    %5350 = vrot.lane.b32.xlu0 %v5102, 112
    %v5351 = vpop.permute.xlu0 %5350
    %5352 = vrot.lane.b32.xlu0 %v5103, 112
    %v5353 = vpop.permute.xlu0 %5352
    %5354 = vrot.lane.b32.xlu0 %v5104, 112
    %v5355 = vpop.permute.xlu0 %5354
    %5356 = vrot.lane.b32.xlu0 %v5105, 112
    %v5357 = vpop.permute.xlu0 %5356
    %5358 = vrot.lane.b32.xlu0 %v5106, 112
    %v5359 = vpop.permute.xlu0 %5358
    %5360 = vrot.lane.b32.xlu0 %v5107, 112
    %v5361 = vpop.permute.xlu0 %5360
    %5362 = vrot.lane.b32.xlu0 %v5108, 112
    %v5363 = vpop.permute.xlu0 %5362
    %5364 = vrot.lane.b32.xlu0 %v5109, 112
    %v5365 = vpop.permute.xlu0 %5364
    %5366 = vrot.lane.b32.xlu0 %v5110, 112
    %v5367 = vpop.permute.xlu0 %5366
    %5368 = vrot.lane.b32.xlu0 %v5111, 112
    %v5369 = vpop.permute.xlu0 %5368
    %5370 = vrot.lane.b32.xlu0 %v5112, 112
    %v5371 = vpop.permute.xlu0 %5370
    %5372 = vrot.lane.b32.xlu0 %v5113, 112
    %v5373 = vpop.permute.xlu0 %5372
    %5374 = vrot.lane.b32.xlu0 %v5114, 112
    %v5375 = vpop.permute.xlu0 %5374
    %5376 = vrot.lane.b32.xlu0 %v5115, 112
    %v5377 = vpop.permute.xlu0 %5376
    %5378 = vrot.lane.b32.xlu0 %v5116, 112
    %v5379 = vpop.permute.xlu0 %5378
    %5380 = vrot.lane.b32.xlu0 %v5117, 112
    %v5381 = vpop.permute.xlu0 %5380
    %5382 = vrot.lane.b32.xlu0 %v5118, 112
    %v5383 = vpop.permute.xlu0 %5382
    %5384 = vrot.lane.b32.xlu0 %v5119, 112
    %v5385 = vpop.permute.xlu0 %5384
    %5386 = vrot.lane.b32.xlu0 %v5120, 112
    %v5387 = vpop.permute.xlu0 %5386
    %5388 = vrot.lane.b32.xlu0 %v5121, 112
    %v5389 = vpop.permute.xlu0 %5388
    %5390 = vrot.lane.b32.xlu0 %v5122, 112
    %v5391 = vpop.permute.xlu0 %5390
    %5392 = vrot.lane.b32.xlu0 %v5123, 112
    %v5393 = vpop.permute.xlu0 %5392
    %5394 = vrot.lane.b32.xlu0 %v5124, 112
    %v5395 = vpop.permute.xlu0 %5394
    %5396 = vrot.lane.b32.xlu0 %v5125, 112
    %v5397 = vpop.permute.xlu0 %5396
    %5398 = vrot.lane.b32.xlu0 %v5126, 112
    %v5399 = vpop.permute.xlu0 %5398
    %5400 = vrot.lane.b32.xlu0 %v5127, 112
    %v5401 = vpop.permute.xlu0 %5400
    %5402 = vrot.lane.b32.xlu0 %v5128, 112
    %v5403 = vpop.permute.xlu0 %5402
    %5404 = vrot.lane.b32.xlu0 %v5129, 112
    %v5405 = vpop.permute.xlu0 %5404
    %5406 = vrot.lane.b32.xlu0 %v5130, 112
    %v5407 = vpop.permute.xlu0 %5406
    %5408 = vrot.lane.b32.xlu0 %v5131, 112
    %v5409 = vpop.permute.xlu0 %5408
    %5410 = vrot.lane.b32.xlu0 %v5132, 112
    %v5411 = vpop.permute.xlu0 %5410
    %5412 = vrot.lane.b32.xlu0 %v5133, 112
    %v5413 = vpop.permute.xlu0 %5412
    %5414 = vrot.lane.b32.xlu0 %v5134, 112
    %v5415 = vpop.permute.xlu0 %5414
    %5416 = vrot.lane.b32.xlu0 %v5135, 112
    %v5417 = vpop.permute.xlu0 %5416
    %5418 = vrot.lane.b32.xlu0 %v5136, 112
    %v5419 = vpop.permute.xlu0 %5418
    %5420 = vrot.lane.b32.xlu0 %v5137, 112
    %v5421 = vpop.permute.xlu0 %5420
    %5422 = vrot.lane.b32.xlu0 %v5138, 112
    %v5423 = vpop.permute.xlu0 %5422
    %5424 = vrot.lane.b32.xlu0 %v5139, 112
    %v5425 = vpop.permute.xlu0 %5424
    %5426 = vrot.lane.b32.xlu0 %v5140, 112
    %v5427 = vpop.permute.xlu0 %5426
    %5428 = vrot.lane.b32.xlu0 %v5141, 112
    %v5429 = vpop.permute.xlu0 %5428
    %vm5526 = vcmask 1048448
    %5527 = vst.msk [vmem:[#allocation3] sm:$0xff] %vm5526, %v5239
    %vm5528 = vcmask 1047424
    %5529 = vst.msk [vmem:[#allocation3 + $0x10] sm:$0x7f] %vm5528, %v5241
    %5530 = vst.msk [vmem:[#allocation3 + $0x20] sm:$0xff] %vm5526, %v5243
    %5531 = vst.msk [vmem:[#allocation3 + $0x30] sm:$0x7f] %vm5528, %v5245
    %5532 = vst.msk [vmem:[#allocation3 + $0x40] sm:$0xff] %vm5526, %v5247
    %5533 = vst.msk [vmem:[#allocation3 + $0x50] sm:$0x7f] %vm5528, %v5249
    %5534 = vst.msk [vmem:[#allocation3 + $0x60] sm:$0xff] %vm5526, %v5251
    %5535 = vst.msk [vmem:[#allocation3 + $0x70] sm:$0x7f] %vm5528, %v5253
    %5536 = vst.msk [vmem:[#allocation3 + $0x80] sm:$0xff] %vm5526, %v5255
    %5537 = vst.msk [vmem:[#allocation3 + $0x90] sm:$0x7f] %vm5528, %v5257
    %5538 = vst.msk [vmem:[#allocation3 + $0xa0] sm:$0xff] %vm5526, %v5259
    %5539 = vst.msk [vmem:[#allocation3 + $0xb0] sm:$0x7f] %vm5528, %v5261
    %5540 = vst.msk [vmem:[#allocation3 + $0x100] sm:$0xff] %vm5526, %v5263
    %5541 = vst.msk [vmem:[#allocation3 + $0x110] sm:$0x7f] %vm5528, %v5265
    %5542 = vst.msk [vmem:[#allocation3 + $0x120] sm:$0xff] %vm5526, %v5267
    %5543 = vst.msk [vmem:[#allocation3 + $0x130] sm:$0x7f] %vm5528, %v5269
    %5544 = vst.msk [vmem:[#allocation3 + $0x140] sm:$0xff] %vm5526, %v5271
    %5545 = vst.msk [vmem:[#allocation3 + $0x150] sm:$0x7f] %vm5528, %v5273
    %5546 = vst.msk [vmem:[#allocation3 + $0x160] sm:$0xff] %vm5526, %v5275
    %5547 = vst.msk [vmem:[#allocation3 + $0x170] sm:$0x7f] %vm5528, %v5277
    %5548 = vst.msk [vmem:[#allocation3 + $0x180] sm:$0xff] %vm5526, %v5279
    %5549 = vst.msk [vmem:[#allocation3 + $0x190] sm:$0x7f] %vm5528, %v5281
    %5550 = vst.msk [vmem:[#allocation3 + $0x1a0] sm:$0xff] %vm5526, %v5283
    %5551 = vst.msk [vmem:[#allocation3 + $0x1b0] sm:$0x7f] %vm5528, %v5285
    %5552 = vst.msk [vmem:[#allocation3 + $0x200] sm:$0xff] %vm5526, %v5287
    %5553 = vst.msk [vmem:[#allocation3 + $0x210] sm:$0x7f] %vm5528, %v5289
    %5554 = vst.msk [vmem:[#allocation3 + $0x220] sm:$0xff] %vm5526, %v5291
    %5555 = vst.msk [vmem:[#allocation3 + $0x230] sm:$0x7f] %vm5528, %v5293
    %5556 = vst.msk [vmem:[#allocation3 + $0x240] sm:$0xff] %vm5526, %v5295
    %5557 = vst.msk [vmem:[#allocation3 + $0x250] sm:$0x7f] %vm5528, %v5297
    %5558 = vst.msk [vmem:[#allocation3 + $0x260] sm:$0xff] %vm5526, %v5299
    %5559 = vst.msk [vmem:[#allocation3 + $0x270] sm:$0x7f] %vm5528, %v5301
    %5560 = vst.msk [vmem:[#allocation3 + $0x280] sm:$0xff] %vm5526, %v5303
    %5561 = vst.msk [vmem:[#allocation3 + $0x290] sm:$0x7f] %vm5528, %v5305
    %5562 = vst.msk [vmem:[#allocation3 + $0x2a0] sm:$0xff] %vm5526, %v5307
    %5563 = vst.msk [vmem:[#allocation3 + $0x2b0] sm:$0x7f] %vm5528, %v5309
    %5564 = vst.msk [vmem:[#allocation3 + $0x300] sm:$0xff] %vm5526, %v5311
    %5565 = vst.msk [vmem:[#allocation3 + $0x310] sm:$0x7f] %vm5528, %v5313
    %5566 = vst.msk [vmem:[#allocation3 + $0x320] sm:$0xff] %vm5526, %v5315
    %5567 = vst.msk [vmem:[#allocation3 + $0x330] sm:$0x7f] %vm5528, %v5317
    %5568 = vst.msk [vmem:[#allocation3 + $0x340] sm:$0xff] %vm5526, %v5319
    %5569 = vst.msk [vmem:[#allocation3 + $0x350] sm:$0x7f] %vm5528, %v5321
    %5570 = vst.msk [vmem:[#allocation3 + $0x360] sm:$0xff] %vm5526, %v5323
    %5571 = vst.msk [vmem:[#allocation3 + $0x370] sm:$0x7f] %vm5528, %v5325
    %5572 = vst.msk [vmem:[#allocation3 + $0x380] sm:$0xff] %vm5526, %v5327
    %5573 = vst.msk [vmem:[#allocation3 + $0x390] sm:$0x7f] %vm5528, %v5329
    %5574 = vst.msk [vmem:[#allocation3 + $0x3a0] sm:$0xff] %vm5526, %v5331
    %5575 = vst.msk [vmem:[#allocation3 + $0x3b0] sm:$0x7f] %vm5528, %v5333
    %5576 = vst.msk [vmem:[#allocation3 + $0x400] sm:$0xff] %vm5526, %v5335
    %5577 = vst.msk [vmem:[#allocation3 + $0x410] sm:$0x7f] %vm5528, %v5337
    %5578 = vst.msk [vmem:[#allocation3 + $0x420] sm:$0xff] %vm5526, %v5339
    %5579 = vst.msk [vmem:[#allocation3 + $0x430] sm:$0x7f] %vm5528, %v5341
    %5580 = vst.msk [vmem:[#allocation3 + $0x440] sm:$0xff] %vm5526, %v5343
    %5581 = vst.msk [vmem:[#allocation3 + $0x450] sm:$0x7f] %vm5528, %v5345
    %5582 = vst.msk [vmem:[#allocation3 + $0x460] sm:$0xff] %vm5526, %v5347
    %5583 = vst.msk [vmem:[#allocation3 + $0x470] sm:$0x7f] %vm5528, %v5349
    %5584 = vst.msk [vmem:[#allocation3 + $0x480] sm:$0xff] %vm5526, %v5351
    %5585 = vst.msk [vmem:[#allocation3 + $0x490] sm:$0x7f] %vm5528, %v5353
    %5586 = vst.msk [vmem:[#allocation3 + $0x4a0] sm:$0xff] %vm5526, %v5355
    %5587 = vst.msk [vmem:[#allocation3 + $0x4b0] sm:$0x7f] %vm5528, %v5357
    %5588 = vst.msk [vmem:[#allocation3 + $0x500] sm:$0xff] %vm5526, %v5359
    %5589 = vst.msk [vmem:[#allocation3 + $0x510] sm:$0x7f] %vm5528, %v5361
    %5590 = vst.msk [vmem:[#allocation3 + $0x520] sm:$0xff] %vm5526, %v5363
    %5591 = vst.msk [vmem:[#allocation3 + $0x530] sm:$0x7f] %vm5528, %v5365
    %5592 = vst.msk [vmem:[#allocation3 + $0x540] sm:$0xff] %vm5526, %v5367
    %5593 = vst.msk [vmem:[#allocation3 + $0x550] sm:$0x7f] %vm5528, %v5369
    %5594 = vst.msk [vmem:[#allocation3 + $0x560] sm:$0xff] %vm5526, %v5371
    %5595 = vst.msk [vmem:[#allocation3 + $0x570] sm:$0x7f] %vm5528, %v5373
    %5596 = vst.msk [vmem:[#allocation3 + $0x580] sm:$0xff] %vm5526, %v5375
    %5597 = vst.msk [vmem:[#allocation3 + $0x590] sm:$0x7f] %vm5528, %v5377
    %5598 = vst.msk [vmem:[#allocation3 + $0x5a0] sm:$0xff] %vm5526, %v5379
    %5599 = vst.msk [vmem:[#allocation3 + $0x5b0] sm:$0x7f] %vm5528, %v5381
    %5600 = vst.msk [vmem:[#allocation3 + $0x600] sm:$0xff] %vm5526, %v5383
    %5601 = vst.msk [vmem:[#allocation3 + $0x610] sm:$0x7f] %vm5528, %v5385
    %5602 = vst.msk [vmem:[#allocation3 + $0x620] sm:$0xff] %vm5526, %v5387
    %5603 = vst.msk [vmem:[#allocation3 + $0x630] sm:$0x7f] %vm5528, %v5389
    %5604 = vst.msk [vmem:[#allocation3 + $0x640] sm:$0xff] %vm5526, %v5391
    %5605 = vst.msk [vmem:[#allocation3 + $0x650] sm:$0x7f] %vm5528, %v5393
    %5606 = vst.msk [vmem:[#allocation3 + $0x660] sm:$0xff] %vm5526, %v5395
    %5607 = vst.msk [vmem:[#allocation3 + $0x670] sm:$0x7f] %vm5528, %v5397
    %5608 = vst.msk [vmem:[#allocation3 + $0x680] sm:$0xff] %vm5526, %v5399
    %5609 = vst.msk [vmem:[#allocation3 + $0x690] sm:$0x7f] %vm5528, %v5401
    %5610 = vst.msk [vmem:[#allocation3 + $0x6a0] sm:$0xff] %vm5526, %v5403
    %5611 = vst.msk [vmem:[#allocation3 + $0x6b0] sm:$0x7f] %vm5528, %v5405
    %5612 = vst.msk [vmem:[#allocation3 + $0x700] sm:$0xff] %vm5526, %v5407
    %5613 = vst.msk [vmem:[#allocation3 + $0x710] sm:$0x7f] %vm5528, %v5409
    %5614 = vst.msk [vmem:[#allocation3 + $0x720] sm:$0xff] %vm5526, %v5411
    %5615 = vst.msk [vmem:[#allocation3 + $0x730] sm:$0x7f] %vm5528, %v5413
    %5616 = vst.msk [vmem:[#allocation3 + $0x740] sm:$0xff] %vm5526, %v5415
    %5617 = vst.msk [vmem:[#allocation3 + $0x750] sm:$0x7f] %vm5528, %v5417
    %5618 = vst.msk [vmem:[#allocation3 + $0x760] sm:$0xff] %vm5526, %v5419
    %5619 = vst.msk [vmem:[#allocation3 + $0x770] sm:$0x7f] %vm5528, %v5421
    %5620 = vst.msk [vmem:[#allocation3 + $0x780] sm:$0xff] %vm5526, %v5423
    %5621 = vst.msk [vmem:[#allocation3 + $0x790] sm:$0x7f] %vm5528, %v5425
    %5622 = vst.msk [vmem:[#allocation3 + $0x7a0] sm:$0xff] %vm5526, %v5427
    %5623 = vst.msk [vmem:[#allocation3 + $0x7b0] sm:$0x7f] %vm5528, %v5429
    %v5624 = vld [vmem:[%s4468 + $0x2] sm:$0xff]
    %v5625 = vld [vmem:[%s4468 + $0xa] sm:$0x3f]
    %v5626 = vld [vmem:[%s4468 + $0x12] sm:$0xff]
    %v5627 = vld [vmem:[%s4468 + $0x1a] sm:$0x3f]
    %v5628 = vld [vmem:[%s4468 + $0x22] sm:$0xff]
    %v5629 = vld [vmem:[%s4468 + $0x2a] sm:$0x3f]
    %v5630 = vld [vmem:[%s4468 + $0x32] sm:$0xff]
    %v5631 = vld [vmem:[%s4468 + $0x3a] sm:$0x3f]
    %v5632 = vld [vmem:[%s4468 + $0x42] sm:$0xff]
    %v5633 = vld [vmem:[%s4468 + $0x4a] sm:$0x3f]
    %v5634 = vld [vmem:[%s4468 + $0x52] sm:$0xff]
    %v5635 = vld [vmem:[%s4468 + $0x5a] sm:$0x3f]
    %v5636 = vld [vmem:[%s4468 + $0x82] sm:$0xff]
    %v5637 = vld [vmem:[%s4468 + $0x8a] sm:$0x3f]
    %v5638 = vld [vmem:[%s4468 + $0x92] sm:$0xff]
    %v5639 = vld [vmem:[%s4468 + $0x9a] sm:$0x3f]
    %v5640 = vld [vmem:[%s4468 + $0xa2] sm:$0xff]
    %v5641 = vld [vmem:[%s4468 + $0xaa] sm:$0x3f]
    %v5642 = vld [vmem:[%s4468 + $0xb2] sm:$0xff]
    %v5643 = vld [vmem:[%s4468 + $0xba] sm:$0x3f]
    %v5644 = vld [vmem:[%s4468 + $0xc2] sm:$0xff]
    %v5645 = vld [vmem:[%s4468 + $0xca] sm:$0x3f]
    %v5646 = vld [vmem:[%s4468 + $0xd2] sm:$0xff]
    %v5647 = vld [vmem:[%s4468 + $0xda] sm:$0x3f]
    %v5648 = vld [vmem:[%s4468 + $0x102] sm:$0xff]
    %v5649 = vld [vmem:[%s4468 + $0x10a] sm:$0x3f]
    %v5650 = vld [vmem:[%s4468 + $0x112] sm:$0xff]
    %v5651 = vld [vmem:[%s4468 + $0x11a] sm:$0x3f]
    %v5652 = vld [vmem:[%s4468 + $0x122] sm:$0xff]
    %v5653 = vld [vmem:[%s4468 + $0x12a] sm:$0x3f]
    %v5654 = vld [vmem:[%s4468 + $0x132] sm:$0xff]
    %v5655 = vld [vmem:[%s4468 + $0x13a] sm:$0x3f]
    %v5656 = vld [vmem:[%s4468 + $0x142] sm:$0xff]
    %v5657 = vld [vmem:[%s4468 + $0x14a] sm:$0x3f]
    %v5658 = vld [vmem:[%s4468 + $0x152] sm:$0xff]
    %v5659 = vld [vmem:[%s4468 + $0x15a] sm:$0x3f]
    %v5660 = vld [vmem:[%s4468 + $0x182] sm:$0xff]
    %v5661 = vld [vmem:[%s4468 + $0x18a] sm:$0x3f]
    %v5662 = vld [vmem:[%s4468 + $0x192] sm:$0xff]
    %v5663 = vld [vmem:[%s4468 + $0x19a] sm:$0x3f]
    %v5664 = vld [vmem:[%s4468 + $0x1a2] sm:$0xff]
    %v5665 = vld [vmem:[%s4468 + $0x1aa] sm:$0x3f]
    %v5666 = vld [vmem:[%s4468 + $0x1b2] sm:$0xff]
    %v5667 = vld [vmem:[%s4468 + $0x1ba] sm:$0x3f]
    %v5668 = vld [vmem:[%s4468 + $0x1c2] sm:$0xff]
    %v5669 = vld [vmem:[%s4468 + $0x1ca] sm:$0x3f]
    %v5670 = vld [vmem:[%s4468 + $0x1d2] sm:$0xff]
    %v5671 = vld [vmem:[%s4468 + $0x1da] sm:$0x3f]
    %v5672 = vld [vmem:[%s4468 + $0x202] sm:$0xff]
    %v5673 = vld [vmem:[%s4468 + $0x20a] sm:$0x3f]
    %v5674 = vld [vmem:[%s4468 + $0x212] sm:$0xff]
    %v5675 = vld [vmem:[%s4468 + $0x21a] sm:$0x3f]
    %v5676 = vld [vmem:[%s4468 + $0x222] sm:$0xff]
    %v5677 = vld [vmem:[%s4468 + $0x22a] sm:$0x3f]
    %v5678 = vld [vmem:[%s4468 + $0x232] sm:$0xff]
    %v5679 = vld [vmem:[%s4468 + $0x23a] sm:$0x3f]
    %v5680 = vld [vmem:[%s4468 + $0x242] sm:$0xff]
    %v5681 = vld [vmem:[%s4468 + $0x24a] sm:$0x3f]
    %v5682 = vld [vmem:[%s4468 + $0x252] sm:$0xff]
    %v5683 = vld [vmem:[%s4468 + $0x25a] sm:$0x3f]
    %v5684 = vld [vmem:[%s4468 + $0x282] sm:$0xff]
    %v5685 = vld [vmem:[%s4468 + $0x28a] sm:$0x3f]
    %v5686 = vld [vmem:[%s4468 + $0x292] sm:$0xff]
    %v5687 = vld [vmem:[%s4468 + $0x29a] sm:$0x3f]
    %v5688 = vld [vmem:[%s4468 + $0x2a2] sm:$0xff]
    %v5689 = vld [vmem:[%s4468 + $0x2aa] sm:$0x3f]
    %v5690 = vld [vmem:[%s4468 + $0x2b2] sm:$0xff]
    %v5691 = vld [vmem:[%s4468 + $0x2ba] sm:$0x3f]
    %v5692 = vld [vmem:[%s4468 + $0x2c2] sm:$0xff]
    %v5693 = vld [vmem:[%s4468 + $0x2ca] sm:$0x3f]
    %v5694 = vld [vmem:[%s4468 + $0x2d2] sm:$0xff]
    %v5695 = vld [vmem:[%s4468 + $0x2da] sm:$0x3f]
    %v5696 = vld [vmem:[%s4468 + $0x302] sm:$0xff]
    %v5697 = vld [vmem:[%s4468 + $0x30a] sm:$0x3f]
    %v5698 = vld [vmem:[%s4468 + $0x312] sm:$0xff]
    %v5699 = vld [vmem:[%s4468 + $0x31a] sm:$0x3f]
    %v5700 = vld [vmem:[%s4468 + $0x322] sm:$0xff]
    %v5701 = vld [vmem:[%s4468 + $0x32a] sm:$0x3f]
    %v5702 = vld [vmem:[%s4468 + $0x332] sm:$0xff]
    %v5703 = vld [vmem:[%s4468 + $0x33a] sm:$0x3f]
    %v5704 = vld [vmem:[%s4468 + $0x342] sm:$0xff]
    %v5705 = vld [vmem:[%s4468 + $0x34a] sm:$0x3f]
    %v5706 = vld [vmem:[%s4468 + $0x352] sm:$0xff]
    %v5707 = vld [vmem:[%s4468 + $0x35a] sm:$0x3f]
    %v5708 = vld [vmem:[%s4468 + $0x382] sm:$0xff]
    %v5709 = vld [vmem:[%s4468 + $0x38a] sm:$0x3f]
    %v5710 = vld [vmem:[%s4468 + $0x392] sm:$0xff]
    %v5711 = vld [vmem:[%s4468 + $0x39a] sm:$0x3f]
    %v5712 = vld [vmem:[%s4468 + $0x3a2] sm:$0xff]
    %v5713 = vld [vmem:[%s4468 + $0x3aa] sm:$0x3f]
    %v5714 = vld [vmem:[%s4468 + $0x3b2] sm:$0xff]
    %v5715 = vld [vmem:[%s4468 + $0x3ba] sm:$0x3f]
    %v5716 = vld [vmem:[%s4468 + $0x3c2] sm:$0xff]
    %v5717 = vld [vmem:[%s4468 + $0x3ca] sm:$0x3f]
    %v5718 = vld [vmem:[%s4468 + $0x3d2] sm:$0xff]
    %v5719 = vld [vmem:[%s4468 + $0x3da] sm:$0x3f]
    %5720 = vst.msk [vmem:[#allocation3 + $0x8] sm:$0xff] %vm359, %v5624
    %vm5721 = vcmask 128000
    %5722 = vst.msk [vmem:[#allocation3 + $0x18] sm:$0x3f] %vm5721, %v5625
    %5723 = vst.msk [vmem:[#allocation3 + $0x28] sm:$0xff] %vm359, %v5626
    %5724 = vst.msk [vmem:[#allocation3 + $0x38] sm:$0x3f] %vm5721, %v5627
    %5725 = vst.msk [vmem:[#allocation3 + $0x48] sm:$0xff] %vm359, %v5628
    %5726 = vst.msk [vmem:[#allocation3 + $0x58] sm:$0x3f] %vm5721, %v5629
    %5727 = vst.msk [vmem:[#allocation3 + $0x68] sm:$0xff] %vm359, %v5630
    %5728 = vst.msk [vmem:[#allocation3 + $0x78] sm:$0x3f] %vm5721, %v5631
    %5729 = vst.msk [vmem:[#allocation3 + $0x88] sm:$0xff] %vm359, %v5632
    %5730 = vst.msk [vmem:[#allocation3 + $0x98] sm:$0x3f] %vm5721, %v5633
    %5731 = vst.msk [vmem:[#allocation3 + $0xa8] sm:$0xff] %vm359, %v5634
    %5732 = vst.msk [vmem:[#allocation3 + $0xb8] sm:$0x3f] %vm5721, %v5635
    %5733 = vst.msk [vmem:[#allocation3 + $0x108] sm:$0xff] %vm359, %v5636
    %5734 = vst.msk [vmem:[#allocation3 + $0x118] sm:$0x3f] %vm5721, %v5637
    %5735 = vst.msk [vmem:[#allocation3 + $0x128] sm:$0xff] %vm359, %v5638
    %5736 = vst.msk [vmem:[#allocation3 + $0x138] sm:$0x3f] %vm5721, %v5639
    %5737 = vst.msk [vmem:[#allocation3 + $0x148] sm:$0xff] %vm359, %v5640
    %5738 = vst.msk [vmem:[#allocation3 + $0x158] sm:$0x3f] %vm5721, %v5641
    %5739 = vst.msk [vmem:[#allocation3 + $0x168] sm:$0xff] %vm359, %v5642
    %5740 = vst.msk [vmem:[#allocation3 + $0x178] sm:$0x3f] %vm5721, %v5643
    %5741 = vst.msk [vmem:[#allocation3 + $0x188] sm:$0xff] %vm359, %v5644
    %5742 = vst.msk [vmem:[#allocation3 + $0x198] sm:$0x3f] %vm5721, %v5645
    %5743 = vst.msk [vmem:[#allocation3 + $0x1a8] sm:$0xff] %vm359, %v5646
    %5744 = vst.msk [vmem:[#allocation3 + $0x1b8] sm:$0x3f] %vm5721, %v5647
    %5745 = vst.msk [vmem:[#allocation3 + $0x208] sm:$0xff] %vm359, %v5648
    %5746 = vst.msk [vmem:[#allocation3 + $0x218] sm:$0x3f] %vm5721, %v5649
    %5747 = vst.msk [vmem:[#allocation3 + $0x228] sm:$0xff] %vm359, %v5650
    %5748 = vst.msk [vmem:[#allocation3 + $0x238] sm:$0x3f] %vm5721, %v5651
    %5749 = vst.msk [vmem:[#allocation3 + $0x248] sm:$0xff] %vm359, %v5652
    %5750 = vst.msk [vmem:[#allocation3 + $0x258] sm:$0x3f] %vm5721, %v5653
    %5751 = vst.msk [vmem:[#allocation3 + $0x268] sm:$0xff] %vm359, %v5654
    %5752 = vst.msk [vmem:[#allocation3 + $0x278] sm:$0x3f] %vm5721, %v5655
    %5753 = vst.msk [vmem:[#allocation3 + $0x288] sm:$0xff] %vm359, %v5656
    %5754 = vst.msk [vmem:[#allocation3 + $0x298] sm:$0x3f] %vm5721, %v5657
    %5755 = vst.msk [vmem:[#allocation3 + $0x2a8] sm:$0xff] %vm359, %v5658
    %5756 = vst.msk [vmem:[#allocation3 + $0x2b8] sm:$0x3f] %vm5721, %v5659
    %5757 = vst.msk [vmem:[#allocation3 + $0x308] sm:$0xff] %vm359, %v5660
    %5758 = vst.msk [vmem:[#allocation3 + $0x318] sm:$0x3f] %vm5721, %v5661
    %5759 = vst.msk [vmem:[#allocation3 + $0x328] sm:$0xff] %vm359, %v5662
    %5760 = vst.msk [vmem:[#allocation3 + $0x338] sm:$0x3f] %vm5721, %v5663
    %5761 = vst.msk [vmem:[#allocation3 + $0x348] sm:$0xff] %vm359, %v5664
    %5762 = vst.msk [vmem:[#allocation3 + $0x358] sm:$0x3f] %vm5721, %v5665
    %5763 = vst.msk [vmem:[#allocation3 + $0x368] sm:$0xff] %vm359, %v5666
    %5764 = vst.msk [vmem:[#allocation3 + $0x378] sm:$0x3f] %vm5721, %v5667
    %5765 = vst.msk [vmem:[#allocation3 + $0x388] sm:$0xff] %vm359, %v5668
    %5766 = vst.msk [vmem:[#allocation3 + $0x398] sm:$0x3f] %vm5721, %v5669
    %5767 = vst.msk [vmem:[#allocation3 + $0x3a8] sm:$0xff] %vm359, %v5670
    %5768 = vst.msk [vmem:[#allocation3 + $0x3b8] sm:$0x3f] %vm5721, %v5671
    %5769 = vst.msk [vmem:[#allocation3 + $0x408] sm:$0xff] %vm359, %v5672
    %5770 = vst.msk [vmem:[#allocation3 + $0x418] sm:$0x3f] %vm5721, %v5673
    %5771 = vst.msk [vmem:[#allocation3 + $0x428] sm:$0xff] %vm359, %v5674
    %5772 = vst.msk [vmem:[#allocation3 + $0x438] sm:$0x3f] %vm5721, %v5675
    %5773 = vst.msk [vmem:[#allocation3 + $0x448] sm:$0xff] %vm359, %v5676
    %5774 = vst.msk [vmem:[#allocation3 + $0x458] sm:$0x3f] %vm5721, %v5677
    %5775 = vst.msk [vmem:[#allocation3 + $0x468] sm:$0xff] %vm359, %v5678
    %5776 = vst.msk [vmem:[#allocation3 + $0x478] sm:$0x3f] %vm5721, %v5679
    %5777 = vst.msk [vmem:[#allocation3 + $0x488] sm:$0xff] %vm359, %v5680
    %5778 = vst.msk [vmem:[#allocation3 + $0x498] sm:$0x3f] %vm5721, %v5681
    %5779 = vst.msk [vmem:[#allocation3 + $0x4a8] sm:$0xff] %vm359, %v5682
    %5780 = vst.msk [vmem:[#allocation3 + $0x4b8] sm:$0x3f] %vm5721, %v5683
    %5781 = vst.msk [vmem:[#allocation3 + $0x508] sm:$0xff] %vm359, %v5684
    %5782 = vst.msk [vmem:[#allocation3 + $0x518] sm:$0x3f] %vm5721, %v5685
    %5783 = vst.msk [vmem:[#allocation3 + $0x528] sm:$0xff] %vm359, %v5686
    %5784 = vst.msk [vmem:[#allocation3 + $0x538] sm:$0x3f] %vm5721, %v5687
    %5785 = vst.msk [vmem:[#allocation3 + $0x548] sm:$0xff] %vm359, %v5688
    %5786 = vst.msk [vmem:[#allocation3 + $0x558] sm:$0x3f] %vm5721, %v5689
    %5787 = vst.msk [vmem:[#allocation3 + $0x568] sm:$0xff] %vm359, %v5690
    %5788 = vst.msk [vmem:[#allocation3 + $0x578] sm:$0x3f] %vm5721, %v5691
    %5789 = vst.msk [vmem:[#allocation3 + $0x588] sm:$0xff] %vm359, %v5692
    %5790 = vst.msk [vmem:[#allocation3 + $0x598] sm:$0x3f] %vm5721, %v5693
    %5791 = vst.msk [vmem:[#allocation3 + $0x5a8] sm:$0xff] %vm359, %v5694
    %5792 = vst.msk [vmem:[#allocation3 + $0x5b8] sm:$0x3f] %vm5721, %v5695
    %5793 = vst.msk [vmem:[#allocation3 + $0x608] sm:$0xff] %vm359, %v5696
    %5794 = vst.msk [vmem:[#allocation3 + $0x618] sm:$0x3f] %vm5721, %v5697
    %5795 = vst.msk [vmem:[#allocation3 + $0x628] sm:$0xff] %vm359, %v5698
    %5796 = vst.msk [vmem:[#allocation3 + $0x638] sm:$0x3f] %vm5721, %v5699
    %5797 = vst.msk [vmem:[#allocation3 + $0x648] sm:$0xff] %vm359, %v5700
    %5798 = vst.msk [vmem:[#allocation3 + $0x658] sm:$0x3f] %vm5721, %v5701
    %5799 = vst.msk [vmem:[#allocation3 + $0x668] sm:$0xff] %vm359, %v5702
    %5800 = vst.msk [vmem:[#allocation3 + $0x678] sm:$0x3f] %vm5721, %v5703
    %5801 = vst.msk [vmem:[#allocation3 + $0x688] sm:$0xff] %vm359, %v5704
    %5802 = vst.msk [vmem:[#allocation3 + $0x698] sm:$0x3f] %vm5721, %v5705
    %5803 = vst.msk [vmem:[#allocation3 + $0x6a8] sm:$0xff] %vm359, %v5706
    %5804 = vst.msk [vmem:[#allocation3 + $0x6b8] sm:$0x3f] %vm5721, %v5707
    %5805 = vst.msk [vmem:[#allocation3 + $0x708] sm:$0xff] %vm359, %v5708
    %5806 = vst.msk [vmem:[#allocation3 + $0x718] sm:$0x3f] %vm5721, %v5709
    %5807 = vst.msk [vmem:[#allocation3 + $0x728] sm:$0xff] %vm359, %v5710
    %5808 = vst.msk [vmem:[#allocation3 + $0x738] sm:$0x3f] %vm5721, %v5711
    %5809 = vst.msk [vmem:[#allocation3 + $0x748] sm:$0xff] %vm359, %v5712
    %5810 = vst.msk [vmem:[#allocation3 + $0x758] sm:$0x3f] %vm5721, %v5713
    %5811 = vst.msk [vmem:[#allocation3 + $0x768] sm:$0xff] %vm359, %v5714
    %5812 = vst.msk [vmem:[#allocation3 + $0x778] sm:$0x3f] %vm5721, %v5715
    %5813 = vst.msk [vmem:[#allocation3 + $0x788] sm:$0xff] %vm359, %v5716
    %5814 = vst.msk [vmem:[#allocation3 + $0x798] sm:$0x3f] %vm5721, %v5717
    %5815 = vst.msk [vmem:[#allocation3 + $0x7a8] sm:$0xff] %vm359, %v5718
    %5816 = vst.msk [vmem:[#allocation3 + $0x7b8] sm:$0x3f] %vm5721, %v5719
    %v5817 = vld [vmem:[#allocation3] sm:$0xff]
    %v5818 = vld [vmem:[#allocation3 + $0x8] sm:$0xff]
    %v5819 = vld [vmem:[#allocation3 + $0x10] sm:$0xff]
    %v5820 = vld [vmem:[#allocation3 + $0x18] sm:$0xff]
    %v5821 = vld [vmem:[#allocation3 + $0x20] sm:$0xff]
    %v5822 = vld [vmem:[#allocation3 + $0x28] sm:$0xff]
    %v5823 = vld [vmem:[#allocation3 + $0x30] sm:$0xff]
    %v5824 = vld [vmem:[#allocation3 + $0x38] sm:$0xff]
    %v5825 = vld [vmem:[#allocation3 + $0x40] sm:$0xff]
    %v5826 = vld [vmem:[#allocation3 + $0x48] sm:$0xff]
    %v5827 = vld [vmem:[#allocation3 + $0x50] sm:$0xff]
    %v5828 = vld [vmem:[#allocation3 + $0x58] sm:$0xff]
    %v5829 = vld [vmem:[#allocation3 + $0x60] sm:$0xff]
    %v5830 = vld [vmem:[#allocation3 + $0x68] sm:$0xff]
    %v5831 = vld [vmem:[#allocation3 + $0x70] sm:$0xff]
    %v5832 = vld [vmem:[#allocation3 + $0x78] sm:$0xff]
    %v5833 = vld [vmem:[#allocation3 + $0x80] sm:$0xff]
    %v5834 = vld [vmem:[#allocation3 + $0x88] sm:$0xff]
    %v5835 = vld [vmem:[#allocation3 + $0x90] sm:$0xff]
    %v5836 = vld [vmem:[#allocation3 + $0x98] sm:$0xff]
    %v5837 = vld [vmem:[#allocation3 + $0xa0] sm:$0xff]
    %v5838 = vld [vmem:[#allocation3 + $0xa8] sm:$0xff]
    %v5839 = vld [vmem:[#allocation3 + $0xb0] sm:$0xff]
    %v5840 = vld [vmem:[#allocation3 + $0xb8] sm:$0xff]
    %v5841 = vld [vmem:[#allocation3 + $0xc0] sm:$0xff]
    %v5842 = vld [vmem:[#allocation3 + $0xc8] sm:$0xff]
    %v5843 = vld [vmem:[#allocation3 + $0xd0] sm:$0xff]
    %v5844 = vld [vmem:[#allocation3 + $0xd8] sm:$0xff]
    %v5845 = vld [vmem:[#allocation3 + $0xe0] sm:$0xff]
    %v5846 = vld [vmem:[#allocation3 + $0xe8] sm:$0xff]
    %v5847 = vld [vmem:[#allocation3 + $0xf0] sm:$0xff]
    %v5848 = vld [vmem:[#allocation3 + $0xf8] sm:$0xff]
    %v5849 = vld [vmem:[#allocation3 + $0x100] sm:$0xff]
    %v5850 = vld [vmem:[#allocation3 + $0x108] sm:$0xff]
    %v5851 = vld [vmem:[#allocation3 + $0x110] sm:$0xff]
    %v5852 = vld [vmem:[#allocation3 + $0x118] sm:$0xff]
    %v5853 = vld [vmem:[#allocation3 + $0x120] sm:$0xff]
    %v5854 = vld [vmem:[#allocation3 + $0x128] sm:$0xff]
    %v5855 = vld [vmem:[#allocation3 + $0x130] sm:$0xff]
    %v5856 = vld [vmem:[#allocation3 + $0x138] sm:$0xff]
    %v5857 = vld [vmem:[#allocation3 + $0x140] sm:$0xff]
    %v5858 = vld [vmem:[#allocation3 + $0x148] sm:$0xff]
    %v5859 = vld [vmem:[#allocation3 + $0x150] sm:$0xff]
    %v5860 = vld [vmem:[#allocation3 + $0x158] sm:$0xff]
    %v5861 = vld [vmem:[#allocation3 + $0x160] sm:$0xff]
    %v5862 = vld [vmem:[#allocation3 + $0x168] sm:$0xff]
    %v5863 = vld [vmem:[#allocation3 + $0x170] sm:$0xff]
    %v5864 = vld [vmem:[#allocation3 + $0x178] sm:$0xff]
    %v5865 = vld [vmem:[#allocation3 + $0x180] sm:$0xff]
    %v5866 = vld [vmem:[#allocation3 + $0x188] sm:$0xff]
    %v5867 = vld [vmem:[#allocation3 + $0x190] sm:$0xff]
    %v5868 = vld [vmem:[#allocation3 + $0x198] sm:$0xff]
    %v5869 = vld [vmem:[#allocation3 + $0x1a0] sm:$0xff]
    %v5870 = vld [vmem:[#allocation3 + $0x1a8] sm:$0xff]
    %v5871 = vld [vmem:[#allocation3 + $0x1b0] sm:$0xff]
    %v5872 = vld [vmem:[#allocation3 + $0x1b8] sm:$0xff]
    %v5873 = vld [vmem:[#allocation3 + $0x1c0] sm:$0xff]
    %v5874 = vld [vmem:[#allocation3 + $0x1c8] sm:$0xff]
    %v5875 = vld [vmem:[#allocation3 + $0x1d0] sm:$0xff]
    %v5876 = vld [vmem:[#allocation3 + $0x1d8] sm:$0xff]
    %v5877 = vld [vmem:[#allocation3 + $0x1e0] sm:$0xff]
    %v5878 = vld [vmem:[#allocation3 + $0x1e8] sm:$0xff]
    %v5879 = vld [vmem:[#allocation3 + $0x1f0] sm:$0xff]
    %v5880 = vld [vmem:[#allocation3 + $0x1f8] sm:$0xff]
    %v5881 = vld [vmem:[#allocation3 + $0x200] sm:$0xff]
    %v5882 = vld [vmem:[#allocation3 + $0x208] sm:$0xff]
    %v5883 = vld [vmem:[#allocation3 + $0x210] sm:$0xff]
    %v5884 = vld [vmem:[#allocation3 + $0x218] sm:$0xff]
    %v5885 = vld [vmem:[#allocation3 + $0x220] sm:$0xff]
    %v5886 = vld [vmem:[#allocation3 + $0x228] sm:$0xff]
    %v5887 = vld [vmem:[#allocation3 + $0x230] sm:$0xff]
    %v5888 = vld [vmem:[#allocation3 + $0x238] sm:$0xff]
    %v5889 = vld [vmem:[#allocation3 + $0x240] sm:$0xff]
    %v5890 = vld [vmem:[#allocation3 + $0x248] sm:$0xff]
    %v5891 = vld [vmem:[#allocation3 + $0x250] sm:$0xff]
    %v5892 = vld [vmem:[#allocation3 + $0x258] sm:$0xff]
    %v5893 = vld [vmem:[#allocation3 + $0x260] sm:$0xff]
    %v5894 = vld [vmem:[#allocation3 + $0x268] sm:$0xff]
    %v5895 = vld [vmem:[#allocation3 + $0x270] sm:$0xff]
    %v5896 = vld [vmem:[#allocation3 + $0x278] sm:$0xff]
    %v5897 = vld [vmem:[#allocation3 + $0x280] sm:$0xff]
    %v5898 = vld [vmem:[#allocation3 + $0x288] sm:$0xff]
    %v5899 = vld [vmem:[#allocation3 + $0x290] sm:$0xff]
    %v5900 = vld [vmem:[#allocation3 + $0x298] sm:$0xff]
    %v5901 = vld [vmem:[#allocation3 + $0x2a0] sm:$0xff]
    %v5902 = vld [vmem:[#allocation3 + $0x2a8] sm:$0xff]
    %v5903 = vld [vmem:[#allocation3 + $0x2b0] sm:$0xff]
    %v5904 = vld [vmem:[#allocation3 + $0x2b8] sm:$0xff]
    %v5905 = vld [vmem:[#allocation3 + $0x2c0] sm:$0xff]
    %v5906 = vld [vmem:[#allocation3 + $0x2c8] sm:$0xff]
    %v5907 = vld [vmem:[#allocation3 + $0x2d0] sm:$0xff]
    %v5908 = vld [vmem:[#allocation3 + $0x2d8] sm:$0xff]
    %v5909 = vld [vmem:[#allocation3 + $0x2e0] sm:$0xff]
    %v5910 = vld [vmem:[#allocation3 + $0x2e8] sm:$0xff]
    %v5911 = vld [vmem:[#allocation3 + $0x2f0] sm:$0xff]
    %v5912 = vld [vmem:[#allocation3 + $0x2f8] sm:$0xff]
    %v5913 = vld [vmem:[#allocation3 + $0x300] sm:$0xff]
    %v5914 = vld [vmem:[#allocation3 + $0x308] sm:$0xff]
    %v5915 = vld [vmem:[#allocation3 + $0x310] sm:$0xff]
    %v5916 = vld [vmem:[#allocation3 + $0x318] sm:$0xff]
    %v5917 = vld [vmem:[#allocation3 + $0x320] sm:$0xff]
    %v5918 = vld [vmem:[#allocation3 + $0x328] sm:$0xff]
    %v5919 = vld [vmem:[#allocation3 + $0x330] sm:$0xff]
    %v5920 = vld [vmem:[#allocation3 + $0x338] sm:$0xff]
    %v5921 = vld [vmem:[#allocation3 + $0x340] sm:$0xff]
    %v5922 = vld [vmem:[#allocation3 + $0x348] sm:$0xff]
    %v5923 = vld [vmem:[#allocation3 + $0x350] sm:$0xff]
    %v5924 = vld [vmem:[#allocation3 + $0x358] sm:$0xff]
    %v5925 = vld [vmem:[#allocation3 + $0x360] sm:$0xff]
    %v5926 = vld [vmem:[#allocation3 + $0x368] sm:$0xff]
    %v5927 = vld [vmem:[#allocation3 + $0x370] sm:$0xff]
    %v5928 = vld [vmem:[#allocation3 + $0x378] sm:$0xff]
    %v5929 = vld [vmem:[#allocation3 + $0x380] sm:$0xff]
    %v5930 = vld [vmem:[#allocation3 + $0x388] sm:$0xff]
    %v5931 = vld [vmem:[#allocation3 + $0x390] sm:$0xff]
    %v5932 = vld [vmem:[#allocation3 + $0x398] sm:$0xff]
    %v5933 = vld [vmem:[#allocation3 + $0x3a0] sm:$0xff]
    %v5934 = vld [vmem:[#allocation3 + $0x3a8] sm:$0xff]
    %v5935 = vld [vmem:[#allocation3 + $0x3b0] sm:$0xff]
    %v5936 = vld [vmem:[#allocation3 + $0x3b8] sm:$0xff]
    %v5937 = vld [vmem:[#allocation3 + $0x3c0] sm:$0xff]
    %v5938 = vld [vmem:[#allocation3 + $0x3c8] sm:$0xff]
    %v5939 = vld [vmem:[#allocation3 + $0x3d0] sm:$0xff]
    %v5940 = vld [vmem:[#allocation3 + $0x3d8] sm:$0xff]
    %v5941 = vld [vmem:[#allocation3 + $0x3e0] sm:$0xff]
    %v5942 = vld [vmem:[#allocation3 + $0x3e8] sm:$0xff]
    %v5943 = vld [vmem:[#allocation3 + $0x3f0] sm:$0xff]
    %v5944 = vld [vmem:[#allocation3 + $0x3f8] sm:$0xff]
    %v5945 = vld [vmem:[#allocation3 + $0x400] sm:$0xff]
    %v5946 = vld [vmem:[#allocation3 + $0x408] sm:$0xff]
    %v5947 = vld [vmem:[#allocation3 + $0x410] sm:$0xff]
    %v5948 = vld [vmem:[#allocation3 + $0x418] sm:$0xff]
    %v5949 = vld [vmem:[#allocation3 + $0x420] sm:$0xff]
    %v5950 = vld [vmem:[#allocation3 + $0x428] sm:$0xff]
    %v5951 = vld [vmem:[#allocation3 + $0x430] sm:$0xff]
    %v5952 = vld [vmem:[#allocation3 + $0x438] sm:$0xff]
    %v5953 = vld [vmem:[#allocation3 + $0x440] sm:$0xff]
    %v5954 = vld [vmem:[#allocation3 + $0x448] sm:$0xff]
    %v5955 = vld [vmem:[#allocation3 + $0x450] sm:$0xff]
    %v5956 = vld [vmem:[#allocation3 + $0x458] sm:$0xff]
    %v5957 = vld [vmem:[#allocation3 + $0x460] sm:$0xff]
    %v5958 = vld [vmem:[#allocation3 + $0x468] sm:$0xff]
    %v5959 = vld [vmem:[#allocation3 + $0x470] sm:$0xff]
    %v5960 = vld [vmem:[#allocation3 + $0x478] sm:$0xff]
    %v5961 = vld [vmem:[#allocation3 + $0x480] sm:$0xff]
    %v5962 = vld [vmem:[#allocation3 + $0x488] sm:$0xff]
    %v5963 = vld [vmem:[#allocation3 + $0x490] sm:$0xff]
    %v5964 = vld [vmem:[#allocation3 + $0x498] sm:$0xff]
    %v5965 = vld [vmem:[#allocation3 + $0x4a0] sm:$0xff]
    %v5966 = vld [vmem:[#allocation3 + $0x4a8] sm:$0xff]
    %v5967 = vld [vmem:[#allocation3 + $0x4b0] sm:$0xff]
    %v5968 = vld [vmem:[#allocation3 + $0x4b8] sm:$0xff]
    %v5969 = vld [vmem:[#allocation3 + $0x4c0] sm:$0xff]
    %v5970 = vld [vmem:[#allocation3 + $0x4c8] sm:$0xff]
    %v5971 = vld [vmem:[#allocation3 + $0x4d0] sm:$0xff]
    %v5972 = vld [vmem:[#allocation3 + $0x4d8] sm:$0xff]
    %v5973 = vld [vmem:[#allocation3 + $0x4e0] sm:$0xff]
    %v5974 = vld [vmem:[#allocation3 + $0x4e8] sm:$0xff]
    %v5975 = vld [vmem:[#allocation3 + $0x4f0] sm:$0xff]
    %v5976 = vld [vmem:[#allocation3 + $0x4f8] sm:$0xff]
    %v5977 = vld [vmem:[#allocation3 + $0x500] sm:$0xff]
    %v5978 = vld [vmem:[#allocation3 + $0x508] sm:$0xff]
    %v5979 = vld [vmem:[#allocation3 + $0x510] sm:$0xff]
    %v5980 = vld [vmem:[#allocation3 + $0x518] sm:$0xff]
    %v5981 = vld [vmem:[#allocation3 + $0x520] sm:$0xff]
    %v5982 = vld [vmem:[#allocation3 + $0x528] sm:$0xff]
    %v5983 = vld [vmem:[#allocation3 + $0x530] sm:$0xff]
    %v5984 = vld [vmem:[#allocation3 + $0x538] sm:$0xff]
    %v5985 = vld [vmem:[#allocation3 + $0x540] sm:$0xff]
    %v5986 = vld [vmem:[#allocation3 + $0x548] sm:$0xff]
    %v5987 = vld [vmem:[#allocation3 + $0x550] sm:$0xff]
    %v5988 = vld [vmem:[#allocation3 + $0x558] sm:$0xff]
    %v5989 = vld [vmem:[#allocation3 + $0x560] sm:$0xff]
    %v5990 = vld [vmem:[#allocation3 + $0x568] sm:$0xff]
    %v5991 = vld [vmem:[#allocation3 + $0x570] sm:$0xff]
    %v5992 = vld [vmem:[#allocation3 + $0x578] sm:$0xff]
    %v5993 = vld [vmem:[#allocation3 + $0x580] sm:$0xff]
    %v5994 = vld [vmem:[#allocation3 + $0x588] sm:$0xff]
    %v5995 = vld [vmem:[#allocation3 + $0x590] sm:$0xff]
    %v5996 = vld [vmem:[#allocation3 + $0x598] sm:$0xff]
    %v5997 = vld [vmem:[#allocation3 + $0x5a0] sm:$0xff]
    %v5998 = vld [vmem:[#allocation3 + $0x5a8] sm:$0xff]
    %v5999 = vld [vmem:[#allocation3 + $0x5b0] sm:$0xff]
    %v6000 = vld [vmem:[#allocation3 + $0x5b8] sm:$0xff]
    %v6001 = vld [vmem:[#allocation3 + $0x5c0] sm:$0xff]
    %v6002 = vld [vmem:[#allocation3 + $0x5c8] sm:$0xff]
    %v6003 = vld [vmem:[#allocation3 + $0x5d0] sm:$0xff]
    %v6004 = vld [vmem:[#allocation3 + $0x5d8] sm:$0xff]
    %v6005 = vld [vmem:[#allocation3 + $0x5e0] sm:$0xff]
    %v6006 = vld [vmem:[#allocation3 + $0x5e8] sm:$0xff]
    %v6007 = vld [vmem:[#allocation3 + $0x5f0] sm:$0xff]
    %v6008 = vld [vmem:[#allocation3 + $0x5f8] sm:$0xff]
    %v6009 = vld [vmem:[#allocation3 + $0x600] sm:$0xff]
    %v6010 = vld [vmem:[#allocation3 + $0x608] sm:$0xff]
    %v6011 = vld [vmem:[#allocation3 + $0x610] sm:$0xff]
    %v6012 = vld [vmem:[#allocation3 + $0x618] sm:$0xff]
    %v6013 = vld [vmem:[#allocation3 + $0x620] sm:$0xff]
    %v6014 = vld [vmem:[#allocation3 + $0x628] sm:$0xff]
    %v6015 = vld [vmem:[#allocation3 + $0x630] sm:$0xff]
    %v6016 = vld [vmem:[#allocation3 + $0x638] sm:$0xff]
    %v6017 = vld [vmem:[#allocation3 + $0x640] sm:$0xff]
    %v6018 = vld [vmem:[#allocation3 + $0x648] sm:$0xff]
    %v6019 = vld [vmem:[#allocation3 + $0x650] sm:$0xff]
    %v6020 = vld [vmem:[#allocation3 + $0x658] sm:$0xff]
    %v6021 = vld [vmem:[#allocation3 + $0x660] sm:$0xff]
    %v6022 = vld [vmem:[#allocation3 + $0x668] sm:$0xff]
    %v6023 = vld [vmem:[#allocation3 + $0x670] sm:$0xff]
    %v6024 = vld [vmem:[#allocation3 + $0x678] sm:$0xff]
    %v6025 = vld [vmem:[#allocation3 + $0x680] sm:$0xff]
    %v6026 = vld [vmem:[#allocation3 + $0x688] sm:$0xff]
    %v6027 = vld [vmem:[#allocation3 + $0x690] sm:$0xff]
    %v6028 = vld [vmem:[#allocation3 + $0x698] sm:$0xff]
    %v6029 = vld [vmem:[#allocation3 + $0x6a0] sm:$0xff]
    %v6030 = vld [vmem:[#allocation3 + $0x6a8] sm:$0xff]
    %v6031 = vld [vmem:[#allocation3 + $0x6b0] sm:$0xff]
    %v6032 = vld [vmem:[#allocation3 + $0x6b8] sm:$0xff]
    %v6033 = vld [vmem:[#allocation3 + $0x6c0] sm:$0xff]
    %v6034 = vld [vmem:[#allocation3 + $0x6c8] sm:$0xff]
    %v6035 = vld [vmem:[#allocation3 + $0x6d0] sm:$0xff]
    %v6036 = vld [vmem:[#allocation3 + $0x6d8] sm:$0xff]
    %v6037 = vld [vmem:[#allocation3 + $0x6e0] sm:$0xff]
    %v6038 = vld [vmem:[#allocation3 + $0x6e8] sm:$0xff]
    %v6039 = vld [vmem:[#allocation3 + $0x6f0] sm:$0xff]
    %v6040 = vld [vmem:[#allocation3 + $0x6f8] sm:$0xff]
    %v6041 = vld [vmem:[#allocation3 + $0x700] sm:$0xff]
    %v6042 = vld [vmem:[#allocation3 + $0x708] sm:$0xff]
    %v6043 = vld [vmem:[#allocation3 + $0x710] sm:$0xff]
    %v6044 = vld [vmem:[#allocation3 + $0x718] sm:$0xff]
    %v6045 = vld [vmem:[#allocation3 + $0x720] sm:$0xff]
    %v6046 = vld [vmem:[#allocation3 + $0x728] sm:$0xff]
    %v6047 = vld [vmem:[#allocation3 + $0x730] sm:$0xff]
    %v6048 = vld [vmem:[#allocation3 + $0x738] sm:$0xff]
    %v6049 = vld [vmem:[#allocation3 + $0x740] sm:$0xff]
    %v6050 = vld [vmem:[#allocation3 + $0x748] sm:$0xff]
    %v6051 = vld [vmem:[#allocation3 + $0x750] sm:$0xff]
    %v6052 = vld [vmem:[#allocation3 + $0x758] sm:$0xff]
    %v6053 = vld [vmem:[#allocation3 + $0x760] sm:$0xff]
    %v6054 = vld [vmem:[#allocation3 + $0x768] sm:$0xff]
    %v6055 = vld [vmem:[#allocation3 + $0x770] sm:$0xff]
    %v6056 = vld [vmem:[#allocation3 + $0x778] sm:$0xff]
    %v6057 = vld [vmem:[#allocation3 + $0x780] sm:$0xff]
    %v6058 = vld [vmem:[#allocation3 + $0x788] sm:$0xff]
    %v6059 = vld [vmem:[#allocation3 + $0x790] sm:$0xff]
    %v6060 = vld [vmem:[#allocation3 + $0x798] sm:$0xff]
    %v6061 = vld [vmem:[#allocation3 + $0x7a0] sm:$0xff]
    %v6062 = vld [vmem:[#allocation3 + $0x7a8] sm:$0xff]
    %v6063 = vld [vmem:[#allocation3 + $0x7b0] sm:$0xff]
    %v6064 = vld [vmem:[#allocation3 + $0x7b8] sm:$0xff]
    %v6065 = vld [vmem:[#allocation3 + $0x7c0] sm:$0xff]
    %v6066 = vld [vmem:[#allocation3 + $0x7c8] sm:$0xff]
    %v6067 = vld [vmem:[#allocation3 + $0x7d0] sm:$0xff]
    %v6068 = vld [vmem:[#allocation3 + $0x7d8] sm:$0xff]
    %v6069 = vld [vmem:[#allocation3 + $0x7e0] sm:$0xff]
    %v6070 = vld [vmem:[#allocation3 + $0x7e8] sm:$0xff]
    %v6071 = vld [vmem:[#allocation3 + $0x7f0] sm:$0xff]
    %v6072 = vld [vmem:[#allocation3 + $0x7f8] sm:$0xff]
    %v6073 = vpack.c.bf16 %v5819, %v5817
    %v6074 = vpack.c.bf16 %v5820, %v5818
    %v6075 = vpack.c.bf16 %v5823, %v5821
    %v6076 = vpack.c.bf16 %v5824, %v5822
    %v6077 = vpack.c.bf16 %v5827, %v5825
    %v6078 = vpack.c.bf16 %v5828, %v5826
    %v6079 = vpack.c.bf16 %v5831, %v5829
    %v6080 = vpack.c.bf16 %v5832, %v5830
    %v6081 = vpack.c.bf16 %v5835, %v5833
    %v6082 = vpack.c.bf16 %v5836, %v5834
    %v6083 = vpack.c.bf16 %v5839, %v5837
    %v6084 = vpack.c.bf16 %v5840, %v5838
    %v6085 = vpack.c.bf16 %v5843, %v5841
    %v6086 = vpack.c.bf16 %v5844, %v5842
    %v6087 = vpack.c.bf16 %v5847, %v5845
    %v6088 = vpack.c.bf16 %v5848, %v5846
    %v6089 = vpack.c.bf16 %v5851, %v5849
    %v6090 = vpack.c.bf16 %v5852, %v5850
    %v6091 = vpack.c.bf16 %v5855, %v5853
    %v6092 = vpack.c.bf16 %v5856, %v5854
    %v6093 = vpack.c.bf16 %v5859, %v5857
    %v6094 = vpack.c.bf16 %v5860, %v5858
    %v6095 = vpack.c.bf16 %v5863, %v5861
    %v6096 = vpack.c.bf16 %v5864, %v5862
    %v6097 = vpack.c.bf16 %v5867, %v5865
    %v6098 = vpack.c.bf16 %v5868, %v5866
    %v6099 = vpack.c.bf16 %v5871, %v5869
    %v6100 = vpack.c.bf16 %v5872, %v5870
    %v6101 = vpack.c.bf16 %v5875, %v5873
    %v6102 = vpack.c.bf16 %v5876, %v5874
    %v6103 = vpack.c.bf16 %v5879, %v5877
    %v6104 = vpack.c.bf16 %v5880, %v5878
    %v6105 = vpack.c.bf16 %v5883, %v5881
    %v6106 = vpack.c.bf16 %v5884, %v5882
    %v6107 = vpack.c.bf16 %v5887, %v5885
    %v6108 = vpack.c.bf16 %v5888, %v5886
    %v6109 = vpack.c.bf16 %v5891, %v5889
    %v6110 = vpack.c.bf16 %v5892, %v5890
    %v6111 = vpack.c.bf16 %v5895, %v5893
    %v6112 = vpack.c.bf16 %v5896, %v5894
    %v6113 = vpack.c.bf16 %v5899, %v5897
    %v6114 = vpack.c.bf16 %v5900, %v5898
    %v6115 = vpack.c.bf16 %v5903, %v5901
    %v6116 = vpack.c.bf16 %v5904, %v5902
    %v6117 = vpack.c.bf16 %v5907, %v5905
    %v6118 = vpack.c.bf16 %v5908, %v5906
    %v6119 = vpack.c.bf16 %v5911, %v5909
    %v6120 = vpack.c.bf16 %v5912, %v5910
    %v6121 = vpack.c.bf16 %v5915, %v5913
    %v6122 = vpack.c.bf16 %v5916, %v5914
    %v6123 = vpack.c.bf16 %v5919, %v5917
    %v6124 = vpack.c.bf16 %v5920, %v5918
    %v6125 = vpack.c.bf16 %v5923, %v5921
    %v6126 = vpack.c.bf16 %v5924, %v5922
    %v6127 = vpack.c.bf16 %v5927, %v5925
    %v6128 = vpack.c.bf16 %v5928, %v5926
    %v6129 = vpack.c.bf16 %v5931, %v5929
    %v6130 = vpack.c.bf16 %v5932, %v5930
    %v6131 = vpack.c.bf16 %v5935, %v5933
    %v6132 = vpack.c.bf16 %v5936, %v5934
    %v6133 = vpack.c.bf16 %v5939, %v5937
    %v6134 = vpack.c.bf16 %v5940, %v5938
    %v6135 = vpack.c.bf16 %v5943, %v5941
    %v6136 = vpack.c.bf16 %v5944, %v5942
    %v6137 = vpack.c.bf16 %v5947, %v5945
    %v6138 = vpack.c.bf16 %v5948, %v5946
    %v6139 = vpack.c.bf16 %v5951, %v5949
    %v6140 = vpack.c.bf16 %v5952, %v5950
    %v6141 = vpack.c.bf16 %v5955, %v5953
    %v6142 = vpack.c.bf16 %v5956, %v5954
    %v6143 = vpack.c.bf16 %v5959, %v5957
    %v6144 = vpack.c.bf16 %v5960, %v5958
    %v6145 = vpack.c.bf16 %v5963, %v5961
    %v6146 = vpack.c.bf16 %v5964, %v5962
    %v6147 = vpack.c.bf16 %v5967, %v5965
    %v6148 = vpack.c.bf16 %v5968, %v5966
    %v6149 = vpack.c.bf16 %v5971, %v5969
    %v6150 = vpack.c.bf16 %v5972, %v5970
    %v6151 = vpack.c.bf16 %v5975, %v5973
    %v6152 = vpack.c.bf16 %v5976, %v5974
    %v6153 = vpack.c.bf16 %v5979, %v5977
    %v6154 = vpack.c.bf16 %v5980, %v5978
    %v6155 = vpack.c.bf16 %v5983, %v5981
    %v6156 = vpack.c.bf16 %v5984, %v5982
    %v6157 = vpack.c.bf16 %v5987, %v5985
    %v6158 = vpack.c.bf16 %v5988, %v5986
    %v6159 = vpack.c.bf16 %v5991, %v5989
    %v6160 = vpack.c.bf16 %v5992, %v5990
    %v6161 = vpack.c.bf16 %v5995, %v5993
    %v6162 = vpack.c.bf16 %v5996, %v5994
    %v6163 = vpack.c.bf16 %v5999, %v5997
    %v6164 = vpack.c.bf16 %v6000, %v5998
    %v6165 = vpack.c.bf16 %v6003, %v6001
    %v6166 = vpack.c.bf16 %v6004, %v6002
    %v6167 = vpack.c.bf16 %v6007, %v6005
    %v6168 = vpack.c.bf16 %v6008, %v6006
    %v6169 = vpack.c.bf16 %v6011, %v6009
    %v6170 = vpack.c.bf16 %v6012, %v6010
    %v6171 = vpack.c.bf16 %v6015, %v6013
    %v6172 = vpack.c.bf16 %v6016, %v6014
    %v6173 = vpack.c.bf16 %v6019, %v6017
    %v6174 = vpack.c.bf16 %v6020, %v6018
    %v6175 = vpack.c.bf16 %v6023, %v6021
    %v6176 = vpack.c.bf16 %v6024, %v6022
    %v6177 = vpack.c.bf16 %v6027, %v6025
    %v6178 = vpack.c.bf16 %v6028, %v6026
    %v6179 = vpack.c.bf16 %v6031, %v6029
    %v6180 = vpack.c.bf16 %v6032, %v6030
    %v6181 = vpack.c.bf16 %v6035, %v6033
    %v6182 = vpack.c.bf16 %v6036, %v6034
    %v6183 = vpack.c.bf16 %v6039, %v6037
    %v6184 = vpack.c.bf16 %v6040, %v6038
    %v6185 = vpack.c.bf16 %v6043, %v6041
    %v6186 = vpack.c.bf16 %v6044, %v6042
    %v6187 = vpack.c.bf16 %v6047, %v6045
    %v6188 = vpack.c.bf16 %v6048, %v6046
    %v6189 = vpack.c.bf16 %v6051, %v6049
    %v6190 = vpack.c.bf16 %v6052, %v6050
    %v6191 = vpack.c.bf16 %v6055, %v6053
    %v6192 = vpack.c.bf16 %v6056, %v6054
    %v6193 = vpack.c.bf16 %v6059, %v6057
    %v6194 = vpack.c.bf16 %v6060, %v6058
    %v6195 = vpack.c.bf16 %v6063, %v6061
    %v6196 = vpack.c.bf16 %v6064, %v6062
    %v6197 = vpack.c.bf16 %v6067, %v6065
    %v6198 = vpack.c.bf16 %v6068, %v6066
    %v6199 = vpack.c.bf16 %v6071, %v6069
    %v6200 = vpack.c.bf16 %v6072, %v6070
    %v6201 = vld [vmem:[#allocation7] sm:$0xf]
    %v6202 = vld [vmem:[#allocation7 + $0x4] sm:$0xf]
    %v6203 = vld [vmem:[#allocation7 + $0x8] sm:$0xf]
    %v6204 = vld [vmem:[#allocation7 + $0xc] sm:$0xf]
    %v6205 = vld [vmem:[#allocation7 + $0x10] sm:$0xf]
    %v6206 = vld [vmem:[#allocation7 + $0x14] sm:$0xf]
    %v6207 = vld [vmem:[#allocation7 + $0x18] sm:$0xf]
    %v6208 = vld [vmem:[#allocation7 + $0x1c] sm:$0xf]
    %v6209 = vld [vmem:[#allocation7 + $0x20] sm:$0xf]
    %v6210 = vld [vmem:[#allocation7 + $0x24] sm:$0xf]
    %v6211 = vld [vmem:[#allocation7 + $0x28] sm:$0xf]
    %v6212 = vld [vmem:[#allocation7 + $0x2c] sm:$0xf]
    %v6213 = vld [vmem:[#allocation7 + $0x30] sm:$0xf]
    %v6214 = vld [vmem:[#allocation7 + $0x34] sm:$0xf]
    %v6215 = vld [vmem:[#allocation7 + $0x38] sm:$0xf]
    %v6216 = vld [vmem:[#allocation7 + $0x3c] sm:$0xf]
    %v6217 = vld [vmem:[#allocation7 + $0x40] sm:$0xf]
    %v6218 = vld [vmem:[#allocation7 + $0x44] sm:$0xf]
    %v6219 = vld [vmem:[#allocation9] sm:$0x1]
    %v6221 = vlaneseq
    %v6222 = vshrl.u32 %v6221, 7
    %v6223 = vsub.s32 0, %v6222
    %v6224 = vrot.slane %v6219, %v6223
    %v6244 = vunpack.c.l.b16 %v6201
    %v6245 = vunpack.c.l.b16 %v6202
    %v6246 = vunpack.c.l.b16 %v6203
    %v6247 = vunpack.c.l.b16 %v6204
    %v6248 = vunpack.c.l.b16 %v6205
    %v6249 = vunpack.c.l.b16 %v6206
    %v6250 = vunpack.c.l.b16 %v6207
    %v6251 = vunpack.c.l.b16 %v6208
    %v6252 = vunpack.c.l.b16 %v6209
    %v6253 = vunpack.c.l.b16 %v6210
    %v6254 = vunpack.c.l.b16 %v6211
    %v6255 = vunpack.c.l.b16 %v6212
    %v6256 = vunpack.c.l.b16 %v6213
    %v6257 = vunpack.c.l.b16 %v6214
    %v6258 = vunpack.c.l.b16 %v6215
    %v6259 = vunpack.c.l.b16 %v6216
    %v6260 = vunpack.c.l.b16 %v6217
    %v6261 = vunpack.c.l.b16 %v6218
    %v6262 = vpack.c.b16 %v6245, %v6244
    %v6263 = vpack.c.b16 %v6247, %v6246
    %v6264 = vpack.c.b16 %v6249, %v6248
    %v6265 = vpack.c.b16 %v6251, %v6250
    %v6266 = vpack.c.b16 %v6253, %v6252
    %v6267 = vpack.c.b16 %v6255, %v6254
    %v6268 = vpack.c.b16 %v6257, %v6256
    %v6269 = vpack.c.b16 %v6259, %v6258
    %v6270 = vpack.c.b16 %v6261, %v6260
    %v6281 = vsel %vm359, %v6074, 0
    %v6284 = vsel %vm359, %v6076, 0
    %v6287 = vsel %vm359, %v6078, 0
    %v6290 = vsel %vm359, %v6080, 0
    %v6293 = vsel %vm359, %v6082, 0
    %v6296 = vsel %vm359, %v6084, 0
    %v6299 = vsel %vm359, %v6086, 0
    %v6302 = vsel %vm359, %v6088, 0
    %v6305 = vsel %vm359, %v6090, 0
    %v6308 = vsel %vm359, %v6092, 0
    %v6311 = vsel %vm359, %v6094, 0
    %v6314 = vsel %vm359, %v6096, 0
    %v6317 = vsel %vm359, %v6098, 0
    %v6320 = vsel %vm359, %v6100, 0
    %v6323 = vsel %vm359, %v6102, 0
    %v6326 = vsel %vm359, %v6104, 0
    %v6329 = vsel %vm359, %v6106, 0
    %v6332 = vsel %vm359, %v6108, 0
    %v6335 = vsel %vm359, %v6110, 0
    %v6338 = vsel %vm359, %v6112, 0
    %v6341 = vsel %vm359, %v6114, 0
    %v6344 = vsel %vm359, %v6116, 0
    %v6347 = vsel %vm359, %v6118, 0
    %v6350 = vsel %vm359, %v6120, 0
    %v6353 = vsel %vm359, %v6122, 0
    %v6356 = vsel %vm359, %v6124, 0
    %v6359 = vsel %vm359, %v6126, 0
    %v6362 = vsel %vm359, %v6128, 0
    %v6365 = vsel %vm359, %v6130, 0
    %v6368 = vsel %vm359, %v6132, 0
    %v6371 = vsel %vm359, %v6134, 0
    %v6374 = vsel %vm359, %v6136, 0
    %v6377 = vsel %vm359, %v6138, 0
    %v6380 = vsel %vm359, %v6140, 0
    %v6383 = vsel %vm359, %v6142, 0
    %v6386 = vsel %vm359, %v6144, 0
    %v6389 = vsel %vm359, %v6146, 0
    %v6392 = vsel %vm359, %v6148, 0
    %v6395 = vsel %vm359, %v6150, 0
    %v6398 = vsel %vm359, %v6152, 0
    %v6401 = vsel %vm359, %v6154, 0
    %v6404 = vsel %vm359, %v6156, 0
    %v6407 = vsel %vm359, %v6158, 0
    %v6410 = vsel %vm359, %v6160, 0
    %v6413 = vsel %vm359, %v6162, 0
    %v6416 = vsel %vm359, %v6164, 0
    %v6419 = vsel %vm359, %v6166, 0
    %v6422 = vsel %vm359, %v6168, 0
    %v6425 = vsel %vm359, %v6170, 0
    %v6428 = vsel %vm359, %v6172, 0
    %v6431 = vsel %vm359, %v6174, 0
    %v6434 = vsel %vm359, %v6176, 0
    %v6437 = vsel %vm359, %v6178, 0
    %v6440 = vsel %vm359, %v6180, 0
    %v6443 = vsel %vm359, %v6182, 0
    %v6446 = vsel %vm359, %v6184, 0
    %v6449 = vsel %vm359, %v6186, 0
    %v6452 = vsel %vm359, %v6188, 0
    %v6455 = vsel %vm359, %v6190, 0
    %v6458 = vsel %vm359, %v6192, 0
    %v6461 = vsel %vm359, %v6194, 0
    %v6464 = vsel %vm359, %v6196, 0
    %v6467 = vsel %vm359, %v6198, 0
    %v6470 = vsel %vm359, %v6200, 0
    %6472 = vmatprep.subr.bf16.mxu0 0
    %6473 = vmatpush1.bf16.msra.mxu0 %v6262
    %6474 = vmatprep.subr.bf16.mxu0 0
    %6475 = vmatpush1.bf16.msra.mxu0 %v6263
    %6476 = vmatprep.subr.bf16.mxu0 0
    %6477 = vmatpush1.bf16.msra.mxu0 %v6264
    %6478 = vmatprep.subr.bf16.mxu0 0
    %6479 = vmatpush1.bf16.msra.mxu0 %v6265
    %6480 = vmatprep.subr.bf16.mxu0 0
    %6481 = vmatpush1.bf16.msra.mxu0 %v6266
    %6482 = vmatprep.subr.bf16.mxu0 0
    %6483 = vmatpush1.bf16.msra.mxu0 %v6267
    %6484 = vmatprep.subr.bf16.mxu0 0
    %6485 = vmatpush1.bf16.msra.mxu0 %v6268
    %6486 = vmatprep.subr.bf16.mxu0 0
    %6487 = vmatpush1.bf16.msra.mxu0 %v6269
    %6488 = vmatprep.subr.bf16.mxu0 0
    %6489 = vmatpush1.bf16.msra.mxu0 %v6270
    %6490 = vmatprep.subr.bf16.mxu0 0
    %6491 = vmatpush1.bf16.msra.mxu0 0
    %6492 = vmatprep.subr.bf16.mxu0 0
    %6493 = vmatpush1.bf16.msra.mxu0 0
    %6494 = vmatprep.subr.bf16.mxu0 0
    %6495 = vmatpush1.bf16.msra.mxu0 0
    %6496 = vmatprep.subr.bf16.mxu0 0
    %6497 = vmatpush1.bf16.msra.mxu0 0
    %6498 = vmatprep.subr.bf16.mxu0 0
    %6499 = vmatpush1.bf16.msra.mxu0 0
    %6500 = vmatprep.subr.bf16.mxu0 0
    %6501 = vmatpush1.bf16.msra.mxu0 0
    %6502 = vmatprep.subr.bf16.mxu0 0
    %6503 = vmatpush1.bf16.msra.mxu0 0
    %6504 = vmatprep.mubr.bf16.mxu0 %v6281
    %6505 = vmatmul.mubr.bf16.gmra.mrb[0].mxu0 %v6073
    %v6506 = vpop.f32.mrb[0].mxu0
    %v6507 = vadd.f32 %v6224, %v6506
    %v6508 = vpop.f32.mrb[0].mxu0
    %v6509 = vpop.f32.mrb[0].mxu0
    %v6510 = vadd.f32 %v6224, %v6509
    %v6511 = vpop.f32.mrb[0].mxu0
    %6512 = vmatprep.mubr.bf16.mxu0 %v6284
    %6513 = vmatmul.mubr.bf16.gmra.mrb[0].mxu0 %v6075
    %v6514 = vpop.f32.mrb[0].mxu0
    %v6515 = vadd.f32 %v6224, %v6514
    %v6516 = vpop.f32.mrb[0].mxu0
    %v6517 = vpop.f32.mrb[0].mxu0
    %v6518 = vadd.f32 %v6224, %v6517
    %v6519 = vpop.f32.mrb[0].mxu0
    %6520 = vmatprep.mubr.bf16.mxu0 %v6287
    %6521 = vmatmul.mubr.bf16.gmra.mrb[0].mxu0 %v6077
    %v6522 = vpop.f32.mrb[0].mxu0
    %v6523 = vadd.f32 %v6224, %v6522
    %v6524 = vpop.f32.mrb[0].mxu0
    %v6525 = vpop.f32.mrb[0].mxu0
    %v6526 = vadd.f32 %v6224, %v6525
    %v6527 = vpop.f32.mrb[0].mxu0
    %6528 = vmatprep.mubr.bf16.mxu0 %v6290
    %6529 = vmatmul.mubr.bf16.gmra.mrb[0].mxu0 %v6079
    %v6530 = vpop.f32.mrb[0].mxu0
    %v6531 = vadd.f32 %v6224, %v6530
    %v6532 = vpop.f32.mrb[0].mxu0
    %v6533 = vpop.f32.mrb[0].mxu0
    %v6534 = vadd.f32 %v6224, %v6533
    %v6535 = vpop.f32.mrb[0].mxu0
    %6536 = vmatprep.mubr.bf16.mxu0 %v6293
    %6537 = vmatmul.mubr.bf16.gmra.mrb[0].mxu0 %v6081
    %v6538 = vpop.f32.mrb[0].mxu0
    %v6539 = vadd.f32 %v6224, %v6538
    %v6540 = vpop.f32.mrb[0].mxu0
    %v6541 = vpop.f32.mrb[0].mxu0
    %v6542 = vadd.f32 %v6224, %v6541
    %v6543 = vpop.f32.mrb[0].mxu0
    %6544 = vmatprep.mubr.bf16.mxu0 %v6296
    %6545 = vmatmul.mubr.bf16.gmra.mrb[0].mxu0 %v6083
    %v6546 = vpop.f32.mrb[0].mxu0
    %v6547 = vadd.f32 %v6224, %v6546
    %v6548 = vpop.f32.mrb[0].mxu0
    %v6549 = vpop.f32.mrb[0].mxu0
    %v6550 = vadd.f32 %v6224, %v6549
    %v6551 = vpop.f32.mrb[0].mxu0
    %6552 = vmatprep.mubr.bf16.mxu0 %v6299
    %6553 = vmatmul.mubr.bf16.gmra.mrb[0].mxu0 %v6085
    %v6554 = vpop.f32.mrb[0].mxu0
    %v6555 = vadd.f32 %v6224, %v6554
    %v6556 = vpop.f32.mrb[0].mxu0
    %v6557 = vpop.f32.mrb[0].mxu0
    %v6558 = vadd.f32 %v6224, %v6557
    %v6559 = vpop.f32.mrb[0].mxu0
    %6560 = vmatprep.mubr.bf16.mxu0 %v6302
    %6561 = vmatmul.mubr.bf16.gmra.mrb[0].mxu0 %v6087
    %v6562 = vpop.f32.mrb[0].mxu0
    %v6563 = vadd.f32 %v6224, %v6562
    %v6564 = vpop.f32.mrb[0].mxu0
    %v6565 = vpop.f32.mrb[0].mxu0
    %v6566 = vadd.f32 %v6224, %v6565
    %v6567 = vpop.f32.mrb[0].mxu0
    %6568 = vmatprep.mubr.bf16.mxu0 %v6305
    %6569 = vmatmul.mubr.bf16.gmra.mrb[0].mxu0 %v6089
    %v6570 = vpop.f32.mrb[0].mxu0
    %v6571 = vadd.f32 %v6224, %v6570
    %v6572 = vpop.f32.mrb[0].mxu0
    %v6573 = vpop.f32.mrb[0].mxu0
    %v6574 = vadd.f32 %v6224, %v6573
    %v6575 = vpop.f32.mrb[0].mxu0
    %6576 = vmatprep.mubr.bf16.mxu0 %v6308
    %6577 = vmatmul.mubr.bf16.gmra.mrb[0].mxu0 %v6091
    %v6578 = vpop.f32.mrb[0].mxu0
    %v6579 = vadd.f32 %v6224, %v6578
    %v6580 = vpop.f32.mrb[0].mxu0
    %v6581 = vpop.f32.mrb[0].mxu0
    %v6582 = vadd.f32 %v6224, %v6581
    %v6583 = vpop.f32.mrb[0].mxu0
    %6584 = vmatprep.mubr.bf16.mxu0 %v6311
    %6585 = vmatmul.mubr.bf16.gmra.mrb[0].mxu0 %v6093
    %v6586 = vpop.f32.mrb[0].mxu0
    %v6587 = vadd.f32 %v6224, %v6586
    %v6588 = vpop.f32.mrb[0].mxu0
    %v6589 = vpop.f32.mrb[0].mxu0
    %v6590 = vadd.f32 %v6224, %v6589
    %v6591 = vpop.f32.mrb[0].mxu0
    %6592 = vmatprep.mubr.bf16.mxu0 %v6314
    %6593 = vmatmul.mubr.bf16.gmra.mrb[0].mxu0 %v6095
    %v6594 = vpop.f32.mrb[0].mxu0
    %v6595 = vadd.f32 %v6224, %v6594
    %v6596 = vpop.f32.mrb[0].mxu0
    %v6597 = vpop.f32.mrb[0].mxu0
    %v6598 = vadd.f32 %v6224, %v6597
    %v6599 = vpop.f32.mrb[0].mxu0
    %6600 = vmatprep.mubr.bf16.mxu0 %v6317
    %6601 = vmatmul.mubr.bf16.gmra.mrb[0].mxu0 %v6097
    %v6602 = vpop.f32.mrb[0].mxu0
    %v6603 = vadd.f32 %v6224, %v6602
    %v6604 = vpop.f32.mrb[0].mxu0
    %v6605 = vpop.f32.mrb[0].mxu0
    %v6606 = vadd.f32 %v6224, %v6605
    %v6607 = vpop.f32.mrb[0].mxu0
    %6608 = vmatprep.mubr.bf16.mxu0 %v6320
    %6609 = vmatmul.mubr.bf16.gmra.mrb[0].mxu0 %v6099
    %v6610 = vpop.f32.mrb[0].mxu0
    %v6611 = vadd.f32 %v6224, %v6610
    %v6612 = vpop.f32.mrb[0].mxu0
    %v6613 = vpop.f32.mrb[0].mxu0
    %v6614 = vadd.f32 %v6224, %v6613
    %v6615 = vpop.f32.mrb[0].mxu0
    %6616 = vmatprep.mubr.bf16.mxu0 %v6323
    %6617 = vmatmul.mubr.bf16.gmra.mrb[0].mxu0 %v6101
    %v6618 = vpop.f32.mrb[0].mxu0
    %v6619 = vadd.f32 %v6224, %v6618
    %v6620 = vpop.f32.mrb[0].mxu0
    %v6621 = vpop.f32.mrb[0].mxu0
    %v6622 = vadd.f32 %v6224, %v6621
    %v6623 = vpop.f32.mrb[0].mxu0
    %6624 = vmatprep.mubr.bf16.mxu0 %v6326
    %6625 = vmatmul.mubr.bf16.gmra.mrb[0].mxu0 %v6103
    %v6626 = vpop.f32.mrb[0].mxu0
    %v6627 = vadd.f32 %v6224, %v6626
    %v6628 = vpop.f32.mrb[0].mxu0
    %v6629 = vpop.f32.mrb[0].mxu0
    %v6630 = vadd.f32 %v6224, %v6629
    %v6631 = vpop.f32.mrb[0].mxu0
    %6632 = vmatprep.mubr.bf16.mxu0 %v6329
    %6633 = vmatmul.mubr.bf16.gmra.mrb[0].mxu0 %v6105
    %v6634 = vpop.f32.mrb[0].mxu0
    %v6635 = vadd.f32 %v6224, %v6634
    %v6636 = vpop.f32.mrb[0].mxu0
    %v6637 = vpop.f32.mrb[0].mxu0
    %v6638 = vadd.f32 %v6224, %v6637
    %v6639 = vpop.f32.mrb[0].mxu0
    %6640 = vmatprep.mubr.bf16.mxu0 %v6332
    %6641 = vmatmul.mubr.bf16.gmra.mrb[0].mxu0 %v6107
    %v6642 = vpop.f32.mrb[0].mxu0
    %v6643 = vadd.f32 %v6224, %v6642
    %v6644 = vpop.f32.mrb[0].mxu0
    %v6645 = vpop.f32.mrb[0].mxu0
    %v6646 = vadd.f32 %v6224, %v6645
    %v6647 = vpop.f32.mrb[0].mxu0
    %6648 = vmatprep.mubr.bf16.mxu0 %v6335
    %6649 = vmatmul.mubr.bf16.gmra.mrb[0].mxu0 %v6109
    %v6650 = vpop.f32.mrb[0].mxu0
    %v6651 = vadd.f32 %v6224, %v6650
    %v6652 = vpop.f32.mrb[0].mxu0
    %v6653 = vpop.f32.mrb[0].mxu0
    %v6654 = vadd.f32 %v6224, %v6653
    %v6655 = vpop.f32.mrb[0].mxu0
    %6656 = vmatprep.mubr.bf16.mxu0 %v6338
    %6657 = vmatmul.mubr.bf16.gmra.mrb[0].mxu0 %v6111
    %v6658 = vpop.f32.mrb[0].mxu0
    %v6659 = vadd.f32 %v6224, %v6658
    %v6660 = vpop.f32.mrb[0].mxu0
    %v6661 = vpop.f32.mrb[0].mxu0
    %v6662 = vadd.f32 %v6224, %v6661
    %v6663 = vpop.f32.mrb[0].mxu0
    %6664 = vmatprep.mubr.bf16.mxu0 %v6341
    %6665 = vmatmul.mubr.bf16.gmra.mrb[0].mxu0 %v6113
    %v6666 = vpop.f32.mrb[0].mxu0
    %v6667 = vadd.f32 %v6224, %v6666
    %v6668 = vpop.f32.mrb[0].mxu0
    %v6669 = vpop.f32.mrb[0].mxu0
    %v6670 = vadd.f32 %v6224, %v6669
    %v6671 = vpop.f32.mrb[0].mxu0
    %6672 = vmatprep.mubr.bf16.mxu0 %v6344
    %6673 = vmatmul.mubr.bf16.gmra.mrb[0].mxu0 %v6115
    %v6674 = vpop.f32.mrb[0].mxu0
    %v6675 = vadd.f32 %v6224, %v6674
    %v6676 = vpop.f32.mrb[0].mxu0
    %v6677 = vpop.f32.mrb[0].mxu0
    %v6678 = vadd.f32 %v6224, %v6677
    %v6679 = vpop.f32.mrb[0].mxu0
    %6680 = vmatprep.mubr.bf16.mxu0 %v6347
    %6681 = vmatmul.mubr.bf16.gmra.mrb[0].mxu0 %v6117
    %v6682 = vpop.f32.mrb[0].mxu0
    %v6683 = vadd.f32 %v6224, %v6682
    %v6684 = vpop.f32.mrb[0].mxu0
    %v6685 = vpop.f32.mrb[0].mxu0
    %v6686 = vadd.f32 %v6224, %v6685
    %v6687 = vpop.f32.mrb[0].mxu0
    %6688 = vmatprep.mubr.bf16.mxu0 %v6350
    %6689 = vmatmul.mubr.bf16.gmra.mrb[0].mxu0 %v6119
    %v6690 = vpop.f32.mrb[0].mxu0
    %v6691 = vadd.f32 %v6224, %v6690
    %v6692 = vpop.f32.mrb[0].mxu0
    %v6693 = vpop.f32.mrb[0].mxu0
    %v6694 = vadd.f32 %v6224, %v6693
    %v6695 = vpop.f32.mrb[0].mxu0
    %6696 = vmatprep.mubr.bf16.mxu0 %v6353
    %6697 = vmatmul.mubr.bf16.gmra.mrb[0].mxu0 %v6121
    %v6698 = vpop.f32.mrb[0].mxu0
    %v6699 = vadd.f32 %v6224, %v6698
    %v6700 = vpop.f32.mrb[0].mxu0
    %v6701 = vpop.f32.mrb[0].mxu0
    %v6702 = vadd.f32 %v6224, %v6701
    %v6703 = vpop.f32.mrb[0].mxu0
    %6704 = vmatprep.mubr.bf16.mxu0 %v6356
    %6705 = vmatmul.mubr.bf16.gmra.mrb[0].mxu0 %v6123
    %v6706 = vpop.f32.mrb[0].mxu0
    %v6707 = vadd.f32 %v6224, %v6706
    %v6708 = vpop.f32.mrb[0].mxu0
    %v6709 = vpop.f32.mrb[0].mxu0
    %v6710 = vadd.f32 %v6224, %v6709
    %v6711 = vpop.f32.mrb[0].mxu0
    %6712 = vmatprep.mubr.bf16.mxu0 %v6359
    %6713 = vmatmul.mubr.bf16.gmra.mrb[0].mxu0 %v6125
    %v6714 = vpop.f32.mrb[0].mxu0
    %v6715 = vadd.f32 %v6224, %v6714
    %v6716 = vpop.f32.mrb[0].mxu0
    %v6717 = vpop.f32.mrb[0].mxu0
    %v6718 = vadd.f32 %v6224, %v6717
    %v6719 = vpop.f32.mrb[0].mxu0
    %6720 = vmatprep.mubr.bf16.mxu0 %v6362
    %6721 = vmatmul.mubr.bf16.gmra.mrb[0].mxu0 %v6127
    %v6722 = vpop.f32.mrb[0].mxu0
    %v6723 = vadd.f32 %v6224, %v6722
    %v6724 = vpop.f32.mrb[0].mxu0
    %v6725 = vpop.f32.mrb[0].mxu0
    %v6726 = vadd.f32 %v6224, %v6725
    %v6727 = vpop.f32.mrb[0].mxu0
    %6728 = vmatprep.mubr.bf16.mxu0 %v6365
    %6729 = vmatmul.mubr.bf16.gmra.mrb[0].mxu0 %v6129
    %v6730 = vpop.f32.mrb[0].mxu0
    %v6731 = vadd.f32 %v6224, %v6730
    %v6732 = vpop.f32.mrb[0].mxu0
    %v6733 = vpop.f32.mrb[0].mxu0
    %v6734 = vadd.f32 %v6224, %v6733
    %v6735 = vpop.f32.mrb[0].mxu0
    %6736 = vmatprep.mubr.bf16.mxu0 %v6368
    %6737 = vmatmul.mubr.bf16.gmra.mrb[0].mxu0 %v6131
    %v6738 = vpop.f32.mrb[0].mxu0
    %v6739 = vadd.f32 %v6224, %v6738
    %v6740 = vpop.f32.mrb[0].mxu0
    %v6741 = vpop.f32.mrb[0].mxu0
    %v6742 = vadd.f32 %v6224, %v6741
    %v6743 = vpop.f32.mrb[0].mxu0
    %6744 = vmatprep.mubr.bf16.mxu0 %v6371
    %6745 = vmatmul.mubr.bf16.gmra.mrb[0].mxu0 %v6133
    %v6746 = vpop.f32.mrb[0].mxu0
    %v6747 = vadd.f32 %v6224, %v6746
    %v6748 = vpop.f32.mrb[0].mxu0
    %v6749 = vpop.f32.mrb[0].mxu0
    %v6750 = vadd.f32 %v6224, %v6749
    %v6751 = vpop.f32.mrb[0].mxu0
    %6752 = vmatprep.mubr.bf16.mxu0 %v6374
    %6753 = vmatmul.mubr.bf16.gmra.mrb[0].mxu0 %v6135
    %v6754 = vpop.f32.mrb[0].mxu0
    %v6755 = vadd.f32 %v6224, %v6754
    %v6756 = vpop.f32.mrb[0].mxu0
    %v6757 = vpop.f32.mrb[0].mxu0
    %v6758 = vadd.f32 %v6224, %v6757
    %v6759 = vpop.f32.mrb[0].mxu0
    %6760 = vmatprep.mubr.bf16.mxu0 %v6377
    %6761 = vmatmul.mubr.bf16.gmra.mrb[0].mxu0 %v6137
    %v6762 = vpop.f32.mrb[0].mxu0
    %v6763 = vadd.f32 %v6224, %v6762
    %v6764 = vpop.f32.mrb[0].mxu0
    %v6765 = vpop.f32.mrb[0].mxu0
    %v6766 = vadd.f32 %v6224, %v6765
    %v6767 = vpop.f32.mrb[0].mxu0
    %6768 = vmatprep.mubr.bf16.mxu0 %v6380
    %6769 = vmatmul.mubr.bf16.gmra.mrb[0].mxu0 %v6139
    %v6770 = vpop.f32.mrb[0].mxu0
    %v6771 = vadd.f32 %v6224, %v6770
    %v6772 = vpop.f32.mrb[0].mxu0
    %v6773 = vpop.f32.mrb[0].mxu0
    %v6774 = vadd.f32 %v6224, %v6773
    %v6775 = vpop.f32.mrb[0].mxu0
    %6776 = vmatprep.mubr.bf16.mxu0 %v6383
    %6777 = vmatmul.mubr.bf16.gmra.mrb[0].mxu0 %v6141
    %v6778 = vpop.f32.mrb[0].mxu0
    %v6779 = vadd.f32 %v6224, %v6778
    %v6780 = vpop.f32.mrb[0].mxu0
    %v6781 = vpop.f32.mrb[0].mxu0
    %v6782 = vadd.f32 %v6224, %v6781
    %v6783 = vpop.f32.mrb[0].mxu0
    %6784 = vmatprep.mubr.bf16.mxu0 %v6386
    %6785 = vmatmul.mubr.bf16.gmra.mrb[0].mxu0 %v6143
    %v6786 = vpop.f32.mrb[0].mxu0
    %v6787 = vadd.f32 %v6224, %v6786
    %v6788 = vpop.f32.mrb[0].mxu0
    %v6789 = vpop.f32.mrb[0].mxu0
    %v6790 = vadd.f32 %v6224, %v6789
    %v6791 = vpop.f32.mrb[0].mxu0
    %6792 = vmatprep.mubr.bf16.mxu0 %v6389
    %6793 = vmatmul.mubr.bf16.gmra.mrb[0].mxu0 %v6145
    %v6794 = vpop.f32.mrb[0].mxu0
    %v6795 = vadd.f32 %v6224, %v6794
    %v6796 = vpop.f32.mrb[0].mxu0
    %v6797 = vpop.f32.mrb[0].mxu0
    %v6798 = vadd.f32 %v6224, %v6797
    %v6799 = vpop.f32.mrb[0].mxu0
    %6800 = vmatprep.mubr.bf16.mxu0 %v6392
    %6801 = vmatmul.mubr.bf16.gmra.mrb[0].mxu0 %v6147
    %v6802 = vpop.f32.mrb[0].mxu0
    %v6803 = vadd.f32 %v6224, %v6802
    %v6804 = vpop.f32.mrb[0].mxu0
    %v6805 = vpop.f32.mrb[0].mxu0
    %v6806 = vadd.f32 %v6224, %v6805
    %v6807 = vpop.f32.mrb[0].mxu0
    %6808 = vmatprep.mubr.bf16.mxu0 %v6395
    %6809 = vmatmul.mubr.bf16.gmra.mrb[0].mxu0 %v6149
    %v6810 = vpop.f32.mrb[0].mxu0
    %v6811 = vadd.f32 %v6224, %v6810
    %v6812 = vpop.f32.mrb[0].mxu0
    %v6813 = vpop.f32.mrb[0].mxu0
    %v6814 = vadd.f32 %v6224, %v6813
    %v6815 = vpop.f32.mrb[0].mxu0
    %6816 = vmatprep.mubr.bf16.mxu0 %v6398
    %6817 = vmatmul.mubr.bf16.gmra.mrb[0].mxu0 %v6151
    %v6818 = vpop.f32.mrb[0].mxu0
    %v6819 = vadd.f32 %v6224, %v6818
    %v6820 = vpop.f32.mrb[0].mxu0
    %v6821 = vpop.f32.mrb[0].mxu0
    %v6822 = vadd.f32 %v6224, %v6821
    %v6823 = vpop.f32.mrb[0].mxu0
    %6824 = vmatprep.mubr.bf16.mxu0 %v6401
    %6825 = vmatmul.mubr.bf16.gmra.mrb[0].mxu0 %v6153
    %v6826 = vpop.f32.mrb[0].mxu0
    %v6827 = vadd.f32 %v6224, %v6826
    %v6828 = vpop.f32.mrb[0].mxu0
    %v6829 = vpop.f32.mrb[0].mxu0
    %v6830 = vadd.f32 %v6224, %v6829
    %v6831 = vpop.f32.mrb[0].mxu0
    %6832 = vmatprep.mubr.bf16.mxu0 %v6404
    %6833 = vmatmul.mubr.bf16.gmra.mrb[0].mxu0 %v6155
    %v6834 = vpop.f32.mrb[0].mxu0
    %v6835 = vadd.f32 %v6224, %v6834
    %v6836 = vpop.f32.mrb[0].mxu0
    %v6837 = vpop.f32.mrb[0].mxu0
    %v6838 = vadd.f32 %v6224, %v6837
    %v6839 = vpop.f32.mrb[0].mxu0
    %6840 = vmatprep.mubr.bf16.mxu0 %v6407
    %6841 = vmatmul.mubr.bf16.gmra.mrb[0].mxu0 %v6157
    %v6842 = vpop.f32.mrb[0].mxu0
    %v6843 = vadd.f32 %v6224, %v6842
    %v6844 = vpop.f32.mrb[0].mxu0
    %v6845 = vpop.f32.mrb[0].mxu0
    %v6846 = vadd.f32 %v6224, %v6845
    %v6847 = vpop.f32.mrb[0].mxu0
    %6848 = vmatprep.mubr.bf16.mxu0 %v6410
    %6849 = vmatmul.mubr.bf16.gmra.mrb[0].mxu0 %v6159
    %v6850 = vpop.f32.mrb[0].mxu0
    %v6851 = vadd.f32 %v6224, %v6850
    %v6852 = vpop.f32.mrb[0].mxu0
    %v6853 = vpop.f32.mrb[0].mxu0
    %v6854 = vadd.f32 %v6224, %v6853
    %v6855 = vpop.f32.mrb[0].mxu0
    %6856 = vmatprep.mubr.bf16.mxu0 %v6413
    %6857 = vmatmul.mubr.bf16.gmra.mrb[0].mxu0 %v6161
    %v6858 = vpop.f32.mrb[0].mxu0
    %v6859 = vadd.f32 %v6224, %v6858
    %v6860 = vpop.f32.mrb[0].mxu0
    %v6861 = vpop.f32.mrb[0].mxu0
    %v6862 = vadd.f32 %v6224, %v6861
    %v6863 = vpop.f32.mrb[0].mxu0
    %6864 = vmatprep.mubr.bf16.mxu0 %v6416
    %6865 = vmatmul.mubr.bf16.gmra.mrb[0].mxu0 %v6163
    %v6866 = vpop.f32.mrb[0].mxu0
    %v6867 = vadd.f32 %v6224, %v6866
    %v6868 = vpop.f32.mrb[0].mxu0
    %v6869 = vpop.f32.mrb[0].mxu0
    %v6870 = vadd.f32 %v6224, %v6869
    %v6871 = vpop.f32.mrb[0].mxu0
    %6872 = vmatprep.mubr.bf16.mxu0 %v6419
    %6873 = vmatmul.mubr.bf16.gmra.mrb[0].mxu0 %v6165
    %v6874 = vpop.f32.mrb[0].mxu0
    %v6875 = vadd.f32 %v6224, %v6874
    %v6876 = vpop.f32.mrb[0].mxu0
    %v6877 = vpop.f32.mrb[0].mxu0
    %v6878 = vadd.f32 %v6224, %v6877
    %v6879 = vpop.f32.mrb[0].mxu0
    %6880 = vmatprep.mubr.bf16.mxu0 %v6422
    %6881 = vmatmul.mubr.bf16.gmra.mrb[0].mxu0 %v6167
    %v6882 = vpop.f32.mrb[0].mxu0
    %v6883 = vadd.f32 %v6224, %v6882
    %v6884 = vpop.f32.mrb[0].mxu0
    %v6885 = vpop.f32.mrb[0].mxu0
    %v6886 = vadd.f32 %v6224, %v6885
    %v6887 = vpop.f32.mrb[0].mxu0
    %6888 = vmatprep.mubr.bf16.mxu0 %v6425
    %6889 = vmatmul.mubr.bf16.gmra.mrb[0].mxu0 %v6169
    %v6890 = vpop.f32.mrb[0].mxu0
    %v6891 = vadd.f32 %v6224, %v6890
    %v6892 = vpop.f32.mrb[0].mxu0
    %v6893 = vpop.f32.mrb[0].mxu0
    %v6894 = vadd.f32 %v6224, %v6893
    %v6895 = vpop.f32.mrb[0].mxu0
    %6896 = vmatprep.mubr.bf16.mxu0 %v6428
    %6897 = vmatmul.mubr.bf16.gmra.mrb[0].mxu0 %v6171
    %v6898 = vpop.f32.mrb[0].mxu0
    %v6899 = vadd.f32 %v6224, %v6898
    %v6900 = vpop.f32.mrb[0].mxu0
    %v6901 = vpop.f32.mrb[0].mxu0
    %v6902 = vadd.f32 %v6224, %v6901
    %v6903 = vpop.f32.mrb[0].mxu0
    %6904 = vmatprep.mubr.bf16.mxu0 %v6431
    %6905 = vmatmul.mubr.bf16.gmra.mrb[0].mxu0 %v6173
    %v6906 = vpop.f32.mrb[0].mxu0
    %v6907 = vadd.f32 %v6224, %v6906
    %v6908 = vpop.f32.mrb[0].mxu0
    %v6909 = vpop.f32.mrb[0].mxu0
    %v6910 = vadd.f32 %v6224, %v6909
    %v6911 = vpop.f32.mrb[0].mxu0
    %6912 = vmatprep.mubr.bf16.mxu0 %v6434
    %6913 = vmatmul.mubr.bf16.gmra.mrb[0].mxu0 %v6175
    %v6914 = vpop.f32.mrb[0].mxu0
    %v6915 = vadd.f32 %v6224, %v6914
    %v6916 = vpop.f32.mrb[0].mxu0
    %v6917 = vpop.f32.mrb[0].mxu0
    %v6918 = vadd.f32 %v6224, %v6917
    %v6919 = vpop.f32.mrb[0].mxu0
    %6920 = vmatprep.mubr.bf16.mxu0 %v6437
    %6921 = vmatmul.mubr.bf16.gmra.mrb[0].mxu0 %v6177
    %v6922 = vpop.f32.mrb[0].mxu0
    %v6923 = vadd.f32 %v6224, %v6922
    %v6924 = vpop.f32.mrb[0].mxu0
    %v6925 = vpop.f32.mrb[0].mxu0
    %v6926 = vadd.f32 %v6224, %v6925
    %v6927 = vpop.f32.mrb[0].mxu0
    %6928 = vmatprep.mubr.bf16.mxu0 %v6440
    %6929 = vmatmul.mubr.bf16.gmra.mrb[0].mxu0 %v6179
    %v6930 = vpop.f32.mrb[0].mxu0
    %v6931 = vadd.f32 %v6224, %v6930
    %v6932 = vpop.f32.mrb[0].mxu0
    %v6933 = vpop.f32.mrb[0].mxu0
    %v6934 = vadd.f32 %v6224, %v6933
    %v6935 = vpop.f32.mrb[0].mxu0
    %6936 = vmatprep.mubr.bf16.mxu0 %v6443
    %6937 = vmatmul.mubr.bf16.gmra.mrb[0].mxu0 %v6181
    %v6938 = vpop.f32.mrb[0].mxu0
    %v6939 = vadd.f32 %v6224, %v6938
    %v6940 = vpop.f32.mrb[0].mxu0
    %v6941 = vpop.f32.mrb[0].mxu0
    %v6942 = vadd.f32 %v6224, %v6941
    %v6943 = vpop.f32.mrb[0].mxu0
    %6944 = vmatprep.mubr.bf16.mxu0 %v6446
    %6945 = vmatmul.mubr.bf16.gmra.mrb[0].mxu0 %v6183
    %v6946 = vpop.f32.mrb[0].mxu0
    %v6947 = vadd.f32 %v6224, %v6946
    %v6948 = vpop.f32.mrb[0].mxu0
    %v6949 = vpop.f32.mrb[0].mxu0
    %v6950 = vadd.f32 %v6224, %v6949
    %v6951 = vpop.f32.mrb[0].mxu0
    %6952 = vmatprep.mubr.bf16.mxu0 %v6449
    %6953 = vmatmul.mubr.bf16.gmra.mrb[0].mxu0 %v6185
    %v6954 = vpop.f32.mrb[0].mxu0
    %v6955 = vadd.f32 %v6224, %v6954
    %v6956 = vpop.f32.mrb[0].mxu0
    %v6957 = vpop.f32.mrb[0].mxu0
    %v6958 = vadd.f32 %v6224, %v6957
    %v6959 = vpop.f32.mrb[0].mxu0
    %6960 = vmatprep.mubr.bf16.mxu0 %v6452
    %6961 = vmatmul.mubr.bf16.gmra.mrb[0].mxu0 %v6187
    %v6962 = vpop.f32.mrb[0].mxu0
    %v6963 = vadd.f32 %v6224, %v6962
    %v6964 = vpop.f32.mrb[0].mxu0
    %v6965 = vpop.f32.mrb[0].mxu0
    %v6966 = vadd.f32 %v6224, %v6965
    %v6967 = vpop.f32.mrb[0].mxu0
    %6968 = vmatprep.mubr.bf16.mxu0 %v6455
    %6969 = vmatmul.mubr.bf16.gmra.mrb[0].mxu0 %v6189
    %v6970 = vpop.f32.mrb[0].mxu0
    %v6971 = vadd.f32 %v6224, %v6970
    %v6972 = vpop.f32.mrb[0].mxu0
    %v6973 = vpop.f32.mrb[0].mxu0
    %v6974 = vadd.f32 %v6224, %v6973
    %v6975 = vpop.f32.mrb[0].mxu0
    %6976 = vmatprep.mubr.bf16.mxu0 %v6458
    %6977 = vmatmul.mubr.bf16.gmra.mrb[0].mxu0 %v6191
    %v6978 = vpop.f32.mrb[0].mxu0
    %v6979 = vadd.f32 %v6224, %v6978
    %v6980 = vpop.f32.mrb[0].mxu0
    %v6981 = vpop.f32.mrb[0].mxu0
    %v6982 = vadd.f32 %v6224, %v6981
    %v6983 = vpop.f32.mrb[0].mxu0
    %6984 = vmatprep.mubr.bf16.mxu0 %v6461
    %6985 = vmatmul.mubr.bf16.gmra.mrb[0].mxu0 %v6193
    %v6986 = vpop.f32.mrb[0].mxu0
    %v6987 = vadd.f32 %v6224, %v6986
    %v6988 = vpop.f32.mrb[0].mxu0
    %v6989 = vpop.f32.mrb[0].mxu0
    %v6990 = vadd.f32 %v6224, %v6989
    %v6991 = vpop.f32.mrb[0].mxu0
    %6992 = vmatprep.mubr.bf16.mxu0 %v6464
    %6993 = vmatmul.mubr.bf16.gmra.mrb[0].mxu0 %v6195
    %v6994 = vpop.f32.mrb[0].mxu0
    %v6995 = vadd.f32 %v6224, %v6994
    %v6996 = vpop.f32.mrb[0].mxu0
    %v6997 = vpop.f32.mrb[0].mxu0
    %v6998 = vadd.f32 %v6224, %v6997
    %v6999 = vpop.f32.mrb[0].mxu0
    %7000 = vmatprep.mubr.bf16.mxu0 %v6467
    %7001 = vmatmul.mubr.bf16.gmra.mrb[0].mxu0 %v6197
    %v7002 = vpop.f32.mrb[0].mxu0
    %v7003 = vadd.f32 %v6224, %v7002
    %v7004 = vpop.f32.mrb[0].mxu0
    %v7005 = vpop.f32.mrb[0].mxu0
    %v7006 = vadd.f32 %v6224, %v7005
    %v7007 = vpop.f32.mrb[0].mxu0
    %7008 = vmatprep.mubr.bf16.mxu0 %v6470
    %7009 = vmatmul.mubr.bf16.gmra.mrb[0].mxu0 %v6199
    %v7010 = vpop.f32.mrb[0].mxu0
    %v7011 = vadd.f32 %v6224, %v7010
    %v7012 = vpop.f32.mrb[0].mxu0
    %v7013 = vpop.f32.mrb[0].mxu0
    %v7014 = vadd.f32 %v6224, %v7013
    %v7015 = vpop.f32.mrb[0].mxu0
    %7016 = vdwg.mxu0
    %v7017 = vmax.f32 %v6507, 0.0
    %v7018 = vmax.f32 %v6510, 0.0
    %v7019 = vmax.f32 %v6515, 0.0
    %v7020 = vmax.f32 %v6518, 0.0
    %v7021 = vmax.f32 %v6523, 0.0
    %v7022 = vmax.f32 %v6526, 0.0
    %v7023 = vmax.f32 %v6531, 0.0
    %v7024 = vmax.f32 %v6534, 0.0
    %v7025 = vmax.f32 %v6539, 0.0
    %v7026 = vmax.f32 %v6542, 0.0
    %v7027 = vmax.f32 %v6547, 0.0
    %v7028 = vmax.f32 %v6550, 0.0
    %v7029 = vmax.f32 %v6555, 0.0
    %v7030 = vmax.f32 %v6558, 0.0
    %v7031 = vmax.f32 %v6563, 0.0
    %v7032 = vmax.f32 %v6566, 0.0
    %v7033 = vmax.f32 %v6571, 0.0
    %v7034 = vmax.f32 %v6574, 0.0
    %v7035 = vmax.f32 %v6579, 0.0
    %v7036 = vmax.f32 %v6582, 0.0
    %v7037 = vmax.f32 %v6587, 0.0
    %v7038 = vmax.f32 %v6590, 0.0
    %v7039 = vmax.f32 %v6595, 0.0
    %v7040 = vmax.f32 %v6598, 0.0
    %v7041 = vmax.f32 %v6603, 0.0
    %v7042 = vmax.f32 %v6606, 0.0
    %v7043 = vmax.f32 %v6611, 0.0
    %v7044 = vmax.f32 %v6614, 0.0
    %v7045 = vmax.f32 %v6619, 0.0
    %v7046 = vmax.f32 %v6622, 0.0
    %v7047 = vmax.f32 %v6627, 0.0
    %v7048 = vmax.f32 %v6630, 0.0
    %v7049 = vmax.f32 %v6635, 0.0
    %v7050 = vmax.f32 %v6638, 0.0
    %v7051 = vmax.f32 %v6643, 0.0
    %v7052 = vmax.f32 %v6646, 0.0
    %v7053 = vmax.f32 %v6651, 0.0
    %v7054 = vmax.f32 %v6654, 0.0
    %v7055 = vmax.f32 %v6659, 0.0
    %v7056 = vmax.f32 %v6662, 0.0
    %v7057 = vmax.f32 %v6667, 0.0
    %v7058 = vmax.f32 %v6670, 0.0
    %v7059 = vmax.f32 %v6675, 0.0
    %v7060 = vmax.f32 %v6678, 0.0
    %v7061 = vmax.f32 %v6683, 0.0
    %v7062 = vmax.f32 %v6686, 0.0
    %v7063 = vmax.f32 %v6691, 0.0
    %v7064 = vmax.f32 %v6694, 0.0
    %v7065 = vmax.f32 %v6699, 0.0
    %v7066 = vmax.f32 %v6702, 0.0
    %v7067 = vmax.f32 %v6707, 0.0
    %v7068 = vmax.f32 %v6710, 0.0
    %v7069 = vmax.f32 %v6715, 0.0
    %v7070 = vmax.f32 %v6718, 0.0
    %v7071 = vmax.f32 %v6723, 0.0
    %v7072 = vmax.f32 %v6726, 0.0
    %v7073 = vmax.f32 %v6731, 0.0
    %v7074 = vmax.f32 %v6734, 0.0
    %v7075 = vmax.f32 %v6739, 0.0
    %v7076 = vmax.f32 %v6742, 0.0
    %v7077 = vmax.f32 %v6747, 0.0
    %v7078 = vmax.f32 %v6750, 0.0
    %v7079 = vmax.f32 %v6755, 0.0
    %v7080 = vmax.f32 %v6758, 0.0
    %v7081 = vmax.f32 %v6763, 0.0
    %v7082 = vmax.f32 %v6766, 0.0
    %v7083 = vmax.f32 %v6771, 0.0
    %v7084 = vmax.f32 %v6774, 0.0
    %v7085 = vmax.f32 %v6779, 0.0
    %v7086 = vmax.f32 %v6782, 0.0
    %v7087 = vmax.f32 %v6787, 0.0
    %v7088 = vmax.f32 %v6790, 0.0
    %v7089 = vmax.f32 %v6795, 0.0
    %v7090 = vmax.f32 %v6798, 0.0
    %v7091 = vmax.f32 %v6803, 0.0
    %v7092 = vmax.f32 %v6806, 0.0
    %v7093 = vmax.f32 %v6811, 0.0
    %v7094 = vmax.f32 %v6814, 0.0
    %v7095 = vmax.f32 %v6819, 0.0
    %v7096 = vmax.f32 %v6822, 0.0
    %v7097 = vmax.f32 %v6827, 0.0
    %v7098 = vmax.f32 %v6830, 0.0
    %v7099 = vmax.f32 %v6835, 0.0
    %v7100 = vmax.f32 %v6838, 0.0
    %v7101 = vmax.f32 %v6843, 0.0
    %v7102 = vmax.f32 %v6846, 0.0
    %v7103 = vmax.f32 %v6851, 0.0
    %v7104 = vmax.f32 %v6854, 0.0
    %v7105 = vmax.f32 %v6859, 0.0
    %v7106 = vmax.f32 %v6862, 0.0
    %v7107 = vmax.f32 %v6867, 0.0
    %v7108 = vmax.f32 %v6870, 0.0
    %v7109 = vmax.f32 %v6875, 0.0
    %v7110 = vmax.f32 %v6878, 0.0
    %v7111 = vmax.f32 %v6883, 0.0
    %v7112 = vmax.f32 %v6886, 0.0
    %v7113 = vmax.f32 %v6891, 0.0
    %v7114 = vmax.f32 %v6894, 0.0
    %v7115 = vmax.f32 %v6899, 0.0
    %v7116 = vmax.f32 %v6902, 0.0
    %v7117 = vmax.f32 %v6907, 0.0
    %v7118 = vmax.f32 %v6910, 0.0
    %v7119 = vmax.f32 %v6915, 0.0
    %v7120 = vmax.f32 %v6918, 0.0
    %v7121 = vmax.f32 %v6923, 0.0
    %v7122 = vmax.f32 %v6926, 0.0
    %v7123 = vmax.f32 %v6931, 0.0
    %v7124 = vmax.f32 %v6934, 0.0
    %v7125 = vmax.f32 %v6939, 0.0
    %v7126 = vmax.f32 %v6942, 0.0
    %v7127 = vmax.f32 %v6947, 0.0
    %v7128 = vmax.f32 %v6950, 0.0
    %v7129 = vmax.f32 %v6955, 0.0
    %v7130 = vmax.f32 %v6958, 0.0
    %v7131 = vmax.f32 %v6963, 0.0
    %v7132 = vmax.f32 %v6966, 0.0
    %v7133 = vmax.f32 %v6971, 0.0
    %v7134 = vmax.f32 %v6974, 0.0
    %v7135 = vmax.f32 %v6979, 0.0
    %v7136 = vmax.f32 %v6982, 0.0
    %v7137 = vmax.f32 %v6987, 0.0
    %v7138 = vmax.f32 %v6990, 0.0
    %v7139 = vmax.f32 %v6995, 0.0
    %v7140 = vmax.f32 %v6998, 0.0
    %v7141 = vmax.f32 %v7003, 0.0
    %v7142 = vmax.f32 %v7006, 0.0
    %v7143 = vmax.f32 %v7011, 0.0
    %v7144 = vmax.f32 %v7014, 0.0
    %v7145 = vld [vmem:[#allocation10] sm:$0xff]
    %v7146 = vld [vmem:[#allocation10 + $0x8] sm:$0xff]
    %v7147 = vld [vmem:[#allocation10 + $0x10] sm:$0xff]
    %v7148 = vld [vmem:[#allocation10 + $0x18] sm:$0xff]
    %v7149 = vld [vmem:[#allocation10 + $0x20] sm:$0xff]
    %v7150 = vld [vmem:[#allocation10 + $0x28] sm:$0xff]
    %v7151 = vld [vmem:[#allocation10 + $0x30] sm:$0xff]
    %v7152 = vld [vmem:[#allocation10 + $0x38] sm:$0xff]
    %v7153 = vld [vmem:[#allocation10 + $0x40] sm:$0xff]
    %v7154 = vld [vmem:[#allocation10 + $0x48] sm:$0xff]
    %v7155 = vld [vmem:[#allocation10 + $0x50] sm:$0xff]
    %v7156 = vld [vmem:[#allocation10 + $0x58] sm:$0xff]
    %v7157 = vld [vmem:[#allocation10 + $0x60] sm:$0xff]
    %v7158 = vld [vmem:[#allocation10 + $0x68] sm:$0xff]
    %v7159 = vld [vmem:[#allocation10 + $0x70] sm:$0xff]
    %v7160 = vld [vmem:[#allocation10 + $0x78] sm:$0xff]
    %v7161 = vmul.f32 %v7017, %v7145
    %v7162 = vmul.f32 %v7018, %v7146
    %v7163 = vmul.f32 %v7019, %v7147
    %v7164 = vmul.f32 %v7020, %v7148
    %v7165 = vmul.f32 %v7021, %v7149
    %v7166 = vmul.f32 %v7022, %v7150
    %v7167 = vmul.f32 %v7023, %v7151
    %v7168 = vmul.f32 %v7024, %v7152
    %v7169 = vmul.f32 %v7025, %v7153
    %v7170 = vmul.f32 %v7026, %v7154
    %v7171 = vmul.f32 %v7027, %v7155
    %v7172 = vmul.f32 %v7028, %v7156
    %v7173 = vmul.f32 %v7029, %v7157
    %v7174 = vmul.f32 %v7030, %v7158
    %v7175 = vmul.f32 %v7031, %v7159
    %v7176 = vmul.f32 %v7032, %v7160
    %v7177 = vmul.f32 %v7033, %v7145
    %v7178 = vmul.f32 %v7034, %v7146
    %v7179 = vmul.f32 %v7035, %v7147
    %v7180 = vmul.f32 %v7036, %v7148
    %v7181 = vmul.f32 %v7037, %v7149
    %v7182 = vmul.f32 %v7038, %v7150
    %v7183 = vmul.f32 %v7039, %v7151
    %v7184 = vmul.f32 %v7040, %v7152
    %v7185 = vmul.f32 %v7041, %v7153
    %v7186 = vmul.f32 %v7042, %v7154
    %v7187 = vmul.f32 %v7043, %v7155
    %v7188 = vmul.f32 %v7044, %v7156
    %v7189 = vmul.f32 %v7045, %v7157
    %v7190 = vmul.f32 %v7046, %v7158
    %v7191 = vmul.f32 %v7047, %v7159
    %v7192 = vmul.f32 %v7048, %v7160
    %v7193 = vmul.f32 %v7049, %v7145
    %v7194 = vmul.f32 %v7050, %v7146
    %v7195 = vmul.f32 %v7051, %v7147
    %v7196 = vmul.f32 %v7052, %v7148
    %v7197 = vmul.f32 %v7053, %v7149
    %v7198 = vmul.f32 %v7054, %v7150
    %v7199 = vmul.f32 %v7055, %v7151
    %v7200 = vmul.f32 %v7056, %v7152
    %v7201 = vmul.f32 %v7057, %v7153
    %v7202 = vmul.f32 %v7058, %v7154
    %v7203 = vmul.f32 %v7059, %v7155
    %v7204 = vmul.f32 %v7060, %v7156
    %v7205 = vmul.f32 %v7061, %v7157
    %v7206 = vmul.f32 %v7062, %v7158
    %v7207 = vmul.f32 %v7063, %v7159
    %v7208 = vmul.f32 %v7064, %v7160
    %v7209 = vmul.f32 %v7065, %v7145
    %v7210 = vmul.f32 %v7066, %v7146
    %v7211 = vmul.f32 %v7067, %v7147
    %v7212 = vmul.f32 %v7068, %v7148
    %v7213 = vmul.f32 %v7069, %v7149
    %v7214 = vmul.f32 %v7070, %v7150
    %v7215 = vmul.f32 %v7071, %v7151
    %v7216 = vmul.f32 %v7072, %v7152
    %v7217 = vmul.f32 %v7073, %v7153
    %v7218 = vmul.f32 %v7074, %v7154
    %v7219 = vmul.f32 %v7075, %v7155
    %v7220 = vmul.f32 %v7076, %v7156
    %v7221 = vmul.f32 %v7077, %v7157
    %v7222 = vmul.f32 %v7078, %v7158
    %v7223 = vmul.f32 %v7079, %v7159
    %v7224 = vmul.f32 %v7080, %v7160
    %v7225 = vmul.f32 %v7081, %v7145
    %v7226 = vmul.f32 %v7082, %v7146
    %v7227 = vmul.f32 %v7083, %v7147
    %v7228 = vmul.f32 %v7084, %v7148
    %v7229 = vmul.f32 %v7085, %v7149
    %v7230 = vmul.f32 %v7086, %v7150
    %v7231 = vmul.f32 %v7087, %v7151
    %v7232 = vmul.f32 %v7088, %v7152
    %v7233 = vmul.f32 %v7089, %v7153
    %v7234 = vmul.f32 %v7090, %v7154
    %v7235 = vmul.f32 %v7091, %v7155
    %v7236 = vmul.f32 %v7092, %v7156
    %v7237 = vmul.f32 %v7093, %v7157
    %v7238 = vmul.f32 %v7094, %v7158
    %v7239 = vmul.f32 %v7095, %v7159
    %v7240 = vmul.f32 %v7096, %v7160
    %v7241 = vmul.f32 %v7097, %v7145
    %v7242 = vmul.f32 %v7098, %v7146
    %v7243 = vmul.f32 %v7099, %v7147
    %v7244 = vmul.f32 %v7100, %v7148
    %v7245 = vmul.f32 %v7101, %v7149
    %v7246 = vmul.f32 %v7102, %v7150
    %v7247 = vmul.f32 %v7103, %v7151
    %v7248 = vmul.f32 %v7104, %v7152
    %v7249 = vmul.f32 %v7105, %v7153
    %v7250 = vmul.f32 %v7106, %v7154
    %v7251 = vmul.f32 %v7107, %v7155
    %v7252 = vmul.f32 %v7108, %v7156
    %v7253 = vmul.f32 %v7109, %v7157
    %v7254 = vmul.f32 %v7110, %v7158
    %v7255 = vmul.f32 %v7111, %v7159
    %v7256 = vmul.f32 %v7112, %v7160
    %v7257 = vmul.f32 %v7113, %v7145
    %v7258 = vmul.f32 %v7114, %v7146
    %v7259 = vmul.f32 %v7115, %v7147
    %v7260 = vmul.f32 %v7116, %v7148
    %v7261 = vmul.f32 %v7117, %v7149
    %v7262 = vmul.f32 %v7118, %v7150
    %v7263 = vmul.f32 %v7119, %v7151
    %v7264 = vmul.f32 %v7120, %v7152
    %v7265 = vmul.f32 %v7121, %v7153
    %v7266 = vmul.f32 %v7122, %v7154
    %v7267 = vmul.f32 %v7123, %v7155
    %v7268 = vmul.f32 %v7124, %v7156
    %v7269 = vmul.f32 %v7125, %v7157
    %v7270 = vmul.f32 %v7126, %v7158
    %v7271 = vmul.f32 %v7127, %v7159
    %v7272 = vmul.f32 %v7128, %v7160
    %v7273 = vmul.f32 %v7129, %v7145
    %v7274 = vmul.f32 %v7130, %v7146
    %v7275 = vmul.f32 %v7131, %v7147
    %v7276 = vmul.f32 %v7132, %v7148
    %v7277 = vmul.f32 %v7133, %v7149
    %v7278 = vmul.f32 %v7134, %v7150
    %v7279 = vmul.f32 %v7135, %v7151
    %v7280 = vmul.f32 %v7136, %v7152
    %v7281 = vmul.f32 %v7137, %v7153
    %v7282 = vmul.f32 %v7138, %v7154
    %v7283 = vmul.f32 %v7139, %v7155
    %v7284 = vmul.f32 %v7140, %v7156
    %v7285 = vmul.f32 %v7141, %v7157
    %v7286 = vmul.f32 %v7142, %v7158
    %v7287 = vmul.f32 %v7143, %v7159
    %v7288 = vmul.f32 %v7144, %v7160
    %v7289 = vmax.f32 %v7161, %v7162
    %v7290 = vmax.f32 %v7289, %v7163
    %v7291 = vmax.f32 %v7290, %v7164
    %v7292 = vmax.f32 %v7291, %v7165
    %v7293 = vmax.f32 %v7292, %v7166
    %v7294 = vmax.f32 %v7293, %v7167
    %v7295 = vmax.f32 %v7294, %v7168
    %v7296 = vmax.f32 %v7295, %v7169
    %v7297 = vmax.f32 %v7296, %v7170
    %v7298 = vmax.f32 %v7297, %v7171
    %v7299 = vmax.f32 %v7298, %v7172
    %v7300 = vmax.f32 %v7299, %v7173
    %v7301 = vmax.f32 %v7300, %v7174
    %v7302 = vmax.f32 %v7301, %v7175
    %v7303 = vmax.f32 %v7302, %v7176
    %v7304 = vrot.slane %v7303, 4
    %v7305 = vmax.f32 %v7303, %v7304
    %v7306 = vrot.slane %v7305, 2
    %v7307 = vmax.f32 %v7305, %v7306
    %v7308 = vrot.slane %v7307, 1
    %v7309 = vmax.f32 %v7307, %v7308
    %v7310 = vmax.f32 %v7177, %v7178
    %v7311 = vmax.f32 %v7310, %v7179
    %v7312 = vmax.f32 %v7311, %v7180
    %v7313 = vmax.f32 %v7312, %v7181
    %v7314 = vmax.f32 %v7313, %v7182
    %v7315 = vmax.f32 %v7314, %v7183
    %v7316 = vmax.f32 %v7315, %v7184
    %v7317 = vmax.f32 %v7316, %v7185
    %v7318 = vmax.f32 %v7317, %v7186
    %v7319 = vmax.f32 %v7318, %v7187
    %v7320 = vmax.f32 %v7319, %v7188
    %v7321 = vmax.f32 %v7320, %v7189
    %v7322 = vmax.f32 %v7321, %v7190
    %v7323 = vmax.f32 %v7322, %v7191
    %v7324 = vmax.f32 %v7323, %v7192
    %v7325 = vrot.slane %v7324, 4
    %v7326 = vmax.f32 %v7324, %v7325
    %v7327 = vrot.slane %v7326, 2
    %v7328 = vmax.f32 %v7326, %v7327
    %v7329 = vrot.slane %v7328, 1
    %v7330 = vmax.f32 %v7328, %v7329
    %v7331 = vmax.f32 %v7193, %v7194
    %v7332 = vmax.f32 %v7331, %v7195
    %v7333 = vmax.f32 %v7332, %v7196
    %v7334 = vmax.f32 %v7333, %v7197
    %v7335 = vmax.f32 %v7334, %v7198
    %v7336 = vmax.f32 %v7335, %v7199
    %v7337 = vmax.f32 %v7336, %v7200
    %v7338 = vmax.f32 %v7337, %v7201
    %v7339 = vmax.f32 %v7338, %v7202
    %v7340 = vmax.f32 %v7339, %v7203
    %v7341 = vmax.f32 %v7340, %v7204
    %v7342 = vmax.f32 %v7341, %v7205
    %v7343 = vmax.f32 %v7342, %v7206
    %v7344 = vmax.f32 %v7343, %v7207
    %v7345 = vmax.f32 %v7344, %v7208
    %v7346 = vrot.slane %v7345, 4
    %v7347 = vmax.f32 %v7345, %v7346
    %v7348 = vrot.slane %v7347, 2
    %v7349 = vmax.f32 %v7347, %v7348
    %v7350 = vrot.slane %v7349, 1
    %v7351 = vmax.f32 %v7349, %v7350
    %v7352 = vmax.f32 %v7209, %v7210
    %v7353 = vmax.f32 %v7352, %v7211
    %v7354 = vmax.f32 %v7353, %v7212
    %v7355 = vmax.f32 %v7354, %v7213
    %v7356 = vmax.f32 %v7355, %v7214
    %v7357 = vmax.f32 %v7356, %v7215
    %v7358 = vmax.f32 %v7357, %v7216
    %v7359 = vmax.f32 %v7358, %v7217
    %v7360 = vmax.f32 %v7359, %v7218
    %v7361 = vmax.f32 %v7360, %v7219
    %v7362 = vmax.f32 %v7361, %v7220
    %v7363 = vmax.f32 %v7362, %v7221
    %v7364 = vmax.f32 %v7363, %v7222
    %v7365 = vmax.f32 %v7364, %v7223
    %v7366 = vmax.f32 %v7365, %v7224
    %v7367 = vrot.slane %v7366, 4
    %v7368 = vmax.f32 %v7366, %v7367
    %v7369 = vrot.slane %v7368, 2
    %v7370 = vmax.f32 %v7368, %v7369
    %v7371 = vrot.slane %v7370, 1
    %v7372 = vmax.f32 %v7370, %v7371
    %v7373 = vmax.f32 %v7225, %v7226
    %v7374 = vmax.f32 %v7373, %v7227
    %v7375 = vmax.f32 %v7374, %v7228
    %v7376 = vmax.f32 %v7375, %v7229
    %v7377 = vmax.f32 %v7376, %v7230
    %v7378 = vmax.f32 %v7377, %v7231
    %v7379 = vmax.f32 %v7378, %v7232
    %v7380 = vmax.f32 %v7379, %v7233
    %v7381 = vmax.f32 %v7380, %v7234
    %v7382 = vmax.f32 %v7381, %v7235
    %v7383 = vmax.f32 %v7382, %v7236
    %v7384 = vmax.f32 %v7383, %v7237
    %v7385 = vmax.f32 %v7384, %v7238
    %v7386 = vmax.f32 %v7385, %v7239
    %v7387 = vmax.f32 %v7386, %v7240
    %v7388 = vrot.slane %v7387, 4
    %v7389 = vmax.f32 %v7387, %v7388
    %v7390 = vrot.slane %v7389, 2
    %v7391 = vmax.f32 %v7389, %v7390
    %v7392 = vrot.slane %v7391, 1
    %v7393 = vmax.f32 %v7391, %v7392
    %v7394 = vmax.f32 %v7241, %v7242
    %v7395 = vmax.f32 %v7394, %v7243
    %v7396 = vmax.f32 %v7395, %v7244
    %v7397 = vmax.f32 %v7396, %v7245
    %v7398 = vmax.f32 %v7397, %v7246
    %v7399 = vmax.f32 %v7398, %v7247
    %v7400 = vmax.f32 %v7399, %v7248
    %v7401 = vmax.f32 %v7400, %v7249
    %v7402 = vmax.f32 %v7401, %v7250
    %v7403 = vmax.f32 %v7402, %v7251
    %v7404 = vmax.f32 %v7403, %v7252
    %v7405 = vmax.f32 %v7404, %v7253
    %v7406 = vmax.f32 %v7405, %v7254
    %v7407 = vmax.f32 %v7406, %v7255
    %v7408 = vmax.f32 %v7407, %v7256
    %v7409 = vrot.slane %v7408, 4
    %v7410 = vmax.f32 %v7408, %v7409
    %v7411 = vrot.slane %v7410, 2
    %v7412 = vmax.f32 %v7410, %v7411
    %v7413 = vrot.slane %v7412, 1
    %v7414 = vmax.f32 %v7412, %v7413
    %v7415 = vmax.f32 %v7257, %v7258
    %v7416 = vmax.f32 %v7415, %v7259
    %v7417 = vmax.f32 %v7416, %v7260
    %v7418 = vmax.f32 %v7417, %v7261
    %v7419 = vmax.f32 %v7418, %v7262
    %v7420 = vmax.f32 %v7419, %v7263
    %v7421 = vmax.f32 %v7420, %v7264
    %v7422 = vmax.f32 %v7421, %v7265
    %v7423 = vmax.f32 %v7422, %v7266
    %v7424 = vmax.f32 %v7423, %v7267
    %v7425 = vmax.f32 %v7424, %v7268
    %v7426 = vmax.f32 %v7425, %v7269
    %v7427 = vmax.f32 %v7426, %v7270
    %v7428 = vmax.f32 %v7427, %v7271
    %v7429 = vmax.f32 %v7428, %v7272
    %v7430 = vrot.slane %v7429, 4
    %v7431 = vmax.f32 %v7429, %v7430
    %v7432 = vrot.slane %v7431, 2
    %v7433 = vmax.f32 %v7431, %v7432
    %v7434 = vrot.slane %v7433, 1
    %v7435 = vmax.f32 %v7433, %v7434
    %v7436 = vmax.f32 %v7273, %v7274
    %v7437 = vmax.f32 %v7436, %v7275
    %v7438 = vmax.f32 %v7437, %v7276
    %v7439 = vmax.f32 %v7438, %v7277
    %v7440 = vmax.f32 %v7439, %v7278
    %v7441 = vmax.f32 %v7440, %v7279
    %v7442 = vmax.f32 %v7441, %v7280
    %v7443 = vmax.f32 %v7442, %v7281
    %v7444 = vmax.f32 %v7443, %v7282
    %v7445 = vmax.f32 %v7444, %v7283
    %v7446 = vmax.f32 %v7445, %v7284
    %v7447 = vmax.f32 %v7446, %v7285
    %v7448 = vmax.f32 %v7447, %v7286
    %v7449 = vmax.f32 %v7448, %v7287
    %v7450 = vmax.f32 %v7449, %v7288
    %v7451 = vrot.slane %v7450, 4
    %v7452 = vmax.f32 %v7450, %v7451
    %v7453 = vrot.slane %v7452, 2
    %v7454 = vmax.f32 %v7452, %v7453
    %v7455 = vrot.slane %v7454, 1
    %v7456 = vmax.f32 %v7454, %v7455
    %v7457 = vpack.c.bf16 %v7309, %v7309
    %v7458 = vpack.c.bf16 %v7330, %v7330
    %v7459 = vpack.c.bf16 %v7351, %v7351
    %v7460 = vpack.c.bf16 %v7372, %v7372
    %v7461 = vpack.c.bf16 %v7393, %v7393
    %v7462 = vpack.c.bf16 %v7414, %v7414
    %v7463 = vpack.c.bf16 %v7435, %v7435
    %v7464 = vpack.c.bf16 %v7456, %v7456
    %v7465 = vld [vmem:[#allocation12] sm:$0xf]
    %v7466 = vld [vmem:[#allocation12 + $0x4] sm:$0xf]
    %v7467 = vld [vmem:[#allocation12 + $0x8] sm:$0xf]
    %v7468 = vld [vmem:[#allocation12 + $0xc] sm:$0xf]
    %v7469 = vld [vmem:[#allocation12 + $0x10] sm:$0xf]
    %v7470 = vld [vmem:[#allocation12 + $0x14] sm:$0xf]
    %v7471 = vld [vmem:[#allocation12 + $0x18] sm:$0xf]
    %v7472 = vld [vmem:[#allocation12 + $0x1c] sm:$0xf]
    %v7473 = vld [vmem:[#allocation12 + $0x20] sm:$0xf]
    %v7474 = vld [vmem:[#allocation12 + $0x24] sm:$0xf]
    %v7475 = vld [vmem:[#allocation12 + $0x28] sm:$0xf]
    %v7476 = vld [vmem:[#allocation12 + $0x2c] sm:$0xf]
    %v7477 = vld [vmem:[#allocation12 + $0x30] sm:$0xf]
    %v7478 = vld [vmem:[#allocation12 + $0x34] sm:$0xf]
    %v7479 = vld [vmem:[#allocation12 + $0x38] sm:$0xf]
    %v7480 = vld [vmem:[#allocation12 + $0x3c] sm:$0xf]
    %v7481 = vld [vmem:[#allocation13] sm:$0x1]
    %v7483 = vlaneseq
    %v7484 = vshrl.u32 %v7483, 7
    %v7485 = vsub.s32 0, %v7484
    %v7486 = vrot.slane %v7481, %v7485
    %v7496 = vunpack.c.l.b16 %v7457
    %v7497 = vunpack.c.l.b16 %v7458
    %v7498 = vunpack.c.l.b16 %v7459
    %v7499 = vunpack.c.l.b16 %v7460
    %v7500 = vunpack.c.l.b16 %v7461
    %v7501 = vunpack.c.l.b16 %v7462
    %v7502 = vunpack.c.l.b16 %v7463
    %v7503 = vunpack.c.l.b16 %v7464
    %vm7504 = vcmask 1041409
    %v7505 = vsel %vm7504, %v7497, %v7496
    %vm7506 = vcmask 1042434
    %v7507 = vsel %vm7506, %v7498, %v7505
    %vm7508 = vcmask 1043459
    %v7509 = vsel %vm7508, %v7499, %v7507
    %vm7510 = vcmask 1044484
    %v7511 = vsel %vm7510, %v7500, %v7509
    %vm7512 = vcmask 1045509
    %v7513 = vsel %vm7512, %v7501, %v7511
    %vm7514 = vcmask 1046534
    %v7515 = vsel %vm7514, %v7502, %v7513
    %vm7516 = vcmask 1047559
    %v7517 = vsel %vm7516, %v7503, %v7515
    %v7518 = vpack.c.b16 %v7517, %v7517
    %v7536 = vunpack.c.l.b16 %v7465
    %v7537 = vunpack.c.l.b16 %v7466
    %v7538 = vunpack.c.l.b16 %v7467
    %v7539 = vunpack.c.l.b16 %v7468
    %v7540 = vunpack.c.l.b16 %v7469
    %v7541 = vunpack.c.l.b16 %v7470
    %v7542 = vunpack.c.l.b16 %v7471
    %v7543 = vunpack.c.l.b16 %v7472
    %v7544 = vunpack.c.l.b16 %v7473
    %v7545 = vunpack.c.l.b16 %v7474
    %v7546 = vunpack.c.l.b16 %v7475
    %v7547 = vunpack.c.l.b16 %v7476
    %v7548 = vunpack.c.l.b16 %v7477
    %v7549 = vunpack.c.l.b16 %v7478
    %v7550 = vunpack.c.l.b16 %v7479
    %v7551 = vunpack.c.l.b16 %v7480
    %v7552 = vpack.c.b16 %v7537, %v7536
    %v7553 = vpack.c.b16 %v7539, %v7538
    %v7554 = vpack.c.b16 %v7541, %v7540
    %v7555 = vpack.c.b16 %v7543, %v7542
    %v7556 = vpack.c.b16 %v7545, %v7544
    %v7557 = vpack.c.b16 %v7547, %v7546
    %v7558 = vpack.c.b16 %v7549, %v7548
    %v7559 = vpack.c.b16 %v7551, %v7550
    %7568 = vmatprep.subr.bf16.mxu0 0
    %7569 = vmatpush1.bf16.msra.mxu0 %v7552
    %7570 = vmatprep.subr.bf16.mxu0 0
    %7571 = vmatpush1.bf16.msra.mxu0 %v7553
    %7572 = vmatprep.subr.bf16.mxu0 0
    %7573 = vmatpush1.bf16.msra.mxu0 %v7554
    %7574 = vmatprep.subr.bf16.mxu0 0
    %7575 = vmatpush1.bf16.msra.mxu0 %v7555
    %7576 = vmatprep.subr.bf16.mxu0 0
    %7577 = vmatpush1.bf16.msra.mxu0 %v7556
    %7578 = vmatprep.subr.bf16.mxu0 0
    %7579 = vmatpush1.bf16.msra.mxu0 %v7557
    %7580 = vmatprep.subr.bf16.mxu0 0
    %7581 = vmatpush1.bf16.msra.mxu0 %v7558
    %7582 = vmatprep.subr.bf16.mxu0 0
    %7583 = vmatpush1.bf16.msra.mxu0 %v7559
    %7584 = vmatprep.subr.bf16.mxu0 0
    %7585 = vmatpush1.bf16.msra.mxu0 0
    %7586 = vmatprep.subr.bf16.mxu0 0
    %7587 = vmatpush1.bf16.msra.mxu0 0
    %7588 = vmatprep.subr.bf16.mxu0 0
    %7589 = vmatpush1.bf16.msra.mxu0 0
    %7590 = vmatprep.subr.bf16.mxu0 0
    %7591 = vmatpush1.bf16.msra.mxu0 0
    %7592 = vmatprep.subr.bf16.mxu0 0
    %7593 = vmatpush1.bf16.msra.mxu0 0
    %7594 = vmatprep.subr.bf16.mxu0 0
    %7595 = vmatpush1.bf16.msra.mxu0 0
    %7596 = vmatprep.subr.bf16.mxu0 0
    %7597 = vmatpush1.bf16.msra.mxu0 0
    %7598 = vmatprep.subr.bf16.mxu0 0
    %7599 = vmatpush1.bf16.msra.mxu0 0
    %7600 = vmatprep.mubr.bf16.mxu0 0
    %7601 = vmatmul.mubr.bf16.gmra.mrb[0].mxu0 %v7518
    %v7602 = vpop.f32.mrb[0].mxu0
    %v7603 = vadd.f32 %v7486, %v7602
    %v7604 = vpop.f32.mrb[0].mxu0
    %v7605 = vpop.f32.mrb[0].mxu0
    %v7606 = vpop.f32.mrb[0].mxu0
    %7607 = vdwg.mxu0
    %7608 = vst [vmem:[#allocation15] sm:$0xff] %v7603
    // Predicated region
    $region50: #{tpu_custom_call.1} parent=1 // pred_check
      _
    $region51: #{tpu_custom_call.1} parent=1 // pred_check_branch
      %7610 = sbr.rel (0) target = $region53
    $region52: #{tpu_custom_call.1} parent=1 // pred_region
      %s7612 = ssub.s32 128, 128
      %7613 = vsyncadd [#allocation6], %s7612
      %s7615 = sshll.u32 [#allocation15], 4
      %s7616 = int_to_ptr.vmem [resolvable:$true] %s7615
      %7618 = dma.vmem_to_hbm [thread:$0]  %s7616, 128, %s6, [#allocation6]
    $region53: #{tpu_custom_call.1} parent=1 // pred_fallthru
      _
    // Predicated region
    $region54: #{tpu_custom_call.1} parent=1 // pred_check
      _
    $region55: #{tpu_custom_call.1} parent=1 // pred_check_branch
      %7620 = sbr.rel (0) target = $region57
    $region56: #{tpu_custom_call.1} parent=1 // pred_region
      %7621 = dma.done [#allocation6], 128
    $region57: #{tpu_custom_call.1} parent=1 // pred_fallthru
      _
    %7622 = vsyncpa [#allocation5], 1
    %7623 = vsyncpa [#allocation8], 1
    %7624 = vsyncpa [#allocation11], 1
    %7625 = vsyncpa [#allocation14], 1
    %7626 = vsyncpa [#allocation6], 1

</llo_original>
